<compile_context>
chip_gen: v7x
topology: tpu7x:2x2x1
jax: 0.10.0
libtpu: 0.0.40
codegen_flags: <defaults>
</compile_context>

<pallas_src>
import math
from functools import partial

import jax
import jax.numpy as jnp
from jax.experimental import pallas as pl
from jax.experimental.pallas import tpu as pltpu


# ----------------------------------------------------------------------------
# Per-generation VMEM budget (v7x: 64 MiB/TC -> ~48 MiB; v5e/v6e: 128 MiB -> 96).
# ----------------------------------------------------------------------------
def _default_vmem_limit():
    try:
        cap = int(pltpu.get_tpu_info().vmem_capacity_bytes)
        return max(16 * 1024 * 1024, min((cap * 3) // 4, 96 * 1024 * 1024))
    except Exception:
        return 40 * 1024 * 1024


_VMEM_LIMIT = _default_vmem_limit()


def _cparams(sem):
    return pltpu.CompilerParams(dimension_semantics=sem,
                                vmem_limit_bytes=_VMEM_LIMIT)


def _pick_tm(m, target=512):
    """Choose an M tile: (tm, padded_m)."""
    if m <= target:
        return m, m
    for t in range(target, 7, -1):
        if t % 8 == 0 and m % t == 0:
            return t, m
    t = 256
    return t, ((m + t - 1) // t) * t


def _pick_tn(n):
    if n % 256 == 0:
        return 256
    if n % 128 == 0:
        return 128
    return n


# ----------------------------------------------------------------------------
# Pallas kernels
# ----------------------------------------------------------------------------
def _mm_kernel(a_ref, b_ref, s_ref, c_ref, *rest, relu, has_res):
    # out = act((A @ B) * scale + bias [+ residual]); bf16 MXU, f32 epilogue.
    if has_res:
        r_ref, o_ref = rest
    else:
        (o_ref,) = rest
    acc = jnp.dot(a_ref[...].astype(jnp.bfloat16), b_ref[...],
                  preferred_element_type=jnp.float32)
    acc = acc * s_ref[...] + c_ref[...]
    if has_res:
        acc = acc + r_ref[...].astype(jnp.float32)
    if relu:
        acc = jnp.maximum(acc, 0.0)
    o_ref[...] = acc.astype(o_ref.dtype)


def mm_affine(a, b, scale, bias, *, relu, residual=None, out_dtype=jnp.bfloat16):
    """Tiled matmul + folded-BN affine (+ optional fused residual add + ReLU).

    a: (M, K), b: (K, N) bf16, scale/bias: (1, N) f32, residual: (M, N) or None.
    K stays a single block (K <= ~10K here); M and N are gridded with M as the
    innermost axis so the weight tile stays resident across the M loop.
    """
    m, k = a.shape
    n = b.shape[1]
    tn = _pick_tn(n)
    tm, m_pad = _pick_tm(m)
    if m_pad != m:
        a = jnp.pad(a, ((0, m_pad - m), (0, 0)))
        if residual is not None:
            residual = jnp.pad(residual, ((0, m_pad - m), (0, 0)))

    in_specs = [
        pl.BlockSpec((tm, k), lambda j, i: (i, 0)),
        pl.BlockSpec((k, tn), lambda j, i: (0, j)),
        pl.BlockSpec((1, tn), lambda j, i: (0, j)),
        pl.BlockSpec((1, tn), lambda j, i: (0, j)),
    ]
    args = [a, b, scale, bias]
    if residual is not None:
        in_specs.append(pl.BlockSpec((tm, tn), lambda j, i: (i, j)))
        args.append(residual)

    out = pl.pallas_call(
        partial(_mm_kernel, relu=relu, has_res=residual is not None),
        out_shape=jax.ShapeDtypeStruct((m_pad, n), out_dtype),
        grid=(n // tn, m_pad // tm),           # M innermost -> B tile resident
        in_specs=in_specs,
        out_specs=pl.BlockSpec((tm, tn), lambda j, i: (i, j)),
        compiler_params=_cparams(("parallel", "parallel")),
    )(*args)
    return out[:m] if m_pad != m else out


def _gconv_s1_kernel(x_ref, w_ref, s_ref, c_ref, o_ref, *, h, w):
    # Grouped 3x3 stride-1 conv, one (super-group, image) per grid step.
    # The padded NHWC tile is resident in VMEM; the 9 taps are static slices,
    # so no im2col patch matrix ever touches HBM.
    nsup = o_ref.shape[2]
    acc = jnp.zeros((h * w, nsup), jnp.float32)
    for dh in range(3):
        for dw in range(3):
            win = x_ref[0, dh:dh + h, dw:dw + w, :].reshape(h * w, -1)
            acc = acc + jnp.dot(win, w_ref[0, dh * 3 + dw],
                                preferred_element_type=jnp.float32)
    acc = acc * s_ref[0] + c_ref[0]
    o_ref[0] = jnp.maximum(acc, 0.0).astype(o_ref.dtype)


def grouped_conv3x3_s1(x, w_packed, scale, bias):
    """Fused grouped 3x3 / stride-1 conv + BN + ReLU (super-group packed)."""
    n, h, w, cin = x.shape
    n_sup, _, csup, nsup = w_packed.shape
    xp = jnp.pad(x, ((0, 0), (1, 1), (1, 1), (0, 0)))
    out = pl.pallas_call(
        partial(_gconv_s1_kernel, h=h, w=w),
        out_shape=jax.ShapeDtypeStruct((n, h * w, n_sup * nsup), jnp.bfloat16),
        grid=(n_sup, n),
        in_specs=[
            pl.BlockSpec((1, h + 2, w + 2, csup), lambda s, b: (b, 0, 0, s)),
            pl.BlockSpec((1, 9, csup, nsup), lambda s, b: (s, 0, 0, 0)),
            pl.BlockSpec((1, 1, nsup), lambda s, b: (s, 0, 0)),
            pl.BlockSpec((1, 1, nsup), lambda s, b: (s, 0, 0)),
        ],
        out_specs=pl.BlockSpec((1, h * w, nsup), lambda s, b: (b, 0, s)),
        compiler_params=_cparams(("parallel", "parallel")),
    )(xp, w_packed, scale, bias)
    return out.reshape(n, h, w, n_sup * nsup)


def _gmm_kernel(a_ref, b_ref, s_ref, c_ref, o_ref):
    acc = jnp.dot(a_ref[...], b_ref[0], preferred_element_type=jnp.float32)
    acc = acc * s_ref[0] + c_ref[0]
    o_ref[...] = jnp.maximum(acc, 0.0).astype(o_ref.dtype)


def grouped_conv3x3_gmm(x, w_packed, scale, bias, *, stride):
    """Grouped 3x3 conv via im2col + super-group blocked matmul (used for the
    3 stride-2 blocks and for spatial sizes not sublane-aligned)."""
    n, h, w, cin = x.shape
    n_sup, _, csup, nsup = w_packed.shape
    xp = jnp.pad(x, ((0, 0), (1, 1), (1, 1), (0, 0)))
    ho = (h - 1) // stride + 1
    wo = (w - 1) // stride + 1
    slices = [xp[:, dh:dh + stride * ho:stride, dw:dw + stride * wo:stride, :]
              for dh in range(3) for dw in range(3)]
    p = jnp.stack(slices, axis=0).reshape(3, 3, n, ho, wo, n_sup, csup)
    p = p.transpose(2, 3, 4, 5, 0, 1, 6).reshape(n * ho * wo, n_sup * 9 * csup)

    m = n * ho * wo
    tm, m_pad = _pick_tm(m)
    if m_pad != m:
        p = jnp.pad(p, ((0, m_pad - m), (0, 0)))
    wk = w_packed.reshape(n_sup, 9 * csup, nsup)

    out = pl.pallas_call(
        _gmm_kernel,
        out_shape=jax.ShapeDtypeStruct((m_pad, n_sup * nsup), jnp.bfloat16),
        grid=(n_sup, m_pad // tm),
        in_specs=[
            pl.BlockSpec((tm, 9 * csup), lambda s, i: (i, s)),
            pl.BlockSpec((1, 9 * csup, nsup), lambda s, i: (s, 0, 0)),
            pl.BlockSpec((1, 1, nsup), lambda s, i: (s, 0, 0)),
            pl.BlockSpec((1, 1, nsup), lambda s, i: (s, 0, 0)),
        ],
        out_specs=pl.BlockSpec((tm, nsup), lambda s, i: (i, s)),
        compiler_params=_cparams(("parallel", "parallel")),
    )(p, wk, scale, bias)
    if m_pad != m:
        out = out[:m]
    return out.reshape(n, ho, wo, n_sup * nsup)


def _maxpool9_fused_kernel(x_ref, o_ref, *, h, w):
    # 3x3 / stride-1 max of the padded NHWC tile; the 9 taps are static
    # in-kernel slices (no 9x stacked patch tensor in HBM).  Stride-2
    # subsampling is done by the caller on the result.
    acc = x_ref[0, 0:h, 0:w, :]
    for dh in range(3):
        for dw in range(3):
            if dh == 0 and dw == 0:
                continue
            acc = jnp.maximum(acc, x_ref[0, dh:dh + h, dw:dw + w, :])
    o_ref[0] = acc


def maxpool_3x3_s2_fused(x):
    n, h, w, c = x.shape
    xp = jnp.pad(x, ((0, 0), (1, 1), (1, 1), (0, 0)))  # input is post-ReLU (>=0)
    y = pl.pallas_call(
        partial(_maxpool9_fused_kernel, h=h, w=w),
        out_shape=jax.ShapeDtypeStruct((n, h, w, c), x.dtype),
        grid=(n,),
        in_specs=[pl.BlockSpec((1, h + 2, w + 2, c), lambda b: (b, 0, 0, 0))],
        out_specs=pl.BlockSpec((1, h, w, c), lambda b: (b, 0, 0, 0)),
        compiler_params=_cparams(("parallel",)),
    )(xp)
    return y[:, ::2, ::2, :]


def _max9_kernel(x_ref, o_ref):
    o_ref[...] = jnp.max(x_ref[...], axis=0)


def maxpool_3x3_s2_stacked(x):
    # Fallback path: build the 9 shifted slices via XLA and reduce in Pallas.
    n, h, w, c = x.shape
    xp = jnp.pad(x, ((0, 0), (1, 1), (1, 1), (0, 0)))  # input is post-ReLU (>=0)
    ho = (h - 1) // 2 + 1
    wo = (w - 1) // 2 + 1
    slices = [xp[:, dh:dh + 2 * ho:2, dw:dw + 2 * wo:2, :]
              for dh in range(3) for dw in range(3)]
    p = jnp.stack(slices, axis=0).reshape(9, n * ho * wo, c)
    m = n * ho * wo
    tm, m_pad = _pick_tm(m)
    if m_pad != m:
        p = jnp.pad(p, ((0, 0), (0, m_pad - m), (0, 0)))
    out = pl.pallas_call(
        _max9_kernel,
        out_shape=jax.ShapeDtypeStruct((m_pad, c), x.dtype),
        grid=(m_pad // tm,),
        in_specs=[pl.BlockSpec((9, tm, c), lambda i: (0, i, 0))],
        out_specs=pl.BlockSpec((tm, c), lambda i: (i, 0)),
        compiler_params=_cparams(("parallel",)),
    )(p)
    if m_pad != m:
        out = out[:m]
    return out.reshape(n, ho, wo, c)


def _gap_kernel(x_ref, o_ref, *, inv_hw):
    o_ref[0] = jnp.sum(x_ref[0].astype(jnp.float32), axis=0, keepdims=True) * inv_hw


@jax.jit
def global_avg_pool(x):
    n, h, w, c = x.shape
    x3 = x.reshape(n, h * w, c)
    out = pl.pallas_call(
        partial(_gap_kernel, inv_hw=1.0 / (h * w)),
        out_shape=jax.ShapeDtypeStruct((n, 1, c), jnp.float32),
        grid=(n,),
        in_specs=[pl.BlockSpec((1, h * w, c), lambda b: (b, 0, 0))],
        out_specs=pl.BlockSpec((1, 1, c), lambda b: (b, 0, 0)),
        compiler_params=_cparams(("parallel",)),
    )(x3)
    return out.reshape(n, c)


# ----------------------------------------------------------------------------
# JAX glue: im2col for the 7x7 stem conv
# TODO(synk): fold the 49 stem taps in-kernel like the grouped conv (the stem
# runs once per forward, so the XLA-side patch build is cheap relative to L1-4).
# ----------------------------------------------------------------------------
def _im2col(x, kh, kw, stride, pad):
    n, h, w, c = x.shape
    if pad:
        x = jnp.pad(x, ((0, 0), (pad, pad), (pad, pad), (0, 0)))
    ho = (h + 2 * pad - kh) // stride + 1
    wo = (w + 2 * pad - kw) // stride + 1
    slices = [x[:, dh:dh + stride * ho:stride, dw:dw + stride * wo:stride, :]
              for dh in range(kh) for dw in range(kw)]
    p = jnp.stack(slices, axis=0).reshape(kh, kw, n, ho, wo, c)
    p = p.transpose(2, 3, 4, 0, 1, 5).reshape(n * ho * wo, kh * kw * c)
    return p, ho, wo


# ----------------------------------------------------------------------------
# Jitted stages (glue + Pallas fused per stage; identical blocks share compiles)
# ----------------------------------------------------------------------------
@partial(jax.jit, static_argnames=("use_fused",))
def stem_forward(x_nchw, wmat, scale, bias, *, use_fused=True):
    x = jnp.transpose(x_nchw, (0, 2, 3, 1)).astype(jnp.bfloat16)
    n = x.shape[0]
    patches, ho, wo = _im2col(x, 7, 7, 2, 3)
    y = mm_affine(patches, wmat, scale, bias, relu=True)
    y = y.reshape(n, ho, wo, wmat.shape[1])
    if use_fused:
        return maxpool_3x3_s2_fused(y)
    return maxpool_3x3_s2_stacked(y)


@partial(jax.jit, static_argnames=("stride", "use_fused"))
def bottleneck_block(x, p, *, stride, use_fused):
    n, h, w, cin = x.shape
    x_flat = x.reshape(n * h * w, cin)
    width = p["conv1"][0].shape[1]
    cout = p["conv3"][0].shape[1]

    # conv1: 1x1 + BN + ReLU
    out = mm_affine(x_flat, *p["conv1"], relu=True).reshape(n, h, w, width)

    # conv2: grouped 3x3 + BN + ReLU (super-group packed)
    if stride == 1 and w % 8 == 0 and use_fused:
        out = grouped_conv3x3_s1(out, *p["conv2"])
    else:
        out = grouped_conv3x3_gmm(out, *p["conv2"], stride=stride)
    n2, h2, w2 = out.shape[0], out.shape[1], out.shape[2]
    out_flat = out.reshape(n2 * h2 * w2, width)

    # identity path (1x1/stride-s conv + BN when shapes change)
    if "down" in p:
        if stride > 1:
            ident_in = x[:, ::stride, ::stride, :].reshape(n2 * h2 * w2, cin)
        else:
            ident_in = x_flat
        identity = mm_affine(ident_in, *p["down"], relu=False)
    else:
        identity = x_flat

    # conv3: 1x1 + BN, residual add and ReLU fused into the epilogue
    out_flat = mm_affine(out_flat, *p["conv3"], relu=True, residual=identity)
    return out_flat.reshape(n2, h2, w2, cout)


@jax.jit
def fc_head(features, wmat, scale, bias):
    return mm_affine(features, wmat, scale, bias, relu=False,
                     out_dtype=jnp.float32)


# ----------------------------------------------------------------------------
# Deterministic parameter construction (resnext50_32x4d structure, n_class=5)
# ----------------------------------------------------------------------------
_CFG = [(64, 3, 1), (128, 4, 2), (256, 6, 2), (512, 3, 2)]  # resnext50: [3,4,6,3]
_key = jax.random.PRNGKey(0)


def _next_key():
    global _key
    _key, sub = jax.random.split(_key)
    return sub


def conv_bn_raw(cin, cout, kh, kw, groups=1):
    fan_in = (cin // groups) * kh * kw
    w = jax.random.normal(_next_key(), (cout, cin // groups, kh, kw), jnp.float32)
    w = w * math.sqrt(2.0 / fan_in)
    gamma = 1.0 + 0.1 * jax.random.normal(_next_key(), (cout,), jnp.float32)
    beta = 0.1 * jax.random.normal(_next_key(), (cout,), jnp.float32)
    rmean = 0.1 * jax.random.normal(_next_key(), (cout,), jnp.float32)
    rvar = 1.0 + 0.5 * jax.random.uniform(_next_key(), (cout,), jnp.float32)
    scale = gamma / jnp.sqrt(rvar + 1e-5)
    bias = beta - rmean * scale
    return w, scale, bias


def _prep_1x1(w, scale, bias, pad_cin_to=None):
    cout, cin = w.shape[0], w.shape[1]
    wmat = w.reshape(cout, cin).T
    if pad_cin_to is not None and pad_cin_to > cin:
        wmat = jnp.pad(wmat, ((0, pad_cin_to - cin), (0, 0)))
    return (wmat.astype(jnp.bfloat16),
            scale.reshape(1, cout).astype(jnp.float32),
            bias.reshape(1, cout).astype(jnp.float32))


def _prep_stem(w, scale, bias, pad_cout_to=128):
    # K order = (kh, kw, cin); cout padded 64->128 (pad channels: scale 1, bias 0
    # and zero weights -> exactly 0 after ReLU, so downstream math is unchanged).
    cout, cin, kh, kw = w.shape
    wmat = w.transpose(2, 3, 1, 0).reshape(kh * kw * cin, cout)
    wmat = jnp.pad(wmat, ((0, 0), (0, pad_cout_to - cout)))
    scale = jnp.pad(scale, (0, pad_cout_to - cout), constant_values=1.0)
    bias = jnp.pad(bias, (0, pad_cout_to - cout))
    return (wmat.astype(jnp.bfloat16),
            scale.reshape(1, pad_cout_to).astype(jnp.float32),
            bias.reshape(1, pad_cout_to).astype(jnp.float32))


def _prep_grouped(w, scale, bias, groups=32):
    # Pack groups into 128-wide block-diagonal super-groups:
    # packed[s, kh*kw, csup=128, nsup=128]; zero off-diagonal blocks.
    cout, cpg, kh, kw = w.shape
    opg = cout // groups
    sup = max(1, 128 // opg)          # groups per super-group
    n_sup = groups // sup
    csup, nsup = sup * cpg, sup * opg
    wt = w.reshape(n_sup, sup, opg, cpg, kh, kw).transpose(0, 4, 5, 1, 3, 2)
    eye = jnp.eye(sup, dtype=w.dtype)
    packed = jnp.einsum('sabgic,gh->sabgihc', wt, eye)
    packed = packed.reshape(n_sup, kh * kw, csup, nsup)
    return (packed.astype(jnp.bfloat16),
            scale.reshape(n_sup, 1, nsup).astype(jnp.float32),
            bias.reshape(n_sup, 1, nsup).astype(jnp.float32))


def build_prepared_params(n_class=5):
    prep = {"stem": _prep_stem(*conv_bn_raw(3, 64, 7, 7))}
    layers = []
    cin = 64
    for planes, nblocks, stride in _CFG:
        width = planes * 2            # int(planes * 4/64) * 32
        cout = planes * 4
        blocks = []
        for i in range(nblocks):
            s = stride if i == 0 else 1
            pad_to = 128 if cin == 64 else None   # stem output is padded to 128
            bp = {
                "conv1": _prep_1x1(*conv_bn_raw(cin, width, 1, 1), pad_cin_to=pad_to),
                "conv2": _prep_grouped(*conv_bn_raw(width, width, 3, 3, groups=32)),
                "conv3": _prep_1x1(*conv_bn_raw(width, cout, 1, 1)),
            }
            if s != 1 or cin != cout:
                bp["down"] = _prep_1x1(*conv_bn_raw(cin, cout, 1, 1), pad_cin_to=pad_to)
            blocks.append(bp)
            cin = cout
        layers.append(blocks)
    prep["layers"] = layers
    n_features = cin                  # 2048
    lim = 1.0 / math.sqrt(n_features)
    fc_w = jax.random.uniform(_next_key(), (n_class, n_features), jnp.float32, -lim, lim)
    fc_b = jax.random.uniform(_next_key(), (n_class,), jnp.float32, -lim, lim)
    prep["fc"] = (fc_w.T.astype(jnp.bfloat16),
                  jnp.ones((1, n_class), jnp.float32),
                  fc_b.reshape(1, n_class).astype(jnp.float32))
    return prep


# ----------------------------------------------------------------------------
# Forward pass (matches timmNet.forward: returns (features, output))
# ----------------------------------------------------------------------------
def timmnet_forward(x_nchw, prep, *, use_fused=True):
    x = stem_forward(x_nchw, *prep["stem"], use_fused=use_fused)
    for layer, (planes, nblocks, stride0) in zip(prep["layers"], _CFG):
        for i, bp in enumerate(layer):
            x = bottleneck_block(x, bp, stride=stride0 if i == 0 else 1,
                                 use_fused=use_fused)
    features = global_avg_pool(x)     # (N, 2048) f32; model.fc is Identity
    output = fc_head(features, *prep["fc"])
    return features, output


# ----------------------------------------------------------------------------
if __name__ == "__main__":
    prep = build_prepared_params(n_class=5)
    # small input: batch=2, 3 channels, 64x64 spatial (survives the 32x downsample)
    x = jax.random.normal(jax.random.PRNGKey(0), (2, 3, 64, 64), jnp.float32)

    try:
        features, output = timmnet_forward(x, prep, use_fused=True)
        features, output = jax.block_until_ready((features, output))
    except Exception:
        # Fallback: route every grouped conv / the maxpool through the
        # patch-matmul kernels (no in-kernel window slicing) if the fused
        # in-kernel-tap path fails to lower on this TPU generation.
        features, output = timmnet_forward(x, prep, use_fused=False)
        features, output = jax.block_until_ready((features, output))

    assert features.shape == (2, 2048), features.shape
    assert output.shape == (2, 5), output.shape
    assert bool(jnp.all(jnp.isfinite(features))) and bool(jnp.all(jnp.isfinite(output)))
    print("KERNEL_OK")
</pallas_src>

<mosaic_0001>
module attributes {stable_mosaic.version = 11 : i64} {
  func.func @_mm_kernel(%arg0: i32, %arg1: i32, %arg2: memref<512x147xbf16, #tpu.memory_space<vmem>>, %arg3: memref<147x128xbf16, #tpu.memory_space<vmem>>, %arg4: memref<1x128xf32, #tpu.memory_space<vmem>>, %arg5: memref<1x128xf32, #tpu.memory_space<vmem>>, %arg6: memref<512x128xbf16, #tpu.memory_space<vmem>>) attributes {dimension_semantics = [#tpu.dimension_semantics<parallel>, #tpu.dimension_semantics<parallel>], iteration_bounds = array<i64: 1, 4>, scalar_prefetch = 0 : i64, scratch_operands = 0 : i64, tpu.core_type = #tpu.core_type<tc>, window_params = [{transform_indices = @transform_0, window_bounds = array<i64: 512, 147>}, {transform_indices = @transform_1, window_bounds = array<i64: 147, 128>}, {transform_indices = @transform_2, window_bounds = array<i64: 1, 128>}, {transform_indices = @transform_3, window_bounds = array<i64: 1, 128>}, {transform_indices = @transform_4, window_bounds = array<i64: 512, 128>}]} {
    %c0 = arith.constant 0 : index
    %c0_0 = arith.constant 0 : index
    %0 = vector.load %arg2[%c0, %c0_0] : memref<512x147xbf16, #tpu.memory_space<vmem>>, vector<512x147xbf16>
    %c0_1 = arith.constant 0 : index
    %c0_2 = arith.constant 0 : index
    %1 = vector.load %arg3[%c0_1, %c0_2] : memref<147x128xbf16, #tpu.memory_space<vmem>>, vector<147x128xbf16>
    %cst = arith.constant dense<0.000000e+00> : vector<512x128xf32>
    %2 = tpu.matmul %0, %1, %cst {dimension_numbers = #tpu.dot_dimension_numbers<[1], [0], [0], [1], [0, 0, 1, 1], [], []>} : vector<512x147xbf16>, vector<147x128xbf16>, vector<512x128xf32> -> vector<512x128xf32>
    %c0_3 = arith.constant 0 : index
    %c0_4 = arith.constant 0 : index
    %3 = vector.load %arg4[%c0_3, %c0_4] : memref<1x128xf32, #tpu.memory_space<vmem>>, vector<1x128xf32>
    %4 = vector.broadcast %3 : vector<1x128xf32> to vector<512x128xf32>
    %5 = arith.mulf %2, %4 : vector<512x128xf32>
    %c0_5 = arith.constant 0 : index
    %c0_6 = arith.constant 0 : index
    %6 = vector.load %arg5[%c0_5, %c0_6] : memref<1x128xf32, #tpu.memory_space<vmem>>, vector<1x128xf32>
    %7 = vector.broadcast %6 : vector<1x128xf32> to vector<512x128xf32>
    %8 = arith.addf %5, %7 : vector<512x128xf32>
    %cst_7 = arith.constant 0.000000e+00 : f32
    %9 = vector.broadcast %cst_7 : f32 to vector<512x128xf32>
    %10 = arith.maximumf %8, %9 : vector<512x128xf32>
    %11 = arith.truncf %10 : vector<512x128xf32> to vector<512x128xbf16>
    %c0_8 = arith.constant 0 : index
    %c0_9 = arith.constant 0 : index
    %12 = vector.load %arg6[%c0_8, %c0_9] : memref<512x128xbf16, #tpu.memory_space<vmem>>, vector<512x128xbf16>
    tpu.vector_store %arg6[%c0_8, %c0_9], %11 {strides = array<i32>} : memref<512x128xbf16, #tpu.memory_space<vmem>>, vector<512x128xbf16>,
    return
  }
  func.func @transform_0(%arg0: i32, %arg1: i32) -> (i32, i32) {
    %c0_i32 = arith.constant 0 : i32
    %c0_i32_0 = arith.constant 0 : i32
    return %arg1, %c0_i32 : i32, i32
  }
  func.func @transform_1(%arg0: i32, %arg1: i32) -> (i32, i32) {
    %c0_i32 = arith.constant 0 : i32
    %c0_i32_0 = arith.constant 0 : i32
    return %c0_i32, %arg0 : i32, i32
  }
  func.func @transform_2(%arg0: i32, %arg1: i32) -> (i32, i32) {
    %c0_i32 = arith.constant 0 : i32
    %c0_i32_0 = arith.constant 0 : i32
    return %c0_i32, %arg0 : i32, i32
  }
  func.func @transform_3(%arg0: i32, %arg1: i32) -> (i32, i32) {
    %c0_i32 = arith.constant 0 : i32
    %c0_i32_0 = arith.constant 0 : i32
    return %c0_i32, %arg0 : i32, i32
  }
  func.func @transform_4(%arg0: i32, %arg1: i32) -> (i32, i32) {
    %c0_i32 = arith.constant 0 : i32
    return %arg1, %arg0 : i32, i32
  }
}

module attributes {stable_mosaic.version = 11 : i64} {
  func.func @_maxpool9_fused_kernel(%arg0: i32, %arg1: memref<1x34x34x128xbf16, #tpu.memory_space<vmem>>, %arg2: memref<1x32x32x128xbf16, #tpu.memory_space<vmem>>) attributes {dimension_semantics = [#tpu.dimension_semantics<parallel>], iteration_bounds = array<i64: 2>, scalar_prefetch = 0 : i64, scratch_operands = 0 : i64, tpu.core_type = #tpu.core_type<tc>, window_params = [{transform_indices = @transform_0, window_bounds = array<i64: 1, 34, 34, 128>}, {transform_indices = @transform_1, window_bounds = array<i64: 1, 32, 32, 128>}]} {
    %c0 = arith.constant 0 : index
    %c0_0 = arith.constant 0 : index
    %c0_1 = arith.constant 0 : index
    %c0_2 = arith.constant 0 : index
    %0 = vector.load %arg1[%c0, %c0_0, %c0_1, %c0_2] : memref<1x34x34x128xbf16, #tpu.memory_space<vmem>>, vector<1x32x32x128xbf16>
    %1 = vector.shape_cast %0 : vector<1x32x32x128xbf16> to vector<32x32x128xbf16>
    %c0_3 = arith.constant 0 : index
    %c0_4 = arith.constant 0 : index
    %c1 = arith.constant 1 : index
    %c0_5 = arith.constant 0 : index
    %2 = vector.load %arg1[%c0_3, %c0_4, %c1, %c0_5] : memref<1x34x34x128xbf16, #tpu.memory_space<vmem>>, vector<1x32x32x128xbf16>
    %3 = vector.shape_cast %2 : vector<1x32x32x128xbf16> to vector<32x32x128xbf16>
    %4 = arith.maximumf %1, %3 : vector<32x32x128xbf16>
    %c0_6 = arith.constant 0 : index
    %c0_7 = arith.constant 0 : index
    %c2 = arith.constant 2 : index
    %c0_8 = arith.constant 0 : index
    %5 = vector.load %arg1[%c0_6, %c0_7, %c2, %c0_8] : memref<1x34x34x128xbf16, #tpu.memory_space<vmem>>, vector<1x32x32x128xbf16>
    %6 = vector.shape_cast %5 : vector<1x32x32x128xbf16> to vector<32x32x128xbf16>
    %7 = arith.maximumf %4, %6 : vector<32x32x128xbf16>
    %c0_9 = arith.constant 0 : index
    %c1_10 = arith.constant 1 : index
    %c0_11 = arith.constant 0 : index
    %c0_12 = arith.constant 0 : index
    %8 = vector.load %arg1[%c0_9, %c1_10, %c0_11, %c0_12] : memref<1x34x34x128xbf16, #tpu.memory_space<vmem>>, vector<1x32x32x128xbf16>
    %9 = vector.shape_cast %8 : vector<1x32x32x128xbf16> to vector<32x32x128xbf16>
    %10 = arith.maximumf %7, %9 : vector<32x32x128xbf16>
    %c0_13 = arith.constant 0 : index
    %c1_14 = arith.constant 1 : index
    %c1_15 = arith.constant 1 : index
    %c0_16 = arith.constant 0 : index
    %11 = vector.load %arg1[%c0_13, %c1_14, %c1_15, %c0_16] : memref<1x34x34x128xbf16, #tpu.memory_space<vmem>>, vector<1x32x32x128xbf16>
    %12 = vector.shape_cast %11 : vector<1x32x32x128xbf16> to vector<32x32x128xbf16>
    %13 = arith.maximumf %10, %12 : vector<32x32x128xbf16>
    %c0_17 = arith.constant 0 : index
    %c1_18 = arith.constant 1 : index
    %c2_19 = arith.constant 2 : index
    %c0_20 = arith.constant 0 : index
    %14 = vector.load %arg1[%c0_17, %c1_18, %c2_19, %c0_20] : memref<1x34x34x128xbf16, #tpu.memory_space<vmem>>, vector<1x32x32x128xbf16>
    %15 = vector.shape_cast %14 : vector<1x32x32x128xbf16> to vector<32x32x128xbf16>
    %16 = arith.maximumf %13, %15 : vector<32x32x128xbf16>
    %c0_21 = arith.constant 0 : index
    %c2_22 = arith.constant 2 : index
    %c0_23 = arith.constant 0 : index
    %c0_24 = arith.constant 0 : index
    %17 = vector.load %arg1[%c0_21, %c2_22, %c0_23, %c0_24] : memref<1x34x34x128xbf16, #tpu.memory_space<vmem>>, vector<1x32x32x128xbf16>
    %18 = vector.shape_cast %17 : vector<1x32x32x128xbf16> to vector<32x32x128xbf16>
    %19 = arith.maximumf %16, %18 : vector<32x32x128xbf16>
    %c0_25 = arith.constant 0 : index
    %c2_26 = arith.constant 2 : index
    %c1_27 = arith.constant 1 : index
    %c0_28 = arith.constant 0 : index
    %20 = vector.load %arg1[%c0_25, %c2_26, %c1_27, %c0_28] : memref<1x34x34x128xbf16, #tpu.memory_space<vmem>>, vector<1x32x32x128xbf16>
    %21 = vector.shape_cast %20 : vector<1x32x32x128xbf16> to vector<32x32x128xbf16>
    %22 = arith.maximumf %19, %21 : vector<32x32x128xbf16>
    %c0_29 = arith.constant 0 : index
    %c2_30 = arith.constant 2 : index
    %c2_31 = arith.constant 2 : index
    %c0_32 = arith.constant 0 : index
    %23 = vector.load %arg1[%c0_29, %c2_30, %c2_31, %c0_32] : memref<1x34x34x128xbf16, #tpu.memory_space<vmem>>, vector<1x32x32x128xbf16>
    %24 = vector.shape_cast %23 : vector<1x32x32x128xbf16> to vector<32x32x128xbf16>
    %25 = arith.maximumf %22, %24 : vector<32x32x128xbf16>
    %c0_33 = arith.constant 0 : index
    %c0_34 = arith.constant 0 : index
    %c0_35 = arith.constant 0 : index
    %c0_36 = arith.constant 0 : index
    %26 = vector.load %arg2[%c0_33, %c0_34, %c0_35, %c0_36] : memref<1x32x32x128xbf16, #tpu.memory_space<vmem>>, vector<1x32x32x128xbf16>
    %27 = vector.shape_cast %26 : vector<1x32x32x128xbf16> to vector<32x32x128xbf16>
    %28 = vector.shape_cast %25 : vector<32x32x128xbf16> to vector<1x32x32x128xbf16>
    tpu.vector_store %arg2[%c0_33, %c0_34, %c0_35, %c0_36], %28 {strides = array<i32>} : memref<1x32x32x128xbf16, #tpu.memory_space<vmem>>, vector<1x32x32x128xbf16>,
    return
  }
  func.func @transform_0(%arg0: i32) -> (i32, i32, i32, i32) {
    %c0_i32 = arith.constant 0 : i32
    %c0_i32_0 = arith.constant 0 : i32
    %c0_i32_1 = arith.constant 0 : i32
    %c0_i32_2 = arith.constant 0 : i32
    return %arg0, %c0_i32, %c0_i32_0, %c0_i32_1 : i32, i32, i32, i32
  }
  func.func @transform_1(%arg0: i32) -> (i32, i32, i32, i32) {
    %c0_i32 = arith.constant 0 : i32
    %c0_i32_0 = arith.constant 0 : i32
    %c0_i32_1 = arith.constant 0 : i32
    %c0_i32_2 = arith.constant 0 : i32
    return %arg0, %c0_i32, %c0_i32_0, %c0_i32_1 : i32, i32, i32, i32
  }
}

module attributes {stable_mosaic.version = 11 : i64} {
  func.func @_mm_kernel(%arg0: i32, %arg1: i32, %arg2: memref<512x147xbf16, #tpu.memory_space<vmem>>, %arg3: memref<147x128xbf16, #tpu.memory_space<vmem>>, %arg4: memref<1x128xf32, #tpu.memory_space<vmem>>, %arg5: memref<1x128xf32, #tpu.memory_space<vmem>>, %arg6: memref<512x128xbf16, #tpu.memory_space<vmem>>) attributes {dimension_semantics = [#tpu.dimension_semantics<parallel>, #tpu.dimension_semantics<parallel>], iteration_bounds = array<i64: 1, 4>, scalar_prefetch = 0 : i64, scratch_operands = 0 : i64, tpu.core_type = #tpu.core_type<tc>, window_params = [{transform_indices = @transform_0, window_bounds = array<i64: 512, 147>}, {transform_indices = @transform_1, window_bounds = array<i64: 147, 128>}, {transform_indices = @transform_2, window_bounds = array<i64: 1, 128>}, {transform_indices = @transform_3, window_bounds = array<i64: 1, 128>}, {transform_indices = @transform_4, window_bounds = array<i64: 512, 128>}]} {
    %c0 = arith.constant 0 : index
    %c0_0 = arith.constant 0 : index
    %0 = vector.load %arg2[%c0, %c0_0] : memref<512x147xbf16, #tpu.memory_space<vmem>>, vector<512x147xbf16>
    %c0_1 = arith.constant 0 : index
    %c0_2 = arith.constant 0 : index
    %1 = vector.load %arg3[%c0_1, %c0_2] : memref<147x128xbf16, #tpu.memory_space<vmem>>, vector<147x128xbf16>
    %cst = arith.constant dense<0.000000e+00> : vector<512x128xf32>
    %2 = tpu.matmul %0, %1, %cst {dimension_numbers = #tpu.dot_dimension_numbers<[1], [0], [0], [1], [0, 0, 1, 1], [], []>} : vector<512x147xbf16>, vector<147x128xbf16>, vector<512x128xf32> -> vector<512x128xf32>
    %c0_3 = arith.constant 0 : index
    %c0_4 = arith.constant 0 : index
    %3 = vector.load %arg4[%c0_3, %c0_4] : memref<1x128xf32, #tpu.memory_space<vmem>>, vector<1x128xf32>
    %4 = vector.broadcast %3 : vector<1x128xf32> to vector<512x128xf32>
    %5 = arith.mulf %2, %4 : vector<512x128xf32>
    %c0_5 = arith.constant 0 : index
    %c0_6 = arith.constant 0 : index
    %6 = vector.load %arg5[%c0_5, %c0_6] : memref<1x128xf32, #tpu.memory_space<vmem>>, vector<1x128xf32>
    %7 = vector.broadcast %6 : vector<1x128xf32> to vector<512x128xf32>
    %8 = arith.addf %5, %7 : vector<512x128xf32>
    %cst_7 = arith.constant 0.000000e+00 : f32
    %9 = vector.broadcast %cst_7 : f32 to vector<512x128xf32>
    %10 = arith.maximumf %8, %9 : vector<512x128xf32>
    %11 = arith.truncf %10 : vector<512x128xf32> to vector<512x128xbf16>
    %c0_8 = arith.constant 0 : index
    %c0_9 = arith.constant 0 : index
    %12 = vector.load %arg6[%c0_8, %c0_9] : memref<512x128xbf16, #tpu.memory_space<vmem>>, vector<512x128xbf16>
    tpu.vector_store %arg6[%c0_8, %c0_9], %11 {strides = array<i32>} : memref<512x128xbf16, #tpu.memory_space<vmem>>, vector<512x128xbf16>,
    return
  }
  func.func @transform_0(%arg0: i32, %arg1: i32) -> (i32, i32) {
    %c0_i32 = arith.constant 0 : i32
    %c0_i32_0 = arith.constant 0 : i32
    return %arg1, %c0_i32 : i32, i32
  }
  func.func @transform_1(%arg0: i32, %arg1: i32) -> (i32, i32) {
    %c0_i32 = arith.constant 0 : i32
    %c0_i32_0 = arith.constant 0 : i32
    return %c0_i32, %arg0 : i32, i32
  }
  func.func @transform_2(%arg0: i32, %arg1: i32) -> (i32, i32) {
    %c0_i32 = arith.constant 0 : i32
    %c0_i32_0 = arith.constant 0 : i32
    return %c0_i32, %arg0 : i32, i32
  }
  func.func @transform_3(%arg0: i32, %arg1: i32) -> (i32, i32) {
    %c0_i32 = arith.constant 0 : i32
    %c0_i32_0 = arith.constant 0 : i32
    return %c0_i32, %arg0 : i32, i32
  }
  func.func @transform_4(%arg0: i32, %arg1: i32) -> (i32, i32) {
    %c0_i32 = arith.constant 0 : i32
    return %arg1, %arg0 : i32, i32
  }
}

module attributes {stable_mosaic.version = 11 : i64} {
  func.func @_max9_kernel(%arg0: i32, %arg1: memref<9x512x128xbf16, #tpu.memory_space<vmem>>, %arg2: memref<512x128xbf16, #tpu.memory_space<vmem>>) attributes {dimension_semantics = [#tpu.dimension_semantics<parallel>], iteration_bounds = array<i64: 1>, scalar_prefetch = 0 : i64, scratch_operands = 0 : i64, tpu.core_type = #tpu.core_type<tc>, window_params = [{transform_indices = @transform_0, window_bounds = array<i64: 9, 512, 128>}, {transform_indices = @transform_1, window_bounds = array<i64: 512, 128>}]} {
    %c0 = arith.constant 0 : index
    %c0_0 = arith.constant 0 : index
    %c0_1 = arith.constant 0 : index
    %0 = vector.load %arg1[%c0, %c0_0, %c0_1] : memref<9x512x128xbf16, #tpu.memory_space<vmem>>, vector<9x512x128xbf16>
    %cst = arith.constant dense<0xFF80> : vector<512x128xbf16>
    %1 = vector.multi_reduction <maximumf>, %0, %cst [0] : vector<9x512x128xbf16> to vector<512x128xbf16>
    %c0_2 = arith.constant 0 : index
    %c0_3 = arith.constant 0 : index
    %2 = vector.load %arg2[%c0_2, %c0_3] : memref<512x128xbf16, #tpu.memory_space<vmem>>, vector<512x128xbf16>
    tpu.vector_store %arg2[%c0_2, %c0_3], %1 {strides = array<i32>} : memref<512x128xbf16, #tpu.memory_space<vmem>>, vector<512x128xbf16>,
    return
  }
  func.func @transform_0(%arg0: i32) -> (i32, i32, i32) {
    %c0_i32 = arith.constant 0 : i32
    %c0_i32_0 = arith.constant 0 : i32
    %c0_i32_1 = arith.constant 0 : i32
    return %c0_i32, %arg0, %c0_i32_0 : i32, i32, i32
  }
  func.func @transform_1(%arg0: i32) -> (i32, i32) {
    %c0_i32 = arith.constant 0 : i32
    %c0_i32_0 = arith.constant 0 : i32
    return %arg0, %c0_i32 : i32, i32
  }
}

</mosaic_0001>

<llo_original>
// kernel: stem_forward.2
$region0: #{stem_forward.2}
  #allocation0 [shape = 'u32[]', space=smem, size = 0x4, offset = 0x4, fixed_abs, tag = 'smem constant byte address 0x4 - core index']
  #allocation1 [shape = 'u32[144,128]{1,0:T(1,128)}', space=vmem, size = 0x12000, scoped, tag = 'internal scratch']
  %s0 = inlined_call_operand.vmem [shape: bf16[2048,147], index: 0, kind: input, shape index: {}]
  %s1 = inlined_call_operand.vmem [shape: bf16[147,128], index: 1, kind: input, shape index: {}]
  %s2 = inlined_call_operand.vmem [shape: f32[1,128], index: 2, kind: input, shape index: {}]
  %s3 = inlined_call_operand.vmem [shape: f32[1,128], index: 3, kind: input, shape index: {}]
  %s4 = inlined_call_operand.vmem [shape: bf16[2048,128], index: 4, kind: output, shape index: {}]
  %s5 = sld [smem:[#allocation0]]
  $region49: #{stem_forward.2} parent=0
    _
  %s7 = ssub.s32 1, %s5
  %s8 = scalar_select 0, %s7, %s5
  loop: start=0, step=1, limit=6
  $region2: #{stem_forward.2} parent=0 // loop_pre_header
    _
  $region3: #{stem_forward.2} parent=0 // loop_header
    %s10 = sphi 0, %s14
    %p11 = scmp.ge.s32.totalorder %s10, 6
    %s17 = sphi 0, %s29
    %s18 = sphi 0, %s25
    %s19 = sphi 0, %s17
    %s20 = sphi 0, %s18
    %s21 = sphi 0, %s19
    %s22 = sphi 0, %s20
    %s32 = sphi 0, %s34
    %s35 = sphi 0, %s32
    %s36 = sphi 0, %s35
    %s52 = sphi 0, %s36
    %s58 = sphi 0, %s60
    %s61 = sphi 0, %s58
    %s62 = sphi 0, %s61
    %s78 = sphi 0, %s62
    %s84 = sphi 0, %s86
    %s87 = sphi 0, %s84
    %s88 = sphi 0, %s87
    %s104 = sphi 0, %s88
    %s110 = sphi 0, %s112
    %s113 = sphi 0, %s110
    %s114 = sphi 0, %s113
    %s130 = sphi 0, %s114
    %s138 = sphi 0, %s140
    %s141 = sphi 0, %s138
    %s142 = sphi 0, %s141
    %s158 = sphi 0, %s142
  $region4: #{stem_forward.2} parent=0 // loop_header_branch
    %13 = sbr.rel (%p11) target = $region8
  $region5: #{stem_forward.2} parent=0 // loop_body
    %s15 = ssub.s32 %s10, 1
    %s16 = ssub.s32 %s10, 2
    %s23 = sadd.s32 1, %s18
    %p24 = scmp.ge.s32.totalorder %s23, 4
    %s25 = scalar_select %p24, 0, %s23
    %s26 = sadd.s32 1, %s17
    %s27 = scalar_select %p24, %s26, %s17
    %p28 = scmp.ge.s32.totalorder %s27, 1
    %s29 = scalar_select %p28, 0, %s27
    %s30 = ssub.s32 %s18, %s25
    %p31 = scmp.eq.s32.totalorder %s30, 0
    %s33 = sadd.s32 %s32, 1
    %s34 = scalar_select %p31, %s32, %s33
    %p37 = pneg %p31
    %p38 = scmp.eq.s32.totalorder %s10, 3
    %p39 = por %p37, %p38
    %p40 = scmp.ne.s32.totalorder %s32, %s35
    %p41 = scmp.eq.s32.totalorder %s10, 0
    %p42 = por %p40, %p41
    %p43 = scmp.ne.s32.totalorder %s32, %s35
    %p44 = scmp.eq.s32.totalorder %s15, 3
    %p45 = por %p43, %p44
    %p46 = scmp.ne.s32.totalorder %s35, %s36
    %p47 = scmp.eq.s32.totalorder %s15, 0
    %p48 = por %p46, %p47
    %p49 = scmp.ne.s32.totalorder %s35, %s36
    %p50 = scmp.eq.s32.totalorder %s16, 3
    %p51 = por %p49, %p50
    %p53 = scmp.ne.s32.totalorder %s36, %s52
    %p54 = scmp.eq.s32.totalorder %s16, 0
    %p55 = por %p53, %p54
    %s56 = ssub.s32 %s17, %s29
    %p57 = scmp.eq.s32.totalorder %s56, 0
    %s59 = sadd.s32 %s58, 1
    %s60 = scalar_select %p57, %s58, %s59
    %p63 = pneg %p57
    %p64 = scmp.eq.s32.totalorder %s10, 3
    %p65 = por %p63, %p64
    %p66 = scmp.ne.s32.totalorder %s58, %s61
    %p67 = scmp.eq.s32.totalorder %s10, 0
    %p68 = por %p66, %p67
    %p69 = scmp.ne.s32.totalorder %s58, %s61
    %p70 = scmp.eq.s32.totalorder %s15, 3
    %p71 = por %p69, %p70
    %p72 = scmp.ne.s32.totalorder %s61, %s62
    %p73 = scmp.eq.s32.totalorder %s15, 0
    %p74 = por %p72, %p73
    %p75 = scmp.ne.s32.totalorder %s61, %s62
    %p76 = scmp.eq.s32.totalorder %s16, 3
    %p77 = por %p75, %p76
    %p79 = scmp.ne.s32.totalorder %s62, %s78
    %p80 = scmp.eq.s32.totalorder %s16, 0
    %p81 = por %p79, %p80
    %s82 = ssub.s32 %s17, %s29
    %p83 = scmp.eq.s32.totalorder %s82, 0
    %s85 = sadd.s32 %s84, 1
    %s86 = scalar_select %p83, %s84, %s85
    %p89 = pneg %p83
    %p90 = scmp.eq.s32.totalorder %s10, 3
    %p91 = por %p89, %p90
    %p92 = scmp.ne.s32.totalorder %s84, %s87
    %p93 = scmp.eq.s32.totalorder %s10, 0
    %p94 = por %p92, %p93
    %p95 = scmp.ne.s32.totalorder %s84, %s87
    %p96 = scmp.eq.s32.totalorder %s15, 3
    %p97 = por %p95, %p96
    %p98 = scmp.ne.s32.totalorder %s87, %s88
    %p99 = scmp.eq.s32.totalorder %s15, 0
    %p100 = por %p98, %p99
    %p101 = scmp.ne.s32.totalorder %s87, %s88
    %p102 = scmp.eq.s32.totalorder %s16, 3
    %p103 = por %p101, %p102
    %p105 = scmp.ne.s32.totalorder %s88, %s104
    %p106 = scmp.eq.s32.totalorder %s16, 0
    %p107 = por %p105, %p106
    %s108 = ssub.s32 %s17, %s29
    %p109 = scmp.eq.s32.totalorder %s108, 0
    %s111 = sadd.s32 %s110, 1
    %s112 = scalar_select %p109, %s110, %s111
    %p115 = pneg %p109
    %p116 = scmp.eq.s32.totalorder %s10, 3
    %p117 = por %p115, %p116
    %p118 = scmp.ne.s32.totalorder %s110, %s113
    %p119 = scmp.eq.s32.totalorder %s10, 0
    %p120 = por %p118, %p119
    %p121 = scmp.ne.s32.totalorder %s110, %s113
    %p122 = scmp.eq.s32.totalorder %s15, 3
    %p123 = por %p121, %p122
    %p124 = scmp.ne.s32.totalorder %s113, %s114
    %p125 = scmp.eq.s32.totalorder %s15, 0
    %p126 = por %p124, %p125
    %p127 = scmp.ne.s32.totalorder %s113, %s114
    %p128 = scmp.eq.s32.totalorder %s16, 3
    %p129 = por %p127, %p128
    %p131 = scmp.ne.s32.totalorder %s114, %s130
    %p132 = scmp.eq.s32.totalorder %s16, 0
    %p133 = por %p131, %p132
    %s134 = ssub.s32 %s18, %s25
    %s135 = ssub.s32 %s17, %s29
    %s136 = sor.u32 %s134, %s135
    %p137 = scmp.eq.s32.totalorder %s136, 0
    %s139 = sadd.s32 %s138, 1
    %s140 = scalar_select %p137, %s138, %s139
    %p143 = pneg %p137
    %p144 = scmp.eq.s32.totalorder %s10, 3
    %p145 = por %p143, %p144
    %p146 = scmp.ne.s32.totalorder %s138, %s141
    %p147 = scmp.eq.s32.totalorder %s10, 0
    %p148 = por %p146, %p147
    %p149 = scmp.ne.s32.totalorder %s138, %s141
    %p150 = scmp.eq.s32.totalorder %s15, 3
    %p151 = por %p149, %p150
    %p152 = scmp.ne.s32.totalorder %s141, %s142
    %p153 = scmp.eq.s32.totalorder %s15, 0
    %p154 = por %p152, %p153
    %p155 = scmp.ne.s32.totalorder %s141, %s142
    %p156 = scmp.eq.s32.totalorder %s16, 3
    %p157 = por %p155, %p156
    %p159 = scmp.ne.s32.totalorder %s142, %s158
    %p160 = scmp.eq.s32.totalorder %s16, 0
    %p161 = por %p159, %p160
    %p162 = scmp.le.s32.totalorder 1, %s10
    %p163 = scmp.lt.s32.totalorder %s10, 5
    %p164 = pnand %p162, %p163
    %p165 = pneg %p164
    // Predicated region
    $region9: #{stem_forward.2} parent=5 // pred_check
      _
    $region10: #{stem_forward.2} parent=5 // pred_check_branch
      %167 = sbr.rel (%p164) target = $region12
    $region11: #{stem_forward.2} parent=5 // pred_region
      %s168 = ssub.s32 %s10, 1
      // Predicated region
      $region13: #{stem_forward.2} parent=11 // pred_check
        %p169 = pneg %p74
      $region14: #{stem_forward.2} parent=11 // pred_check_branch
        %171 = sbr.rel (%p169) target = $region16
      $region15: #{stem_forward.2} parent=11 // pred_region
        %p172 = scmp.lt.s32.totalorder %s19, 0
        %s173 = scalar_select %p172, %s19, 0
        %s174 = smul.addr %s173, 4
        %s175 = scalar_lea.vmem %s1, %s174
      $region16: #{stem_forward.2} parent=11 // pred_fallthru
        _
      // Predicated region
      $region17: #{stem_forward.2} parent=11 // pred_check
        %p176 = pneg %p100
      $region18: #{stem_forward.2} parent=11 // pred_check_branch
        %178 = sbr.rel (%p176) target = $region20
      $region19: #{stem_forward.2} parent=11 // pred_region
        %p179 = scmp.lt.s32.totalorder %s19, 0
        %s180 = scalar_select %p179, %s19, 0
        %s181 = scalar_lea.vmem %s2, %s180
      $region20: #{stem_forward.2} parent=11 // pred_fallthru
        _
      // Predicated region
      $region21: #{stem_forward.2} parent=11 // pred_check
        %p182 = pneg %p126
      $region22: #{stem_forward.2} parent=11 // pred_check_branch
        %184 = sbr.rel (%p182) target = $region24
      $region23: #{stem_forward.2} parent=11 // pred_region
        %p185 = scmp.lt.s32.totalorder %s19, 0
        %s186 = scalar_select %p185, %s19, 0
        %s187 = scalar_lea.vmem %s3, %s186
      $region24: #{stem_forward.2} parent=11 // pred_fallthru
        _
    $region12: #{stem_forward.2} parent=5 // pred_fallthru
      _
    %p188 = scmp.lt.s32.totalorder %s10, 4
    // Predicated region
    $region25: #{stem_forward.2} parent=5 // pred_check
      %p189 = pneg %p188
    $region26: #{stem_forward.2} parent=5 // pred_check_branch
      %191 = sbr.rel (%p189) target = $region28
    $region27: #{stem_forward.2} parent=5 // pred_region
      // Predicated region
      $region29: #{stem_forward.2} parent=27 // pred_check
        %p192 = pneg %p42
      $region30: #{stem_forward.2} parent=27 // pred_check_branch
        %194 = sbr.rel (%p192) target = $region32
      $region31: #{stem_forward.2} parent=27 // pred_region
        %s195 = smul.u32 64, %s18
        %p196 = scmp.lt.s32.totalorder %s195, 255
        %s197 = scalar_select %p196, %s195, 255
        %s198 = smul.addr %s197, 2
        %s199 = smul.addr %s198, 4
        %s200 = scalar_lea.vmem %s0, %s199
        %s201 = smul.u32 64, %s18
      $region32: #{stem_forward.2} parent=27 // pred_fallthru
        _
    $region28: #{stem_forward.2} parent=5 // pred_fallthru
      _
    %p202 = scmp.le.s32.totalorder 1, %s10
    %p203 = scmp.lt.s32.totalorder %s10, 5
    %p204 = pnand %p202, %p203
    %p205 = pneg %p204
    // Predicated region
    $region33: #{stem_forward.2} parent=5 // pred_check
      _
    $region34: #{stem_forward.2} parent=5 // pred_check_branch
      %207 = sbr.rel (%p204) target = $region36
    $region35: #{stem_forward.2} parent=5 // pred_region
      %s208 = ssub.s32 %s10, 1
      %s209 = smul.u32 64, %s20
      %p210 = scmp.lt.s32.totalorder %s209, 255
      %s211 = scalar_select %p210, %s209, 255
      %s212 = smul.addr %s211, 2
      %s213 = smul.addr %s212, 4
      %s214 = scalar_lea.vmem %s0, %s213
      %p215 = pneg %p48
      %p216 = pneg %p45
      %p217 = scmp.lt.s32.totalorder %s19, 0
      %s218 = scalar_select %p217, %s19, 0
      %s219 = smul.addr %s218, 4
      %s220 = scalar_lea.vmem %s1, %s219
      %p221 = pneg %p74
      %p222 = pneg %p71
      %p223 = scmp.lt.s32.totalorder %s19, 0
      %s224 = scalar_select %p223, %s19, 0
      %s225 = scalar_lea.vmem %s2, %s224
      %p226 = pneg %p100
      %p227 = pneg %p97
      %p228 = scmp.lt.s32.totalorder %s19, 0
      %s229 = scalar_select %p228, %s19, 0
      %s230 = scalar_lea.vmem %s3, %s229
      %p231 = pneg %p126
      %p232 = pneg %p123
      %p233 = pneg %p154
      %p234 = pneg %p151
      %s235 = smul.u32 64, %s20
      %p236 = scmp.lt.s32.totalorder %s235, 255
      %s237 = scalar_select %p236, %s235, 255
      %p238 = scmp.lt.s32.totalorder %s19, 0
      %s239 = scalar_select %p238, %s19, 0
      %s240 = sadd.s32 %s239, %s237
      %s241 = smul.addr %s240, 4
      %s242 = scalar_lea.vmem %s4, %s241
      %s243 = smul.u32 64, %s20
      %p244 = scmp.lt.s32.totalorder %s243, 255
      %s245 = scalar_select %p244, %s243, 255
      %s246 = smul.addr %s245, 2
      %s247 = smul.addr %s246, 4
      %s248 = scalar_lea.vmem %s0, %s247
      %s249 = smul.u32 64, %s20
      %p250 = scmp.lt.s32.totalorder %s19, 0
      %s251 = scalar_select %p250, %s19, 0
      %s252 = smul.addr %s251, 4
      %s253 = scalar_lea.vmem %s1, %s252
      %p254 = scmp.lt.s32.totalorder %s19, 0
      %s255 = scalar_select %p254, %s19, 0
      %s256 = scalar_lea.vmem %s2, %s255
      %p257 = scmp.lt.s32.totalorder %s19, 0
      %s258 = scalar_select %p257, %s19, 0
      %s259 = scalar_lea.vmem %s3, %s258
      %s260 = smul.u32 64, %s20
      %p261 = scmp.lt.s32.totalorder %s260, 255
      %s262 = scalar_select %p261, %s260, 255
      %p263 = scmp.lt.s32.totalorder %s19, 0
      %s264 = scalar_select %p263, %s19, 0
      %s265 = sadd.s32 %s264, %s262
      %s266 = smul.addr %s265, 4
      %s267 = scalar_lea.vmem %s4, %s266
      %s268 = smul.u32 64, %s20
      %v270 = vld [vmem:[%s248] sm:$0xff]
      %v271 = vld [vmem:[%s248 + $0x8] sm:$0xff]
      %v272 = vld [vmem:[%s248 + $0x10] sm:$0xff]
      %v273 = vld [vmem:[%s248 + $0x18] sm:$0xff]
      %v274 = vld [vmem:[%s248 + $0x20] sm:$0xff]
      %v275 = vld [vmem:[%s248 + $0x28] sm:$0xff]
      %v276 = vld [vmem:[%s248 + $0x30] sm:$0xff]
      %v277 = vld [vmem:[%s248 + $0x38] sm:$0xff]
      %v278 = vld [vmem:[%s248 + $0x40] sm:$0xff]
      %v279 = vld [vmem:[%s248 + $0x48] sm:$0xff]
      %v280 = vld [vmem:[%s248 + $0x50] sm:$0xff]
      %v281 = vld [vmem:[%s248 + $0x58] sm:$0xff]
      %v282 = vld [vmem:[%s248 + $0x60] sm:$0xff]
      %v283 = vld [vmem:[%s248 + $0x68] sm:$0xff]
      %v284 = vld [vmem:[%s248 + $0x70] sm:$0xff]
      %v285 = vld [vmem:[%s248 + $0x78] sm:$0xff]
      %v286 = vld [vmem:[%s248 + $0x80] sm:$0xff]
      %v287 = vld [vmem:[%s248 + $0x88] sm:$0xff]
      %v288 = vld [vmem:[%s248 + $0x90] sm:$0xff]
      %v289 = vld [vmem:[%s248 + $0x98] sm:$0xff]
      %v290 = vld [vmem:[%s248 + $0xa0] sm:$0xff]
      %v291 = vld [vmem:[%s248 + $0xa8] sm:$0xff]
      %v292 = vld [vmem:[%s248 + $0xb0] sm:$0xff]
      %v293 = vld [vmem:[%s248 + $0xb8] sm:$0xff]
      %v294 = vld [vmem:[%s248 + $0xc0] sm:$0xff]
      %v295 = vld [vmem:[%s248 + $0xc8] sm:$0xff]
      %v296 = vld [vmem:[%s248 + $0xd0] sm:$0xff]
      %v297 = vld [vmem:[%s248 + $0xd8] sm:$0xff]
      %v298 = vld [vmem:[%s248 + $0xe0] sm:$0xff]
      %v299 = vld [vmem:[%s248 + $0xe8] sm:$0xff]
      %v300 = vld [vmem:[%s248 + $0xf0] sm:$0xff]
      %v301 = vld [vmem:[%s248 + $0xf8] sm:$0xff]
      %v302 = vld [vmem:[%s248 + $0x100] sm:$0xff]
      %v303 = vld [vmem:[%s248 + $0x108] sm:$0xff]
      %v304 = vld [vmem:[%s248 + $0x110] sm:$0xff]
      %v305 = vld [vmem:[%s248 + $0x118] sm:$0xff]
      %v306 = vld [vmem:[%s248 + $0x120] sm:$0xff]
      %v307 = vld [vmem:[%s248 + $0x128] sm:$0xff]
      %v308 = vld [vmem:[%s248 + $0x130] sm:$0xff]
      %v309 = vld [vmem:[%s248 + $0x138] sm:$0xff]
      %v310 = vld [vmem:[%s248 + $0x140] sm:$0xff]
      %v311 = vld [vmem:[%s248 + $0x148] sm:$0xff]
      %v312 = vld [vmem:[%s248 + $0x150] sm:$0xff]
      %v313 = vld [vmem:[%s248 + $0x158] sm:$0xff]
      %v314 = vld [vmem:[%s248 + $0x160] sm:$0xff]
      %v315 = vld [vmem:[%s248 + $0x168] sm:$0xff]
      %v316 = vld [vmem:[%s248 + $0x170] sm:$0xff]
      %v317 = vld [vmem:[%s248 + $0x178] sm:$0xff]
      %v318 = vld [vmem:[%s248 + $0x180] sm:$0xff]
      %v319 = vld [vmem:[%s248 + $0x188] sm:$0xff]
      %v320 = vld [vmem:[%s248 + $0x190] sm:$0xff]
      %v321 = vld [vmem:[%s248 + $0x198] sm:$0xff]
      %v322 = vld [vmem:[%s248 + $0x1a0] sm:$0xff]
      %v323 = vld [vmem:[%s248 + $0x1a8] sm:$0xff]
      %v324 = vld [vmem:[%s248 + $0x1b0] sm:$0xff]
      %v325 = vld [vmem:[%s248 + $0x1b8] sm:$0xff]
      %v326 = vld [vmem:[%s248 + $0x1c0] sm:$0xff]
      %v327 = vld [vmem:[%s248 + $0x1c8] sm:$0xff]
      %v328 = vld [vmem:[%s248 + $0x1d0] sm:$0xff]
      %v329 = vld [vmem:[%s248 + $0x1d8] sm:$0xff]
      %v330 = vld [vmem:[%s248 + $0x1e0] sm:$0xff]
      %v331 = vld [vmem:[%s248 + $0x1e8] sm:$0xff]
      %v332 = vld [vmem:[%s248 + $0x1f0] sm:$0xff]
      %v333 = vld [vmem:[%s248 + $0x1f8] sm:$0xff]
      %v334 = vld [vmem:[%s253] sm:$0xf]
      %v335 = vld [vmem:[%s253 + $0x4] sm:$0xf]
      %v336 = vld [vmem:[%s253 + $0x8] sm:$0xf]
      %v337 = vld [vmem:[%s253 + $0xc] sm:$0xf]
      %v338 = vld [vmem:[%s253 + $0x10] sm:$0xf]
      %v339 = vld [vmem:[%s253 + $0x14] sm:$0xf]
      %v340 = vld [vmem:[%s253 + $0x18] sm:$0xf]
      %v341 = vld [vmem:[%s253 + $0x1c] sm:$0xf]
      %v342 = vld [vmem:[%s253 + $0x20] sm:$0xf]
      %v343 = vld [vmem:[%s253 + $0x24] sm:$0xf]
      %v344 = vld [vmem:[%s253 + $0x28] sm:$0xf]
      %v345 = vld [vmem:[%s253 + $0x2c] sm:$0xf]
      %v346 = vld [vmem:[%s253 + $0x30] sm:$0xf]
      %v347 = vld [vmem:[%s253 + $0x34] sm:$0xf]
      %v348 = vld [vmem:[%s253 + $0x38] sm:$0xf]
      %v349 = vld [vmem:[%s253 + $0x3c] sm:$0xf]
      %v350 = vld [vmem:[%s253 + $0x40] sm:$0xf]
      %v351 = vld [vmem:[%s253 + $0x44] sm:$0xf]
      %v352 = vld [vmem:[%s253 + $0x48] sm:$0x3]
      %v417 = vunpack.c.l.b16 %v270
      %v418 = vunpack.c.h.b16 %v270
      %v419 = vunpack.c.l.b16 %v271
      %v420 = vunpack.c.h.b16 %v271
      %v421 = vunpack.c.l.b16 %v272
      %v422 = vunpack.c.h.b16 %v272
      %v423 = vunpack.c.l.b16 %v273
      %v424 = vunpack.c.h.b16 %v273
      %v425 = vunpack.c.l.b16 %v274
      %v426 = vunpack.c.h.b16 %v274
      %v427 = vunpack.c.l.b16 %v275
      %v428 = vunpack.c.h.b16 %v275
      %v429 = vunpack.c.l.b16 %v276
      %v430 = vunpack.c.h.b16 %v276
      %v431 = vunpack.c.l.b16 %v277
      %v432 = vunpack.c.h.b16 %v277
      %v433 = vunpack.c.l.b16 %v278
      %v434 = vunpack.c.h.b16 %v278
      %v435 = vunpack.c.l.b16 %v279
      %v436 = vunpack.c.h.b16 %v279
      %v437 = vunpack.c.l.b16 %v280
      %v438 = vunpack.c.h.b16 %v280
      %v439 = vunpack.c.l.b16 %v281
      %v440 = vunpack.c.h.b16 %v281
      %v441 = vunpack.c.l.b16 %v282
      %v442 = vunpack.c.h.b16 %v282
      %v443 = vunpack.c.l.b16 %v283
      %v444 = vunpack.c.h.b16 %v283
      %v445 = vunpack.c.l.b16 %v284
      %v446 = vunpack.c.h.b16 %v284
      %v447 = vunpack.c.l.b16 %v285
      %v448 = vunpack.c.h.b16 %v285
      %v449 = vunpack.c.l.b16 %v286
      %v450 = vunpack.c.h.b16 %v286
      %v451 = vunpack.c.l.b16 %v287
      %v452 = vunpack.c.h.b16 %v287
      %v453 = vunpack.c.l.b16 %v288
      %v454 = vunpack.c.h.b16 %v288
      %v455 = vunpack.c.l.b16 %v289
      %v456 = vunpack.c.h.b16 %v289
      %v457 = vunpack.c.l.b16 %v290
      %v458 = vunpack.c.h.b16 %v290
      %v459 = vunpack.c.l.b16 %v291
      %v460 = vunpack.c.h.b16 %v291
      %v461 = vunpack.c.l.b16 %v292
      %v462 = vunpack.c.h.b16 %v292
      %v463 = vunpack.c.l.b16 %v293
      %v464 = vunpack.c.h.b16 %v293
      %v465 = vunpack.c.l.b16 %v294
      %v466 = vunpack.c.h.b16 %v294
      %v467 = vunpack.c.l.b16 %v295
      %v468 = vunpack.c.h.b16 %v295
      %v469 = vunpack.c.l.b16 %v296
      %v470 = vunpack.c.h.b16 %v296
      %v471 = vunpack.c.l.b16 %v297
      %v472 = vunpack.c.h.b16 %v297
      %v473 = vunpack.c.l.b16 %v298
      %v474 = vunpack.c.h.b16 %v298
      %v475 = vunpack.c.l.b16 %v299
      %v476 = vunpack.c.h.b16 %v299
      %v477 = vunpack.c.l.b16 %v300
      %v478 = vunpack.c.h.b16 %v300
      %v479 = vunpack.c.l.b16 %v301
      %v480 = vunpack.c.h.b16 %v301
      %v481 = vunpack.c.l.b16 %v302
      %v482 = vunpack.c.h.b16 %v302
      %v483 = vunpack.c.l.b16 %v303
      %v484 = vunpack.c.h.b16 %v303
      %v485 = vunpack.c.l.b16 %v304
      %v486 = vunpack.c.h.b16 %v304
      %v487 = vunpack.c.l.b16 %v305
      %v488 = vunpack.c.h.b16 %v305
      %v489 = vunpack.c.l.b16 %v306
      %v490 = vunpack.c.h.b16 %v306
      %v491 = vunpack.c.l.b16 %v307
      %v492 = vunpack.c.h.b16 %v307
      %v493 = vunpack.c.l.b16 %v308
      %v494 = vunpack.c.h.b16 %v308
      %v495 = vunpack.c.l.b16 %v309
      %v496 = vunpack.c.h.b16 %v309
      %v497 = vunpack.c.l.b16 %v310
      %v498 = vunpack.c.h.b16 %v310
      %v499 = vunpack.c.l.b16 %v311
      %v500 = vunpack.c.h.b16 %v311
      %v501 = vunpack.c.l.b16 %v312
      %v502 = vunpack.c.h.b16 %v312
      %v503 = vunpack.c.l.b16 %v313
      %v504 = vunpack.c.h.b16 %v313
      %v505 = vunpack.c.l.b16 %v314
      %v506 = vunpack.c.h.b16 %v314
      %v507 = vunpack.c.l.b16 %v315
      %v508 = vunpack.c.h.b16 %v315
      %v509 = vunpack.c.l.b16 %v316
      %v510 = vunpack.c.h.b16 %v316
      %v511 = vunpack.c.l.b16 %v317
      %v512 = vunpack.c.h.b16 %v317
      %v513 = vunpack.c.l.b16 %v318
      %v514 = vunpack.c.h.b16 %v318
      %v515 = vunpack.c.l.b16 %v319
      %v516 = vunpack.c.h.b16 %v319
      %v517 = vunpack.c.l.b16 %v320
      %v518 = vunpack.c.h.b16 %v320
      %v519 = vunpack.c.l.b16 %v321
      %v520 = vunpack.c.h.b16 %v321
      %v521 = vunpack.c.l.b16 %v322
      %v522 = vunpack.c.h.b16 %v322
      %v523 = vunpack.c.l.b16 %v323
      %v524 = vunpack.c.h.b16 %v323
      %v525 = vunpack.c.l.b16 %v324
      %v526 = vunpack.c.h.b16 %v324
      %v527 = vunpack.c.l.b16 %v325
      %v528 = vunpack.c.h.b16 %v325
      %v529 = vunpack.c.l.b16 %v326
      %v530 = vunpack.c.h.b16 %v326
      %v531 = vunpack.c.l.b16 %v327
      %v532 = vunpack.c.h.b16 %v327
      %v533 = vunpack.c.l.b16 %v328
      %v534 = vunpack.c.h.b16 %v328
      %v535 = vunpack.c.l.b16 %v329
      %v536 = vunpack.c.h.b16 %v329
      %v537 = vunpack.c.l.b16 %v330
      %v538 = vunpack.c.h.b16 %v330
      %v539 = vunpack.c.l.b16 %v331
      %v540 = vunpack.c.h.b16 %v331
      %v541 = vunpack.c.l.b16 %v332
      %v542 = vunpack.c.h.b16 %v332
      %v543 = vunpack.c.l.b16 %v333
      %v544 = vunpack.c.h.b16 %v333
      %v545 = vpack.c.b16 %v419, %v417
      %v546 = vpack.c.b16 %v420, %v418
      %v547 = vpack.c.b16 %v423, %v421
      %v548 = vpack.c.b16 %v424, %v422
      %v549 = vpack.c.b16 %v427, %v425
      %v550 = vpack.c.b16 %v428, %v426
      %v551 = vpack.c.b16 %v431, %v429
      %v552 = vpack.c.b16 %v432, %v430
      %v553 = vpack.c.b16 %v435, %v433
      %v554 = vpack.c.b16 %v436, %v434
      %v555 = vpack.c.b16 %v439, %v437
      %v556 = vpack.c.b16 %v440, %v438
      %v557 = vpack.c.b16 %v443, %v441
      %v558 = vpack.c.b16 %v444, %v442
      %v559 = vpack.c.b16 %v447, %v445
      %v560 = vpack.c.b16 %v448, %v446
      %v561 = vpack.c.b16 %v451, %v449
      %v562 = vpack.c.b16 %v452, %v450
      %v563 = vpack.c.b16 %v455, %v453
      %v564 = vpack.c.b16 %v456, %v454
      %v565 = vpack.c.b16 %v459, %v457
      %v566 = vpack.c.b16 %v460, %v458
      %v567 = vpack.c.b16 %v463, %v461
      %v568 = vpack.c.b16 %v464, %v462
      %v569 = vpack.c.b16 %v467, %v465
      %v570 = vpack.c.b16 %v468, %v466
      %v571 = vpack.c.b16 %v471, %v469
      %v572 = vpack.c.b16 %v472, %v470
      %v573 = vpack.c.b16 %v475, %v473
      %v574 = vpack.c.b16 %v476, %v474
      %v575 = vpack.c.b16 %v479, %v477
      %v576 = vpack.c.b16 %v480, %v478
      %v577 = vpack.c.b16 %v483, %v481
      %v578 = vpack.c.b16 %v484, %v482
      %v579 = vpack.c.b16 %v487, %v485
      %v580 = vpack.c.b16 %v488, %v486
      %v581 = vpack.c.b16 %v491, %v489
      %v582 = vpack.c.b16 %v492, %v490
      %v583 = vpack.c.b16 %v495, %v493
      %v584 = vpack.c.b16 %v496, %v494
      %v585 = vpack.c.b16 %v499, %v497
      %v586 = vpack.c.b16 %v500, %v498
      %v587 = vpack.c.b16 %v503, %v501
      %v588 = vpack.c.b16 %v504, %v502
      %v589 = vpack.c.b16 %v507, %v505
      %v590 = vpack.c.b16 %v508, %v506
      %v591 = vpack.c.b16 %v511, %v509
      %v592 = vpack.c.b16 %v512, %v510
      %v593 = vpack.c.b16 %v515, %v513
      %v594 = vpack.c.b16 %v516, %v514
      %v595 = vpack.c.b16 %v519, %v517
      %v596 = vpack.c.b16 %v520, %v518
      %v597 = vpack.c.b16 %v523, %v521
      %v598 = vpack.c.b16 %v524, %v522
      %v599 = vpack.c.b16 %v527, %v525
      %v600 = vpack.c.b16 %v528, %v526
      %v601 = vpack.c.b16 %v531, %v529
      %v602 = vpack.c.b16 %v532, %v530
      %v603 = vpack.c.b16 %v535, %v533
      %v604 = vpack.c.b16 %v536, %v534
      %v605 = vpack.c.b16 %v539, %v537
      %v606 = vpack.c.b16 %v540, %v538
      %v607 = vpack.c.b16 %v543, %v541
      %v608 = vpack.c.b16 %v544, %v542
      %v660 = vunpack.c.l.b16 %v334
      %v661 = vunpack.c.l.b16 %v335
      %v662 = vunpack.c.l.b16 %v336
      %v663 = vunpack.c.l.b16 %v337
      %v664 = vunpack.c.l.b16 %v338
      %v665 = vunpack.c.l.b16 %v339
      %v666 = vunpack.c.l.b16 %v340
      %v667 = vunpack.c.l.b16 %v341
      %v668 = vunpack.c.l.b16 %v342
      %v669 = vunpack.c.l.b16 %v343
      %v670 = vunpack.c.l.b16 %v344
      %v671 = vunpack.c.l.b16 %v345
      %v672 = vunpack.c.l.b16 %v346
      %v673 = vunpack.c.l.b16 %v347
      %v674 = vunpack.c.l.b16 %v348
      %v675 = vunpack.c.l.b16 %v349
      %v676 = vunpack.c.l.b16 %v350
      %v677 = vunpack.c.l.b16 %v351
      %v678 = vunpack.c.l.b16 %v352
      %v679 = vpack.c.b16 %v661, %v660
      %v680 = vpack.c.b16 %v663, %v662
      %v681 = vpack.c.b16 %v665, %v664
      %v682 = vpack.c.b16 %v667, %v666
      %v683 = vpack.c.b16 %v669, %v668
      %v684 = vpack.c.b16 %v671, %v670
      %v685 = vpack.c.b16 %v673, %v672
      %v686 = vpack.c.b16 %v675, %v674
      %v687 = vpack.c.b16 %v677, %v676
      %v688 = vpack.c.b16 %v678, %v678
      %vm698 = vcmask 154624
      %v700 = vsel %vm698, %v546, 0
      %v703 = vsel %vm698, %v548, 0
      %v706 = vsel %vm698, %v550, 0
      %v709 = vsel %vm698, %v552, 0
      %v712 = vsel %vm698, %v554, 0
      %v715 = vsel %vm698, %v556, 0
      %v718 = vsel %vm698, %v558, 0
      %v721 = vsel %vm698, %v560, 0
      %v724 = vsel %vm698, %v562, 0
      %v727 = vsel %vm698, %v564, 0
      %v730 = vsel %vm698, %v566, 0
      %v733 = vsel %vm698, %v568, 0
      %v736 = vsel %vm698, %v570, 0
      %v739 = vsel %vm698, %v572, 0
      %v742 = vsel %vm698, %v574, 0
      %v745 = vsel %vm698, %v576, 0
      %v748 = vsel %vm698, %v578, 0
      %v751 = vsel %vm698, %v580, 0
      %v754 = vsel %vm698, %v582, 0
      %v757 = vsel %vm698, %v584, 0
      %v760 = vsel %vm698, %v586, 0
      %v763 = vsel %vm698, %v588, 0
      %v766 = vsel %vm698, %v590, 0
      %v769 = vsel %vm698, %v592, 0
      %v772 = vsel %vm698, %v594, 0
      %v775 = vsel %vm698, %v596, 0
      %v778 = vsel %vm698, %v598, 0
      %v781 = vsel %vm698, %v600, 0
      %v784 = vsel %vm698, %v602, 0
      %v787 = vsel %vm698, %v604, 0
      %v790 = vsel %vm698, %v606, 0
      %v793 = vsel %vm698, %v608, 0
      %vm795 = vcmask 1040384
      %vm796 = vcmask 1041408
      %v797 = vsel %vm795, 4294967295, 65535
      %v798 = vsel %vm796, %v797, 0
      %v800 = vand.u32 %v688, %v798
      %802 = vmatprep.subr.bf16.mxu0 0
      %803 = vmatpush1.bf16.msra.mxu0 %v679
      %804 = vmatprep.subr.bf16.mxu0 0
      %805 = vmatpush1.bf16.msra.mxu0 %v680
      %806 = vmatprep.subr.bf16.mxu0 0
      %807 = vmatpush1.bf16.msra.mxu0 %v681
      %808 = vmatprep.subr.bf16.mxu0 0
      %809 = vmatpush1.bf16.msra.mxu0 %v682
      %810 = vmatprep.subr.bf16.mxu0 0
      %811 = vmatpush1.bf16.msra.mxu0 %v683
      %812 = vmatprep.subr.bf16.mxu0 0
      %813 = vmatpush1.bf16.msra.mxu0 %v684
      %814 = vmatprep.subr.bf16.mxu0 0
      %815 = vmatpush1.bf16.msra.mxu0 %v685
      %816 = vmatprep.subr.bf16.mxu0 0
      %817 = vmatpush1.bf16.msra.mxu0 %v686
      %818 = vmatprep.subr.bf16.mxu0 0
      %819 = vmatpush1.bf16.msra.mxu0 %v687
      %820 = vmatprep.subr.bf16.mxu0 0
      %821 = vmatpush1.bf16.msra.mxu0 %v800
      %822 = vmatprep.subr.bf16.mxu0 0
      %823 = vmatpush1.bf16.msra.mxu0 0
      %824 = vmatprep.subr.bf16.mxu0 0
      %825 = vmatpush1.bf16.msra.mxu0 0
      %826 = vmatprep.subr.bf16.mxu0 0
      %827 = vmatpush1.bf16.msra.mxu0 0
      %828 = vmatprep.subr.bf16.mxu0 0
      %829 = vmatpush1.bf16.msra.mxu0 0
      %830 = vmatprep.subr.bf16.mxu0 0
      %831 = vmatpush1.bf16.msra.mxu0 0
      %832 = vmatprep.subr.bf16.mxu0 0
      %833 = vmatpush1.bf16.msra.mxu0 0
      %834 = vmatprep.mubr.bf16.mxu0 %v700
      %835 = vmatmul.mubr.bf16.gmra.mrb[0].mxu0 %v545
      %v836 = vpop.f32.mrb[0].mxu0
      %v837 = vadd.f32 0.0, %v836
      %v838 = vpop.f32.mrb[0].mxu0
      %v839 = vpop.f32.mrb[0].mxu0
      %v840 = vadd.f32 0.0, %v839
      %v841 = vpop.f32.mrb[0].mxu0
      %842 = vmatprep.mubr.bf16.mxu0 %v703
      %843 = vmatmul.mubr.bf16.gmra.mrb[0].mxu0 %v547
      %v844 = vpop.f32.mrb[0].mxu0
      %v845 = vadd.f32 0.0, %v844
      %v846 = vpop.f32.mrb[0].mxu0
      %v847 = vpop.f32.mrb[0].mxu0
      %v848 = vadd.f32 0.0, %v847
      %v849 = vpop.f32.mrb[0].mxu0
      %850 = vmatprep.mubr.bf16.mxu0 %v706
      %851 = vmatmul.mubr.bf16.gmra.mrb[0].mxu0 %v549
      %v852 = vpop.f32.mrb[0].mxu0
      %v853 = vadd.f32 0.0, %v852
      %v854 = vpop.f32.mrb[0].mxu0
      %v855 = vpop.f32.mrb[0].mxu0
      %v856 = vadd.f32 0.0, %v855
      %v857 = vpop.f32.mrb[0].mxu0
      %858 = vmatprep.mubr.bf16.mxu0 %v709
      %859 = vmatmul.mubr.bf16.gmra.mrb[0].mxu0 %v551
      %v860 = vpop.f32.mrb[0].mxu0
      %v861 = vadd.f32 0.0, %v860
      %v862 = vpop.f32.mrb[0].mxu0
      %v863 = vpop.f32.mrb[0].mxu0
      %v864 = vadd.f32 0.0, %v863
      %v865 = vpop.f32.mrb[0].mxu0
      %866 = vmatprep.mubr.bf16.mxu0 %v712
      %867 = vmatmul.mubr.bf16.gmra.mrb[0].mxu0 %v553
      %v868 = vpop.f32.mrb[0].mxu0
      %v869 = vadd.f32 0.0, %v868
      %v870 = vpop.f32.mrb[0].mxu0
      %v871 = vpop.f32.mrb[0].mxu0
      %v872 = vadd.f32 0.0, %v871
      %v873 = vpop.f32.mrb[0].mxu0
      %874 = vmatprep.mubr.bf16.mxu0 %v715
      %875 = vmatmul.mubr.bf16.gmra.mrb[0].mxu0 %v555
      %v876 = vpop.f32.mrb[0].mxu0
      %v877 = vadd.f32 0.0, %v876
      %v878 = vpop.f32.mrb[0].mxu0
      %v879 = vpop.f32.mrb[0].mxu0
      %v880 = vadd.f32 0.0, %v879
      %v881 = vpop.f32.mrb[0].mxu0
      %882 = vmatprep.mubr.bf16.mxu0 %v718
      %883 = vmatmul.mubr.bf16.gmra.mrb[0].mxu0 %v557
      %v884 = vpop.f32.mrb[0].mxu0
      %v885 = vadd.f32 0.0, %v884
      %v886 = vpop.f32.mrb[0].mxu0
      %v887 = vpop.f32.mrb[0].mxu0
      %v888 = vadd.f32 0.0, %v887
      %v889 = vpop.f32.mrb[0].mxu0
      %890 = vmatprep.mubr.bf16.mxu0 %v721
      %891 = vmatmul.mubr.bf16.gmra.mrb[0].mxu0 %v559
      %v892 = vpop.f32.mrb[0].mxu0
      %v893 = vadd.f32 0.0, %v892
      %v894 = vpop.f32.mrb[0].mxu0
      %v895 = vpop.f32.mrb[0].mxu0
      %v896 = vadd.f32 0.0, %v895
      %v897 = vpop.f32.mrb[0].mxu0
      %898 = vmatprep.mubr.bf16.mxu0 %v724
      %899 = vmatmul.mubr.bf16.gmra.mrb[0].mxu0 %v561
      %v900 = vpop.f32.mrb[0].mxu0
      %v901 = vadd.f32 0.0, %v900
      %v902 = vpop.f32.mrb[0].mxu0
      %v903 = vpop.f32.mrb[0].mxu0
      %v904 = vadd.f32 0.0, %v903
      %v905 = vpop.f32.mrb[0].mxu0
      %906 = vmatprep.mubr.bf16.mxu0 %v727
      %907 = vmatmul.mubr.bf16.gmra.mrb[0].mxu0 %v563
      %v908 = vpop.f32.mrb[0].mxu0
      %v909 = vadd.f32 0.0, %v908
      %v910 = vpop.f32.mrb[0].mxu0
      %v911 = vpop.f32.mrb[0].mxu0
      %v912 = vadd.f32 0.0, %v911
      %v913 = vpop.f32.mrb[0].mxu0
      %914 = vmatprep.mubr.bf16.mxu0 %v730
      %915 = vmatmul.mubr.bf16.gmra.mrb[0].mxu0 %v565
      %v916 = vpop.f32.mrb[0].mxu0
      %v917 = vadd.f32 0.0, %v916
      %v918 = vpop.f32.mrb[0].mxu0
      %v919 = vpop.f32.mrb[0].mxu0
      %v920 = vadd.f32 0.0, %v919
      %v921 = vpop.f32.mrb[0].mxu0
      %922 = vmatprep.mubr.bf16.mxu0 %v733
      %923 = vmatmul.mubr.bf16.gmra.mrb[0].mxu0 %v567
      %v924 = vpop.f32.mrb[0].mxu0
      %v925 = vadd.f32 0.0, %v924
      %v926 = vpop.f32.mrb[0].mxu0
      %v927 = vpop.f32.mrb[0].mxu0
      %v928 = vadd.f32 0.0, %v927
      %v929 = vpop.f32.mrb[0].mxu0
      %930 = vmatprep.mubr.bf16.mxu0 %v736
      %931 = vmatmul.mubr.bf16.gmra.mrb[0].mxu0 %v569
      %v932 = vpop.f32.mrb[0].mxu0
      %v933 = vadd.f32 0.0, %v932
      %v934 = vpop.f32.mrb[0].mxu0
      %v935 = vpop.f32.mrb[0].mxu0
      %v936 = vadd.f32 0.0, %v935
      %v937 = vpop.f32.mrb[0].mxu0
      %938 = vmatprep.mubr.bf16.mxu0 %v739
      %939 = vmatmul.mubr.bf16.gmra.mrb[0].mxu0 %v571
      %v940 = vpop.f32.mrb[0].mxu0
      %v941 = vadd.f32 0.0, %v940
      %v942 = vpop.f32.mrb[0].mxu0
      %v943 = vpop.f32.mrb[0].mxu0
      %v944 = vadd.f32 0.0, %v943
      %v945 = vpop.f32.mrb[0].mxu0
      %946 = vmatprep.mubr.bf16.mxu0 %v742
      %947 = vmatmul.mubr.bf16.gmra.mrb[0].mxu0 %v573
      %v948 = vpop.f32.mrb[0].mxu0
      %v949 = vadd.f32 0.0, %v948
      %v950 = vpop.f32.mrb[0].mxu0
      %v951 = vpop.f32.mrb[0].mxu0
      %v952 = vadd.f32 0.0, %v951
      %v953 = vpop.f32.mrb[0].mxu0
      %954 = vmatprep.mubr.bf16.mxu0 %v745
      %955 = vmatmul.mubr.bf16.gmra.mrb[0].mxu0 %v575
      %v956 = vpop.f32.mrb[0].mxu0
      %v957 = vadd.f32 0.0, %v956
      %v958 = vpop.f32.mrb[0].mxu0
      %v959 = vpop.f32.mrb[0].mxu0
      %v960 = vadd.f32 0.0, %v959
      %v961 = vpop.f32.mrb[0].mxu0
      %962 = vmatprep.mubr.bf16.mxu0 %v748
      %963 = vmatmul.mubr.bf16.gmra.mrb[0].mxu0 %v577
      %v964 = vpop.f32.mrb[0].mxu0
      %v965 = vadd.f32 0.0, %v964
      %v966 = vpop.f32.mrb[0].mxu0
      %v967 = vpop.f32.mrb[0].mxu0
      %v968 = vadd.f32 0.0, %v967
      %v969 = vpop.f32.mrb[0].mxu0
      %970 = vmatprep.mubr.bf16.mxu0 %v751
      %971 = vmatmul.mubr.bf16.gmra.mrb[0].mxu0 %v579
      %v972 = vpop.f32.mrb[0].mxu0
      %v973 = vadd.f32 0.0, %v972
      %v974 = vpop.f32.mrb[0].mxu0
      %v975 = vpop.f32.mrb[0].mxu0
      %v976 = vadd.f32 0.0, %v975
      %v977 = vpop.f32.mrb[0].mxu0
      %978 = vmatprep.mubr.bf16.mxu0 %v754
      %979 = vmatmul.mubr.bf16.gmra.mrb[0].mxu0 %v581
      %v980 = vpop.f32.mrb[0].mxu0
      %v981 = vadd.f32 0.0, %v980
      %v982 = vpop.f32.mrb[0].mxu0
      %v983 = vpop.f32.mrb[0].mxu0
      %v984 = vadd.f32 0.0, %v983
      %v985 = vpop.f32.mrb[0].mxu0
      %986 = vmatprep.mubr.bf16.mxu0 %v757
      %987 = vmatmul.mubr.bf16.gmra.mrb[0].mxu0 %v583
      %v988 = vpop.f32.mrb[0].mxu0
      %v989 = vadd.f32 0.0, %v988
      %v990 = vpop.f32.mrb[0].mxu0
      %v991 = vpop.f32.mrb[0].mxu0
      %v992 = vadd.f32 0.0, %v991
      %v993 = vpop.f32.mrb[0].mxu0
      %994 = vmatprep.mubr.bf16.mxu0 %v760
      %995 = vmatmul.mubr.bf16.gmra.mrb[0].mxu0 %v585
      %v996 = vpop.f32.mrb[0].mxu0
      %v997 = vadd.f32 0.0, %v996
      %v998 = vpop.f32.mrb[0].mxu0
      %v999 = vpop.f32.mrb[0].mxu0
      %v1000 = vadd.f32 0.0, %v999
      %v1001 = vpop.f32.mrb[0].mxu0
      %1002 = vmatprep.mubr.bf16.mxu0 %v763
      %1003 = vmatmul.mubr.bf16.gmra.mrb[0].mxu0 %v587
      %v1004 = vpop.f32.mrb[0].mxu0
      %v1005 = vadd.f32 0.0, %v1004
      %v1006 = vpop.f32.mrb[0].mxu0
      %v1007 = vpop.f32.mrb[0].mxu0
      %v1008 = vadd.f32 0.0, %v1007
      %v1009 = vpop.f32.mrb[0].mxu0
      %1010 = vmatprep.mubr.bf16.mxu0 %v766
      %1011 = vmatmul.mubr.bf16.gmra.mrb[0].mxu0 %v589
      %v1012 = vpop.f32.mrb[0].mxu0
      %v1013 = vadd.f32 0.0, %v1012
      %v1014 = vpop.f32.mrb[0].mxu0
      %v1015 = vpop.f32.mrb[0].mxu0
      %v1016 = vadd.f32 0.0, %v1015
      %v1017 = vpop.f32.mrb[0].mxu0
      %1018 = vmatprep.mubr.bf16.mxu0 %v769
      %1019 = vmatmul.mubr.bf16.gmra.mrb[0].mxu0 %v591
      %v1020 = vpop.f32.mrb[0].mxu0
      %v1021 = vadd.f32 0.0, %v1020
      %v1022 = vpop.f32.mrb[0].mxu0
      %v1023 = vpop.f32.mrb[0].mxu0
      %v1024 = vadd.f32 0.0, %v1023
      %v1025 = vpop.f32.mrb[0].mxu0
      %1026 = vmatprep.mubr.bf16.mxu0 %v772
      %1027 = vmatmul.mubr.bf16.gmra.mrb[0].mxu0 %v593
      %v1028 = vpop.f32.mrb[0].mxu0
      %v1029 = vadd.f32 0.0, %v1028
      %v1030 = vpop.f32.mrb[0].mxu0
      %v1031 = vpop.f32.mrb[0].mxu0
      %v1032 = vadd.f32 0.0, %v1031
      %v1033 = vpop.f32.mrb[0].mxu0
      %1034 = vmatprep.mubr.bf16.mxu0 %v775
      %1035 = vmatmul.mubr.bf16.gmra.mrb[0].mxu0 %v595
      %v1036 = vpop.f32.mrb[0].mxu0
      %v1037 = vadd.f32 0.0, %v1036
      %v1038 = vpop.f32.mrb[0].mxu0
      %v1039 = vpop.f32.mrb[0].mxu0
      %v1040 = vadd.f32 0.0, %v1039
      %v1041 = vpop.f32.mrb[0].mxu0
      %1042 = vmatprep.mubr.bf16.mxu0 %v778
      %1043 = vmatmul.mubr.bf16.gmra.mrb[0].mxu0 %v597
      %v1044 = vpop.f32.mrb[0].mxu0
      %v1045 = vadd.f32 0.0, %v1044
      %v1046 = vpop.f32.mrb[0].mxu0
      %v1047 = vpop.f32.mrb[0].mxu0
      %v1048 = vadd.f32 0.0, %v1047
      %v1049 = vpop.f32.mrb[0].mxu0
      %1050 = vmatprep.mubr.bf16.mxu0 %v781
      %1051 = vmatmul.mubr.bf16.gmra.mrb[0].mxu0 %v599
      %v1052 = vpop.f32.mrb[0].mxu0
      %v1053 = vadd.f32 0.0, %v1052
      %v1054 = vpop.f32.mrb[0].mxu0
      %v1055 = vpop.f32.mrb[0].mxu0
      %v1056 = vadd.f32 0.0, %v1055
      %v1057 = vpop.f32.mrb[0].mxu0
      %1058 = vmatprep.mubr.bf16.mxu0 %v784
      %1059 = vmatmul.mubr.bf16.gmra.mrb[0].mxu0 %v601
      %v1060 = vpop.f32.mrb[0].mxu0
      %v1061 = vadd.f32 0.0, %v1060
      %v1062 = vpop.f32.mrb[0].mxu0
      %v1063 = vpop.f32.mrb[0].mxu0
      %v1064 = vadd.f32 0.0, %v1063
      %v1065 = vpop.f32.mrb[0].mxu0
      %1066 = vmatprep.mubr.bf16.mxu0 %v787
      %1067 = vmatmul.mubr.bf16.gmra.mrb[0].mxu0 %v603
      %v1068 = vpop.f32.mrb[0].mxu0
      %v1069 = vadd.f32 0.0, %v1068
      %v1070 = vpop.f32.mrb[0].mxu0
      %v1071 = vpop.f32.mrb[0].mxu0
      %v1072 = vadd.f32 0.0, %v1071
      %v1073 = vpop.f32.mrb[0].mxu0
      %1074 = vmatprep.mubr.bf16.mxu0 %v790
      %1075 = vmatmul.mubr.bf16.gmra.mrb[0].mxu0 %v605
      %v1076 = vpop.f32.mrb[0].mxu0
      %v1077 = vadd.f32 0.0, %v1076
      %v1078 = vpop.f32.mrb[0].mxu0
      %v1079 = vpop.f32.mrb[0].mxu0
      %v1080 = vadd.f32 0.0, %v1079
      %v1081 = vpop.f32.mrb[0].mxu0
      %1082 = vmatprep.mubr.bf16.mxu0 %v793
      %1083 = vmatmul.mubr.bf16.gmra.mrb[0].mxu0 %v607
      %v1084 = vpop.f32.mrb[0].mxu0
      %v1085 = vadd.f32 0.0, %v1084
      %v1086 = vpop.f32.mrb[0].mxu0
      %v1087 = vpop.f32.mrb[0].mxu0
      %v1088 = vadd.f32 0.0, %v1087
      %v1089 = vpop.f32.mrb[0].mxu0
      %1090 = vdwg.mxu0
      %v1091 = vld [vmem:[%s256] sm:$0x1]
      %v1093 = vlaneseq
      %v1094 = vshrl.u32 %v1093, 7
      %v1095 = vsub.s32 0, %v1094
      %v1096 = vrot.slane %v1091, %v1095
      %v1098 = vmul.f32 %v837, %v1096
      %v1099 = vmul.f32 %v840, %v1096
      %v1100 = vmul.f32 %v845, %v1096
      %v1101 = vmul.f32 %v848, %v1096
      %v1102 = vmul.f32 %v853, %v1096
      %v1103 = vmul.f32 %v856, %v1096
      %v1104 = vmul.f32 %v861, %v1096
      %v1105 = vmul.f32 %v864, %v1096
      %v1106 = vmul.f32 %v869, %v1096
      %v1107 = vmul.f32 %v872, %v1096
      %v1108 = vmul.f32 %v877, %v1096
      %v1109 = vmul.f32 %v880, %v1096
      %v1110 = vmul.f32 %v885, %v1096
      %v1111 = vmul.f32 %v888, %v1096
      %v1112 = vmul.f32 %v893, %v1096
      %v1113 = vmul.f32 %v896, %v1096
      %v1114 = vmul.f32 %v901, %v1096
      %v1115 = vmul.f32 %v904, %v1096
      %v1116 = vmul.f32 %v909, %v1096
      %v1117 = vmul.f32 %v912, %v1096
      %v1118 = vmul.f32 %v917, %v1096
      %v1119 = vmul.f32 %v920, %v1096
      %v1120 = vmul.f32 %v925, %v1096
      %v1121 = vmul.f32 %v928, %v1096
      %v1122 = vmul.f32 %v933, %v1096
      %v1123 = vmul.f32 %v936, %v1096
      %v1124 = vmul.f32 %v941, %v1096
      %v1125 = vmul.f32 %v944, %v1096
      %v1126 = vmul.f32 %v949, %v1096
      %v1127 = vmul.f32 %v952, %v1096
      %v1128 = vmul.f32 %v957, %v1096
      %v1129 = vmul.f32 %v960, %v1096
      %v1130 = vmul.f32 %v965, %v1096
      %v1131 = vmul.f32 %v968, %v1096
      %v1132 = vmul.f32 %v973, %v1096
      %v1133 = vmul.f32 %v976, %v1096
      %v1134 = vmul.f32 %v981, %v1096
      %v1135 = vmul.f32 %v984, %v1096
      %v1136 = vmul.f32 %v989, %v1096
      %v1137 = vmul.f32 %v992, %v1096
      %v1138 = vmul.f32 %v997, %v1096
      %v1139 = vmul.f32 %v1000, %v1096
      %v1140 = vmul.f32 %v1005, %v1096
      %v1141 = vmul.f32 %v1008, %v1096
      %v1142 = vmul.f32 %v1013, %v1096
      %v1143 = vmul.f32 %v1016, %v1096
      %v1144 = vmul.f32 %v1021, %v1096
      %v1145 = vmul.f32 %v1024, %v1096
      %v1146 = vmul.f32 %v1029, %v1096
      %v1147 = vmul.f32 %v1032, %v1096
      %v1148 = vmul.f32 %v1037, %v1096
      %v1149 = vmul.f32 %v1040, %v1096
      %v1150 = vmul.f32 %v1045, %v1096
      %v1151 = vmul.f32 %v1048, %v1096
      %v1152 = vmul.f32 %v1053, %v1096
      %v1153 = vmul.f32 %v1056, %v1096
      %v1154 = vmul.f32 %v1061, %v1096
      %v1155 = vmul.f32 %v1064, %v1096
      %v1156 = vmul.f32 %v1069, %v1096
      %v1157 = vmul.f32 %v1072, %v1096
      %v1158 = vmul.f32 %v1077, %v1096
      %v1159 = vmul.f32 %v1080, %v1096
      %v1160 = vmul.f32 %v1085, %v1096
      %v1161 = vmul.f32 %v1088, %v1096
      %v1162 = vld [vmem:[%s259] sm:$0x1]
      %v1164 = vlaneseq
      %v1165 = vshrl.u32 %v1164, 7
      %v1166 = vsub.s32 0, %v1165
      %v1167 = vrot.slane %v1162, %v1166
      %v1169 = vadd.f32 %v1098, %v1167
      %v1170 = vadd.f32 %v1099, %v1167
      %v1171 = vadd.f32 %v1100, %v1167
      %v1172 = vadd.f32 %v1101, %v1167
      %v1173 = vadd.f32 %v1102, %v1167
      %v1174 = vadd.f32 %v1103, %v1167
      %v1175 = vadd.f32 %v1104, %v1167
      %v1176 = vadd.f32 %v1105, %v1167
      %v1177 = vadd.f32 %v1106, %v1167
      %v1178 = vadd.f32 %v1107, %v1167
      %v1179 = vadd.f32 %v1108, %v1167
      %v1180 = vadd.f32 %v1109, %v1167
      %v1181 = vadd.f32 %v1110, %v1167
      %v1182 = vadd.f32 %v1111, %v1167
      %v1183 = vadd.f32 %v1112, %v1167
      %v1184 = vadd.f32 %v1113, %v1167
      %v1185 = vadd.f32 %v1114, %v1167
      %v1186 = vadd.f32 %v1115, %v1167
      %v1187 = vadd.f32 %v1116, %v1167
      %v1188 = vadd.f32 %v1117, %v1167
      %v1189 = vadd.f32 %v1118, %v1167
      %v1190 = vadd.f32 %v1119, %v1167
      %v1191 = vadd.f32 %v1120, %v1167
      %v1192 = vadd.f32 %v1121, %v1167
      %v1193 = vadd.f32 %v1122, %v1167
      %v1194 = vadd.f32 %v1123, %v1167
      %v1195 = vadd.f32 %v1124, %v1167
      %v1196 = vadd.f32 %v1125, %v1167
      %v1197 = vadd.f32 %v1126, %v1167
      %v1198 = vadd.f32 %v1127, %v1167
      %v1199 = vadd.f32 %v1128, %v1167
      %v1200 = vadd.f32 %v1129, %v1167
      %v1201 = vadd.f32 %v1130, %v1167
      %v1202 = vadd.f32 %v1131, %v1167
      %v1203 = vadd.f32 %v1132, %v1167
      %v1204 = vadd.f32 %v1133, %v1167
      %v1205 = vadd.f32 %v1134, %v1167
      %v1206 = vadd.f32 %v1135, %v1167
      %v1207 = vadd.f32 %v1136, %v1167
      %v1208 = vadd.f32 %v1137, %v1167
      %v1209 = vadd.f32 %v1138, %v1167
      %v1210 = vadd.f32 %v1139, %v1167
      %v1211 = vadd.f32 %v1140, %v1167
      %v1212 = vadd.f32 %v1141, %v1167
      %v1213 = vadd.f32 %v1142, %v1167
      %v1214 = vadd.f32 %v1143, %v1167
      %v1215 = vadd.f32 %v1144, %v1167
      %v1216 = vadd.f32 %v1145, %v1167
      %v1217 = vadd.f32 %v1146, %v1167
      %v1218 = vadd.f32 %v1147, %v1167
      %v1219 = vadd.f32 %v1148, %v1167
      %v1220 = vadd.f32 %v1149, %v1167
      %v1221 = vadd.f32 %v1150, %v1167
      %v1222 = vadd.f32 %v1151, %v1167
      %v1223 = vadd.f32 %v1152, %v1167
      %v1224 = vadd.f32 %v1153, %v1167
      %v1225 = vadd.f32 %v1154, %v1167
      %v1226 = vadd.f32 %v1155, %v1167
      %v1227 = vadd.f32 %v1156, %v1167
      %v1228 = vadd.f32 %v1157, %v1167
      %v1229 = vadd.f32 %v1158, %v1167
      %v1230 = vadd.f32 %v1159, %v1167
      %v1231 = vadd.f32 %v1160, %v1167
      %v1232 = vadd.f32 %v1161, %v1167
      %v1233 = vmax.f32 %v1169, 0.0
      %v1234 = vmax.f32 %v1170, 0.0
      %v1235 = vmax.f32 %v1171, 0.0
      %v1236 = vmax.f32 %v1172, 0.0
      %v1237 = vmax.f32 %v1173, 0.0
      %v1238 = vmax.f32 %v1174, 0.0
      %v1239 = vmax.f32 %v1175, 0.0
      %v1240 = vmax.f32 %v1176, 0.0
      %v1241 = vmax.f32 %v1177, 0.0
      %v1242 = vmax.f32 %v1178, 0.0
      %v1243 = vmax.f32 %v1179, 0.0
      %v1244 = vmax.f32 %v1180, 0.0
      %v1245 = vmax.f32 %v1181, 0.0
      %v1246 = vmax.f32 %v1182, 0.0
      %v1247 = vmax.f32 %v1183, 0.0
      %v1248 = vmax.f32 %v1184, 0.0
      %v1249 = vmax.f32 %v1185, 0.0
      %v1250 = vmax.f32 %v1186, 0.0
      %v1251 = vmax.f32 %v1187, 0.0
      %v1252 = vmax.f32 %v1188, 0.0
      %v1253 = vmax.f32 %v1189, 0.0
      %v1254 = vmax.f32 %v1190, 0.0
      %v1255 = vmax.f32 %v1191, 0.0
      %v1256 = vmax.f32 %v1192, 0.0
      %v1257 = vmax.f32 %v1193, 0.0
      %v1258 = vmax.f32 %v1194, 0.0
      %v1259 = vmax.f32 %v1195, 0.0
      %v1260 = vmax.f32 %v1196, 0.0
      %v1261 = vmax.f32 %v1197, 0.0
      %v1262 = vmax.f32 %v1198, 0.0
      %v1263 = vmax.f32 %v1199, 0.0
      %v1264 = vmax.f32 %v1200, 0.0
      %v1265 = vmax.f32 %v1201, 0.0
      %v1266 = vmax.f32 %v1202, 0.0
      %v1267 = vmax.f32 %v1203, 0.0
      %v1268 = vmax.f32 %v1204, 0.0
      %v1269 = vmax.f32 %v1205, 0.0
      %v1270 = vmax.f32 %v1206, 0.0
      %v1271 = vmax.f32 %v1207, 0.0
      %v1272 = vmax.f32 %v1208, 0.0
      %v1273 = vmax.f32 %v1209, 0.0
      %v1274 = vmax.f32 %v1210, 0.0
      %v1275 = vmax.f32 %v1211, 0.0
      %v1276 = vmax.f32 %v1212, 0.0
      %v1277 = vmax.f32 %v1213, 0.0
      %v1278 = vmax.f32 %v1214, 0.0
      %v1279 = vmax.f32 %v1215, 0.0
      %v1280 = vmax.f32 %v1216, 0.0
      %v1281 = vmax.f32 %v1217, 0.0
      %v1282 = vmax.f32 %v1218, 0.0
      %v1283 = vmax.f32 %v1219, 0.0
      %v1284 = vmax.f32 %v1220, 0.0
      %v1285 = vmax.f32 %v1221, 0.0
      %v1286 = vmax.f32 %v1222, 0.0
      %v1287 = vmax.f32 %v1223, 0.0
      %v1288 = vmax.f32 %v1224, 0.0
      %v1289 = vmax.f32 %v1225, 0.0
      %v1290 = vmax.f32 %v1226, 0.0
      %v1291 = vmax.f32 %v1227, 0.0
      %v1292 = vmax.f32 %v1228, 0.0
      %v1293 = vmax.f32 %v1229, 0.0
      %v1294 = vmax.f32 %v1230, 0.0
      %v1295 = vmax.f32 %v1231, 0.0
      %v1296 = vmax.f32 %v1232, 0.0
      %v1297 = vpack.c.bf16 %v1234, %v1233
      %v1298 = vpack.c.bf16 %v1236, %v1235
      %v1299 = vpack.c.bf16 %v1238, %v1237
      %v1300 = vpack.c.bf16 %v1240, %v1239
      %v1301 = vpack.c.bf16 %v1242, %v1241
      %v1302 = vpack.c.bf16 %v1244, %v1243
      %v1303 = vpack.c.bf16 %v1246, %v1245
      %v1304 = vpack.c.bf16 %v1248, %v1247
      %v1305 = vpack.c.bf16 %v1250, %v1249
      %v1306 = vpack.c.bf16 %v1252, %v1251
      %v1307 = vpack.c.bf16 %v1254, %v1253
      %v1308 = vpack.c.bf16 %v1256, %v1255
      %v1309 = vpack.c.bf16 %v1258, %v1257
      %v1310 = vpack.c.bf16 %v1260, %v1259
      %v1311 = vpack.c.bf16 %v1262, %v1261
      %v1312 = vpack.c.bf16 %v1264, %v1263
      %v1313 = vpack.c.bf16 %v1266, %v1265
      %v1314 = vpack.c.bf16 %v1268, %v1267
      %v1315 = vpack.c.bf16 %v1270, %v1269
      %v1316 = vpack.c.bf16 %v1272, %v1271
      %v1317 = vpack.c.bf16 %v1274, %v1273
      %v1318 = vpack.c.bf16 %v1276, %v1275
      %v1319 = vpack.c.bf16 %v1278, %v1277
      %v1320 = vpack.c.bf16 %v1280, %v1279
      %v1321 = vpack.c.bf16 %v1282, %v1281
      %v1322 = vpack.c.bf16 %v1284, %v1283
      %v1323 = vpack.c.bf16 %v1286, %v1285
      %v1324 = vpack.c.bf16 %v1288, %v1287
      %v1325 = vpack.c.bf16 %v1290, %v1289
      %v1326 = vpack.c.bf16 %v1292, %v1291
      %v1327 = vpack.c.bf16 %v1294, %v1293
      %v1328 = vpack.c.bf16 %v1296, %v1295
      %v1361 = vunpack.c.l.b16 %v1297
      %v1362 = vunpack.c.h.b16 %v1297
      %v1363 = vunpack.c.l.b16 %v1298
      %v1364 = vunpack.c.h.b16 %v1298
      %v1365 = vunpack.c.l.b16 %v1299
      %v1366 = vunpack.c.h.b16 %v1299
      %v1367 = vunpack.c.l.b16 %v1300
      %v1368 = vunpack.c.h.b16 %v1300
      %v1369 = vunpack.c.l.b16 %v1301
      %v1370 = vunpack.c.h.b16 %v1301
      %v1371 = vunpack.c.l.b16 %v1302
      %v1372 = vunpack.c.h.b16 %v1302
      %v1373 = vunpack.c.l.b16 %v1303
      %v1374 = vunpack.c.h.b16 %v1303
      %v1375 = vunpack.c.l.b16 %v1304
      %v1376 = vunpack.c.h.b16 %v1304
      %v1377 = vunpack.c.l.b16 %v1305
      %v1378 = vunpack.c.h.b16 %v1305
      %v1379 = vunpack.c.l.b16 %v1306
      %v1380 = vunpack.c.h.b16 %v1306
      %v1381 = vunpack.c.l.b16 %v1307
      %v1382 = vunpack.c.h.b16 %v1307
      %v1383 = vunpack.c.l.b16 %v1308
      %v1384 = vunpack.c.h.b16 %v1308
      %v1385 = vunpack.c.l.b16 %v1309
      %v1386 = vunpack.c.h.b16 %v1309
      %v1387 = vunpack.c.l.b16 %v1310
      %v1388 = vunpack.c.h.b16 %v1310
      %v1389 = vunpack.c.l.b16 %v1311
      %v1390 = vunpack.c.h.b16 %v1311
      %v1391 = vunpack.c.l.b16 %v1312
      %v1392 = vunpack.c.h.b16 %v1312
      %v1393 = vunpack.c.l.b16 %v1313
      %v1394 = vunpack.c.h.b16 %v1313
      %v1395 = vunpack.c.l.b16 %v1314
      %v1396 = vunpack.c.h.b16 %v1314
      %v1397 = vunpack.c.l.b16 %v1315
      %v1398 = vunpack.c.h.b16 %v1315
      %v1399 = vunpack.c.l.b16 %v1316
      %v1400 = vunpack.c.h.b16 %v1316
      %v1401 = vunpack.c.l.b16 %v1317
      %v1402 = vunpack.c.h.b16 %v1317
      %v1403 = vunpack.c.l.b16 %v1318
      %v1404 = vunpack.c.h.b16 %v1318
      %v1405 = vunpack.c.l.b16 %v1319
      %v1406 = vunpack.c.h.b16 %v1319
      %v1407 = vunpack.c.l.b16 %v1320
      %v1408 = vunpack.c.h.b16 %v1320
      %v1409 = vunpack.c.l.b16 %v1321
      %v1410 = vunpack.c.h.b16 %v1321
      %v1411 = vunpack.c.l.b16 %v1322
      %v1412 = vunpack.c.h.b16 %v1322
      %v1413 = vunpack.c.l.b16 %v1323
      %v1414 = vunpack.c.h.b16 %v1323
      %v1415 = vunpack.c.l.b16 %v1324
      %v1416 = vunpack.c.h.b16 %v1324
      %v1417 = vunpack.c.l.b16 %v1325
      %v1418 = vunpack.c.h.b16 %v1325
      %v1419 = vunpack.c.l.b16 %v1326
      %v1420 = vunpack.c.h.b16 %v1326
      %v1421 = vunpack.c.l.b16 %v1327
      %v1422 = vunpack.c.h.b16 %v1327
      %v1423 = vunpack.c.l.b16 %v1328
      %v1424 = vunpack.c.h.b16 %v1328
      %v1425 = vpack.c.b16 %v1361, %v1361
      %v1426 = vpack.c.b16 %v1362, %v1362
      %v1427 = vpack.c.b16 %v1363, %v1363
      %v1428 = vpack.c.b16 %v1364, %v1364
      %v1429 = vpack.c.b16 %v1365, %v1365
      %v1430 = vpack.c.b16 %v1366, %v1366
      %v1431 = vpack.c.b16 %v1367, %v1367
      %v1432 = vpack.c.b16 %v1368, %v1368
      %v1433 = vpack.c.b16 %v1369, %v1369
      %v1434 = vpack.c.b16 %v1370, %v1370
      %v1435 = vpack.c.b16 %v1371, %v1371
      %v1436 = vpack.c.b16 %v1372, %v1372
      %v1437 = vpack.c.b16 %v1373, %v1373
      %v1438 = vpack.c.b16 %v1374, %v1374
      %v1439 = vpack.c.b16 %v1375, %v1375
      %v1440 = vpack.c.b16 %v1376, %v1376
      %v1441 = vpack.c.b16 %v1377, %v1377
      %v1442 = vpack.c.b16 %v1378, %v1378
      %v1443 = vpack.c.b16 %v1379, %v1379
      %v1444 = vpack.c.b16 %v1380, %v1380
      %v1445 = vpack.c.b16 %v1381, %v1381
      %v1446 = vpack.c.b16 %v1382, %v1382
      %v1447 = vpack.c.b16 %v1383, %v1383
      %v1448 = vpack.c.b16 %v1384, %v1384
      %v1449 = vpack.c.b16 %v1385, %v1385
      %v1450 = vpack.c.b16 %v1386, %v1386
      %v1451 = vpack.c.b16 %v1387, %v1387
      %v1452 = vpack.c.b16 %v1388, %v1388
      %v1453 = vpack.c.b16 %v1389, %v1389
      %v1454 = vpack.c.b16 %v1390, %v1390
      %v1455 = vpack.c.b16 %v1391, %v1391
      %v1456 = vpack.c.b16 %v1392, %v1392
      %v1457 = vpack.c.b16 %v1393, %v1393
      %v1458 = vpack.c.b16 %v1394, %v1394
      %v1459 = vpack.c.b16 %v1395, %v1395
      %v1460 = vpack.c.b16 %v1396, %v1396
      %v1461 = vpack.c.b16 %v1397, %v1397
      %v1462 = vpack.c.b16 %v1398, %v1398
      %v1463 = vpack.c.b16 %v1399, %v1399
      %v1464 = vpack.c.b16 %v1400, %v1400
      %v1465 = vpack.c.b16 %v1401, %v1401
      %v1466 = vpack.c.b16 %v1402, %v1402
      %v1467 = vpack.c.b16 %v1403, %v1403
      %v1468 = vpack.c.b16 %v1404, %v1404
      %v1469 = vpack.c.b16 %v1405, %v1405
      %v1470 = vpack.c.b16 %v1406, %v1406
      %v1471 = vpack.c.b16 %v1407, %v1407
      %v1472 = vpack.c.b16 %v1408, %v1408
      %v1473 = vpack.c.b16 %v1409, %v1409
      %v1474 = vpack.c.b16 %v1410, %v1410
      %v1475 = vpack.c.b16 %v1411, %v1411
      %v1476 = vpack.c.b16 %v1412, %v1412
      %v1477 = vpack.c.b16 %v1413, %v1413
      %v1478 = vpack.c.b16 %v1414, %v1414
      %v1479 = vpack.c.b16 %v1415, %v1415
      %v1480 = vpack.c.b16 %v1416, %v1416
      %v1481 = vpack.c.b16 %v1417, %v1417
      %v1482 = vpack.c.b16 %v1418, %v1418
      %v1483 = vpack.c.b16 %v1419, %v1419
      %v1484 = vpack.c.b16 %v1420, %v1420
      %v1485 = vpack.c.b16 %v1421, %v1421
      %v1486 = vpack.c.b16 %v1422, %v1422
      %v1487 = vpack.c.b16 %v1423, %v1423
      %v1488 = vpack.c.b16 %v1424, %v1424
      %1553 = vst [vmem:[%s267] sm:$0xf] %v1425
      %1554 = vst [vmem:[%s267 + $0x4] sm:$0xf] %v1426
      %1555 = vst [vmem:[%s267 + $0x8] sm:$0xf] %v1427
      %1556 = vst [vmem:[%s267 + $0xc] sm:$0xf] %v1428
      %1557 = vst [vmem:[%s267 + $0x10] sm:$0xf] %v1429
      %1558 = vst [vmem:[%s267 + $0x14] sm:$0xf] %v1430
      %1559 = vst [vmem:[%s267 + $0x18] sm:$0xf] %v1431
      %1560 = vst [vmem:[%s267 + $0x1c] sm:$0xf] %v1432
      %1561 = vst [vmem:[%s267 + $0x20] sm:$0xf] %v1433
      %1562 = vst [vmem:[%s267 + $0x24] sm:$0xf] %v1434
      %1563 = vst [vmem:[%s267 + $0x28] sm:$0xf] %v1435
      %1564 = vst [vmem:[%s267 + $0x2c] sm:$0xf] %v1436
      %1565 = vst [vmem:[%s267 + $0x30] sm:$0xf] %v1437
      %1566 = vst [vmem:[%s267 + $0x34] sm:$0xf] %v1438
      %1567 = vst [vmem:[%s267 + $0x38] sm:$0xf] %v1439
      %1568 = vst [vmem:[%s267 + $0x3c] sm:$0xf] %v1440
      %1569 = vst [vmem:[%s267 + $0x40] sm:$0xf] %v1441
      %1570 = vst [vmem:[%s267 + $0x44] sm:$0xf] %v1442
      %1571 = vst [vmem:[%s267 + $0x48] sm:$0xf] %v1443
      %1572 = vst [vmem:[%s267 + $0x4c] sm:$0xf] %v1444
      %1573 = vst [vmem:[%s267 + $0x50] sm:$0xf] %v1445
      %1574 = vst [vmem:[%s267 + $0x54] sm:$0xf] %v1446
      %1575 = vst [vmem:[%s267 + $0x58] sm:$0xf] %v1447
      %1576 = vst [vmem:[%s267 + $0x5c] sm:$0xf] %v1448
      %1577 = vst [vmem:[%s267 + $0x60] sm:$0xf] %v1449
      %1578 = vst [vmem:[%s267 + $0x64] sm:$0xf] %v1450
      %1579 = vst [vmem:[%s267 + $0x68] sm:$0xf] %v1451
      %1580 = vst [vmem:[%s267 + $0x6c] sm:$0xf] %v1452
      %1581 = vst [vmem:[%s267 + $0x70] sm:$0xf] %v1453
      %1582 = vst [vmem:[%s267 + $0x74] sm:$0xf] %v1454
      %1583 = vst [vmem:[%s267 + $0x78] sm:$0xf] %v1455
      %1584 = vst [vmem:[%s267 + $0x7c] sm:$0xf] %v1456
      %1585 = vst [vmem:[%s267 + $0x80] sm:$0xf] %v1457
      %1586 = vst [vmem:[%s267 + $0x84] sm:$0xf] %v1458
      %1587 = vst [vmem:[%s267 + $0x88] sm:$0xf] %v1459
      %1588 = vst [vmem:[%s267 + $0x8c] sm:$0xf] %v1460
      %1589 = vst [vmem:[%s267 + $0x90] sm:$0xf] %v1461
      %1590 = vst [vmem:[%s267 + $0x94] sm:$0xf] %v1462
      %1591 = vst [vmem:[%s267 + $0x98] sm:$0xf] %v1463
      %1592 = vst [vmem:[%s267 + $0x9c] sm:$0xf] %v1464
      %1593 = vst [vmem:[%s267 + $0xa0] sm:$0xf] %v1465
      %1594 = vst [vmem:[%s267 + $0xa4] sm:$0xf] %v1466
      %1595 = vst [vmem:[%s267 + $0xa8] sm:$0xf] %v1467
      %1596 = vst [vmem:[%s267 + $0xac] sm:$0xf] %v1468
      %1597 = vst [vmem:[%s267 + $0xb0] sm:$0xf] %v1469
      %1598 = vst [vmem:[%s267 + $0xb4] sm:$0xf] %v1470
      %1599 = vst [vmem:[%s267 + $0xb8] sm:$0xf] %v1471
      %1600 = vst [vmem:[%s267 + $0xbc] sm:$0xf] %v1472
      %1601 = vst [vmem:[%s267 + $0xc0] sm:$0xf] %v1473
      %1602 = vst [vmem:[%s267 + $0xc4] sm:$0xf] %v1474
      %1603 = vst [vmem:[%s267 + $0xc8] sm:$0xf] %v1475
      %1604 = vst [vmem:[%s267 + $0xcc] sm:$0xf] %v1476
      %1605 = vst [vmem:[%s267 + $0xd0] sm:$0xf] %v1477
      %1606 = vst [vmem:[%s267 + $0xd4] sm:$0xf] %v1478
      %1607 = vst [vmem:[%s267 + $0xd8] sm:$0xf] %v1479
      %1608 = vst [vmem:[%s267 + $0xdc] sm:$0xf] %v1480
      %1609 = vst [vmem:[%s267 + $0xe0] sm:$0xf] %v1481
      %1610 = vst [vmem:[%s267 + $0xe4] sm:$0xf] %v1482
      %1611 = vst [vmem:[%s267 + $0xe8] sm:$0xf] %v1483
      %1612 = vst [vmem:[%s267 + $0xec] sm:$0xf] %v1484
      %1613 = vst [vmem:[%s267 + $0xf0] sm:$0xf] %v1485
      %1614 = vst [vmem:[%s267 + $0xf4] sm:$0xf] %v1486
      %1615 = vst [vmem:[%s267 + $0xf8] sm:$0xf] %v1487
      %1616 = vst [vmem:[%s267 + $0xfc] sm:$0xf] %v1488
      %s1617 = smul.u32 64, %s20
      %p1618 = scmp.lt.s32.totalorder %s1617, 255
      %s1619 = scalar_select %p1618, %s1617, 255
      %p1620 = scmp.lt.s32.totalorder %s19, 0
      %s1621 = scalar_select %p1620, %s19, 0
      %s1622 = sadd.s32 %s1621, %s1619
      %s1623 = smul.addr %s1622, 4
      %s1624 = scalar_lea.vmem %s4, %s1623
      // Predicated region
      $region37: #{stem_forward.2} parent=35 // pred_check
        %p1625 = pneg %p151
      $region38: #{stem_forward.2} parent=35 // pred_check_branch
        %1627 = sbr.rel (%p1625) target = $region40
      $region39: #{stem_forward.2} parent=35 // pred_region
        %s1628 = smul.u32 64, %s20
      $region40: #{stem_forward.2} parent=35 // pred_fallthru
        _
    $region36: #{stem_forward.2} parent=5 // pred_fallthru
      _
    %p1629 = scmp.le.s32.totalorder 2, %s10
    // Predicated region
    $region41: #{stem_forward.2} parent=5 // pred_check
      %p1630 = pneg %p1629
    $region42: #{stem_forward.2} parent=5 // pred_check_branch
      %1632 = sbr.rel (%p1630) target = $region44
    $region43: #{stem_forward.2} parent=5 // pred_region
      %s1633 = ssub.s32 %s10, 2
      // Predicated region
      $region45: #{stem_forward.2} parent=43 // pred_check
        %p1634 = pneg %p157
      $region46: #{stem_forward.2} parent=43 // pred_check_branch
        %1636 = sbr.rel (%p1634) target = $region48
      $region47: #{stem_forward.2} parent=43 // pred_region
        %s1637 = smul.u32 64, %s22
        %p1638 = scmp.lt.s32.totalorder %s1637, 255
        %s1639 = scalar_select %p1638, %s1637, 255
        %p1640 = scmp.lt.s32.totalorder %s21, 0
        %s1641 = scalar_select %p1640, %s21, 0
        %s1642 = sadd.s32 %s1641, %s1639
        %s1643 = smul.addr %s1642, 4
        %s1644 = scalar_lea.vmem %s4, %s1643
      $region48: #{stem_forward.2} parent=43 // pred_fallthru
        _
    $region44: #{stem_forward.2} parent=5 // pred_fallthru
      _
  $region6: #{stem_forward.2} parent=0 // loop_footer
    %s14 = sadd.s32 1, %s10
  $region7: #{stem_forward.2} parent=0 // loop_footer_branch
    %9 = sbr.rel target = $region3
  $region8: #{stem_forward.2} parent=0 // loop_exit
    _

// kernel: stem_forward.3
$region0: #{stem_forward.3}
  #allocation0 [shape = 'u32[]', space=smem, size = 0x4, offset = 0x4, fixed_abs, tag = 'smem constant byte address 0x4 - core index']
  #allocation1 [shape = 'u32[144,128]{1,0:T(1,128)}', space=vmem, size = 0x12000, scoped, tag = 'internal scratch']
  %s0 = inlined_call_operand.vmem [shape: bf16[2,34,34,128], index: 0, kind: input, shape index: {}]
  %s1 = inlined_call_operand.vmem [shape: bf16[2,32,32,128], index: 1, kind: output, shape index: {}]
  %s2 = sld [smem:[#allocation0]]
  $region37: #{stem_forward.3} parent=0
    _
  %s4 = ssub.s32 1, %s2
  %s5 = scalar_select 0, %s4, %s2
  loop: start=0, step=1, limit=4
  $region2: #{stem_forward.3} parent=0 // loop_pre_header
    _
  $region3: #{stem_forward.3} parent=0 // loop_header
    %s7 = sphi 0, %s11
    %p8 = scmp.ge.s32.totalorder %s7, 4
    %s17 = sphi 0, %s19
    %s20 = sphi 0, %s17
    %s21 = sphi 0, %s20
    %s37 = sphi 0, %s21
    %s43 = sphi 0, %s45
    %s46 = sphi 0, %s43
    %s47 = sphi 0, %s46
    %s63 = sphi 0, %s47
  $region4: #{stem_forward.3} parent=0 // loop_header_branch
    %10 = sbr.rel (%p8) target = $region8
  $region5: #{stem_forward.3} parent=0 // loop_body
    %s12 = ssub.s32 %s7, 1
    %s13 = ssub.s32 %s7, 2
    %s14 = sadd.s32 %s7, 1
    %s15 = ssub.s32 %s7, %s14
    %p16 = scmp.eq.s32.totalorder %s15, 0
    %s18 = sadd.s32 %s17, 1
    %s19 = scalar_select %p16, %s17, %s18
    %p22 = pneg %p16
    %p23 = scmp.eq.s32.totalorder %s7, 1
    %p24 = por %p22, %p23
    %p25 = scmp.ne.s32.totalorder %s17, %s20
    %p26 = scmp.eq.s32.totalorder %s7, 0
    %p27 = por %p25, %p26
    %p28 = scmp.ne.s32.totalorder %s17, %s20
    %p29 = scmp.eq.s32.totalorder %s12, 1
    %p30 = por %p28, %p29
    %p31 = scmp.ne.s32.totalorder %s20, %s21
    %p32 = scmp.eq.s32.totalorder %s12, 0
    %p33 = por %p31, %p32
    %p34 = scmp.ne.s32.totalorder %s20, %s21
    %p35 = scmp.eq.s32.totalorder %s13, 1
    %p36 = por %p34, %p35
    %p38 = scmp.ne.s32.totalorder %s21, %s37
    %p39 = scmp.eq.s32.totalorder %s13, 0
    %p40 = por %p38, %p39
    %s41 = ssub.s32 %s7, %s14
    %p42 = scmp.eq.s32.totalorder %s41, 0
    %s44 = sadd.s32 %s43, 1
    %s45 = scalar_select %p42, %s43, %s44
    %p48 = pneg %p42
    %p49 = scmp.eq.s32.totalorder %s7, 1
    %p50 = por %p48, %p49
    %p51 = scmp.ne.s32.totalorder %s43, %s46
    %p52 = scmp.eq.s32.totalorder %s7, 0
    %p53 = por %p51, %p52
    %p54 = scmp.ne.s32.totalorder %s43, %s46
    %p55 = scmp.eq.s32.totalorder %s12, 1
    %p56 = por %p54, %p55
    %p57 = scmp.ne.s32.totalorder %s46, %s47
    %p58 = scmp.eq.s32.totalorder %s12, 0
    %p59 = por %p57, %p58
    %p60 = scmp.ne.s32.totalorder %s46, %s47
    %p61 = scmp.eq.s32.totalorder %s13, 1
    %p62 = por %p60, %p61
    %p64 = scmp.ne.s32.totalorder %s47, %s63
    %p65 = scmp.eq.s32.totalorder %s13, 0
    %p66 = por %p64, %p65
    %p67 = scmp.le.s32.totalorder 1, %s7
    %p68 = scmp.lt.s32.totalorder %s7, 3
    %p69 = pnand %p67, %p68
    %p70 = pneg %p69
    // Predicated region
    $region9: #{stem_forward.3} parent=5 // pred_check
      _
    $region10: #{stem_forward.3} parent=5 // pred_check_branch
      %72 = sbr.rel (%p69) target = $region12
    $region11: #{stem_forward.3} parent=5 // pred_region
      %s73 = ssub.s32 %s7, 1
    $region12: #{stem_forward.3} parent=5 // pred_fallthru
      _
    %p74 = scmp.lt.s32.totalorder %s7, 2
    // Predicated region
    $region13: #{stem_forward.3} parent=5 // pred_check
      %p75 = pneg %p74
    $region14: #{stem_forward.3} parent=5 // pred_check_branch
      %77 = sbr.rel (%p75) target = $region16
    $region15: #{stem_forward.3} parent=5 // pred_region
      // Predicated region
      $region17: #{stem_forward.3} parent=15 // pred_check
        %p78 = pneg %p27
      $region18: #{stem_forward.3} parent=15 // pred_check_branch
        %80 = sbr.rel (%p78) target = $region20
      $region19: #{stem_forward.3} parent=15 // pred_region
        %p81 = scmp.lt.s32.totalorder %s7, 1
        %s82 = scalar_select %p81, %s7, 1
        %s83 = smul.addr %s82, 170
        %s84 = smul.addr %s83, 4
        %s85 = scalar_lea.vmem %s0, %s84
      $region20: #{stem_forward.3} parent=15 // pred_fallthru
        _
    $region16: #{stem_forward.3} parent=5 // pred_fallthru
      _
    %p86 = scmp.le.s32.totalorder 1, %s7
    %p87 = scmp.lt.s32.totalorder %s7, 3
    %p88 = pnand %p86, %p87
    %p89 = pneg %p88
    // Predicated region
    $region21: #{stem_forward.3} parent=5 // pred_check
      _
    $region22: #{stem_forward.3} parent=5 // pred_check_branch
      %91 = sbr.rel (%p88) target = $region24
    $region23: #{stem_forward.3} parent=5 // pred_region
      %s92 = ssub.s32 %s7, 1
      %p93 = scmp.lt.s32.totalorder %s12, 1
      %s94 = scalar_select %p93, %s12, 1
      %s95 = smul.addr %s94, 170
      %s96 = smul.addr %s95, 4
      %s97 = scalar_lea.vmem %s0, %s96
      %p98 = pneg %p33
      %p99 = pneg %p30
      %p100 = pneg %p59
      %p101 = pneg %p56
      %p102 = scmp.lt.s32.totalorder %s12, 1
      %s103 = scalar_select %p102, %s12, 1
      %s104 = smul.addr %s103, 128
      %s105 = smul.addr %s104, 4
      %s106 = scalar_lea.vmem %s1, %s105
      %p107 = scmp.lt.s32.totalorder %s12, 1
      %s108 = scalar_select %p107, %s12, 1
      %s109 = smul.addr %s108, 170
      %s110 = smul.addr %s109, 4
      %s111 = scalar_lea.vmem %s0, %s110
      %p112 = scmp.lt.s32.totalorder %s12, 1
      %s113 = scalar_select %p112, %s12, 1
      %s114 = smul.addr %s113, 128
      %s115 = smul.addr %s114, 4
      %s116 = scalar_lea.vmem %s1, %s115
      %v117 = vld [vmem:[%s111] sm:$0xf]
      %v118 = vld [vmem:[%s111 + $0x4] sm:$0xf]
      %v119 = vld [vmem:[%s111 + $0x8] sm:$0xf]
      %v120 = vld [vmem:[%s111 + $0xc] sm:$0xf]
      %v121 = vld [vmem:[%s111 + $0x14] sm:$0xf]
      %v122 = vld [vmem:[%s111 + $0x18] sm:$0xf]
      %v123 = vld [vmem:[%s111 + $0x1c] sm:$0xf]
      %v124 = vld [vmem:[%s111 + $0x20] sm:$0xf]
      %v125 = vld [vmem:[%s111 + $0x28] sm:$0xf]
      %v126 = vld [vmem:[%s111 + $0x2c] sm:$0xf]
      %v127 = vld [vmem:[%s111 + $0x30] sm:$0xf]
      %v128 = vld [vmem:[%s111 + $0x34] sm:$0xf]
      %v129 = vld [vmem:[%s111 + $0x3c] sm:$0xf]
      %v130 = vld [vmem:[%s111 + $0x40] sm:$0xf]
      %v131 = vld [vmem:[%s111 + $0x44] sm:$0xf]
      %v132 = vld [vmem:[%s111 + $0x48] sm:$0xf]
      %v133 = vld [vmem:[%s111 + $0x50] sm:$0xf]
      %v134 = vld [vmem:[%s111 + $0x54] sm:$0xf]
      %v135 = vld [vmem:[%s111 + $0x58] sm:$0xf]
      %v136 = vld [vmem:[%s111 + $0x5c] sm:$0xf]
      %v137 = vld [vmem:[%s111 + $0x64] sm:$0xf]
      %v138 = vld [vmem:[%s111 + $0x68] sm:$0xf]
      %v139 = vld [vmem:[%s111 + $0x6c] sm:$0xf]
      %v140 = vld [vmem:[%s111 + $0x70] sm:$0xf]
      %v141 = vld [vmem:[%s111 + $0x78] sm:$0xf]
      %v142 = vld [vmem:[%s111 + $0x7c] sm:$0xf]
      %v143 = vld [vmem:[%s111 + $0x80] sm:$0xf]
      %v144 = vld [vmem:[%s111 + $0x84] sm:$0xf]
      %v145 = vld [vmem:[%s111 + $0x8c] sm:$0xf]
      %v146 = vld [vmem:[%s111 + $0x90] sm:$0xf]
      %v147 = vld [vmem:[%s111 + $0x94] sm:$0xf]
      %v148 = vld [vmem:[%s111 + $0x98] sm:$0xf]
      %v149 = vld [vmem:[%s111 + $0xa0] sm:$0xf]
      %v150 = vld [vmem:[%s111 + $0xa4] sm:$0xf]
      %v151 = vld [vmem:[%s111 + $0xa8] sm:$0xf]
      %v152 = vld [vmem:[%s111 + $0xac] sm:$0xf]
      %v153 = vld [vmem:[%s111 + $0xb4] sm:$0xf]
      %v154 = vld [vmem:[%s111 + $0xb8] sm:$0xf]
      %v155 = vld [vmem:[%s111 + $0xbc] sm:$0xf]
      %v156 = vld [vmem:[%s111 + $0xc0] sm:$0xf]
      %v157 = vld [vmem:[%s111 + $0xc8] sm:$0xf]
      %v158 = vld [vmem:[%s111 + $0xcc] sm:$0xf]
      %v159 = vld [vmem:[%s111 + $0xd0] sm:$0xf]
      %v160 = vld [vmem:[%s111 + $0xd4] sm:$0xf]
      %v161 = vld [vmem:[%s111 + $0xdc] sm:$0xf]
      %v162 = vld [vmem:[%s111 + $0xe0] sm:$0xf]
      %v163 = vld [vmem:[%s111 + $0xe4] sm:$0xf]
      %v164 = vld [vmem:[%s111 + $0xe8] sm:$0xf]
      %v165 = vld [vmem:[%s111 + $0xf0] sm:$0xf]
      %v166 = vld [vmem:[%s111 + $0xf4] sm:$0xf]
      %v167 = vld [vmem:[%s111 + $0xf8] sm:$0xf]
      %v168 = vld [vmem:[%s111 + $0xfc] sm:$0xf]
      %v169 = vld [vmem:[%s111 + $0x104] sm:$0xf]
      %v170 = vld [vmem:[%s111 + $0x108] sm:$0xf]
      %v171 = vld [vmem:[%s111 + $0x10c] sm:$0xf]
      %v172 = vld [vmem:[%s111 + $0x110] sm:$0xf]
      %v173 = vld [vmem:[%s111 + $0x118] sm:$0xf]
      %v174 = vld [vmem:[%s111 + $0x11c] sm:$0xf]
      %v175 = vld [vmem:[%s111 + $0x120] sm:$0xf]
      %v176 = vld [vmem:[%s111 + $0x124] sm:$0xf]
      %v177 = vld [vmem:[%s111 + $0x12c] sm:$0xf]
      %v178 = vld [vmem:[%s111 + $0x130] sm:$0xf]
      %v179 = vld [vmem:[%s111 + $0x134] sm:$0xf]
      %v180 = vld [vmem:[%s111 + $0x138] sm:$0xf]
      %v181 = vld [vmem:[%s111 + $0x140] sm:$0xf]
      %v182 = vld [vmem:[%s111 + $0x144] sm:$0xf]
      %v183 = vld [vmem:[%s111 + $0x148] sm:$0xf]
      %v184 = vld [vmem:[%s111 + $0x14c] sm:$0xf]
      %v185 = vld [vmem:[%s111 + $0x154] sm:$0xf]
      %v186 = vld [vmem:[%s111 + $0x158] sm:$0xf]
      %v187 = vld [vmem:[%s111 + $0x15c] sm:$0xf]
      %v188 = vld [vmem:[%s111 + $0x160] sm:$0xf]
      %v189 = vld [vmem:[%s111 + $0x168] sm:$0xf]
      %v190 = vld [vmem:[%s111 + $0x16c] sm:$0xf]
      %v191 = vld [vmem:[%s111 + $0x170] sm:$0xf]
      %v192 = vld [vmem:[%s111 + $0x174] sm:$0xf]
      %v193 = vld [vmem:[%s111 + $0x17c] sm:$0xf]
      %v194 = vld [vmem:[%s111 + $0x180] sm:$0xf]
      %v195 = vld [vmem:[%s111 + $0x184] sm:$0xf]
      %v196 = vld [vmem:[%s111 + $0x188] sm:$0xf]
      %v197 = vld [vmem:[%s111 + $0x190] sm:$0xf]
      %v198 = vld [vmem:[%s111 + $0x194] sm:$0xf]
      %v199 = vld [vmem:[%s111 + $0x198] sm:$0xf]
      %v200 = vld [vmem:[%s111 + $0x19c] sm:$0xf]
      %v201 = vld [vmem:[%s111 + $0x1a4] sm:$0xf]
      %v202 = vld [vmem:[%s111 + $0x1a8] sm:$0xf]
      %v203 = vld [vmem:[%s111 + $0x1ac] sm:$0xf]
      %v204 = vld [vmem:[%s111 + $0x1b0] sm:$0xf]
      %v205 = vld [vmem:[%s111 + $0x1b8] sm:$0xf]
      %v206 = vld [vmem:[%s111 + $0x1bc] sm:$0xf]
      %v207 = vld [vmem:[%s111 + $0x1c0] sm:$0xf]
      %v208 = vld [vmem:[%s111 + $0x1c4] sm:$0xf]
      %v209 = vld [vmem:[%s111 + $0x1cc] sm:$0xf]
      %v210 = vld [vmem:[%s111 + $0x1d0] sm:$0xf]
      %v211 = vld [vmem:[%s111 + $0x1d4] sm:$0xf]
      %v212 = vld [vmem:[%s111 + $0x1d8] sm:$0xf]
      %v213 = vld [vmem:[%s111 + $0x1e0] sm:$0xf]
      %v214 = vld [vmem:[%s111 + $0x1e4] sm:$0xf]
      %v215 = vld [vmem:[%s111 + $0x1e8] sm:$0xf]
      %v216 = vld [vmem:[%s111 + $0x1ec] sm:$0xf]
      %v217 = vld [vmem:[%s111 + $0x1f4] sm:$0xf]
      %v218 = vld [vmem:[%s111 + $0x1f8] sm:$0xf]
      %v219 = vld [vmem:[%s111 + $0x1fc] sm:$0xf]
      %v220 = vld [vmem:[%s111 + $0x200] sm:$0xf]
      %v221 = vld [vmem:[%s111 + $0x208] sm:$0xf]
      %v222 = vld [vmem:[%s111 + $0x20c] sm:$0xf]
      %v223 = vld [vmem:[%s111 + $0x210] sm:$0xf]
      %v224 = vld [vmem:[%s111 + $0x214] sm:$0xf]
      %v225 = vld [vmem:[%s111 + $0x21c] sm:$0xf]
      %v226 = vld [vmem:[%s111 + $0x220] sm:$0xf]
      %v227 = vld [vmem:[%s111 + $0x224] sm:$0xf]
      %v228 = vld [vmem:[%s111 + $0x228] sm:$0xf]
      %v229 = vld [vmem:[%s111 + $0x230] sm:$0xf]
      %v230 = vld [vmem:[%s111 + $0x234] sm:$0xf]
      %v231 = vld [vmem:[%s111 + $0x238] sm:$0xf]
      %v232 = vld [vmem:[%s111 + $0x23c] sm:$0xf]
      %v233 = vld [vmem:[%s111 + $0x244] sm:$0xf]
      %v234 = vld [vmem:[%s111 + $0x248] sm:$0xf]
      %v235 = vld [vmem:[%s111 + $0x24c] sm:$0xf]
      %v236 = vld [vmem:[%s111 + $0x250] sm:$0xf]
      %v237 = vld [vmem:[%s111 + $0x258] sm:$0xf]
      %v238 = vld [vmem:[%s111 + $0x25c] sm:$0xf]
      %v239 = vld [vmem:[%s111 + $0x260] sm:$0xf]
      %v240 = vld [vmem:[%s111 + $0x264] sm:$0xf]
      %v241 = vld [vmem:[%s111 + $0x26c] sm:$0xf]
      %v242 = vld [vmem:[%s111 + $0x270] sm:$0xf]
      %v243 = vld [vmem:[%s111 + $0x274] sm:$0xf]
      %v244 = vld [vmem:[%s111 + $0x278] sm:$0xf]
      %v245 = vld [vmem:[%s111 + $0x10] sm:$0x1]
      %v246 = vld [vmem:[%s111 + $0x24] sm:$0x1]
      %v247 = vld [vmem:[%s111 + $0x38] sm:$0x1]
      %v248 = vld [vmem:[%s111 + $0x4c] sm:$0x1]
      %v249 = vld [vmem:[%s111 + $0x60] sm:$0x1]
      %v250 = vld [vmem:[%s111 + $0x74] sm:$0x1]
      %v251 = vld [vmem:[%s111 + $0x88] sm:$0x1]
      %v252 = vld [vmem:[%s111 + $0x9c] sm:$0x1]
      %v253 = vld [vmem:[%s111 + $0xb0] sm:$0x1]
      %v254 = vld [vmem:[%s111 + $0xc4] sm:$0x1]
      %v255 = vld [vmem:[%s111 + $0xd8] sm:$0x1]
      %v256 = vld [vmem:[%s111 + $0xec] sm:$0x1]
      %v257 = vld [vmem:[%s111 + $0x100] sm:$0x1]
      %v258 = vld [vmem:[%s111 + $0x114] sm:$0x1]
      %v259 = vld [vmem:[%s111 + $0x128] sm:$0x1]
      %v260 = vld [vmem:[%s111 + $0x13c] sm:$0x1]
      %v261 = vld [vmem:[%s111 + $0x150] sm:$0x1]
      %v262 = vld [vmem:[%s111 + $0x164] sm:$0x1]
      %v263 = vld [vmem:[%s111 + $0x178] sm:$0x1]
      %v264 = vld [vmem:[%s111 + $0x18c] sm:$0x1]
      %v265 = vld [vmem:[%s111 + $0x1a0] sm:$0x1]
      %v266 = vld [vmem:[%s111 + $0x1b4] sm:$0x1]
      %v267 = vld [vmem:[%s111 + $0x1c8] sm:$0x1]
      %v268 = vld [vmem:[%s111 + $0x1dc] sm:$0x1]
      %v269 = vld [vmem:[%s111 + $0x1f0] sm:$0x1]
      %v270 = vld [vmem:[%s111 + $0x204] sm:$0x1]
      %v271 = vld [vmem:[%s111 + $0x218] sm:$0x1]
      %v272 = vld [vmem:[%s111 + $0x22c] sm:$0x1]
      %v273 = vld [vmem:[%s111 + $0x240] sm:$0x1]
      %v274 = vld [vmem:[%s111 + $0x254] sm:$0x1]
      %v275 = vld [vmem:[%s111 + $0x268] sm:$0x1]
      %v276 = vld [vmem:[%s111 + $0x27c] sm:$0x1]
      %vm277 = vsmask.f32 3328
      %vm278 = vsmask.f32 7440
      %vm279 = vmor %vm277, %vm278
      %v281 = vshrl.u32 %v117, 16
      %v283 = vrot.slane %v281, 4
      %v284 = vshll.u32 %v117, 16
      %v286 = vrot.slane %v284, 5
      %v287 = vor.u32 %v283, %v286
      %v288 = vrot.slane %v287, 4
      %v290 = vshll.u32 %v118, 16
      %v292 = vrot.slane %v290, 5
      %v293 = vsel %vm279, %v288, %v292
      %v294 = vshrl.u32 %v118, 16
      %v296 = vrot.slane %v294, 4
      %v297 = vor.u32 %v296, %v292
      %v298 = vrot.slane %v297, 4
      %v300 = vshll.u32 %v119, 16
      %v302 = vrot.slane %v300, 5
      %v303 = vsel %vm279, %v298, %v302
      %v304 = vshrl.u32 %v119, 16
      %v306 = vrot.slane %v304, 4
      %v307 = vor.u32 %v306, %v302
      %v308 = vrot.slane %v307, 4
      %v310 = vshll.u32 %v120, 16
      %v312 = vrot.slane %v310, 5
      %v313 = vsel %vm279, %v308, %v312
      %v314 = vshrl.u32 %v120, 16
      %v316 = vrot.slane %v314, 4
      %v317 = vor.u32 %v316, %v312
      %v318 = vrot.slane %v317, 4
      %v320 = vshll.u32 %v245, 16
      %v322 = vrot.slane %v320, 5
      %v323 = vsel %vm279, %v318, %v322
      %v325 = vshrl.u32 %v121, 16
      %v327 = vrot.slane %v325, 4
      %v328 = vshll.u32 %v121, 16
      %v330 = vrot.slane %v328, 5
      %v331 = vor.u32 %v327, %v330
      %v332 = vrot.slane %v331, 4
      %v334 = vshll.u32 %v122, 16
      %v336 = vrot.slane %v334, 5
      %v337 = vsel %vm279, %v332, %v336
      %v338 = vshrl.u32 %v122, 16
      %v340 = vrot.slane %v338, 4
      %v341 = vor.u32 %v340, %v336
      %v342 = vrot.slane %v341, 4
      %v344 = vshll.u32 %v123, 16
      %v346 = vrot.slane %v344, 5
      %v347 = vsel %vm279, %v342, %v346
      %v348 = vshrl.u32 %v123, 16
      %v350 = vrot.slane %v348, 4
      %v351 = vor.u32 %v350, %v346
      %v352 = vrot.slane %v351, 4
      %v354 = vshll.u32 %v124, 16
      %v356 = vrot.slane %v354, 5
      %v357 = vsel %vm279, %v352, %v356
      %v358 = vshrl.u32 %v124, 16
      %v360 = vrot.slane %v358, 4
      %v361 = vor.u32 %v360, %v356
      %v362 = vrot.slane %v361, 4
      %v364 = vshll.u32 %v246, 16
      %v366 = vrot.slane %v364, 5
      %v367 = vsel %vm279, %v362, %v366
      %v369 = vshrl.u32 %v125, 16
      %v371 = vrot.slane %v369, 4
      %v372 = vshll.u32 %v125, 16
      %v374 = vrot.slane %v372, 5
      %v375 = vor.u32 %v371, %v374
      %v376 = vrot.slane %v375, 4
      %v378 = vshll.u32 %v126, 16
      %v380 = vrot.slane %v378, 5
      %v381 = vsel %vm279, %v376, %v380
      %v382 = vshrl.u32 %v126, 16
      %v384 = vrot.slane %v382, 4
      %v385 = vor.u32 %v384, %v380
      %v386 = vrot.slane %v385, 4
      %v388 = vshll.u32 %v127, 16
      %v390 = vrot.slane %v388, 5
      %v391 = vsel %vm279, %v386, %v390
      %v392 = vshrl.u32 %v127, 16
      %v394 = vrot.slane %v392, 4
      %v395 = vor.u32 %v394, %v390
      %v396 = vrot.slane %v395, 4
      %v398 = vshll.u32 %v128, 16
      %v400 = vrot.slane %v398, 5
      %v401 = vsel %vm279, %v396, %v400
      %v402 = vshrl.u32 %v128, 16
      %v404 = vrot.slane %v402, 4
      %v405 = vor.u32 %v404, %v400
      %v406 = vrot.slane %v405, 4
      %v408 = vshll.u32 %v247, 16
      %v410 = vrot.slane %v408, 5
      %v411 = vsel %vm279, %v406, %v410
      %v413 = vshrl.u32 %v129, 16
      %v415 = vrot.slane %v413, 4
      %v416 = vshll.u32 %v129, 16
      %v418 = vrot.slane %v416, 5
      %v419 = vor.u32 %v415, %v418
      %v420 = vrot.slane %v419, 4
      %v422 = vshll.u32 %v130, 16
      %v424 = vrot.slane %v422, 5
      %v425 = vsel %vm279, %v420, %v424
      %v426 = vshrl.u32 %v130, 16
      %v428 = vrot.slane %v426, 4
      %v429 = vor.u32 %v428, %v424
      %v430 = vrot.slane %v429, 4
      %v432 = vshll.u32 %v131, 16
      %v434 = vrot.slane %v432, 5
      %v435 = vsel %vm279, %v430, %v434
      %v436 = vshrl.u32 %v131, 16
      %v438 = vrot.slane %v436, 4
      %v439 = vor.u32 %v438, %v434
      %v440 = vrot.slane %v439, 4
      %v442 = vshll.u32 %v132, 16
      %v444 = vrot.slane %v442, 5
      %v445 = vsel %vm279, %v440, %v444
      %v446 = vshrl.u32 %v132, 16
      %v448 = vrot.slane %v446, 4
      %v449 = vor.u32 %v448, %v444
      %v450 = vrot.slane %v449, 4
      %v452 = vshll.u32 %v248, 16
      %v454 = vrot.slane %v452, 5
      %v455 = vsel %vm279, %v450, %v454
      %v457 = vshrl.u32 %v133, 16
      %v459 = vrot.slane %v457, 4
      %v460 = vshll.u32 %v133, 16
      %v462 = vrot.slane %v460, 5
      %v463 = vor.u32 %v459, %v462
      %v464 = vrot.slane %v463, 4
      %v466 = vshll.u32 %v134, 16
      %v468 = vrot.slane %v466, 5
      %v469 = vsel %vm279, %v464, %v468
      %v470 = vshrl.u32 %v134, 16
      %v472 = vrot.slane %v470, 4
      %v473 = vor.u32 %v472, %v468
      %v474 = vrot.slane %v473, 4
      %v476 = vshll.u32 %v135, 16
      %v478 = vrot.slane %v476, 5
      %v479 = vsel %vm279, %v474, %v478
      %v480 = vshrl.u32 %v135, 16
      %v482 = vrot.slane %v480, 4
      %v483 = vor.u32 %v482, %v478
      %v484 = vrot.slane %v483, 4
      %v486 = vshll.u32 %v136, 16
      %v488 = vrot.slane %v486, 5
      %v489 = vsel %vm279, %v484, %v488
      %v490 = vshrl.u32 %v136, 16
      %v492 = vrot.slane %v490, 4
      %v493 = vor.u32 %v492, %v488
      %v494 = vrot.slane %v493, 4
      %v496 = vshll.u32 %v249, 16
      %v498 = vrot.slane %v496, 5
      %v499 = vsel %vm279, %v494, %v498
      %v501 = vshrl.u32 %v137, 16
      %v503 = vrot.slane %v501, 4
      %v504 = vshll.u32 %v137, 16
      %v506 = vrot.slane %v504, 5
      %v507 = vor.u32 %v503, %v506
      %v508 = vrot.slane %v507, 4
      %v510 = vshll.u32 %v138, 16
      %v512 = vrot.slane %v510, 5
      %v513 = vsel %vm279, %v508, %v512
      %v514 = vshrl.u32 %v138, 16
      %v516 = vrot.slane %v514, 4
      %v517 = vor.u32 %v516, %v512
      %v518 = vrot.slane %v517, 4
      %v520 = vshll.u32 %v139, 16
      %v522 = vrot.slane %v520, 5
      %v523 = vsel %vm279, %v518, %v522
      %v524 = vshrl.u32 %v139, 16
      %v526 = vrot.slane %v524, 4
      %v527 = vor.u32 %v526, %v522
      %v528 = vrot.slane %v527, 4
      %v530 = vshll.u32 %v140, 16
      %v532 = vrot.slane %v530, 5
      %v533 = vsel %vm279, %v528, %v532
      %v534 = vshrl.u32 %v140, 16
      %v536 = vrot.slane %v534, 4
      %v537 = vor.u32 %v536, %v532
      %v538 = vrot.slane %v537, 4
      %v540 = vshll.u32 %v250, 16
      %v542 = vrot.slane %v540, 5
      %v543 = vsel %vm279, %v538, %v542
      %v545 = vshrl.u32 %v141, 16
      %v547 = vrot.slane %v545, 4
      %v548 = vshll.u32 %v141, 16
      %v550 = vrot.slane %v548, 5
      %v551 = vor.u32 %v547, %v550
      %v552 = vrot.slane %v551, 4
      %v554 = vshll.u32 %v142, 16
      %v556 = vrot.slane %v554, 5
      %v557 = vsel %vm279, %v552, %v556
      %v558 = vshrl.u32 %v142, 16
      %v560 = vrot.slane %v558, 4
      %v561 = vor.u32 %v560, %v556
      %v562 = vrot.slane %v561, 4
      %v564 = vshll.u32 %v143, 16
      %v566 = vrot.slane %v564, 5
      %v567 = vsel %vm279, %v562, %v566
      %v568 = vshrl.u32 %v143, 16
      %v570 = vrot.slane %v568, 4
      %v571 = vor.u32 %v570, %v566
      %v572 = vrot.slane %v571, 4
      %v574 = vshll.u32 %v144, 16
      %v576 = vrot.slane %v574, 5
      %v577 = vsel %vm279, %v572, %v576
      %v578 = vshrl.u32 %v144, 16
      %v580 = vrot.slane %v578, 4
      %v581 = vor.u32 %v580, %v576
      %v582 = vrot.slane %v581, 4
      %v584 = vshll.u32 %v251, 16
      %v586 = vrot.slane %v584, 5
      %v587 = vsel %vm279, %v582, %v586
      %v589 = vshrl.u32 %v145, 16
      %v591 = vrot.slane %v589, 4
      %v592 = vshll.u32 %v145, 16
      %v594 = vrot.slane %v592, 5
      %v595 = vor.u32 %v591, %v594
      %v596 = vrot.slane %v595, 4
      %v598 = vshll.u32 %v146, 16
      %v600 = vrot.slane %v598, 5
      %v601 = vsel %vm279, %v596, %v600
      %v602 = vshrl.u32 %v146, 16
      %v604 = vrot.slane %v602, 4
      %v605 = vor.u32 %v604, %v600
      %v606 = vrot.slane %v605, 4
      %v608 = vshll.u32 %v147, 16
      %v610 = vrot.slane %v608, 5
      %v611 = vsel %vm279, %v606, %v610
      %v612 = vshrl.u32 %v147, 16
      %v614 = vrot.slane %v612, 4
      %v615 = vor.u32 %v614, %v610
      %v616 = vrot.slane %v615, 4
      %v618 = vshll.u32 %v148, 16
      %v620 = vrot.slane %v618, 5
      %v621 = vsel %vm279, %v616, %v620
      %v622 = vshrl.u32 %v148, 16
      %v624 = vrot.slane %v622, 4
      %v625 = vor.u32 %v624, %v620
      %v626 = vrot.slane %v625, 4
      %v628 = vshll.u32 %v252, 16
      %v630 = vrot.slane %v628, 5
      %v631 = vsel %vm279, %v626, %v630
      %v633 = vshrl.u32 %v149, 16
      %v635 = vrot.slane %v633, 4
      %v636 = vshll.u32 %v149, 16
      %v638 = vrot.slane %v636, 5
      %v639 = vor.u32 %v635, %v638
      %v640 = vrot.slane %v639, 4
      %v642 = vshll.u32 %v150, 16
      %v644 = vrot.slane %v642, 5
      %v645 = vsel %vm279, %v640, %v644
      %v646 = vshrl.u32 %v150, 16
      %v648 = vrot.slane %v646, 4
      %v649 = vor.u32 %v648, %v644
      %v650 = vrot.slane %v649, 4
      %v652 = vshll.u32 %v151, 16
      %v654 = vrot.slane %v652, 5
      %v655 = vsel %vm279, %v650, %v654
      %v656 = vshrl.u32 %v151, 16
      %v658 = vrot.slane %v656, 4
      %v659 = vor.u32 %v658, %v654
      %v660 = vrot.slane %v659, 4
      %v662 = vshll.u32 %v152, 16
      %v664 = vrot.slane %v662, 5
      %v665 = vsel %vm279, %v660, %v664
      %v666 = vshrl.u32 %v152, 16
      %v668 = vrot.slane %v666, 4
      %v669 = vor.u32 %v668, %v664
      %v670 = vrot.slane %v669, 4
      %v672 = vshll.u32 %v253, 16
      %v674 = vrot.slane %v672, 5
      %v675 = vsel %vm279, %v670, %v674
      %v677 = vshrl.u32 %v153, 16
      %v679 = vrot.slane %v677, 4
      %v680 = vshll.u32 %v153, 16
      %v682 = vrot.slane %v680, 5
      %v683 = vor.u32 %v679, %v682
      %v684 = vrot.slane %v683, 4
      %v686 = vshll.u32 %v154, 16
      %v688 = vrot.slane %v686, 5
      %v689 = vsel %vm279, %v684, %v688
      %v690 = vshrl.u32 %v154, 16
      %v692 = vrot.slane %v690, 4
      %v693 = vor.u32 %v692, %v688
      %v694 = vrot.slane %v693, 4
      %v696 = vshll.u32 %v155, 16
      %v698 = vrot.slane %v696, 5
      %v699 = vsel %vm279, %v694, %v698
      %v700 = vshrl.u32 %v155, 16
      %v702 = vrot.slane %v700, 4
      %v703 = vor.u32 %v702, %v698
      %v704 = vrot.slane %v703, 4
      %v706 = vshll.u32 %v156, 16
      %v708 = vrot.slane %v706, 5
      %v709 = vsel %vm279, %v704, %v708
      %v710 = vshrl.u32 %v156, 16
      %v712 = vrot.slane %v710, 4
      %v713 = vor.u32 %v712, %v708
      %v714 = vrot.slane %v713, 4
      %v716 = vshll.u32 %v254, 16
      %v718 = vrot.slane %v716, 5
      %v719 = vsel %vm279, %v714, %v718
      %v721 = vshrl.u32 %v157, 16
      %v723 = vrot.slane %v721, 4
      %v724 = vshll.u32 %v157, 16
      %v726 = vrot.slane %v724, 5
      %v727 = vor.u32 %v723, %v726
      %v728 = vrot.slane %v727, 4
      %v730 = vshll.u32 %v158, 16
      %v732 = vrot.slane %v730, 5
      %v733 = vsel %vm279, %v728, %v732
      %v734 = vshrl.u32 %v158, 16
      %v736 = vrot.slane %v734, 4
      %v737 = vor.u32 %v736, %v732
      %v738 = vrot.slane %v737, 4
      %v740 = vshll.u32 %v159, 16
      %v742 = vrot.slane %v740, 5
      %v743 = vsel %vm279, %v738, %v742
      %v744 = vshrl.u32 %v159, 16
      %v746 = vrot.slane %v744, 4
      %v747 = vor.u32 %v746, %v742
      %v748 = vrot.slane %v747, 4
      %v750 = vshll.u32 %v160, 16
      %v752 = vrot.slane %v750, 5
      %v753 = vsel %vm279, %v748, %v752
      %v754 = vshrl.u32 %v160, 16
      %v756 = vrot.slane %v754, 4
      %v757 = vor.u32 %v756, %v752
      %v758 = vrot.slane %v757, 4
      %v760 = vshll.u32 %v255, 16
      %v762 = vrot.slane %v760, 5
      %v763 = vsel %vm279, %v758, %v762
      %v765 = vshrl.u32 %v161, 16
      %v767 = vrot.slane %v765, 4
      %v768 = vshll.u32 %v161, 16
      %v770 = vrot.slane %v768, 5
      %v771 = vor.u32 %v767, %v770
      %v772 = vrot.slane %v771, 4
      %v774 = vshll.u32 %v162, 16
      %v776 = vrot.slane %v774, 5
      %v777 = vsel %vm279, %v772, %v776
      %v778 = vshrl.u32 %v162, 16
      %v780 = vrot.slane %v778, 4
      %v781 = vor.u32 %v780, %v776
      %v782 = vrot.slane %v781, 4
      %v784 = vshll.u32 %v163, 16
      %v786 = vrot.slane %v784, 5
      %v787 = vsel %vm279, %v782, %v786
      %v788 = vshrl.u32 %v163, 16
      %v790 = vrot.slane %v788, 4
      %v791 = vor.u32 %v790, %v786
      %v792 = vrot.slane %v791, 4
      %v794 = vshll.u32 %v164, 16
      %v796 = vrot.slane %v794, 5
      %v797 = vsel %vm279, %v792, %v796
      %v798 = vshrl.u32 %v164, 16
      %v800 = vrot.slane %v798, 4
      %v801 = vor.u32 %v800, %v796
      %v802 = vrot.slane %v801, 4
      %v804 = vshll.u32 %v256, 16
      %v806 = vrot.slane %v804, 5
      %v807 = vsel %vm279, %v802, %v806
      %v809 = vshrl.u32 %v165, 16
      %v811 = vrot.slane %v809, 4
      %v812 = vshll.u32 %v165, 16
      %v814 = vrot.slane %v812, 5
      %v815 = vor.u32 %v811, %v814
      %v816 = vrot.slane %v815, 4
      %v818 = vshll.u32 %v166, 16
      %v820 = vrot.slane %v818, 5
      %v821 = vsel %vm279, %v816, %v820
      %v822 = vshrl.u32 %v166, 16
      %v824 = vrot.slane %v822, 4
      %v825 = vor.u32 %v824, %v820
      %v826 = vrot.slane %v825, 4
      %v828 = vshll.u32 %v167, 16
      %v830 = vrot.slane %v828, 5
      %v831 = vsel %vm279, %v826, %v830
      %v832 = vshrl.u32 %v167, 16
      %v834 = vrot.slane %v832, 4
      %v835 = vor.u32 %v834, %v830
      %v836 = vrot.slane %v835, 4
      %v838 = vshll.u32 %v168, 16
      %v840 = vrot.slane %v838, 5
      %v841 = vsel %vm279, %v836, %v840
      %v842 = vshrl.u32 %v168, 16
      %v844 = vrot.slane %v842, 4
      %v845 = vor.u32 %v844, %v840
      %v846 = vrot.slane %v845, 4
      %v848 = vshll.u32 %v257, 16
      %v850 = vrot.slane %v848, 5
      %v851 = vsel %vm279, %v846, %v850
      %v853 = vshrl.u32 %v169, 16
      %v855 = vrot.slane %v853, 4
      %v856 = vshll.u32 %v169, 16
      %v858 = vrot.slane %v856, 5
      %v859 = vor.u32 %v855, %v858
      %v860 = vrot.slane %v859, 4
      %v862 = vshll.u32 %v170, 16
      %v864 = vrot.slane %v862, 5
      %v865 = vsel %vm279, %v860, %v864
      %v866 = vshrl.u32 %v170, 16
      %v868 = vrot.slane %v866, 4
      %v869 = vor.u32 %v868, %v864
      %v870 = vrot.slane %v869, 4
      %v872 = vshll.u32 %v171, 16
      %v874 = vrot.slane %v872, 5
      %v875 = vsel %vm279, %v870, %v874
      %v876 = vshrl.u32 %v171, 16
      %v878 = vrot.slane %v876, 4
      %v879 = vor.u32 %v878, %v874
      %v880 = vrot.slane %v879, 4
      %v882 = vshll.u32 %v172, 16
      %v884 = vrot.slane %v882, 5
      %v885 = vsel %vm279, %v880, %v884
      %v886 = vshrl.u32 %v172, 16
      %v888 = vrot.slane %v886, 4
      %v889 = vor.u32 %v888, %v884
      %v890 = vrot.slane %v889, 4
      %v892 = vshll.u32 %v258, 16
      %v894 = vrot.slane %v892, 5
      %v895 = vsel %vm279, %v890, %v894
      %v897 = vshrl.u32 %v173, 16
      %v899 = vrot.slane %v897, 4
      %v900 = vshll.u32 %v173, 16
      %v902 = vrot.slane %v900, 5
      %v903 = vor.u32 %v899, %v902
      %v904 = vrot.slane %v903, 4
      %v906 = vshll.u32 %v174, 16
      %v908 = vrot.slane %v906, 5
      %v909 = vsel %vm279, %v904, %v908
      %v910 = vshrl.u32 %v174, 16
      %v912 = vrot.slane %v910, 4
      %v913 = vor.u32 %v912, %v908
      %v914 = vrot.slane %v913, 4
      %v916 = vshll.u32 %v175, 16
      %v918 = vrot.slane %v916, 5
      %v919 = vsel %vm279, %v914, %v918
      %v920 = vshrl.u32 %v175, 16
      %v922 = vrot.slane %v920, 4
      %v923 = vor.u32 %v922, %v918
      %v924 = vrot.slane %v923, 4
      %v926 = vshll.u32 %v176, 16
      %v928 = vrot.slane %v926, 5
      %v929 = vsel %vm279, %v924, %v928
      %v930 = vshrl.u32 %v176, 16
      %v932 = vrot.slane %v930, 4
      %v933 = vor.u32 %v932, %v928
      %v934 = vrot.slane %v933, 4
      %v936 = vshll.u32 %v259, 16
      %v938 = vrot.slane %v936, 5
      %v939 = vsel %vm279, %v934, %v938
      %v941 = vshrl.u32 %v177, 16
      %v943 = vrot.slane %v941, 4
      %v944 = vshll.u32 %v177, 16
      %v946 = vrot.slane %v944, 5
      %v947 = vor.u32 %v943, %v946
      %v948 = vrot.slane %v947, 4
      %v950 = vshll.u32 %v178, 16
      %v952 = vrot.slane %v950, 5
      %v953 = vsel %vm279, %v948, %v952
      %v954 = vshrl.u32 %v178, 16
      %v956 = vrot.slane %v954, 4
      %v957 = vor.u32 %v956, %v952
      %v958 = vrot.slane %v957, 4
      %v960 = vshll.u32 %v179, 16
      %v962 = vrot.slane %v960, 5
      %v963 = vsel %vm279, %v958, %v962
      %v964 = vshrl.u32 %v179, 16
      %v966 = vrot.slane %v964, 4
      %v967 = vor.u32 %v966, %v962
      %v968 = vrot.slane %v967, 4
      %v970 = vshll.u32 %v180, 16
      %v972 = vrot.slane %v970, 5
      %v973 = vsel %vm279, %v968, %v972
      %v974 = vshrl.u32 %v180, 16
      %v976 = vrot.slane %v974, 4
      %v977 = vor.u32 %v976, %v972
      %v978 = vrot.slane %v977, 4
      %v980 = vshll.u32 %v260, 16
      %v982 = vrot.slane %v980, 5
      %v983 = vsel %vm279, %v978, %v982
      %v985 = vshrl.u32 %v181, 16
      %v987 = vrot.slane %v985, 4
      %v988 = vshll.u32 %v181, 16
      %v990 = vrot.slane %v988, 5
      %v991 = vor.u32 %v987, %v990
      %v992 = vrot.slane %v991, 4
      %v994 = vshll.u32 %v182, 16
      %v996 = vrot.slane %v994, 5
      %v997 = vsel %vm279, %v992, %v996
      %v998 = vshrl.u32 %v182, 16
      %v1000 = vrot.slane %v998, 4
      %v1001 = vor.u32 %v1000, %v996
      %v1002 = vrot.slane %v1001, 4
      %v1004 = vshll.u32 %v183, 16
      %v1006 = vrot.slane %v1004, 5
      %v1007 = vsel %vm279, %v1002, %v1006
      %v1008 = vshrl.u32 %v183, 16
      %v1010 = vrot.slane %v1008, 4
      %v1011 = vor.u32 %v1010, %v1006
      %v1012 = vrot.slane %v1011, 4
      %v1014 = vshll.u32 %v184, 16
      %v1016 = vrot.slane %v1014, 5
      %v1017 = vsel %vm279, %v1012, %v1016
      %v1018 = vshrl.u32 %v184, 16
      %v1020 = vrot.slane %v1018, 4
      %v1021 = vor.u32 %v1020, %v1016
      %v1022 = vrot.slane %v1021, 4
      %v1024 = vshll.u32 %v261, 16
      %v1026 = vrot.slane %v1024, 5
      %v1027 = vsel %vm279, %v1022, %v1026
      %v1029 = vshrl.u32 %v185, 16
      %v1031 = vrot.slane %v1029, 4
      %v1032 = vshll.u32 %v185, 16
      %v1034 = vrot.slane %v1032, 5
      %v1035 = vor.u32 %v1031, %v1034
      %v1036 = vrot.slane %v1035, 4
      %v1038 = vshll.u32 %v186, 16
      %v1040 = vrot.slane %v1038, 5
      %v1041 = vsel %vm279, %v1036, %v1040
      %v1042 = vshrl.u32 %v186, 16
      %v1044 = vrot.slane %v1042, 4
      %v1045 = vor.u32 %v1044, %v1040
      %v1046 = vrot.slane %v1045, 4
      %v1048 = vshll.u32 %v187, 16
      %v1050 = vrot.slane %v1048, 5
      %v1051 = vsel %vm279, %v1046, %v1050
      %v1052 = vshrl.u32 %v187, 16
      %v1054 = vrot.slane %v1052, 4
      %v1055 = vor.u32 %v1054, %v1050
      %v1056 = vrot.slane %v1055, 4
      %v1058 = vshll.u32 %v188, 16
      %v1060 = vrot.slane %v1058, 5
      %v1061 = vsel %vm279, %v1056, %v1060
      %v1062 = vshrl.u32 %v188, 16
      %v1064 = vrot.slane %v1062, 4
      %v1065 = vor.u32 %v1064, %v1060
      %v1066 = vrot.slane %v1065, 4
      %v1068 = vshll.u32 %v262, 16
      %v1070 = vrot.slane %v1068, 5
      %v1071 = vsel %vm279, %v1066, %v1070
      %v1073 = vshrl.u32 %v189, 16
      %v1075 = vrot.slane %v1073, 4
      %v1076 = vshll.u32 %v189, 16
      %v1078 = vrot.slane %v1076, 5
      %v1079 = vor.u32 %v1075, %v1078
      %v1080 = vrot.slane %v1079, 4
      %v1082 = vshll.u32 %v190, 16
      %v1084 = vrot.slane %v1082, 5
      %v1085 = vsel %vm279, %v1080, %v1084
      %v1086 = vshrl.u32 %v190, 16
      %v1088 = vrot.slane %v1086, 4
      %v1089 = vor.u32 %v1088, %v1084
      %v1090 = vrot.slane %v1089, 4
      %v1092 = vshll.u32 %v191, 16
      %v1094 = vrot.slane %v1092, 5
      %v1095 = vsel %vm279, %v1090, %v1094
      %v1096 = vshrl.u32 %v191, 16
      %v1098 = vrot.slane %v1096, 4
      %v1099 = vor.u32 %v1098, %v1094
      %v1100 = vrot.slane %v1099, 4
      %v1102 = vshll.u32 %v192, 16
      %v1104 = vrot.slane %v1102, 5
      %v1105 = vsel %vm279, %v1100, %v1104
      %v1106 = vshrl.u32 %v192, 16
      %v1108 = vrot.slane %v1106, 4
      %v1109 = vor.u32 %v1108, %v1104
      %v1110 = vrot.slane %v1109, 4
      %v1112 = vshll.u32 %v263, 16
      %v1114 = vrot.slane %v1112, 5
      %v1115 = vsel %vm279, %v1110, %v1114
      %v1117 = vshrl.u32 %v193, 16
      %v1119 = vrot.slane %v1117, 4
      %v1120 = vshll.u32 %v193, 16
      %v1122 = vrot.slane %v1120, 5
      %v1123 = vor.u32 %v1119, %v1122
      %v1124 = vrot.slane %v1123, 4
      %v1126 = vshll.u32 %v194, 16
      %v1128 = vrot.slane %v1126, 5
      %v1129 = vsel %vm279, %v1124, %v1128
      %v1130 = vshrl.u32 %v194, 16
      %v1132 = vrot.slane %v1130, 4
      %v1133 = vor.u32 %v1132, %v1128
      %v1134 = vrot.slane %v1133, 4
      %v1136 = vshll.u32 %v195, 16
      %v1138 = vrot.slane %v1136, 5
      %v1139 = vsel %vm279, %v1134, %v1138
      %v1140 = vshrl.u32 %v195, 16
      %v1142 = vrot.slane %v1140, 4
      %v1143 = vor.u32 %v1142, %v1138
      %v1144 = vrot.slane %v1143, 4
      %v1146 = vshll.u32 %v196, 16
      %v1148 = vrot.slane %v1146, 5
      %v1149 = vsel %vm279, %v1144, %v1148
      %v1150 = vshrl.u32 %v196, 16
      %v1152 = vrot.slane %v1150, 4
      %v1153 = vor.u32 %v1152, %v1148
      %v1154 = vrot.slane %v1153, 4
      %v1156 = vshll.u32 %v264, 16
      %v1158 = vrot.slane %v1156, 5
      %v1159 = vsel %vm279, %v1154, %v1158
      %v1161 = vshrl.u32 %v197, 16
      %v1163 = vrot.slane %v1161, 4
      %v1164 = vshll.u32 %v197, 16
      %v1166 = vrot.slane %v1164, 5
      %v1167 = vor.u32 %v1163, %v1166
      %v1168 = vrot.slane %v1167, 4
      %v1170 = vshll.u32 %v198, 16
      %v1172 = vrot.slane %v1170, 5
      %v1173 = vsel %vm279, %v1168, %v1172
      %v1174 = vshrl.u32 %v198, 16
      %v1176 = vrot.slane %v1174, 4
      %v1177 = vor.u32 %v1176, %v1172
      %v1178 = vrot.slane %v1177, 4
      %v1180 = vshll.u32 %v199, 16
      %v1182 = vrot.slane %v1180, 5
      %v1183 = vsel %vm279, %v1178, %v1182
      %v1184 = vshrl.u32 %v199, 16
      %v1186 = vrot.slane %v1184, 4
      %v1187 = vor.u32 %v1186, %v1182
      %v1188 = vrot.slane %v1187, 4
      %v1190 = vshll.u32 %v200, 16
      %v1192 = vrot.slane %v1190, 5
      %v1193 = vsel %vm279, %v1188, %v1192
      %v1194 = vshrl.u32 %v200, 16
      %v1196 = vrot.slane %v1194, 4
      %v1197 = vor.u32 %v1196, %v1192
      %v1198 = vrot.slane %v1197, 4
      %v1200 = vshll.u32 %v265, 16
      %v1202 = vrot.slane %v1200, 5
      %v1203 = vsel %vm279, %v1198, %v1202
      %v1205 = vshrl.u32 %v201, 16
      %v1207 = vrot.slane %v1205, 4
      %v1208 = vshll.u32 %v201, 16
      %v1210 = vrot.slane %v1208, 5
      %v1211 = vor.u32 %v1207, %v1210
      %v1212 = vrot.slane %v1211, 4
      %v1214 = vshll.u32 %v202, 16
      %v1216 = vrot.slane %v1214, 5
      %v1217 = vsel %vm279, %v1212, %v1216
      %v1218 = vshrl.u32 %v202, 16
      %v1220 = vrot.slane %v1218, 4
      %v1221 = vor.u32 %v1220, %v1216
      %v1222 = vrot.slane %v1221, 4
      %v1224 = vshll.u32 %v203, 16
      %v1226 = vrot.slane %v1224, 5
      %v1227 = vsel %vm279, %v1222, %v1226
      %v1228 = vshrl.u32 %v203, 16
      %v1230 = vrot.slane %v1228, 4
      %v1231 = vor.u32 %v1230, %v1226
      %v1232 = vrot.slane %v1231, 4
      %v1234 = vshll.u32 %v204, 16
      %v1236 = vrot.slane %v1234, 5
      %v1237 = vsel %vm279, %v1232, %v1236
      %v1238 = vshrl.u32 %v204, 16
      %v1240 = vrot.slane %v1238, 4
      %v1241 = vor.u32 %v1240, %v1236
      %v1242 = vrot.slane %v1241, 4
      %v1244 = vshll.u32 %v266, 16
      %v1246 = vrot.slane %v1244, 5
      %v1247 = vsel %vm279, %v1242, %v1246
      %v1249 = vshrl.u32 %v205, 16
      %v1251 = vrot.slane %v1249, 4
      %v1252 = vshll.u32 %v205, 16
      %v1254 = vrot.slane %v1252, 5
      %v1255 = vor.u32 %v1251, %v1254
      %v1256 = vrot.slane %v1255, 4
      %v1258 = vshll.u32 %v206, 16
      %v1260 = vrot.slane %v1258, 5
      %v1261 = vsel %vm279, %v1256, %v1260
      %v1262 = vshrl.u32 %v206, 16
      %v1264 = vrot.slane %v1262, 4
      %v1265 = vor.u32 %v1264, %v1260
      %v1266 = vrot.slane %v1265, 4
      %v1268 = vshll.u32 %v207, 16
      %v1270 = vrot.slane %v1268, 5
      %v1271 = vsel %vm279, %v1266, %v1270
      %v1272 = vshrl.u32 %v207, 16
      %v1274 = vrot.slane %v1272, 4
      %v1275 = vor.u32 %v1274, %v1270
      %v1276 = vrot.slane %v1275, 4
      %v1278 = vshll.u32 %v208, 16
      %v1280 = vrot.slane %v1278, 5
      %v1281 = vsel %vm279, %v1276, %v1280
      %v1282 = vshrl.u32 %v208, 16
      %v1284 = vrot.slane %v1282, 4
      %v1285 = vor.u32 %v1284, %v1280
      %v1286 = vrot.slane %v1285, 4
      %v1288 = vshll.u32 %v267, 16
      %v1290 = vrot.slane %v1288, 5
      %v1291 = vsel %vm279, %v1286, %v1290
      %v1293 = vshrl.u32 %v209, 16
      %v1295 = vrot.slane %v1293, 4
      %v1296 = vshll.u32 %v209, 16
      %v1298 = vrot.slane %v1296, 5
      %v1299 = vor.u32 %v1295, %v1298
      %v1300 = vrot.slane %v1299, 4
      %v1302 = vshll.u32 %v210, 16
      %v1304 = vrot.slane %v1302, 5
      %v1305 = vsel %vm279, %v1300, %v1304
      %v1306 = vshrl.u32 %v210, 16
      %v1308 = vrot.slane %v1306, 4
      %v1309 = vor.u32 %v1308, %v1304
      %v1310 = vrot.slane %v1309, 4
      %v1312 = vshll.u32 %v211, 16
      %v1314 = vrot.slane %v1312, 5
      %v1315 = vsel %vm279, %v1310, %v1314
      %v1316 = vshrl.u32 %v211, 16
      %v1318 = vrot.slane %v1316, 4
      %v1319 = vor.u32 %v1318, %v1314
      %v1320 = vrot.slane %v1319, 4
      %v1322 = vshll.u32 %v212, 16
      %v1324 = vrot.slane %v1322, 5
      %v1325 = vsel %vm279, %v1320, %v1324
      %v1326 = vshrl.u32 %v212, 16
      %v1328 = vrot.slane %v1326, 4
      %v1329 = vor.u32 %v1328, %v1324
      %v1330 = vrot.slane %v1329, 4
      %v1332 = vshll.u32 %v268, 16
      %v1334 = vrot.slane %v1332, 5
      %v1335 = vsel %vm279, %v1330, %v1334
      %v1337 = vshrl.u32 %v213, 16
      %v1339 = vrot.slane %v1337, 4
      %v1340 = vshll.u32 %v213, 16
      %v1342 = vrot.slane %v1340, 5
      %v1343 = vor.u32 %v1339, %v1342
      %v1344 = vrot.slane %v1343, 4
      %v1346 = vshll.u32 %v214, 16
      %v1348 = vrot.slane %v1346, 5
      %v1349 = vsel %vm279, %v1344, %v1348
      %v1350 = vshrl.u32 %v214, 16
      %v1352 = vrot.slane %v1350, 4
      %v1353 = vor.u32 %v1352, %v1348
      %v1354 = vrot.slane %v1353, 4
      %v1356 = vshll.u32 %v215, 16
      %v1358 = vrot.slane %v1356, 5
      %v1359 = vsel %vm279, %v1354, %v1358
      %v1360 = vshrl.u32 %v215, 16
      %v1362 = vrot.slane %v1360, 4
      %v1363 = vor.u32 %v1362, %v1358
      %v1364 = vrot.slane %v1363, 4
      %v1366 = vshll.u32 %v216, 16
      %v1368 = vrot.slane %v1366, 5
      %v1369 = vsel %vm279, %v1364, %v1368
      %v1370 = vshrl.u32 %v216, 16
      %v1372 = vrot.slane %v1370, 4
      %v1373 = vor.u32 %v1372, %v1368
      %v1374 = vrot.slane %v1373, 4
      %v1376 = vshll.u32 %v269, 16
      %v1378 = vrot.slane %v1376, 5
      %v1379 = vsel %vm279, %v1374, %v1378
      %v1381 = vshrl.u32 %v217, 16
      %v1383 = vrot.slane %v1381, 4
      %v1384 = vshll.u32 %v217, 16
      %v1386 = vrot.slane %v1384, 5
      %v1387 = vor.u32 %v1383, %v1386
      %v1388 = vrot.slane %v1387, 4
      %v1390 = vshll.u32 %v218, 16
      %v1392 = vrot.slane %v1390, 5
      %v1393 = vsel %vm279, %v1388, %v1392
      %v1394 = vshrl.u32 %v218, 16
      %v1396 = vrot.slane %v1394, 4
      %v1397 = vor.u32 %v1396, %v1392
      %v1398 = vrot.slane %v1397, 4
      %v1400 = vshll.u32 %v219, 16
      %v1402 = vrot.slane %v1400, 5
      %v1403 = vsel %vm279, %v1398, %v1402
      %v1404 = vshrl.u32 %v219, 16
      %v1406 = vrot.slane %v1404, 4
      %v1407 = vor.u32 %v1406, %v1402
      %v1408 = vrot.slane %v1407, 4
      %v1410 = vshll.u32 %v220, 16
      %v1412 = vrot.slane %v1410, 5
      %v1413 = vsel %vm279, %v1408, %v1412
      %v1414 = vshrl.u32 %v220, 16
      %v1416 = vrot.slane %v1414, 4
      %v1417 = vor.u32 %v1416, %v1412
      %v1418 = vrot.slane %v1417, 4
      %v1420 = vshll.u32 %v270, 16
      %v1422 = vrot.slane %v1420, 5
      %v1423 = vsel %vm279, %v1418, %v1422
      %v1425 = vshrl.u32 %v221, 16
      %v1427 = vrot.slane %v1425, 4
      %v1428 = vshll.u32 %v221, 16
      %v1430 = vrot.slane %v1428, 5
      %v1431 = vor.u32 %v1427, %v1430
      %v1432 = vrot.slane %v1431, 4
      %v1434 = vshll.u32 %v222, 16
      %v1436 = vrot.slane %v1434, 5
      %v1437 = vsel %vm279, %v1432, %v1436
      %v1438 = vshrl.u32 %v222, 16
      %v1440 = vrot.slane %v1438, 4
      %v1441 = vor.u32 %v1440, %v1436
      %v1442 = vrot.slane %v1441, 4
      %v1444 = vshll.u32 %v223, 16
      %v1446 = vrot.slane %v1444, 5
      %v1447 = vsel %vm279, %v1442, %v1446
      %v1448 = vshrl.u32 %v223, 16
      %v1450 = vrot.slane %v1448, 4
      %v1451 = vor.u32 %v1450, %v1446
      %v1452 = vrot.slane %v1451, 4
      %v1454 = vshll.u32 %v224, 16
      %v1456 = vrot.slane %v1454, 5
      %v1457 = vsel %vm279, %v1452, %v1456
      %v1458 = vshrl.u32 %v224, 16
      %v1460 = vrot.slane %v1458, 4
      %v1461 = vor.u32 %v1460, %v1456
      %v1462 = vrot.slane %v1461, 4
      %v1464 = vshll.u32 %v271, 16
      %v1466 = vrot.slane %v1464, 5
      %v1467 = vsel %vm279, %v1462, %v1466
      %v1469 = vshrl.u32 %v225, 16
      %v1471 = vrot.slane %v1469, 4
      %v1472 = vshll.u32 %v225, 16
      %v1474 = vrot.slane %v1472, 5
      %v1475 = vor.u32 %v1471, %v1474
      %v1476 = vrot.slane %v1475, 4
      %v1478 = vshll.u32 %v226, 16
      %v1480 = vrot.slane %v1478, 5
      %v1481 = vsel %vm279, %v1476, %v1480
      %v1482 = vshrl.u32 %v226, 16
      %v1484 = vrot.slane %v1482, 4
      %v1485 = vor.u32 %v1484, %v1480
      %v1486 = vrot.slane %v1485, 4
      %v1488 = vshll.u32 %v227, 16
      %v1490 = vrot.slane %v1488, 5
      %v1491 = vsel %vm279, %v1486, %v1490
      %v1492 = vshrl.u32 %v227, 16
      %v1494 = vrot.slane %v1492, 4
      %v1495 = vor.u32 %v1494, %v1490
      %v1496 = vrot.slane %v1495, 4
      %v1498 = vshll.u32 %v228, 16
      %v1500 = vrot.slane %v1498, 5
      %v1501 = vsel %vm279, %v1496, %v1500
      %v1502 = vshrl.u32 %v228, 16
      %v1504 = vrot.slane %v1502, 4
      %v1505 = vor.u32 %v1504, %v1500
      %v1506 = vrot.slane %v1505, 4
      %v1508 = vshll.u32 %v272, 16
      %v1510 = vrot.slane %v1508, 5
      %v1511 = vsel %vm279, %v1506, %v1510
      %v1513 = vshrl.u32 %v229, 16
      %v1515 = vrot.slane %v1513, 4
      %v1516 = vshll.u32 %v229, 16
      %v1518 = vrot.slane %v1516, 5
      %v1519 = vor.u32 %v1515, %v1518
      %v1520 = vrot.slane %v1519, 4
      %v1522 = vshll.u32 %v230, 16
      %v1524 = vrot.slane %v1522, 5
      %v1525 = vsel %vm279, %v1520, %v1524
      %v1526 = vshrl.u32 %v230, 16
      %v1528 = vrot.slane %v1526, 4
      %v1529 = vor.u32 %v1528, %v1524
      %v1530 = vrot.slane %v1529, 4
      %v1532 = vshll.u32 %v231, 16
      %v1534 = vrot.slane %v1532, 5
      %v1535 = vsel %vm279, %v1530, %v1534
      %v1536 = vshrl.u32 %v231, 16
      %v1538 = vrot.slane %v1536, 4
      %v1539 = vor.u32 %v1538, %v1534
      %v1540 = vrot.slane %v1539, 4
      %v1542 = vshll.u32 %v232, 16
      %v1544 = vrot.slane %v1542, 5
      %v1545 = vsel %vm279, %v1540, %v1544
      %v1546 = vshrl.u32 %v232, 16
      %v1548 = vrot.slane %v1546, 4
      %v1549 = vor.u32 %v1548, %v1544
      %v1550 = vrot.slane %v1549, 4
      %v1552 = vshll.u32 %v273, 16
      %v1554 = vrot.slane %v1552, 5
      %v1555 = vsel %vm279, %v1550, %v1554
      %v1557 = vshrl.u32 %v233, 16
      %v1559 = vrot.slane %v1557, 4
      %v1560 = vshll.u32 %v233, 16
      %v1562 = vrot.slane %v1560, 5
      %v1563 = vor.u32 %v1559, %v1562
      %v1564 = vrot.slane %v1563, 4
      %v1566 = vshll.u32 %v234, 16
      %v1568 = vrot.slane %v1566, 5
      %v1569 = vsel %vm279, %v1564, %v1568
      %v1570 = vshrl.u32 %v234, 16
      %v1572 = vrot.slane %v1570, 4
      %v1573 = vor.u32 %v1572, %v1568
      %v1574 = vrot.slane %v1573, 4
      %v1576 = vshll.u32 %v235, 16
      %v1578 = vrot.slane %v1576, 5
      %v1579 = vsel %vm279, %v1574, %v1578
      %v1580 = vshrl.u32 %v235, 16
      %v1582 = vrot.slane %v1580, 4
      %v1583 = vor.u32 %v1582, %v1578
      %v1584 = vrot.slane %v1583, 4
      %v1586 = vshll.u32 %v236, 16
      %v1588 = vrot.slane %v1586, 5
      %v1589 = vsel %vm279, %v1584, %v1588
      %v1590 = vshrl.u32 %v236, 16
      %v1592 = vrot.slane %v1590, 4
      %v1593 = vor.u32 %v1592, %v1588
      %v1594 = vrot.slane %v1593, 4
      %v1596 = vshll.u32 %v274, 16
      %v1598 = vrot.slane %v1596, 5
      %v1599 = vsel %vm279, %v1594, %v1598
      %v1601 = vshrl.u32 %v237, 16
      %v1603 = vrot.slane %v1601, 4
      %v1604 = vshll.u32 %v237, 16
      %v1606 = vrot.slane %v1604, 5
      %v1607 = vor.u32 %v1603, %v1606
      %v1608 = vrot.slane %v1607, 4
      %v1610 = vshll.u32 %v238, 16
      %v1612 = vrot.slane %v1610, 5
      %v1613 = vsel %vm279, %v1608, %v1612
      %v1614 = vshrl.u32 %v238, 16
      %v1616 = vrot.slane %v1614, 4
      %v1617 = vor.u32 %v1616, %v1612
      %v1618 = vrot.slane %v1617, 4
      %v1620 = vshll.u32 %v239, 16
      %v1622 = vrot.slane %v1620, 5
      %v1623 = vsel %vm279, %v1618, %v1622
      %v1624 = vshrl.u32 %v239, 16
      %v1626 = vrot.slane %v1624, 4
      %v1627 = vor.u32 %v1626, %v1622
      %v1628 = vrot.slane %v1627, 4
      %v1630 = vshll.u32 %v240, 16
      %v1632 = vrot.slane %v1630, 5
      %v1633 = vsel %vm279, %v1628, %v1632
      %v1634 = vshrl.u32 %v240, 16
      %v1636 = vrot.slane %v1634, 4
      %v1637 = vor.u32 %v1636, %v1632
      %v1638 = vrot.slane %v1637, 4
      %v1640 = vshll.u32 %v275, 16
      %v1642 = vrot.slane %v1640, 5
      %v1643 = vsel %vm279, %v1638, %v1642
      %v1645 = vshrl.u32 %v241, 16
      %v1647 = vrot.slane %v1645, 4
      %v1648 = vshll.u32 %v241, 16
      %v1650 = vrot.slane %v1648, 5
      %v1651 = vor.u32 %v1647, %v1650
      %v1652 = vrot.slane %v1651, 4
      %v1654 = vshll.u32 %v242, 16
      %v1656 = vrot.slane %v1654, 5
      %v1657 = vsel %vm279, %v1652, %v1656
      %v1658 = vshrl.u32 %v242, 16
      %v1660 = vrot.slane %v1658, 4
      %v1661 = vor.u32 %v1660, %v1656
      %v1662 = vrot.slane %v1661, 4
      %v1664 = vshll.u32 %v243, 16
      %v1666 = vrot.slane %v1664, 5
      %v1667 = vsel %vm279, %v1662, %v1666
      %v1668 = vshrl.u32 %v243, 16
      %v1670 = vrot.slane %v1668, 4
      %v1671 = vor.u32 %v1670, %v1666
      %v1672 = vrot.slane %v1671, 4
      %v1674 = vshll.u32 %v244, 16
      %v1676 = vrot.slane %v1674, 5
      %v1677 = vsel %vm279, %v1672, %v1676
      %v1678 = vshrl.u32 %v244, 16
      %v1680 = vrot.slane %v1678, 4
      %v1681 = vor.u32 %v1680, %v1676
      %v1682 = vrot.slane %v1681, 4
      %v1684 = vshll.u32 %v276, 16
      %v1686 = vrot.slane %v1684, 5
      %v1687 = vsel %vm279, %v1682, %v1686
      %v1816 = vmax.bf16 %v117, %v293
      %v1817 = vmax.bf16 %v118, %v303
      %v1818 = vmax.bf16 %v119, %v313
      %v1819 = vmax.bf16 %v120, %v323
      %v1820 = vmax.bf16 %v121, %v337
      %v1821 = vmax.bf16 %v122, %v347
      %v1822 = vmax.bf16 %v123, %v357
      %v1823 = vmax.bf16 %v124, %v367
      %v1824 = vmax.bf16 %v125, %v381
      %v1825 = vmax.bf16 %v126, %v391
      %v1826 = vmax.bf16 %v127, %v401
      %v1827 = vmax.bf16 %v128, %v411
      %v1828 = vmax.bf16 %v129, %v425
      %v1829 = vmax.bf16 %v130, %v435
      %v1830 = vmax.bf16 %v131, %v445
      %v1831 = vmax.bf16 %v132, %v455
      %v1832 = vmax.bf16 %v133, %v469
      %v1833 = vmax.bf16 %v134, %v479
      %v1834 = vmax.bf16 %v135, %v489
      %v1835 = vmax.bf16 %v136, %v499
      %v1836 = vmax.bf16 %v137, %v513
      %v1837 = vmax.bf16 %v138, %v523
      %v1838 = vmax.bf16 %v139, %v533
      %v1839 = vmax.bf16 %v140, %v543
      %v1840 = vmax.bf16 %v141, %v557
      %v1841 = vmax.bf16 %v142, %v567
      %v1842 = vmax.bf16 %v143, %v577
      %v1843 = vmax.bf16 %v144, %v587
      %v1844 = vmax.bf16 %v145, %v601
      %v1845 = vmax.bf16 %v146, %v611
      %v1846 = vmax.bf16 %v147, %v621
      %v1847 = vmax.bf16 %v148, %v631
      %v1848 = vmax.bf16 %v149, %v645
      %v1849 = vmax.bf16 %v150, %v655
      %v1850 = vmax.bf16 %v151, %v665
      %v1851 = vmax.bf16 %v152, %v675
      %v1852 = vmax.bf16 %v153, %v689
      %v1853 = vmax.bf16 %v154, %v699
      %v1854 = vmax.bf16 %v155, %v709
      %v1855 = vmax.bf16 %v156, %v719
      %v1856 = vmax.bf16 %v157, %v733
      %v1857 = vmax.bf16 %v158, %v743
      %v1858 = vmax.bf16 %v159, %v753
      %v1859 = vmax.bf16 %v160, %v763
      %v1860 = vmax.bf16 %v161, %v777
      %v1861 = vmax.bf16 %v162, %v787
      %v1862 = vmax.bf16 %v163, %v797
      %v1863 = vmax.bf16 %v164, %v807
      %v1864 = vmax.bf16 %v165, %v821
      %v1865 = vmax.bf16 %v166, %v831
      %v1866 = vmax.bf16 %v167, %v841
      %v1867 = vmax.bf16 %v168, %v851
      %v1868 = vmax.bf16 %v169, %v865
      %v1869 = vmax.bf16 %v170, %v875
      %v1870 = vmax.bf16 %v171, %v885
      %v1871 = vmax.bf16 %v172, %v895
      %v1872 = vmax.bf16 %v173, %v909
      %v1873 = vmax.bf16 %v174, %v919
      %v1874 = vmax.bf16 %v175, %v929
      %v1875 = vmax.bf16 %v176, %v939
      %v1876 = vmax.bf16 %v177, %v953
      %v1877 = vmax.bf16 %v178, %v963
      %v1878 = vmax.bf16 %v179, %v973
      %v1879 = vmax.bf16 %v180, %v983
      %v1880 = vmax.bf16 %v181, %v997
      %v1881 = vmax.bf16 %v182, %v1007
      %v1882 = vmax.bf16 %v183, %v1017
      %v1883 = vmax.bf16 %v184, %v1027
      %v1884 = vmax.bf16 %v185, %v1041
      %v1885 = vmax.bf16 %v186, %v1051
      %v1886 = vmax.bf16 %v187, %v1061
      %v1887 = vmax.bf16 %v188, %v1071
      %v1888 = vmax.bf16 %v189, %v1085
      %v1889 = vmax.bf16 %v190, %v1095
      %v1890 = vmax.bf16 %v191, %v1105
      %v1891 = vmax.bf16 %v192, %v1115
      %v1892 = vmax.bf16 %v193, %v1129
      %v1893 = vmax.bf16 %v194, %v1139
      %v1894 = vmax.bf16 %v195, %v1149
      %v1895 = vmax.bf16 %v196, %v1159
      %v1896 = vmax.bf16 %v197, %v1173
      %v1897 = vmax.bf16 %v198, %v1183
      %v1898 = vmax.bf16 %v199, %v1193
      %v1899 = vmax.bf16 %v200, %v1203
      %v1900 = vmax.bf16 %v201, %v1217
      %v1901 = vmax.bf16 %v202, %v1227
      %v1902 = vmax.bf16 %v203, %v1237
      %v1903 = vmax.bf16 %v204, %v1247
      %v1904 = vmax.bf16 %v205, %v1261
      %v1905 = vmax.bf16 %v206, %v1271
      %v1906 = vmax.bf16 %v207, %v1281
      %v1907 = vmax.bf16 %v208, %v1291
      %v1908 = vmax.bf16 %v209, %v1305
      %v1909 = vmax.bf16 %v210, %v1315
      %v1910 = vmax.bf16 %v211, %v1325
      %v1911 = vmax.bf16 %v212, %v1335
      %v1912 = vmax.bf16 %v213, %v1349
      %v1913 = vmax.bf16 %v214, %v1359
      %v1914 = vmax.bf16 %v215, %v1369
      %v1915 = vmax.bf16 %v216, %v1379
      %v1916 = vmax.bf16 %v217, %v1393
      %v1917 = vmax.bf16 %v218, %v1403
      %v1918 = vmax.bf16 %v219, %v1413
      %v1919 = vmax.bf16 %v220, %v1423
      %v1920 = vmax.bf16 %v221, %v1437
      %v1921 = vmax.bf16 %v222, %v1447
      %v1922 = vmax.bf16 %v223, %v1457
      %v1923 = vmax.bf16 %v224, %v1467
      %v1924 = vmax.bf16 %v225, %v1481
      %v1925 = vmax.bf16 %v226, %v1491
      %v1926 = vmax.bf16 %v227, %v1501
      %v1927 = vmax.bf16 %v228, %v1511
      %v1928 = vmax.bf16 %v229, %v1525
      %v1929 = vmax.bf16 %v230, %v1535
      %v1930 = vmax.bf16 %v231, %v1545
      %v1931 = vmax.bf16 %v232, %v1555
      %v1932 = vmax.bf16 %v233, %v1569
      %v1933 = vmax.bf16 %v234, %v1579
      %v1934 = vmax.bf16 %v235, %v1589
      %v1935 = vmax.bf16 %v236, %v1599
      %v1936 = vmax.bf16 %v237, %v1613
      %v1937 = vmax.bf16 %v238, %v1623
      %v1938 = vmax.bf16 %v239, %v1633
      %v1939 = vmax.bf16 %v240, %v1643
      %v1940 = vmax.bf16 %v241, %v1657
      %v1941 = vmax.bf16 %v242, %v1667
      %v1942 = vmax.bf16 %v243, %v1677
      %v1943 = vmax.bf16 %v244, %v1687
      %v1944 = vld [vmem:[%s111] sm:$0xe]
      %v1945 = vld [vmem:[%s111 + $0x14] sm:$0xe]
      %v1946 = vld [vmem:[%s111 + $0x28] sm:$0xe]
      %v1947 = vld [vmem:[%s111 + $0x3c] sm:$0xe]
      %v1948 = vld [vmem:[%s111 + $0x50] sm:$0xe]
      %v1949 = vld [vmem:[%s111 + $0x64] sm:$0xe]
      %v1950 = vld [vmem:[%s111 + $0x78] sm:$0xe]
      %v1951 = vld [vmem:[%s111 + $0x8c] sm:$0xe]
      %v1952 = vld [vmem:[%s111 + $0xa0] sm:$0xe]
      %v1953 = vld [vmem:[%s111 + $0xb4] sm:$0xe]
      %v1954 = vld [vmem:[%s111 + $0xc8] sm:$0xe]
      %v1955 = vld [vmem:[%s111 + $0xdc] sm:$0xe]
      %v1956 = vld [vmem:[%s111 + $0xf0] sm:$0xe]
      %v1957 = vld [vmem:[%s111 + $0x104] sm:$0xe]
      %v1958 = vld [vmem:[%s111 + $0x118] sm:$0xe]
      %v1959 = vld [vmem:[%s111 + $0x12c] sm:$0xe]
      %v1960 = vld [vmem:[%s111 + $0x140] sm:$0xe]
      %v1961 = vld [vmem:[%s111 + $0x154] sm:$0xe]
      %v1962 = vld [vmem:[%s111 + $0x168] sm:$0xe]
      %v1963 = vld [vmem:[%s111 + $0x17c] sm:$0xe]
      %v1964 = vld [vmem:[%s111 + $0x190] sm:$0xe]
      %v1965 = vld [vmem:[%s111 + $0x1a4] sm:$0xe]
      %v1966 = vld [vmem:[%s111 + $0x1b8] sm:$0xe]
      %v1967 = vld [vmem:[%s111 + $0x1cc] sm:$0xe]
      %v1968 = vld [vmem:[%s111 + $0x1e0] sm:$0xe]
      %v1969 = vld [vmem:[%s111 + $0x1f4] sm:$0xe]
      %v1970 = vld [vmem:[%s111 + $0x208] sm:$0xe]
      %v1971 = vld [vmem:[%s111 + $0x21c] sm:$0xe]
      %v1972 = vld [vmem:[%s111 + $0x230] sm:$0xe]
      %v1973 = vld [vmem:[%s111 + $0x244] sm:$0xe]
      %v1974 = vld [vmem:[%s111 + $0x258] sm:$0xe]
      %v1975 = vld [vmem:[%s111 + $0x26c] sm:$0xe]
      %vm2136 = vcmask 1042432
      %vm2137 = vcmask 1046532
      %vm2138 = vmor %vm2136, %vm2137
      %v2139 = vrot.slane %v1944, 5
      %v2140 = vrot.slane %v2139, 4
      %v2141 = vrot.slane %v118, 5
      %v2142 = vsel %vm2138, %v2140, %v2141
      %v2143 = vrot.slane %v2141, 4
      %v2144 = vrot.slane %v119, 5
      %v2145 = vsel %vm2138, %v2143, %v2144
      %v2146 = vrot.slane %v2144, 4
      %v2147 = vrot.slane %v120, 5
      %v2148 = vsel %vm2138, %v2146, %v2147
      %v2149 = vrot.slane %v2147, 4
      %v2150 = vrot.slane %v245, 5
      %v2151 = vsel %vm2138, %v2149, %v2150
      %v2152 = vrot.slane %v1945, 5
      %v2153 = vrot.slane %v2152, 4
      %v2154 = vrot.slane %v122, 5
      %v2155 = vsel %vm2138, %v2153, %v2154
      %v2156 = vrot.slane %v2154, 4
      %v2157 = vrot.slane %v123, 5
      %v2158 = vsel %vm2138, %v2156, %v2157
      %v2159 = vrot.slane %v2157, 4
      %v2160 = vrot.slane %v124, 5
      %v2161 = vsel %vm2138, %v2159, %v2160
      %v2162 = vrot.slane %v2160, 4
      %v2163 = vrot.slane %v246, 5
      %v2164 = vsel %vm2138, %v2162, %v2163
      %v2165 = vrot.slane %v1946, 5
      %v2166 = vrot.slane %v2165, 4
      %v2167 = vrot.slane %v126, 5
      %v2168 = vsel %vm2138, %v2166, %v2167
      %v2169 = vrot.slane %v2167, 4
      %v2170 = vrot.slane %v127, 5
      %v2171 = vsel %vm2138, %v2169, %v2170
      %v2172 = vrot.slane %v2170, 4
      %v2173 = vrot.slane %v128, 5
      %v2174 = vsel %vm2138, %v2172, %v2173
      %v2175 = vrot.slane %v2173, 4
      %v2176 = vrot.slane %v247, 5
      %v2177 = vsel %vm2138, %v2175, %v2176
      %v2178 = vrot.slane %v1947, 5
      %v2179 = vrot.slane %v2178, 4
      %v2180 = vrot.slane %v130, 5
      %v2181 = vsel %vm2138, %v2179, %v2180
      %v2182 = vrot.slane %v2180, 4
      %v2183 = vrot.slane %v131, 5
      %v2184 = vsel %vm2138, %v2182, %v2183
      %v2185 = vrot.slane %v2183, 4
      %v2186 = vrot.slane %v132, 5
      %v2187 = vsel %vm2138, %v2185, %v2186
      %v2188 = vrot.slane %v2186, 4
      %v2189 = vrot.slane %v248, 5
      %v2190 = vsel %vm2138, %v2188, %v2189
      %v2191 = vrot.slane %v1948, 5
      %v2192 = vrot.slane %v2191, 4
      %v2193 = vrot.slane %v134, 5
      %v2194 = vsel %vm2138, %v2192, %v2193
      %v2195 = vrot.slane %v2193, 4
      %v2196 = vrot.slane %v135, 5
      %v2197 = vsel %vm2138, %v2195, %v2196
      %v2198 = vrot.slane %v2196, 4
      %v2199 = vrot.slane %v136, 5
      %v2200 = vsel %vm2138, %v2198, %v2199
      %v2201 = vrot.slane %v2199, 4
      %v2202 = vrot.slane %v249, 5
      %v2203 = vsel %vm2138, %v2201, %v2202
      %v2204 = vrot.slane %v1949, 5
      %v2205 = vrot.slane %v2204, 4
      %v2206 = vrot.slane %v138, 5
      %v2207 = vsel %vm2138, %v2205, %v2206
      %v2208 = vrot.slane %v2206, 4
      %v2209 = vrot.slane %v139, 5
      %v2210 = vsel %vm2138, %v2208, %v2209
      %v2211 = vrot.slane %v2209, 4
      %v2212 = vrot.slane %v140, 5
      %v2213 = vsel %vm2138, %v2211, %v2212
      %v2214 = vrot.slane %v2212, 4
      %v2215 = vrot.slane %v250, 5
      %v2216 = vsel %vm2138, %v2214, %v2215
      %v2217 = vrot.slane %v1950, 5
      %v2218 = vrot.slane %v2217, 4
      %v2219 = vrot.slane %v142, 5
      %v2220 = vsel %vm2138, %v2218, %v2219
      %v2221 = vrot.slane %v2219, 4
      %v2222 = vrot.slane %v143, 5
      %v2223 = vsel %vm2138, %v2221, %v2222
      %v2224 = vrot.slane %v2222, 4
      %v2225 = vrot.slane %v144, 5
      %v2226 = vsel %vm2138, %v2224, %v2225
      %v2227 = vrot.slane %v2225, 4
      %v2228 = vrot.slane %v251, 5
      %v2229 = vsel %vm2138, %v2227, %v2228
      %v2230 = vrot.slane %v1951, 5
      %v2231 = vrot.slane %v2230, 4
      %v2232 = vrot.slane %v146, 5
      %v2233 = vsel %vm2138, %v2231, %v2232
      %v2234 = vrot.slane %v2232, 4
      %v2235 = vrot.slane %v147, 5
      %v2236 = vsel %vm2138, %v2234, %v2235
      %v2237 = vrot.slane %v2235, 4
      %v2238 = vrot.slane %v148, 5
      %v2239 = vsel %vm2138, %v2237, %v2238
      %v2240 = vrot.slane %v2238, 4
      %v2241 = vrot.slane %v252, 5
      %v2242 = vsel %vm2138, %v2240, %v2241
      %v2243 = vrot.slane %v1952, 5
      %v2244 = vrot.slane %v2243, 4
      %v2245 = vrot.slane %v150, 5
      %v2246 = vsel %vm2138, %v2244, %v2245
      %v2247 = vrot.slane %v2245, 4
      %v2248 = vrot.slane %v151, 5
      %v2249 = vsel %vm2138, %v2247, %v2248
      %v2250 = vrot.slane %v2248, 4
      %v2251 = vrot.slane %v152, 5
      %v2252 = vsel %vm2138, %v2250, %v2251
      %v2253 = vrot.slane %v2251, 4
      %v2254 = vrot.slane %v253, 5
      %v2255 = vsel %vm2138, %v2253, %v2254
      %v2256 = vrot.slane %v1953, 5
      %v2257 = vrot.slane %v2256, 4
      %v2258 = vrot.slane %v154, 5
      %v2259 = vsel %vm2138, %v2257, %v2258
      %v2260 = vrot.slane %v2258, 4
      %v2261 = vrot.slane %v155, 5
      %v2262 = vsel %vm2138, %v2260, %v2261
      %v2263 = vrot.slane %v2261, 4
      %v2264 = vrot.slane %v156, 5
      %v2265 = vsel %vm2138, %v2263, %v2264
      %v2266 = vrot.slane %v2264, 4
      %v2267 = vrot.slane %v254, 5
      %v2268 = vsel %vm2138, %v2266, %v2267
      %v2269 = vrot.slane %v1954, 5
      %v2270 = vrot.slane %v2269, 4
      %v2271 = vrot.slane %v158, 5
      %v2272 = vsel %vm2138, %v2270, %v2271
      %v2273 = vrot.slane %v2271, 4
      %v2274 = vrot.slane %v159, 5
      %v2275 = vsel %vm2138, %v2273, %v2274
      %v2276 = vrot.slane %v2274, 4
      %v2277 = vrot.slane %v160, 5
      %v2278 = vsel %vm2138, %v2276, %v2277
      %v2279 = vrot.slane %v2277, 4
      %v2280 = vrot.slane %v255, 5
      %v2281 = vsel %vm2138, %v2279, %v2280
      %v2282 = vrot.slane %v1955, 5
      %v2283 = vrot.slane %v2282, 4
      %v2284 = vrot.slane %v162, 5
      %v2285 = vsel %vm2138, %v2283, %v2284
      %v2286 = vrot.slane %v2284, 4
      %v2287 = vrot.slane %v163, 5
      %v2288 = vsel %vm2138, %v2286, %v2287
      %v2289 = vrot.slane %v2287, 4
      %v2290 = vrot.slane %v164, 5
      %v2291 = vsel %vm2138, %v2289, %v2290
      %v2292 = vrot.slane %v2290, 4
      %v2293 = vrot.slane %v256, 5
      %v2294 = vsel %vm2138, %v2292, %v2293
      %v2295 = vrot.slane %v1956, 5
      %v2296 = vrot.slane %v2295, 4
      %v2297 = vrot.slane %v166, 5
      %v2298 = vsel %vm2138, %v2296, %v2297
      %v2299 = vrot.slane %v2297, 4
      %v2300 = vrot.slane %v167, 5
      %v2301 = vsel %vm2138, %v2299, %v2300
      %v2302 = vrot.slane %v2300, 4
      %v2303 = vrot.slane %v168, 5
      %v2304 = vsel %vm2138, %v2302, %v2303
      %v2305 = vrot.slane %v2303, 4
      %v2306 = vrot.slane %v257, 5
      %v2307 = vsel %vm2138, %v2305, %v2306
      %v2308 = vrot.slane %v1957, 5
      %v2309 = vrot.slane %v2308, 4
      %v2310 = vrot.slane %v170, 5
      %v2311 = vsel %vm2138, %v2309, %v2310
      %v2312 = vrot.slane %v2310, 4
      %v2313 = vrot.slane %v171, 5
      %v2314 = vsel %vm2138, %v2312, %v2313
      %v2315 = vrot.slane %v2313, 4
      %v2316 = vrot.slane %v172, 5
      %v2317 = vsel %vm2138, %v2315, %v2316
      %v2318 = vrot.slane %v2316, 4
      %v2319 = vrot.slane %v258, 5
      %v2320 = vsel %vm2138, %v2318, %v2319
      %v2321 = vrot.slane %v1958, 5
      %v2322 = vrot.slane %v2321, 4
      %v2323 = vrot.slane %v174, 5
      %v2324 = vsel %vm2138, %v2322, %v2323
      %v2325 = vrot.slane %v2323, 4
      %v2326 = vrot.slane %v175, 5
      %v2327 = vsel %vm2138, %v2325, %v2326
      %v2328 = vrot.slane %v2326, 4
      %v2329 = vrot.slane %v176, 5
      %v2330 = vsel %vm2138, %v2328, %v2329
      %v2331 = vrot.slane %v2329, 4
      %v2332 = vrot.slane %v259, 5
      %v2333 = vsel %vm2138, %v2331, %v2332
      %v2334 = vrot.slane %v1959, 5
      %v2335 = vrot.slane %v2334, 4
      %v2336 = vrot.slane %v178, 5
      %v2337 = vsel %vm2138, %v2335, %v2336
      %v2338 = vrot.slane %v2336, 4
      %v2339 = vrot.slane %v179, 5
      %v2340 = vsel %vm2138, %v2338, %v2339
      %v2341 = vrot.slane %v2339, 4
      %v2342 = vrot.slane %v180, 5
      %v2343 = vsel %vm2138, %v2341, %v2342
      %v2344 = vrot.slane %v2342, 4
      %v2345 = vrot.slane %v260, 5
      %v2346 = vsel %vm2138, %v2344, %v2345
      %v2347 = vrot.slane %v1960, 5
      %v2348 = vrot.slane %v2347, 4
      %v2349 = vrot.slane %v182, 5
      %v2350 = vsel %vm2138, %v2348, %v2349
      %v2351 = vrot.slane %v2349, 4
      %v2352 = vrot.slane %v183, 5
      %v2353 = vsel %vm2138, %v2351, %v2352
      %v2354 = vrot.slane %v2352, 4
      %v2355 = vrot.slane %v184, 5
      %v2356 = vsel %vm2138, %v2354, %v2355
      %v2357 = vrot.slane %v2355, 4
      %v2358 = vrot.slane %v261, 5
      %v2359 = vsel %vm2138, %v2357, %v2358
      %v2360 = vrot.slane %v1961, 5
      %v2361 = vrot.slane %v2360, 4
      %v2362 = vrot.slane %v186, 5
      %v2363 = vsel %vm2138, %v2361, %v2362
      %v2364 = vrot.slane %v2362, 4
      %v2365 = vrot.slane %v187, 5
      %v2366 = vsel %vm2138, %v2364, %v2365
      %v2367 = vrot.slane %v2365, 4
      %v2368 = vrot.slane %v188, 5
      %v2369 = vsel %vm2138, %v2367, %v2368
      %v2370 = vrot.slane %v2368, 4
      %v2371 = vrot.slane %v262, 5
      %v2372 = vsel %vm2138, %v2370, %v2371
      %v2373 = vrot.slane %v1962, 5
      %v2374 = vrot.slane %v2373, 4
      %v2375 = vrot.slane %v190, 5
      %v2376 = vsel %vm2138, %v2374, %v2375
      %v2377 = vrot.slane %v2375, 4
      %v2378 = vrot.slane %v191, 5
      %v2379 = vsel %vm2138, %v2377, %v2378
      %v2380 = vrot.slane %v2378, 4
      %v2381 = vrot.slane %v192, 5
      %v2382 = vsel %vm2138, %v2380, %v2381
      %v2383 = vrot.slane %v2381, 4
      %v2384 = vrot.slane %v263, 5
      %v2385 = vsel %vm2138, %v2383, %v2384
      %v2386 = vrot.slane %v1963, 5
      %v2387 = vrot.slane %v2386, 4
      %v2388 = vrot.slane %v194, 5
      %v2389 = vsel %vm2138, %v2387, %v2388
      %v2390 = vrot.slane %v2388, 4
      %v2391 = vrot.slane %v195, 5
      %v2392 = vsel %vm2138, %v2390, %v2391
      %v2393 = vrot.slane %v2391, 4
      %v2394 = vrot.slane %v196, 5
      %v2395 = vsel %vm2138, %v2393, %v2394
      %v2396 = vrot.slane %v2394, 4
      %v2397 = vrot.slane %v264, 5
      %v2398 = vsel %vm2138, %v2396, %v2397
      %v2399 = vrot.slane %v1964, 5
      %v2400 = vrot.slane %v2399, 4
      %v2401 = vrot.slane %v198, 5
      %v2402 = vsel %vm2138, %v2400, %v2401
      %v2403 = vrot.slane %v2401, 4
      %v2404 = vrot.slane %v199, 5
      %v2405 = vsel %vm2138, %v2403, %v2404
      %v2406 = vrot.slane %v2404, 4
      %v2407 = vrot.slane %v200, 5
      %v2408 = vsel %vm2138, %v2406, %v2407
      %v2409 = vrot.slane %v2407, 4
      %v2410 = vrot.slane %v265, 5
      %v2411 = vsel %vm2138, %v2409, %v2410
      %v2412 = vrot.slane %v1965, 5
      %v2413 = vrot.slane %v2412, 4
      %v2414 = vrot.slane %v202, 5
      %v2415 = vsel %vm2138, %v2413, %v2414
      %v2416 = vrot.slane %v2414, 4
      %v2417 = vrot.slane %v203, 5
      %v2418 = vsel %vm2138, %v2416, %v2417
      %v2419 = vrot.slane %v2417, 4
      %v2420 = vrot.slane %v204, 5
      %v2421 = vsel %vm2138, %v2419, %v2420
      %v2422 = vrot.slane %v2420, 4
      %v2423 = vrot.slane %v266, 5
      %v2424 = vsel %vm2138, %v2422, %v2423
      %v2425 = vrot.slane %v1966, 5
      %v2426 = vrot.slane %v2425, 4
      %v2427 = vrot.slane %v206, 5
      %v2428 = vsel %vm2138, %v2426, %v2427
      %v2429 = vrot.slane %v2427, 4
      %v2430 = vrot.slane %v207, 5
      %v2431 = vsel %vm2138, %v2429, %v2430
      %v2432 = vrot.slane %v2430, 4
      %v2433 = vrot.slane %v208, 5
      %v2434 = vsel %vm2138, %v2432, %v2433
      %v2435 = vrot.slane %v2433, 4
      %v2436 = vrot.slane %v267, 5
      %v2437 = vsel %vm2138, %v2435, %v2436
      %v2438 = vrot.slane %v1967, 5
      %v2439 = vrot.slane %v2438, 4
      %v2440 = vrot.slane %v210, 5
      %v2441 = vsel %vm2138, %v2439, %v2440
      %v2442 = vrot.slane %v2440, 4
      %v2443 = vrot.slane %v211, 5
      %v2444 = vsel %vm2138, %v2442, %v2443
      %v2445 = vrot.slane %v2443, 4
      %v2446 = vrot.slane %v212, 5
      %v2447 = vsel %vm2138, %v2445, %v2446
      %v2448 = vrot.slane %v2446, 4
      %v2449 = vrot.slane %v268, 5
      %v2450 = vsel %vm2138, %v2448, %v2449
      %v2451 = vrot.slane %v1968, 5
      %v2452 = vrot.slane %v2451, 4
      %v2453 = vrot.slane %v214, 5
      %v2454 = vsel %vm2138, %v2452, %v2453
      %v2455 = vrot.slane %v2453, 4
      %v2456 = vrot.slane %v215, 5
      %v2457 = vsel %vm2138, %v2455, %v2456
      %v2458 = vrot.slane %v2456, 4
      %v2459 = vrot.slane %v216, 5
      %v2460 = vsel %vm2138, %v2458, %v2459
      %v2461 = vrot.slane %v2459, 4
      %v2462 = vrot.slane %v269, 5
      %v2463 = vsel %vm2138, %v2461, %v2462
      %v2464 = vrot.slane %v1969, 5
      %v2465 = vrot.slane %v2464, 4
      %v2466 = vrot.slane %v218, 5
      %v2467 = vsel %vm2138, %v2465, %v2466
      %v2468 = vrot.slane %v2466, 4
      %v2469 = vrot.slane %v219, 5
      %v2470 = vsel %vm2138, %v2468, %v2469
      %v2471 = vrot.slane %v2469, 4
      %v2472 = vrot.slane %v220, 5
      %v2473 = vsel %vm2138, %v2471, %v2472
      %v2474 = vrot.slane %v2472, 4
      %v2475 = vrot.slane %v270, 5
      %v2476 = vsel %vm2138, %v2474, %v2475
      %v2477 = vrot.slane %v1970, 5
      %v2478 = vrot.slane %v2477, 4
      %v2479 = vrot.slane %v222, 5
      %v2480 = vsel %vm2138, %v2478, %v2479
      %v2481 = vrot.slane %v2479, 4
      %v2482 = vrot.slane %v223, 5
      %v2483 = vsel %vm2138, %v2481, %v2482
      %v2484 = vrot.slane %v2482, 4
      %v2485 = vrot.slane %v224, 5
      %v2486 = vsel %vm2138, %v2484, %v2485
      %v2487 = vrot.slane %v2485, 4
      %v2488 = vrot.slane %v271, 5
      %v2489 = vsel %vm2138, %v2487, %v2488
      %v2490 = vrot.slane %v1971, 5
      %v2491 = vrot.slane %v2490, 4
      %v2492 = vrot.slane %v226, 5
      %v2493 = vsel %vm2138, %v2491, %v2492
      %v2494 = vrot.slane %v2492, 4
      %v2495 = vrot.slane %v227, 5
      %v2496 = vsel %vm2138, %v2494, %v2495
      %v2497 = vrot.slane %v2495, 4
      %v2498 = vrot.slane %v228, 5
      %v2499 = vsel %vm2138, %v2497, %v2498
      %v2500 = vrot.slane %v2498, 4
      %v2501 = vrot.slane %v272, 5
      %v2502 = vsel %vm2138, %v2500, %v2501
      %v2503 = vrot.slane %v1972, 5
      %v2504 = vrot.slane %v2503, 4
      %v2505 = vrot.slane %v230, 5
      %v2506 = vsel %vm2138, %v2504, %v2505
      %v2507 = vrot.slane %v2505, 4
      %v2508 = vrot.slane %v231, 5
      %v2509 = vsel %vm2138, %v2507, %v2508
      %v2510 = vrot.slane %v2508, 4
      %v2511 = vrot.slane %v232, 5
      %v2512 = vsel %vm2138, %v2510, %v2511
      %v2513 = vrot.slane %v2511, 4
      %v2514 = vrot.slane %v273, 5
      %v2515 = vsel %vm2138, %v2513, %v2514
      %v2516 = vrot.slane %v1973, 5
      %v2517 = vrot.slane %v2516, 4
      %v2518 = vrot.slane %v234, 5
      %v2519 = vsel %vm2138, %v2517, %v2518
      %v2520 = vrot.slane %v2518, 4
      %v2521 = vrot.slane %v235, 5
      %v2522 = vsel %vm2138, %v2520, %v2521
      %v2523 = vrot.slane %v2521, 4
      %v2524 = vrot.slane %v236, 5
      %v2525 = vsel %vm2138, %v2523, %v2524
      %v2526 = vrot.slane %v2524, 4
      %v2527 = vrot.slane %v274, 5
      %v2528 = vsel %vm2138, %v2526, %v2527
      %v2529 = vrot.slane %v1974, 5
      %v2530 = vrot.slane %v2529, 4
      %v2531 = vrot.slane %v238, 5
      %v2532 = vsel %vm2138, %v2530, %v2531
      %v2533 = vrot.slane %v2531, 4
      %v2534 = vrot.slane %v239, 5
      %v2535 = vsel %vm2138, %v2533, %v2534
      %v2536 = vrot.slane %v2534, 4
      %v2537 = vrot.slane %v240, 5
      %v2538 = vsel %vm2138, %v2536, %v2537
      %v2539 = vrot.slane %v2537, 4
      %v2540 = vrot.slane %v275, 5
      %v2541 = vsel %vm2138, %v2539, %v2540
      %v2542 = vrot.slane %v1975, 5
      %v2543 = vrot.slane %v2542, 4
      %v2544 = vrot.slane %v242, 5
      %v2545 = vsel %vm2138, %v2543, %v2544
      %v2546 = vrot.slane %v2544, 4
      %v2547 = vrot.slane %v243, 5
      %v2548 = vsel %vm2138, %v2546, %v2547
      %v2549 = vrot.slane %v2547, 4
      %v2550 = vrot.slane %v244, 5
      %v2551 = vsel %vm2138, %v2549, %v2550
      %v2552 = vrot.slane %v2550, 4
      %v2553 = vrot.slane %v276, 5
      %v2554 = vsel %vm2138, %v2552, %v2553
      %v2683 = vmax.bf16 %v1816, %v2142
      %v2684 = vmax.bf16 %v1817, %v2145
      %v2685 = vmax.bf16 %v1818, %v2148
      %v2686 = vmax.bf16 %v1819, %v2151
      %v2687 = vmax.bf16 %v1820, %v2155
      %v2688 = vmax.bf16 %v1821, %v2158
      %v2689 = vmax.bf16 %v1822, %v2161
      %v2690 = vmax.bf16 %v1823, %v2164
      %v2691 = vmax.bf16 %v1824, %v2168
      %v2692 = vmax.bf16 %v1825, %v2171
      %v2693 = vmax.bf16 %v1826, %v2174
      %v2694 = vmax.bf16 %v1827, %v2177
      %v2695 = vmax.bf16 %v1828, %v2181
      %v2696 = vmax.bf16 %v1829, %v2184
      %v2697 = vmax.bf16 %v1830, %v2187
      %v2698 = vmax.bf16 %v1831, %v2190
      %v2699 = vmax.bf16 %v1832, %v2194
      %v2700 = vmax.bf16 %v1833, %v2197
      %v2701 = vmax.bf16 %v1834, %v2200
      %v2702 = vmax.bf16 %v1835, %v2203
      %v2703 = vmax.bf16 %v1836, %v2207
      %v2704 = vmax.bf16 %v1837, %v2210
      %v2705 = vmax.bf16 %v1838, %v2213
      %v2706 = vmax.bf16 %v1839, %v2216
      %v2707 = vmax.bf16 %v1840, %v2220
      %v2708 = vmax.bf16 %v1841, %v2223
      %v2709 = vmax.bf16 %v1842, %v2226
      %v2710 = vmax.bf16 %v1843, %v2229
      %v2711 = vmax.bf16 %v1844, %v2233
      %v2712 = vmax.bf16 %v1845, %v2236
      %v2713 = vmax.bf16 %v1846, %v2239
      %v2714 = vmax.bf16 %v1847, %v2242
      %v2715 = vmax.bf16 %v1848, %v2246
      %v2716 = vmax.bf16 %v1849, %v2249
      %v2717 = vmax.bf16 %v1850, %v2252
      %v2718 = vmax.bf16 %v1851, %v2255
      %v2719 = vmax.bf16 %v1852, %v2259
      %v2720 = vmax.bf16 %v1853, %v2262
      %v2721 = vmax.bf16 %v1854, %v2265
      %v2722 = vmax.bf16 %v1855, %v2268
      %v2723 = vmax.bf16 %v1856, %v2272
      %v2724 = vmax.bf16 %v1857, %v2275
      %v2725 = vmax.bf16 %v1858, %v2278
      %v2726 = vmax.bf16 %v1859, %v2281
      %v2727 = vmax.bf16 %v1860, %v2285
      %v2728 = vmax.bf16 %v1861, %v2288
      %v2729 = vmax.bf16 %v1862, %v2291
      %v2730 = vmax.bf16 %v1863, %v2294
      %v2731 = vmax.bf16 %v1864, %v2298
      %v2732 = vmax.bf16 %v1865, %v2301
      %v2733 = vmax.bf16 %v1866, %v2304
      %v2734 = vmax.bf16 %v1867, %v2307
      %v2735 = vmax.bf16 %v1868, %v2311
      %v2736 = vmax.bf16 %v1869, %v2314
      %v2737 = vmax.bf16 %v1870, %v2317
      %v2738 = vmax.bf16 %v1871, %v2320
      %v2739 = vmax.bf16 %v1872, %v2324
      %v2740 = vmax.bf16 %v1873, %v2327
      %v2741 = vmax.bf16 %v1874, %v2330
      %v2742 = vmax.bf16 %v1875, %v2333
      %v2743 = vmax.bf16 %v1876, %v2337
      %v2744 = vmax.bf16 %v1877, %v2340
      %v2745 = vmax.bf16 %v1878, %v2343
      %v2746 = vmax.bf16 %v1879, %v2346
      %v2747 = vmax.bf16 %v1880, %v2350
      %v2748 = vmax.bf16 %v1881, %v2353
      %v2749 = vmax.bf16 %v1882, %v2356
      %v2750 = vmax.bf16 %v1883, %v2359
      %v2751 = vmax.bf16 %v1884, %v2363
      %v2752 = vmax.bf16 %v1885, %v2366
      %v2753 = vmax.bf16 %v1886, %v2369
      %v2754 = vmax.bf16 %v1887, %v2372
      %v2755 = vmax.bf16 %v1888, %v2376
      %v2756 = vmax.bf16 %v1889, %v2379
      %v2757 = vmax.bf16 %v1890, %v2382
      %v2758 = vmax.bf16 %v1891, %v2385
      %v2759 = vmax.bf16 %v1892, %v2389
      %v2760 = vmax.bf16 %v1893, %v2392
      %v2761 = vmax.bf16 %v1894, %v2395
      %v2762 = vmax.bf16 %v1895, %v2398
      %v2763 = vmax.bf16 %v1896, %v2402
      %v2764 = vmax.bf16 %v1897, %v2405
      %v2765 = vmax.bf16 %v1898, %v2408
      %v2766 = vmax.bf16 %v1899, %v2411
      %v2767 = vmax.bf16 %v1900, %v2415
      %v2768 = vmax.bf16 %v1901, %v2418
      %v2769 = vmax.bf16 %v1902, %v2421
      %v2770 = vmax.bf16 %v1903, %v2424
      %v2771 = vmax.bf16 %v1904, %v2428
      %v2772 = vmax.bf16 %v1905, %v2431
      %v2773 = vmax.bf16 %v1906, %v2434
      %v2774 = vmax.bf16 %v1907, %v2437
      %v2775 = vmax.bf16 %v1908, %v2441
      %v2776 = vmax.bf16 %v1909, %v2444
      %v2777 = vmax.bf16 %v1910, %v2447
      %v2778 = vmax.bf16 %v1911, %v2450
      %v2779 = vmax.bf16 %v1912, %v2454
      %v2780 = vmax.bf16 %v1913, %v2457
      %v2781 = vmax.bf16 %v1914, %v2460
      %v2782 = vmax.bf16 %v1915, %v2463
      %v2783 = vmax.bf16 %v1916, %v2467
      %v2784 = vmax.bf16 %v1917, %v2470
      %v2785 = vmax.bf16 %v1918, %v2473
      %v2786 = vmax.bf16 %v1919, %v2476
      %v2787 = vmax.bf16 %v1920, %v2480
      %v2788 = vmax.bf16 %v1921, %v2483
      %v2789 = vmax.bf16 %v1922, %v2486
      %v2790 = vmax.bf16 %v1923, %v2489
      %v2791 = vmax.bf16 %v1924, %v2493
      %v2792 = vmax.bf16 %v1925, %v2496
      %v2793 = vmax.bf16 %v1926, %v2499
      %v2794 = vmax.bf16 %v1927, %v2502
      %v2795 = vmax.bf16 %v1928, %v2506
      %v2796 = vmax.bf16 %v1929, %v2509
      %v2797 = vmax.bf16 %v1930, %v2512
      %v2798 = vmax.bf16 %v1931, %v2515
      %v2799 = vmax.bf16 %v1932, %v2519
      %v2800 = vmax.bf16 %v1933, %v2522
      %v2801 = vmax.bf16 %v1934, %v2525
      %v2802 = vmax.bf16 %v1935, %v2528
      %v2803 = vmax.bf16 %v1936, %v2532
      %v2804 = vmax.bf16 %v1937, %v2535
      %v2805 = vmax.bf16 %v1938, %v2538
      %v2806 = vmax.bf16 %v1939, %v2541
      %v2807 = vmax.bf16 %v1940, %v2545
      %v2808 = vmax.bf16 %v1941, %v2548
      %v2809 = vmax.bf16 %v1942, %v2551
      %v2810 = vmax.bf16 %v1943, %v2554
      %s2811 = scalar_lea.vmem %s111, 20
      %v2812 = vld [vmem:[%s2811] sm:$0xf]
      %v2813 = vld [vmem:[%s2811 + $0x4] sm:$0xf]
      %v2814 = vld [vmem:[%s2811 + $0x8] sm:$0xf]
      %v2815 = vld [vmem:[%s2811 + $0xc] sm:$0xf]
      %v2816 = vld [vmem:[%s2811 + $0x14] sm:$0xf]
      %v2817 = vld [vmem:[%s2811 + $0x18] sm:$0xf]
      %v2818 = vld [vmem:[%s2811 + $0x1c] sm:$0xf]
      %v2819 = vld [vmem:[%s2811 + $0x20] sm:$0xf]
      %v2820 = vld [vmem:[%s2811 + $0x28] sm:$0xf]
      %v2821 = vld [vmem:[%s2811 + $0x2c] sm:$0xf]
      %v2822 = vld [vmem:[%s2811 + $0x30] sm:$0xf]
      %v2823 = vld [vmem:[%s2811 + $0x34] sm:$0xf]
      %v2824 = vld [vmem:[%s2811 + $0x3c] sm:$0xf]
      %v2825 = vld [vmem:[%s2811 + $0x40] sm:$0xf]
      %v2826 = vld [vmem:[%s2811 + $0x44] sm:$0xf]
      %v2827 = vld [vmem:[%s2811 + $0x48] sm:$0xf]
      %v2828 = vld [vmem:[%s2811 + $0x50] sm:$0xf]
      %v2829 = vld [vmem:[%s2811 + $0x54] sm:$0xf]
      %v2830 = vld [vmem:[%s2811 + $0x58] sm:$0xf]
      %v2831 = vld [vmem:[%s2811 + $0x5c] sm:$0xf]
      %v2832 = vld [vmem:[%s2811 + $0x64] sm:$0xf]
      %v2833 = vld [vmem:[%s2811 + $0x68] sm:$0xf]
      %v2834 = vld [vmem:[%s2811 + $0x6c] sm:$0xf]
      %v2835 = vld [vmem:[%s2811 + $0x70] sm:$0xf]
      %v2836 = vld [vmem:[%s2811 + $0x78] sm:$0xf]
      %v2837 = vld [vmem:[%s2811 + $0x7c] sm:$0xf]
      %v2838 = vld [vmem:[%s2811 + $0x80] sm:$0xf]
      %v2839 = vld [vmem:[%s2811 + $0x84] sm:$0xf]
      %v2840 = vld [vmem:[%s2811 + $0x8c] sm:$0xf]
      %v2841 = vld [vmem:[%s2811 + $0x90] sm:$0xf]
      %v2842 = vld [vmem:[%s2811 + $0x94] sm:$0xf]
      %v2843 = vld [vmem:[%s2811 + $0x98] sm:$0xf]
      %v2844 = vld [vmem:[%s2811 + $0xa0] sm:$0xf]
      %v2845 = vld [vmem:[%s2811 + $0xa4] sm:$0xf]
      %v2846 = vld [vmem:[%s2811 + $0xa8] sm:$0xf]
      %v2847 = vld [vmem:[%s2811 + $0xac] sm:$0xf]
      %v2848 = vld [vmem:[%s2811 + $0xb4] sm:$0xf]
      %v2849 = vld [vmem:[%s2811 + $0xb8] sm:$0xf]
      %v2850 = vld [vmem:[%s2811 + $0xbc] sm:$0xf]
      %v2851 = vld [vmem:[%s2811 + $0xc0] sm:$0xf]
      %v2852 = vld [vmem:[%s2811 + $0xc8] sm:$0xf]
      %v2853 = vld [vmem:[%s2811 + $0xcc] sm:$0xf]
      %v2854 = vld [vmem:[%s2811 + $0xd0] sm:$0xf]
      %v2855 = vld [vmem:[%s2811 + $0xd4] sm:$0xf]
      %v2856 = vld [vmem:[%s2811 + $0xdc] sm:$0xf]
      %v2857 = vld [vmem:[%s2811 + $0xe0] sm:$0xf]
      %v2858 = vld [vmem:[%s2811 + $0xe4] sm:$0xf]
      %v2859 = vld [vmem:[%s2811 + $0xe8] sm:$0xf]
      %v2860 = vld [vmem:[%s2811 + $0xf0] sm:$0xf]
      %v2861 = vld [vmem:[%s2811 + $0xf4] sm:$0xf]
      %v2862 = vld [vmem:[%s2811 + $0xf8] sm:$0xf]
      %v2863 = vld [vmem:[%s2811 + $0xfc] sm:$0xf]
      %v2864 = vld [vmem:[%s2811 + $0x104] sm:$0xf]
      %v2865 = vld [vmem:[%s2811 + $0x108] sm:$0xf]
      %v2866 = vld [vmem:[%s2811 + $0x10c] sm:$0xf]
      %v2867 = vld [vmem:[%s2811 + $0x110] sm:$0xf]
      %v2868 = vld [vmem:[%s2811 + $0x118] sm:$0xf]
      %v2869 = vld [vmem:[%s2811 + $0x11c] sm:$0xf]
      %v2870 = vld [vmem:[%s2811 + $0x120] sm:$0xf]
      %v2871 = vld [vmem:[%s2811 + $0x124] sm:$0xf]
      %v2872 = vld [vmem:[%s2811 + $0x12c] sm:$0xf]
      %v2873 = vld [vmem:[%s2811 + $0x130] sm:$0xf]
      %v2874 = vld [vmem:[%s2811 + $0x134] sm:$0xf]
      %v2875 = vld [vmem:[%s2811 + $0x138] sm:$0xf]
      %v2876 = vld [vmem:[%s2811 + $0x140] sm:$0xf]
      %v2877 = vld [vmem:[%s2811 + $0x144] sm:$0xf]
      %v2878 = vld [vmem:[%s2811 + $0x148] sm:$0xf]
      %v2879 = vld [vmem:[%s2811 + $0x14c] sm:$0xf]
      %v2880 = vld [vmem:[%s2811 + $0x154] sm:$0xf]
      %v2881 = vld [vmem:[%s2811 + $0x158] sm:$0xf]
      %v2882 = vld [vmem:[%s2811 + $0x15c] sm:$0xf]
      %v2883 = vld [vmem:[%s2811 + $0x160] sm:$0xf]
      %v2884 = vld [vmem:[%s2811 + $0x168] sm:$0xf]
      %v2885 = vld [vmem:[%s2811 + $0x16c] sm:$0xf]
      %v2886 = vld [vmem:[%s2811 + $0x170] sm:$0xf]
      %v2887 = vld [vmem:[%s2811 + $0x174] sm:$0xf]
      %v2888 = vld [vmem:[%s2811 + $0x17c] sm:$0xf]
      %v2889 = vld [vmem:[%s2811 + $0x180] sm:$0xf]
      %v2890 = vld [vmem:[%s2811 + $0x184] sm:$0xf]
      %v2891 = vld [vmem:[%s2811 + $0x188] sm:$0xf]
      %v2892 = vld [vmem:[%s2811 + $0x190] sm:$0xf]
      %v2893 = vld [vmem:[%s2811 + $0x194] sm:$0xf]
      %v2894 = vld [vmem:[%s2811 + $0x198] sm:$0xf]
      %v2895 = vld [vmem:[%s2811 + $0x19c] sm:$0xf]
      %v2896 = vld [vmem:[%s2811 + $0x1a4] sm:$0xf]
      %v2897 = vld [vmem:[%s2811 + $0x1a8] sm:$0xf]
      %v2898 = vld [vmem:[%s2811 + $0x1ac] sm:$0xf]
      %v2899 = vld [vmem:[%s2811 + $0x1b0] sm:$0xf]
      %v2900 = vld [vmem:[%s2811 + $0x1b8] sm:$0xf]
      %v2901 = vld [vmem:[%s2811 + $0x1bc] sm:$0xf]
      %v2902 = vld [vmem:[%s2811 + $0x1c0] sm:$0xf]
      %v2903 = vld [vmem:[%s2811 + $0x1c4] sm:$0xf]
      %v2904 = vld [vmem:[%s2811 + $0x1cc] sm:$0xf]
      %v2905 = vld [vmem:[%s2811 + $0x1d0] sm:$0xf]
      %v2906 = vld [vmem:[%s2811 + $0x1d4] sm:$0xf]
      %v2907 = vld [vmem:[%s2811 + $0x1d8] sm:$0xf]
      %v2908 = vld [vmem:[%s2811 + $0x1e0] sm:$0xf]
      %v2909 = vld [vmem:[%s2811 + $0x1e4] sm:$0xf]
      %v2910 = vld [vmem:[%s2811 + $0x1e8] sm:$0xf]
      %v2911 = vld [vmem:[%s2811 + $0x1ec] sm:$0xf]
      %v2912 = vld [vmem:[%s2811 + $0x1f4] sm:$0xf]
      %v2913 = vld [vmem:[%s2811 + $0x1f8] sm:$0xf]
      %v2914 = vld [vmem:[%s2811 + $0x1fc] sm:$0xf]
      %v2915 = vld [vmem:[%s2811 + $0x200] sm:$0xf]
      %v2916 = vld [vmem:[%s2811 + $0x208] sm:$0xf]
      %v2917 = vld [vmem:[%s2811 + $0x20c] sm:$0xf]
      %v2918 = vld [vmem:[%s2811 + $0x210] sm:$0xf]
      %v2919 = vld [vmem:[%s2811 + $0x214] sm:$0xf]
      %v2920 = vld [vmem:[%s2811 + $0x21c] sm:$0xf]
      %v2921 = vld [vmem:[%s2811 + $0x220] sm:$0xf]
      %v2922 = vld [vmem:[%s2811 + $0x224] sm:$0xf]
      %v2923 = vld [vmem:[%s2811 + $0x228] sm:$0xf]
      %v2924 = vld [vmem:[%s2811 + $0x230] sm:$0xf]
      %v2925 = vld [vmem:[%s2811 + $0x234] sm:$0xf]
      %v2926 = vld [vmem:[%s2811 + $0x238] sm:$0xf]
      %v2927 = vld [vmem:[%s2811 + $0x23c] sm:$0xf]
      %v2928 = vld [vmem:[%s2811 + $0x244] sm:$0xf]
      %v2929 = vld [vmem:[%s2811 + $0x248] sm:$0xf]
      %v2930 = vld [vmem:[%s2811 + $0x24c] sm:$0xf]
      %v2931 = vld [vmem:[%s2811 + $0x250] sm:$0xf]
      %v2932 = vld [vmem:[%s2811 + $0x258] sm:$0xf]
      %v2933 = vld [vmem:[%s2811 + $0x25c] sm:$0xf]
      %v2934 = vld [vmem:[%s2811 + $0x260] sm:$0xf]
      %v2935 = vld [vmem:[%s2811 + $0x264] sm:$0xf]
      %v2936 = vld [vmem:[%s2811 + $0x26c] sm:$0xf]
      %v2937 = vld [vmem:[%s2811 + $0x270] sm:$0xf]
      %v2938 = vld [vmem:[%s2811 + $0x274] sm:$0xf]
      %v2939 = vld [vmem:[%s2811 + $0x278] sm:$0xf]
      %v2940 = vmax.bf16 %v2683, %v2812
      %v2941 = vmax.bf16 %v2684, %v2813
      %v2942 = vmax.bf16 %v2685, %v2814
      %v2943 = vmax.bf16 %v2686, %v2815
      %v2944 = vmax.bf16 %v2687, %v2816
      %v2945 = vmax.bf16 %v2688, %v2817
      %v2946 = vmax.bf16 %v2689, %v2818
      %v2947 = vmax.bf16 %v2690, %v2819
      %v2948 = vmax.bf16 %v2691, %v2820
      %v2949 = vmax.bf16 %v2692, %v2821
      %v2950 = vmax.bf16 %v2693, %v2822
      %v2951 = vmax.bf16 %v2694, %v2823
      %v2952 = vmax.bf16 %v2695, %v2824
      %v2953 = vmax.bf16 %v2696, %v2825
      %v2954 = vmax.bf16 %v2697, %v2826
      %v2955 = vmax.bf16 %v2698, %v2827
      %v2956 = vmax.bf16 %v2699, %v2828
      %v2957 = vmax.bf16 %v2700, %v2829
      %v2958 = vmax.bf16 %v2701, %v2830
      %v2959 = vmax.bf16 %v2702, %v2831
      %v2960 = vmax.bf16 %v2703, %v2832
      %v2961 = vmax.bf16 %v2704, %v2833
      %v2962 = vmax.bf16 %v2705, %v2834
      %v2963 = vmax.bf16 %v2706, %v2835
      %v2964 = vmax.bf16 %v2707, %v2836
      %v2965 = vmax.bf16 %v2708, %v2837
      %v2966 = vmax.bf16 %v2709, %v2838
      %v2967 = vmax.bf16 %v2710, %v2839
      %v2968 = vmax.bf16 %v2711, %v2840
      %v2969 = vmax.bf16 %v2712, %v2841
      %v2970 = vmax.bf16 %v2713, %v2842
      %v2971 = vmax.bf16 %v2714, %v2843
      %v2972 = vmax.bf16 %v2715, %v2844
      %v2973 = vmax.bf16 %v2716, %v2845
      %v2974 = vmax.bf16 %v2717, %v2846
      %v2975 = vmax.bf16 %v2718, %v2847
      %v2976 = vmax.bf16 %v2719, %v2848
      %v2977 = vmax.bf16 %v2720, %v2849
      %v2978 = vmax.bf16 %v2721, %v2850
      %v2979 = vmax.bf16 %v2722, %v2851
      %v2980 = vmax.bf16 %v2723, %v2852
      %v2981 = vmax.bf16 %v2724, %v2853
      %v2982 = vmax.bf16 %v2725, %v2854
      %v2983 = vmax.bf16 %v2726, %v2855
      %v2984 = vmax.bf16 %v2727, %v2856
      %v2985 = vmax.bf16 %v2728, %v2857
      %v2986 = vmax.bf16 %v2729, %v2858
      %v2987 = vmax.bf16 %v2730, %v2859
      %v2988 = vmax.bf16 %v2731, %v2860
      %v2989 = vmax.bf16 %v2732, %v2861
      %v2990 = vmax.bf16 %v2733, %v2862
      %v2991 = vmax.bf16 %v2734, %v2863
      %v2992 = vmax.bf16 %v2735, %v2864
      %v2993 = vmax.bf16 %v2736, %v2865
      %v2994 = vmax.bf16 %v2737, %v2866
      %v2995 = vmax.bf16 %v2738, %v2867
      %v2996 = vmax.bf16 %v2739, %v2868
      %v2997 = vmax.bf16 %v2740, %v2869
      %v2998 = vmax.bf16 %v2741, %v2870
      %v2999 = vmax.bf16 %v2742, %v2871
      %v3000 = vmax.bf16 %v2743, %v2872
      %v3001 = vmax.bf16 %v2744, %v2873
      %v3002 = vmax.bf16 %v2745, %v2874
      %v3003 = vmax.bf16 %v2746, %v2875
      %v3004 = vmax.bf16 %v2747, %v2876
      %v3005 = vmax.bf16 %v2748, %v2877
      %v3006 = vmax.bf16 %v2749, %v2878
      %v3007 = vmax.bf16 %v2750, %v2879
      %v3008 = vmax.bf16 %v2751, %v2880
      %v3009 = vmax.bf16 %v2752, %v2881
      %v3010 = vmax.bf16 %v2753, %v2882
      %v3011 = vmax.bf16 %v2754, %v2883
      %v3012 = vmax.bf16 %v2755, %v2884
      %v3013 = vmax.bf16 %v2756, %v2885
      %v3014 = vmax.bf16 %v2757, %v2886
      %v3015 = vmax.bf16 %v2758, %v2887
      %v3016 = vmax.bf16 %v2759, %v2888
      %v3017 = vmax.bf16 %v2760, %v2889
      %v3018 = vmax.bf16 %v2761, %v2890
      %v3019 = vmax.bf16 %v2762, %v2891
      %v3020 = vmax.bf16 %v2763, %v2892
      %v3021 = vmax.bf16 %v2764, %v2893
      %v3022 = vmax.bf16 %v2765, %v2894
      %v3023 = vmax.bf16 %v2766, %v2895
      %v3024 = vmax.bf16 %v2767, %v2896
      %v3025 = vmax.bf16 %v2768, %v2897
      %v3026 = vmax.bf16 %v2769, %v2898
      %v3027 = vmax.bf16 %v2770, %v2899
      %v3028 = vmax.bf16 %v2771, %v2900
      %v3029 = vmax.bf16 %v2772, %v2901
      %v3030 = vmax.bf16 %v2773, %v2902
      %v3031 = vmax.bf16 %v2774, %v2903
      %v3032 = vmax.bf16 %v2775, %v2904
      %v3033 = vmax.bf16 %v2776, %v2905
      %v3034 = vmax.bf16 %v2777, %v2906
      %v3035 = vmax.bf16 %v2778, %v2907
      %v3036 = vmax.bf16 %v2779, %v2908
      %v3037 = vmax.bf16 %v2780, %v2909
      %v3038 = vmax.bf16 %v2781, %v2910
      %v3039 = vmax.bf16 %v2782, %v2911
      %v3040 = vmax.bf16 %v2783, %v2912
      %v3041 = vmax.bf16 %v2784, %v2913
      %v3042 = vmax.bf16 %v2785, %v2914
      %v3043 = vmax.bf16 %v2786, %v2915
      %v3044 = vmax.bf16 %v2787, %v2916
      %v3045 = vmax.bf16 %v2788, %v2917
      %v3046 = vmax.bf16 %v2789, %v2918
      %v3047 = vmax.bf16 %v2790, %v2919
      %v3048 = vmax.bf16 %v2791, %v2920
      %v3049 = vmax.bf16 %v2792, %v2921
      %v3050 = vmax.bf16 %v2793, %v2922
      %v3051 = vmax.bf16 %v2794, %v2923
      %v3052 = vmax.bf16 %v2795, %v2924
      %v3053 = vmax.bf16 %v2796, %v2925
      %v3054 = vmax.bf16 %v2797, %v2926
      %v3055 = vmax.bf16 %v2798, %v2927
      %v3056 = vmax.bf16 %v2799, %v2928
      %v3057 = vmax.bf16 %v2800, %v2929
      %v3058 = vmax.bf16 %v2801, %v2930
      %v3059 = vmax.bf16 %v2802, %v2931
      %v3060 = vmax.bf16 %v2803, %v2932
      %v3061 = vmax.bf16 %v2804, %v2933
      %v3062 = vmax.bf16 %v2805, %v2934
      %v3063 = vmax.bf16 %v2806, %v2935
      %v3064 = vmax.bf16 %v2807, %v2936
      %v3065 = vmax.bf16 %v2808, %v2937
      %v3066 = vmax.bf16 %v2809, %v2938
      %v3067 = vmax.bf16 %v2810, %v2939
      %v3068 = vld [vmem:[%s2811 + $0x10] sm:$0x1]
      %v3069 = vld [vmem:[%s2811 + $0x24] sm:$0x1]
      %v3070 = vld [vmem:[%s2811 + $0x38] sm:$0x1]
      %v3071 = vld [vmem:[%s2811 + $0x4c] sm:$0x1]
      %v3072 = vld [vmem:[%s2811 + $0x60] sm:$0x1]
      %v3073 = vld [vmem:[%s2811 + $0x74] sm:$0x1]
      %v3074 = vld [vmem:[%s2811 + $0x88] sm:$0x1]
      %v3075 = vld [vmem:[%s2811 + $0x9c] sm:$0x1]
      %v3076 = vld [vmem:[%s2811 + $0xb0] sm:$0x1]
      %v3077 = vld [vmem:[%s2811 + $0xc4] sm:$0x1]
      %v3078 = vld [vmem:[%s2811 + $0xd8] sm:$0x1]
      %v3079 = vld [vmem:[%s2811 + $0xec] sm:$0x1]
      %v3080 = vld [vmem:[%s2811 + $0x100] sm:$0x1]
      %v3081 = vld [vmem:[%s2811 + $0x114] sm:$0x1]
      %v3082 = vld [vmem:[%s2811 + $0x128] sm:$0x1]
      %v3083 = vld [vmem:[%s2811 + $0x13c] sm:$0x1]
      %v3084 = vld [vmem:[%s2811 + $0x150] sm:$0x1]
      %v3085 = vld [vmem:[%s2811 + $0x164] sm:$0x1]
      %v3086 = vld [vmem:[%s2811 + $0x178] sm:$0x1]
      %v3087 = vld [vmem:[%s2811 + $0x18c] sm:$0x1]
      %v3088 = vld [vmem:[%s2811 + $0x1a0] sm:$0x1]
      %v3089 = vld [vmem:[%s2811 + $0x1b4] sm:$0x1]
      %v3090 = vld [vmem:[%s2811 + $0x1c8] sm:$0x1]
      %v3091 = vld [vmem:[%s2811 + $0x1dc] sm:$0x1]
      %v3092 = vld [vmem:[%s2811 + $0x1f0] sm:$0x1]
      %v3093 = vld [vmem:[%s2811 + $0x204] sm:$0x1]
      %v3094 = vld [vmem:[%s2811 + $0x218] sm:$0x1]
      %v3095 = vld [vmem:[%s2811 + $0x22c] sm:$0x1]
      %v3096 = vld [vmem:[%s2811 + $0x240] sm:$0x1]
      %v3097 = vld [vmem:[%s2811 + $0x254] sm:$0x1]
      %v3098 = vld [vmem:[%s2811 + $0x268] sm:$0x1]
      %v3099 = vld [vmem:[%s2811 + $0x27c] sm:$0x1]
      %v3101 = vshrl.u32 %v2812, 16
      %v3103 = vrot.slane %v3101, 4
      %v3104 = vshll.u32 %v2812, 16
      %v3106 = vrot.slane %v3104, 5
      %v3107 = vor.u32 %v3103, %v3106
      %v3108 = vrot.slane %v3107, 4
      %v3110 = vshll.u32 %v2813, 16
      %v3112 = vrot.slane %v3110, 5
      %v3113 = vsel %vm279, %v3108, %v3112
      %v3114 = vshrl.u32 %v2813, 16
      %v3116 = vrot.slane %v3114, 4
      %v3117 = vor.u32 %v3116, %v3112
      %v3118 = vrot.slane %v3117, 4
      %v3120 = vshll.u32 %v2814, 16
      %v3122 = vrot.slane %v3120, 5
      %v3123 = vsel %vm279, %v3118, %v3122
      %v3124 = vshrl.u32 %v2814, 16
      %v3126 = vrot.slane %v3124, 4
      %v3127 = vor.u32 %v3126, %v3122
      %v3128 = vrot.slane %v3127, 4
      %v3130 = vshll.u32 %v2815, 16
      %v3132 = vrot.slane %v3130, 5
      %v3133 = vsel %vm279, %v3128, %v3132
      %v3134 = vshrl.u32 %v2815, 16
      %v3136 = vrot.slane %v3134, 4
      %v3137 = vor.u32 %v3136, %v3132
      %v3138 = vrot.slane %v3137, 4
      %v3140 = vshll.u32 %v3068, 16
      %v3142 = vrot.slane %v3140, 5
      %v3143 = vsel %vm279, %v3138, %v3142
      %v3145 = vshrl.u32 %v2816, 16
      %v3147 = vrot.slane %v3145, 4
      %v3148 = vshll.u32 %v2816, 16
      %v3150 = vrot.slane %v3148, 5
      %v3151 = vor.u32 %v3147, %v3150
      %v3152 = vrot.slane %v3151, 4
      %v3154 = vshll.u32 %v2817, 16
      %v3156 = vrot.slane %v3154, 5
      %v3157 = vsel %vm279, %v3152, %v3156
      %v3158 = vshrl.u32 %v2817, 16
      %v3160 = vrot.slane %v3158, 4
      %v3161 = vor.u32 %v3160, %v3156
      %v3162 = vrot.slane %v3161, 4
      %v3164 = vshll.u32 %v2818, 16
      %v3166 = vrot.slane %v3164, 5
      %v3167 = vsel %vm279, %v3162, %v3166
      %v3168 = vshrl.u32 %v2818, 16
      %v3170 = vrot.slane %v3168, 4
      %v3171 = vor.u32 %v3170, %v3166
      %v3172 = vrot.slane %v3171, 4
      %v3174 = vshll.u32 %v2819, 16
      %v3176 = vrot.slane %v3174, 5
      %v3177 = vsel %vm279, %v3172, %v3176
      %v3178 = vshrl.u32 %v2819, 16
      %v3180 = vrot.slane %v3178, 4
      %v3181 = vor.u32 %v3180, %v3176
      %v3182 = vrot.slane %v3181, 4
      %v3184 = vshll.u32 %v3069, 16
      %v3186 = vrot.slane %v3184, 5
      %v3187 = vsel %vm279, %v3182, %v3186
      %v3189 = vshrl.u32 %v2820, 16
      %v3191 = vrot.slane %v3189, 4
      %v3192 = vshll.u32 %v2820, 16
      %v3194 = vrot.slane %v3192, 5
      %v3195 = vor.u32 %v3191, %v3194
      %v3196 = vrot.slane %v3195, 4
      %v3198 = vshll.u32 %v2821, 16
      %v3200 = vrot.slane %v3198, 5
      %v3201 = vsel %vm279, %v3196, %v3200
      %v3202 = vshrl.u32 %v2821, 16
      %v3204 = vrot.slane %v3202, 4
      %v3205 = vor.u32 %v3204, %v3200
      %v3206 = vrot.slane %v3205, 4
      %v3208 = vshll.u32 %v2822, 16
      %v3210 = vrot.slane %v3208, 5
      %v3211 = vsel %vm279, %v3206, %v3210
      %v3212 = vshrl.u32 %v2822, 16
      %v3214 = vrot.slane %v3212, 4
      %v3215 = vor.u32 %v3214, %v3210
      %v3216 = vrot.slane %v3215, 4
      %v3218 = vshll.u32 %v2823, 16
      %v3220 = vrot.slane %v3218, 5
      %v3221 = vsel %vm279, %v3216, %v3220
      %v3222 = vshrl.u32 %v2823, 16
      %v3224 = vrot.slane %v3222, 4
      %v3225 = vor.u32 %v3224, %v3220
      %v3226 = vrot.slane %v3225, 4
      %v3228 = vshll.u32 %v3070, 16
      %v3230 = vrot.slane %v3228, 5
      %v3231 = vsel %vm279, %v3226, %v3230
      %v3233 = vshrl.u32 %v2824, 16
      %v3235 = vrot.slane %v3233, 4
      %v3236 = vshll.u32 %v2824, 16
      %v3238 = vrot.slane %v3236, 5
      %v3239 = vor.u32 %v3235, %v3238
      %v3240 = vrot.slane %v3239, 4
      %v3242 = vshll.u32 %v2825, 16
      %v3244 = vrot.slane %v3242, 5
      %v3245 = vsel %vm279, %v3240, %v3244
      %v3246 = vshrl.u32 %v2825, 16
      %v3248 = vrot.slane %v3246, 4
      %v3249 = vor.u32 %v3248, %v3244
      %v3250 = vrot.slane %v3249, 4
      %v3252 = vshll.u32 %v2826, 16
      %v3254 = vrot.slane %v3252, 5
      %v3255 = vsel %vm279, %v3250, %v3254
      %v3256 = vshrl.u32 %v2826, 16
      %v3258 = vrot.slane %v3256, 4
      %v3259 = vor.u32 %v3258, %v3254
      %v3260 = vrot.slane %v3259, 4
      %v3262 = vshll.u32 %v2827, 16
      %v3264 = vrot.slane %v3262, 5
      %v3265 = vsel %vm279, %v3260, %v3264
      %v3266 = vshrl.u32 %v2827, 16
      %v3268 = vrot.slane %v3266, 4
      %v3269 = vor.u32 %v3268, %v3264
      %v3270 = vrot.slane %v3269, 4
      %v3272 = vshll.u32 %v3071, 16
      %v3274 = vrot.slane %v3272, 5
      %v3275 = vsel %vm279, %v3270, %v3274
      %v3277 = vshrl.u32 %v2828, 16
      %v3279 = vrot.slane %v3277, 4
      %v3280 = vshll.u32 %v2828, 16
      %v3282 = vrot.slane %v3280, 5
      %v3283 = vor.u32 %v3279, %v3282
      %v3284 = vrot.slane %v3283, 4
      %v3286 = vshll.u32 %v2829, 16
      %v3288 = vrot.slane %v3286, 5
      %v3289 = vsel %vm279, %v3284, %v3288
      %v3290 = vshrl.u32 %v2829, 16
      %v3292 = vrot.slane %v3290, 4
      %v3293 = vor.u32 %v3292, %v3288
      %v3294 = vrot.slane %v3293, 4
      %v3296 = vshll.u32 %v2830, 16
      %v3298 = vrot.slane %v3296, 5
      %v3299 = vsel %vm279, %v3294, %v3298
      %v3300 = vshrl.u32 %v2830, 16
      %v3302 = vrot.slane %v3300, 4
      %v3303 = vor.u32 %v3302, %v3298
      %v3304 = vrot.slane %v3303, 4
      %v3306 = vshll.u32 %v2831, 16
      %v3308 = vrot.slane %v3306, 5
      %v3309 = vsel %vm279, %v3304, %v3308
      %v3310 = vshrl.u32 %v2831, 16
      %v3312 = vrot.slane %v3310, 4
      %v3313 = vor.u32 %v3312, %v3308
      %v3314 = vrot.slane %v3313, 4
      %v3316 = vshll.u32 %v3072, 16
      %v3318 = vrot.slane %v3316, 5
      %v3319 = vsel %vm279, %v3314, %v3318
      %v3321 = vshrl.u32 %v2832, 16
      %v3323 = vrot.slane %v3321, 4
      %v3324 = vshll.u32 %v2832, 16
      %v3326 = vrot.slane %v3324, 5
      %v3327 = vor.u32 %v3323, %v3326
      %v3328 = vrot.slane %v3327, 4
      %v3330 = vshll.u32 %v2833, 16
      %v3332 = vrot.slane %v3330, 5
      %v3333 = vsel %vm279, %v3328, %v3332
      %v3334 = vshrl.u32 %v2833, 16
      %v3336 = vrot.slane %v3334, 4
      %v3337 = vor.u32 %v3336, %v3332
      %v3338 = vrot.slane %v3337, 4
      %v3340 = vshll.u32 %v2834, 16
      %v3342 = vrot.slane %v3340, 5
      %v3343 = vsel %vm279, %v3338, %v3342
      %v3344 = vshrl.u32 %v2834, 16
      %v3346 = vrot.slane %v3344, 4
      %v3347 = vor.u32 %v3346, %v3342
      %v3348 = vrot.slane %v3347, 4
      %v3350 = vshll.u32 %v2835, 16
      %v3352 = vrot.slane %v3350, 5
      %v3353 = vsel %vm279, %v3348, %v3352
      %v3354 = vshrl.u32 %v2835, 16
      %v3356 = vrot.slane %v3354, 4
      %v3357 = vor.u32 %v3356, %v3352
      %v3358 = vrot.slane %v3357, 4
      %v3360 = vshll.u32 %v3073, 16
      %v3362 = vrot.slane %v3360, 5
      %v3363 = vsel %vm279, %v3358, %v3362
      %v3365 = vshrl.u32 %v2836, 16
      %v3367 = vrot.slane %v3365, 4
      %v3368 = vshll.u32 %v2836, 16
      %v3370 = vrot.slane %v3368, 5
      %v3371 = vor.u32 %v3367, %v3370
      %v3372 = vrot.slane %v3371, 4
      %v3374 = vshll.u32 %v2837, 16
      %v3376 = vrot.slane %v3374, 5
      %v3377 = vsel %vm279, %v3372, %v3376
      %v3378 = vshrl.u32 %v2837, 16
      %v3380 = vrot.slane %v3378, 4
      %v3381 = vor.u32 %v3380, %v3376
      %v3382 = vrot.slane %v3381, 4
      %v3384 = vshll.u32 %v2838, 16
      %v3386 = vrot.slane %v3384, 5
      %v3387 = vsel %vm279, %v3382, %v3386
      %v3388 = vshrl.u32 %v2838, 16
      %v3390 = vrot.slane %v3388, 4
      %v3391 = vor.u32 %v3390, %v3386
      %v3392 = vrot.slane %v3391, 4
      %v3394 = vshll.u32 %v2839, 16
      %v3396 = vrot.slane %v3394, 5
      %v3397 = vsel %vm279, %v3392, %v3396
      %v3398 = vshrl.u32 %v2839, 16
      %v3400 = vrot.slane %v3398, 4
      %v3401 = vor.u32 %v3400, %v3396
      %v3402 = vrot.slane %v3401, 4
      %v3404 = vshll.u32 %v3074, 16
      %v3406 = vrot.slane %v3404, 5
      %v3407 = vsel %vm279, %v3402, %v3406
      %v3409 = vshrl.u32 %v2840, 16
      %v3411 = vrot.slane %v3409, 4
      %v3412 = vshll.u32 %v2840, 16
      %v3414 = vrot.slane %v3412, 5
      %v3415 = vor.u32 %v3411, %v3414
      %v3416 = vrot.slane %v3415, 4
      %v3418 = vshll.u32 %v2841, 16
      %v3420 = vrot.slane %v3418, 5
      %v3421 = vsel %vm279, %v3416, %v3420
      %v3422 = vshrl.u32 %v2841, 16
      %v3424 = vrot.slane %v3422, 4
      %v3425 = vor.u32 %v3424, %v3420
      %v3426 = vrot.slane %v3425, 4
      %v3428 = vshll.u32 %v2842, 16
      %v3430 = vrot.slane %v3428, 5
      %v3431 = vsel %vm279, %v3426, %v3430
      %v3432 = vshrl.u32 %v2842, 16
      %v3434 = vrot.slane %v3432, 4
      %v3435 = vor.u32 %v3434, %v3430
      %v3436 = vrot.slane %v3435, 4
      %v3438 = vshll.u32 %v2843, 16
      %v3440 = vrot.slane %v3438, 5
      %v3441 = vsel %vm279, %v3436, %v3440
      %v3442 = vshrl.u32 %v2843, 16
      %v3444 = vrot.slane %v3442, 4
      %v3445 = vor.u32 %v3444, %v3440
      %v3446 = vrot.slane %v3445, 4
      %v3448 = vshll.u32 %v3075, 16
      %v3450 = vrot.slane %v3448, 5
      %v3451 = vsel %vm279, %v3446, %v3450
      %v3453 = vshrl.u32 %v2844, 16
      %v3455 = vrot.slane %v3453, 4
      %v3456 = vshll.u32 %v2844, 16
      %v3458 = vrot.slane %v3456, 5
      %v3459 = vor.u32 %v3455, %v3458
      %v3460 = vrot.slane %v3459, 4
      %v3462 = vshll.u32 %v2845, 16
      %v3464 = vrot.slane %v3462, 5
      %v3465 = vsel %vm279, %v3460, %v3464
      %v3466 = vshrl.u32 %v2845, 16
      %v3468 = vrot.slane %v3466, 4
      %v3469 = vor.u32 %v3468, %v3464
      %v3470 = vrot.slane %v3469, 4
      %v3472 = vshll.u32 %v2846, 16
      %v3474 = vrot.slane %v3472, 5
      %v3475 = vsel %vm279, %v3470, %v3474
      %v3476 = vshrl.u32 %v2846, 16
      %v3478 = vrot.slane %v3476, 4
      %v3479 = vor.u32 %v3478, %v3474
      %v3480 = vrot.slane %v3479, 4
      %v3482 = vshll.u32 %v2847, 16
      %v3484 = vrot.slane %v3482, 5
      %v3485 = vsel %vm279, %v3480, %v3484
      %v3486 = vshrl.u32 %v2847, 16
      %v3488 = vrot.slane %v3486, 4
      %v3489 = vor.u32 %v3488, %v3484
      %v3490 = vrot.slane %v3489, 4
      %v3492 = vshll.u32 %v3076, 16
      %v3494 = vrot.slane %v3492, 5
      %v3495 = vsel %vm279, %v3490, %v3494
      %v3497 = vshrl.u32 %v2848, 16
      %v3499 = vrot.slane %v3497, 4
      %v3500 = vshll.u32 %v2848, 16
      %v3502 = vrot.slane %v3500, 5
      %v3503 = vor.u32 %v3499, %v3502
      %v3504 = vrot.slane %v3503, 4
      %v3506 = vshll.u32 %v2849, 16
      %v3508 = vrot.slane %v3506, 5
      %v3509 = vsel %vm279, %v3504, %v3508
      %v3510 = vshrl.u32 %v2849, 16
      %v3512 = vrot.slane %v3510, 4
      %v3513 = vor.u32 %v3512, %v3508
      %v3514 = vrot.slane %v3513, 4
      %v3516 = vshll.u32 %v2850, 16
      %v3518 = vrot.slane %v3516, 5
      %v3519 = vsel %vm279, %v3514, %v3518
      %v3520 = vshrl.u32 %v2850, 16
      %v3522 = vrot.slane %v3520, 4
      %v3523 = vor.u32 %v3522, %v3518
      %v3524 = vrot.slane %v3523, 4
      %v3526 = vshll.u32 %v2851, 16
      %v3528 = vrot.slane %v3526, 5
      %v3529 = vsel %vm279, %v3524, %v3528
      %v3530 = vshrl.u32 %v2851, 16
      %v3532 = vrot.slane %v3530, 4
      %v3533 = vor.u32 %v3532, %v3528
      %v3534 = vrot.slane %v3533, 4
      %v3536 = vshll.u32 %v3077, 16
      %v3538 = vrot.slane %v3536, 5
      %v3539 = vsel %vm279, %v3534, %v3538
      %v3541 = vshrl.u32 %v2852, 16
      %v3543 = vrot.slane %v3541, 4
      %v3544 = vshll.u32 %v2852, 16
      %v3546 = vrot.slane %v3544, 5
      %v3547 = vor.u32 %v3543, %v3546
      %v3548 = vrot.slane %v3547, 4
      %v3550 = vshll.u32 %v2853, 16
      %v3552 = vrot.slane %v3550, 5
      %v3553 = vsel %vm279, %v3548, %v3552
      %v3554 = vshrl.u32 %v2853, 16
      %v3556 = vrot.slane %v3554, 4
      %v3557 = vor.u32 %v3556, %v3552
      %v3558 = vrot.slane %v3557, 4
      %v3560 = vshll.u32 %v2854, 16
      %v3562 = vrot.slane %v3560, 5
      %v3563 = vsel %vm279, %v3558, %v3562
      %v3564 = vshrl.u32 %v2854, 16
      %v3566 = vrot.slane %v3564, 4
      %v3567 = vor.u32 %v3566, %v3562
      %v3568 = vrot.slane %v3567, 4
      %v3570 = vshll.u32 %v2855, 16
      %v3572 = vrot.slane %v3570, 5
      %v3573 = vsel %vm279, %v3568, %v3572
      %v3574 = vshrl.u32 %v2855, 16
      %v3576 = vrot.slane %v3574, 4
      %v3577 = vor.u32 %v3576, %v3572
      %v3578 = vrot.slane %v3577, 4
      %v3580 = vshll.u32 %v3078, 16
      %v3582 = vrot.slane %v3580, 5
      %v3583 = vsel %vm279, %v3578, %v3582
      %v3585 = vshrl.u32 %v2856, 16
      %v3587 = vrot.slane %v3585, 4
      %v3588 = vshll.u32 %v2856, 16
      %v3590 = vrot.slane %v3588, 5
      %v3591 = vor.u32 %v3587, %v3590
      %v3592 = vrot.slane %v3591, 4
      %v3594 = vshll.u32 %v2857, 16
      %v3596 = vrot.slane %v3594, 5
      %v3597 = vsel %vm279, %v3592, %v3596
      %v3598 = vshrl.u32 %v2857, 16
      %v3600 = vrot.slane %v3598, 4
      %v3601 = vor.u32 %v3600, %v3596
      %v3602 = vrot.slane %v3601, 4
      %v3604 = vshll.u32 %v2858, 16
      %v3606 = vrot.slane %v3604, 5
      %v3607 = vsel %vm279, %v3602, %v3606
      %v3608 = vshrl.u32 %v2858, 16
      %v3610 = vrot.slane %v3608, 4
      %v3611 = vor.u32 %v3610, %v3606
      %v3612 = vrot.slane %v3611, 4
      %v3614 = vshll.u32 %v2859, 16
      %v3616 = vrot.slane %v3614, 5
      %v3617 = vsel %vm279, %v3612, %v3616
      %v3618 = vshrl.u32 %v2859, 16
      %v3620 = vrot.slane %v3618, 4
      %v3621 = vor.u32 %v3620, %v3616
      %v3622 = vrot.slane %v3621, 4
      %v3624 = vshll.u32 %v3079, 16
      %v3626 = vrot.slane %v3624, 5
      %v3627 = vsel %vm279, %v3622, %v3626
      %v3629 = vshrl.u32 %v2860, 16
      %v3631 = vrot.slane %v3629, 4
      %v3632 = vshll.u32 %v2860, 16
      %v3634 = vrot.slane %v3632, 5
      %v3635 = vor.u32 %v3631, %v3634
      %v3636 = vrot.slane %v3635, 4
      %v3638 = vshll.u32 %v2861, 16
      %v3640 = vrot.slane %v3638, 5
      %v3641 = vsel %vm279, %v3636, %v3640
      %v3642 = vshrl.u32 %v2861, 16
      %v3644 = vrot.slane %v3642, 4
      %v3645 = vor.u32 %v3644, %v3640
      %v3646 = vrot.slane %v3645, 4
      %v3648 = vshll.u32 %v2862, 16
      %v3650 = vrot.slane %v3648, 5
      %v3651 = vsel %vm279, %v3646, %v3650
      %v3652 = vshrl.u32 %v2862, 16
      %v3654 = vrot.slane %v3652, 4
      %v3655 = vor.u32 %v3654, %v3650
      %v3656 = vrot.slane %v3655, 4
      %v3658 = vshll.u32 %v2863, 16
      %v3660 = vrot.slane %v3658, 5
      %v3661 = vsel %vm279, %v3656, %v3660
      %v3662 = vshrl.u32 %v2863, 16
      %v3664 = vrot.slane %v3662, 4
      %v3665 = vor.u32 %v3664, %v3660
      %v3666 = vrot.slane %v3665, 4
      %v3668 = vshll.u32 %v3080, 16
      %v3670 = vrot.slane %v3668, 5
      %v3671 = vsel %vm279, %v3666, %v3670
      %v3673 = vshrl.u32 %v2864, 16
      %v3675 = vrot.slane %v3673, 4
      %v3676 = vshll.u32 %v2864, 16
      %v3678 = vrot.slane %v3676, 5
      %v3679 = vor.u32 %v3675, %v3678
      %v3680 = vrot.slane %v3679, 4
      %v3682 = vshll.u32 %v2865, 16
      %v3684 = vrot.slane %v3682, 5
      %v3685 = vsel %vm279, %v3680, %v3684
      %v3686 = vshrl.u32 %v2865, 16
      %v3688 = vrot.slane %v3686, 4
      %v3689 = vor.u32 %v3688, %v3684
      %v3690 = vrot.slane %v3689, 4
      %v3692 = vshll.u32 %v2866, 16
      %v3694 = vrot.slane %v3692, 5
      %v3695 = vsel %vm279, %v3690, %v3694
      %v3696 = vshrl.u32 %v2866, 16
      %v3698 = vrot.slane %v3696, 4
      %v3699 = vor.u32 %v3698, %v3694
      %v3700 = vrot.slane %v3699, 4
      %v3702 = vshll.u32 %v2867, 16
      %v3704 = vrot.slane %v3702, 5
      %v3705 = vsel %vm279, %v3700, %v3704
      %v3706 = vshrl.u32 %v2867, 16
      %v3708 = vrot.slane %v3706, 4
      %v3709 = vor.u32 %v3708, %v3704
      %v3710 = vrot.slane %v3709, 4
      %v3712 = vshll.u32 %v3081, 16
      %v3714 = vrot.slane %v3712, 5
      %v3715 = vsel %vm279, %v3710, %v3714
      %v3717 = vshrl.u32 %v2868, 16
      %v3719 = vrot.slane %v3717, 4
      %v3720 = vshll.u32 %v2868, 16
      %v3722 = vrot.slane %v3720, 5
      %v3723 = vor.u32 %v3719, %v3722
      %v3724 = vrot.slane %v3723, 4
      %v3726 = vshll.u32 %v2869, 16
      %v3728 = vrot.slane %v3726, 5
      %v3729 = vsel %vm279, %v3724, %v3728
      %v3730 = vshrl.u32 %v2869, 16
      %v3732 = vrot.slane %v3730, 4
      %v3733 = vor.u32 %v3732, %v3728
      %v3734 = vrot.slane %v3733, 4
      %v3736 = vshll.u32 %v2870, 16
      %v3738 = vrot.slane %v3736, 5
      %v3739 = vsel %vm279, %v3734, %v3738
      %v3740 = vshrl.u32 %v2870, 16
      %v3742 = vrot.slane %v3740, 4
      %v3743 = vor.u32 %v3742, %v3738
      %v3744 = vrot.slane %v3743, 4
      %v3746 = vshll.u32 %v2871, 16
      %v3748 = vrot.slane %v3746, 5
      %v3749 = vsel %vm279, %v3744, %v3748
      %v3750 = vshrl.u32 %v2871, 16
      %v3752 = vrot.slane %v3750, 4
      %v3753 = vor.u32 %v3752, %v3748
      %v3754 = vrot.slane %v3753, 4
      %v3756 = vshll.u32 %v3082, 16
      %v3758 = vrot.slane %v3756, 5
      %v3759 = vsel %vm279, %v3754, %v3758
      %v3761 = vshrl.u32 %v2872, 16
      %v3763 = vrot.slane %v3761, 4
      %v3764 = vshll.u32 %v2872, 16
      %v3766 = vrot.slane %v3764, 5
      %v3767 = vor.u32 %v3763, %v3766
      %v3768 = vrot.slane %v3767, 4
      %v3770 = vshll.u32 %v2873, 16
      %v3772 = vrot.slane %v3770, 5
      %v3773 = vsel %vm279, %v3768, %v3772
      %v3774 = vshrl.u32 %v2873, 16
      %v3776 = vrot.slane %v3774, 4
      %v3777 = vor.u32 %v3776, %v3772
      %v3778 = vrot.slane %v3777, 4
      %v3780 = vshll.u32 %v2874, 16
      %v3782 = vrot.slane %v3780, 5
      %v3783 = vsel %vm279, %v3778, %v3782
      %v3784 = vshrl.u32 %v2874, 16
      %v3786 = vrot.slane %v3784, 4
      %v3787 = vor.u32 %v3786, %v3782
      %v3788 = vrot.slane %v3787, 4
      %v3790 = vshll.u32 %v2875, 16
      %v3792 = vrot.slane %v3790, 5
      %v3793 = vsel %vm279, %v3788, %v3792
      %v3794 = vshrl.u32 %v2875, 16
      %v3796 = vrot.slane %v3794, 4
      %v3797 = vor.u32 %v3796, %v3792
      %v3798 = vrot.slane %v3797, 4
      %v3800 = vshll.u32 %v3083, 16
      %v3802 = vrot.slane %v3800, 5
      %v3803 = vsel %vm279, %v3798, %v3802
      %v3805 = vshrl.u32 %v2876, 16
      %v3807 = vrot.slane %v3805, 4
      %v3808 = vshll.u32 %v2876, 16
      %v3810 = vrot.slane %v3808, 5
      %v3811 = vor.u32 %v3807, %v3810
      %v3812 = vrot.slane %v3811, 4
      %v3814 = vshll.u32 %v2877, 16
      %v3816 = vrot.slane %v3814, 5
      %v3817 = vsel %vm279, %v3812, %v3816
      %v3818 = vshrl.u32 %v2877, 16
      %v3820 = vrot.slane %v3818, 4
      %v3821 = vor.u32 %v3820, %v3816
      %v3822 = vrot.slane %v3821, 4
      %v3824 = vshll.u32 %v2878, 16
      %v3826 = vrot.slane %v3824, 5
      %v3827 = vsel %vm279, %v3822, %v3826
      %v3828 = vshrl.u32 %v2878, 16
      %v3830 = vrot.slane %v3828, 4
      %v3831 = vor.u32 %v3830, %v3826
      %v3832 = vrot.slane %v3831, 4
      %v3834 = vshll.u32 %v2879, 16
      %v3836 = vrot.slane %v3834, 5
      %v3837 = vsel %vm279, %v3832, %v3836
      %v3838 = vshrl.u32 %v2879, 16
      %v3840 = vrot.slane %v3838, 4
      %v3841 = vor.u32 %v3840, %v3836
      %v3842 = vrot.slane %v3841, 4
      %v3844 = vshll.u32 %v3084, 16
      %v3846 = vrot.slane %v3844, 5
      %v3847 = vsel %vm279, %v3842, %v3846
      %v3849 = vshrl.u32 %v2880, 16
      %v3851 = vrot.slane %v3849, 4
      %v3852 = vshll.u32 %v2880, 16
      %v3854 = vrot.slane %v3852, 5
      %v3855 = vor.u32 %v3851, %v3854
      %v3856 = vrot.slane %v3855, 4
      %v3858 = vshll.u32 %v2881, 16
      %v3860 = vrot.slane %v3858, 5
      %v3861 = vsel %vm279, %v3856, %v3860
      %v3862 = vshrl.u32 %v2881, 16
      %v3864 = vrot.slane %v3862, 4
      %v3865 = vor.u32 %v3864, %v3860
      %v3866 = vrot.slane %v3865, 4
      %v3868 = vshll.u32 %v2882, 16
      %v3870 = vrot.slane %v3868, 5
      %v3871 = vsel %vm279, %v3866, %v3870
      %v3872 = vshrl.u32 %v2882, 16
      %v3874 = vrot.slane %v3872, 4
      %v3875 = vor.u32 %v3874, %v3870
      %v3876 = vrot.slane %v3875, 4
      %v3878 = vshll.u32 %v2883, 16
      %v3880 = vrot.slane %v3878, 5
      %v3881 = vsel %vm279, %v3876, %v3880
      %v3882 = vshrl.u32 %v2883, 16
      %v3884 = vrot.slane %v3882, 4
      %v3885 = vor.u32 %v3884, %v3880
      %v3886 = vrot.slane %v3885, 4
      %v3888 = vshll.u32 %v3085, 16
      %v3890 = vrot.slane %v3888, 5
      %v3891 = vsel %vm279, %v3886, %v3890
      %v3893 = vshrl.u32 %v2884, 16
      %v3895 = vrot.slane %v3893, 4
      %v3896 = vshll.u32 %v2884, 16
      %v3898 = vrot.slane %v3896, 5
      %v3899 = vor.u32 %v3895, %v3898
      %v3900 = vrot.slane %v3899, 4
      %v3902 = vshll.u32 %v2885, 16
      %v3904 = vrot.slane %v3902, 5
      %v3905 = vsel %vm279, %v3900, %v3904
      %v3906 = vshrl.u32 %v2885, 16
      %v3908 = vrot.slane %v3906, 4
      %v3909 = vor.u32 %v3908, %v3904
      %v3910 = vrot.slane %v3909, 4
      %v3912 = vshll.u32 %v2886, 16
      %v3914 = vrot.slane %v3912, 5
      %v3915 = vsel %vm279, %v3910, %v3914
      %v3916 = vshrl.u32 %v2886, 16
      %v3918 = vrot.slane %v3916, 4
      %v3919 = vor.u32 %v3918, %v3914
      %v3920 = vrot.slane %v3919, 4
      %v3922 = vshll.u32 %v2887, 16
      %v3924 = vrot.slane %v3922, 5
      %v3925 = vsel %vm279, %v3920, %v3924
      %v3926 = vshrl.u32 %v2887, 16
      %v3928 = vrot.slane %v3926, 4
      %v3929 = vor.u32 %v3928, %v3924
      %v3930 = vrot.slane %v3929, 4
      %v3932 = vshll.u32 %v3086, 16
      %v3934 = vrot.slane %v3932, 5
      %v3935 = vsel %vm279, %v3930, %v3934
      %v3937 = vshrl.u32 %v2888, 16
      %v3939 = vrot.slane %v3937, 4
      %v3940 = vshll.u32 %v2888, 16
      %v3942 = vrot.slane %v3940, 5
      %v3943 = vor.u32 %v3939, %v3942
      %v3944 = vrot.slane %v3943, 4
      %v3946 = vshll.u32 %v2889, 16
      %v3948 = vrot.slane %v3946, 5
      %v3949 = vsel %vm279, %v3944, %v3948
      %v3950 = vshrl.u32 %v2889, 16
      %v3952 = vrot.slane %v3950, 4
      %v3953 = vor.u32 %v3952, %v3948
      %v3954 = vrot.slane %v3953, 4
      %v3956 = vshll.u32 %v2890, 16
      %v3958 = vrot.slane %v3956, 5
      %v3959 = vsel %vm279, %v3954, %v3958
      %v3960 = vshrl.u32 %v2890, 16
      %v3962 = vrot.slane %v3960, 4
      %v3963 = vor.u32 %v3962, %v3958
      %v3964 = vrot.slane %v3963, 4
      %v3966 = vshll.u32 %v2891, 16
      %v3968 = vrot.slane %v3966, 5
      %v3969 = vsel %vm279, %v3964, %v3968
      %v3970 = vshrl.u32 %v2891, 16
      %v3972 = vrot.slane %v3970, 4
      %v3973 = vor.u32 %v3972, %v3968
      %v3974 = vrot.slane %v3973, 4
      %v3976 = vshll.u32 %v3087, 16
      %v3978 = vrot.slane %v3976, 5
      %v3979 = vsel %vm279, %v3974, %v3978
      %v3981 = vshrl.u32 %v2892, 16
      %v3983 = vrot.slane %v3981, 4
      %v3984 = vshll.u32 %v2892, 16
      %v3986 = vrot.slane %v3984, 5
      %v3987 = vor.u32 %v3983, %v3986
      %v3988 = vrot.slane %v3987, 4
      %v3990 = vshll.u32 %v2893, 16
      %v3992 = vrot.slane %v3990, 5
      %v3993 = vsel %vm279, %v3988, %v3992
      %v3994 = vshrl.u32 %v2893, 16
      %v3996 = vrot.slane %v3994, 4
      %v3997 = vor.u32 %v3996, %v3992
      %v3998 = vrot.slane %v3997, 4
      %v4000 = vshll.u32 %v2894, 16
      %v4002 = vrot.slane %v4000, 5
      %v4003 = vsel %vm279, %v3998, %v4002
      %v4004 = vshrl.u32 %v2894, 16
      %v4006 = vrot.slane %v4004, 4
      %v4007 = vor.u32 %v4006, %v4002
      %v4008 = vrot.slane %v4007, 4
      %v4010 = vshll.u32 %v2895, 16
      %v4012 = vrot.slane %v4010, 5
      %v4013 = vsel %vm279, %v4008, %v4012
      %v4014 = vshrl.u32 %v2895, 16
      %v4016 = vrot.slane %v4014, 4
      %v4017 = vor.u32 %v4016, %v4012
      %v4018 = vrot.slane %v4017, 4
      %v4020 = vshll.u32 %v3088, 16
      %v4022 = vrot.slane %v4020, 5
      %v4023 = vsel %vm279, %v4018, %v4022
      %v4025 = vshrl.u32 %v2896, 16
      %v4027 = vrot.slane %v4025, 4
      %v4028 = vshll.u32 %v2896, 16
      %v4030 = vrot.slane %v4028, 5
      %v4031 = vor.u32 %v4027, %v4030
      %v4032 = vrot.slane %v4031, 4
      %v4034 = vshll.u32 %v2897, 16
      %v4036 = vrot.slane %v4034, 5
      %v4037 = vsel %vm279, %v4032, %v4036
      %v4038 = vshrl.u32 %v2897, 16
      %v4040 = vrot.slane %v4038, 4
      %v4041 = vor.u32 %v4040, %v4036
      %v4042 = vrot.slane %v4041, 4
      %v4044 = vshll.u32 %v2898, 16
      %v4046 = vrot.slane %v4044, 5
      %v4047 = vsel %vm279, %v4042, %v4046
      %v4048 = vshrl.u32 %v2898, 16
      %v4050 = vrot.slane %v4048, 4
      %v4051 = vor.u32 %v4050, %v4046
      %v4052 = vrot.slane %v4051, 4
      %v4054 = vshll.u32 %v2899, 16
      %v4056 = vrot.slane %v4054, 5
      %v4057 = vsel %vm279, %v4052, %v4056
      %v4058 = vshrl.u32 %v2899, 16
      %v4060 = vrot.slane %v4058, 4
      %v4061 = vor.u32 %v4060, %v4056
      %v4062 = vrot.slane %v4061, 4
      %v4064 = vshll.u32 %v3089, 16
      %v4066 = vrot.slane %v4064, 5
      %v4067 = vsel %vm279, %v4062, %v4066
      %v4069 = vshrl.u32 %v2900, 16
      %v4071 = vrot.slane %v4069, 4
      %v4072 = vshll.u32 %v2900, 16
      %v4074 = vrot.slane %v4072, 5
      %v4075 = vor.u32 %v4071, %v4074
      %v4076 = vrot.slane %v4075, 4
      %v4078 = vshll.u32 %v2901, 16
      %v4080 = vrot.slane %v4078, 5
      %v4081 = vsel %vm279, %v4076, %v4080
      %v4082 = vshrl.u32 %v2901, 16
      %v4084 = vrot.slane %v4082, 4
      %v4085 = vor.u32 %v4084, %v4080
      %v4086 = vrot.slane %v4085, 4
      %v4088 = vshll.u32 %v2902, 16
      %v4090 = vrot.slane %v4088, 5
      %v4091 = vsel %vm279, %v4086, %v4090
      %v4092 = vshrl.u32 %v2902, 16
      %v4094 = vrot.slane %v4092, 4
      %v4095 = vor.u32 %v4094, %v4090
      %v4096 = vrot.slane %v4095, 4
      %v4098 = vshll.u32 %v2903, 16
      %v4100 = vrot.slane %v4098, 5
      %v4101 = vsel %vm279, %v4096, %v4100
      %v4102 = vshrl.u32 %v2903, 16
      %v4104 = vrot.slane %v4102, 4
      %v4105 = vor.u32 %v4104, %v4100
      %v4106 = vrot.slane %v4105, 4
      %v4108 = vshll.u32 %v3090, 16
      %v4110 = vrot.slane %v4108, 5
      %v4111 = vsel %vm279, %v4106, %v4110
      %v4113 = vshrl.u32 %v2904, 16
      %v4115 = vrot.slane %v4113, 4
      %v4116 = vshll.u32 %v2904, 16
      %v4118 = vrot.slane %v4116, 5
      %v4119 = vor.u32 %v4115, %v4118
      %v4120 = vrot.slane %v4119, 4
      %v4122 = vshll.u32 %v2905, 16
      %v4124 = vrot.slane %v4122, 5
      %v4125 = vsel %vm279, %v4120, %v4124
      %v4126 = vshrl.u32 %v2905, 16
      %v4128 = vrot.slane %v4126, 4
      %v4129 = vor.u32 %v4128, %v4124
      %v4130 = vrot.slane %v4129, 4
      %v4132 = vshll.u32 %v2906, 16
      %v4134 = vrot.slane %v4132, 5
      %v4135 = vsel %vm279, %v4130, %v4134
      %v4136 = vshrl.u32 %v2906, 16
      %v4138 = vrot.slane %v4136, 4
      %v4139 = vor.u32 %v4138, %v4134
      %v4140 = vrot.slane %v4139, 4
      %v4142 = vshll.u32 %v2907, 16
      %v4144 = vrot.slane %v4142, 5
      %v4145 = vsel %vm279, %v4140, %v4144
      %v4146 = vshrl.u32 %v2907, 16
      %v4148 = vrot.slane %v4146, 4
      %v4149 = vor.u32 %v4148, %v4144
      %v4150 = vrot.slane %v4149, 4
      %v4152 = vshll.u32 %v3091, 16
      %v4154 = vrot.slane %v4152, 5
      %v4155 = vsel %vm279, %v4150, %v4154
      %v4157 = vshrl.u32 %v2908, 16
      %v4159 = vrot.slane %v4157, 4
      %v4160 = vshll.u32 %v2908, 16
      %v4162 = vrot.slane %v4160, 5
      %v4163 = vor.u32 %v4159, %v4162
      %v4164 = vrot.slane %v4163, 4
      %v4166 = vshll.u32 %v2909, 16
      %v4168 = vrot.slane %v4166, 5
      %v4169 = vsel %vm279, %v4164, %v4168
      %v4170 = vshrl.u32 %v2909, 16
      %v4172 = vrot.slane %v4170, 4
      %v4173 = vor.u32 %v4172, %v4168
      %v4174 = vrot.slane %v4173, 4
      %v4176 = vshll.u32 %v2910, 16
      %v4178 = vrot.slane %v4176, 5
      %v4179 = vsel %vm279, %v4174, %v4178
      %v4180 = vshrl.u32 %v2910, 16
      %v4182 = vrot.slane %v4180, 4
      %v4183 = vor.u32 %v4182, %v4178
      %v4184 = vrot.slane %v4183, 4
      %v4186 = vshll.u32 %v2911, 16
      %v4188 = vrot.slane %v4186, 5
      %v4189 = vsel %vm279, %v4184, %v4188
      %v4190 = vshrl.u32 %v2911, 16
      %v4192 = vrot.slane %v4190, 4
      %v4193 = vor.u32 %v4192, %v4188
      %v4194 = vrot.slane %v4193, 4
      %v4196 = vshll.u32 %v3092, 16
      %v4198 = vrot.slane %v4196, 5
      %v4199 = vsel %vm279, %v4194, %v4198
      %v4201 = vshrl.u32 %v2912, 16
      %v4203 = vrot.slane %v4201, 4
      %v4204 = vshll.u32 %v2912, 16
      %v4206 = vrot.slane %v4204, 5
      %v4207 = vor.u32 %v4203, %v4206
      %v4208 = vrot.slane %v4207, 4
      %v4210 = vshll.u32 %v2913, 16
      %v4212 = vrot.slane %v4210, 5
      %v4213 = vsel %vm279, %v4208, %v4212
      %v4214 = vshrl.u32 %v2913, 16
      %v4216 = vrot.slane %v4214, 4
      %v4217 = vor.u32 %v4216, %v4212
      %v4218 = vrot.slane %v4217, 4
      %v4220 = vshll.u32 %v2914, 16
      %v4222 = vrot.slane %v4220, 5
      %v4223 = vsel %vm279, %v4218, %v4222
      %v4224 = vshrl.u32 %v2914, 16
      %v4226 = vrot.slane %v4224, 4
      %v4227 = vor.u32 %v4226, %v4222
      %v4228 = vrot.slane %v4227, 4
      %v4230 = vshll.u32 %v2915, 16
      %v4232 = vrot.slane %v4230, 5
      %v4233 = vsel %vm279, %v4228, %v4232
      %v4234 = vshrl.u32 %v2915, 16
      %v4236 = vrot.slane %v4234, 4
      %v4237 = vor.u32 %v4236, %v4232
      %v4238 = vrot.slane %v4237, 4
      %v4240 = vshll.u32 %v3093, 16
      %v4242 = vrot.slane %v4240, 5
      %v4243 = vsel %vm279, %v4238, %v4242
      %v4245 = vshrl.u32 %v2916, 16
      %v4247 = vrot.slane %v4245, 4
      %v4248 = vshll.u32 %v2916, 16
      %v4250 = vrot.slane %v4248, 5
      %v4251 = vor.u32 %v4247, %v4250
      %v4252 = vrot.slane %v4251, 4
      %v4254 = vshll.u32 %v2917, 16
      %v4256 = vrot.slane %v4254, 5
      %v4257 = vsel %vm279, %v4252, %v4256
      %v4258 = vshrl.u32 %v2917, 16
      %v4260 = vrot.slane %v4258, 4
      %v4261 = vor.u32 %v4260, %v4256
      %v4262 = vrot.slane %v4261, 4
      %v4264 = vshll.u32 %v2918, 16
      %v4266 = vrot.slane %v4264, 5
      %v4267 = vsel %vm279, %v4262, %v4266
      %v4268 = vshrl.u32 %v2918, 16
      %v4270 = vrot.slane %v4268, 4
      %v4271 = vor.u32 %v4270, %v4266
      %v4272 = vrot.slane %v4271, 4
      %v4274 = vshll.u32 %v2919, 16
      %v4276 = vrot.slane %v4274, 5
      %v4277 = vsel %vm279, %v4272, %v4276
      %v4278 = vshrl.u32 %v2919, 16
      %v4280 = vrot.slane %v4278, 4
      %v4281 = vor.u32 %v4280, %v4276
      %v4282 = vrot.slane %v4281, 4
      %v4284 = vshll.u32 %v3094, 16
      %v4286 = vrot.slane %v4284, 5
      %v4287 = vsel %vm279, %v4282, %v4286
      %v4289 = vshrl.u32 %v2920, 16
      %v4291 = vrot.slane %v4289, 4
      %v4292 = vshll.u32 %v2920, 16
      %v4294 = vrot.slane %v4292, 5
      %v4295 = vor.u32 %v4291, %v4294
      %v4296 = vrot.slane %v4295, 4
      %v4298 = vshll.u32 %v2921, 16
      %v4300 = vrot.slane %v4298, 5
      %v4301 = vsel %vm279, %v4296, %v4300
      %v4302 = vshrl.u32 %v2921, 16
      %v4304 = vrot.slane %v4302, 4
      %v4305 = vor.u32 %v4304, %v4300
      %v4306 = vrot.slane %v4305, 4
      %v4308 = vshll.u32 %v2922, 16
      %v4310 = vrot.slane %v4308, 5
      %v4311 = vsel %vm279, %v4306, %v4310
      %v4312 = vshrl.u32 %v2922, 16
      %v4314 = vrot.slane %v4312, 4
      %v4315 = vor.u32 %v4314, %v4310
      %v4316 = vrot.slane %v4315, 4
      %v4318 = vshll.u32 %v2923, 16
      %v4320 = vrot.slane %v4318, 5
      %v4321 = vsel %vm279, %v4316, %v4320
      %v4322 = vshrl.u32 %v2923, 16
      %v4324 = vrot.slane %v4322, 4
      %v4325 = vor.u32 %v4324, %v4320
      %v4326 = vrot.slane %v4325, 4
      %v4328 = vshll.u32 %v3095, 16
      %v4330 = vrot.slane %v4328, 5
      %v4331 = vsel %vm279, %v4326, %v4330
      %v4333 = vshrl.u32 %v2924, 16
      %v4335 = vrot.slane %v4333, 4
      %v4336 = vshll.u32 %v2924, 16
      %v4338 = vrot.slane %v4336, 5
      %v4339 = vor.u32 %v4335, %v4338
      %v4340 = vrot.slane %v4339, 4
      %v4342 = vshll.u32 %v2925, 16
      %v4344 = vrot.slane %v4342, 5
      %v4345 = vsel %vm279, %v4340, %v4344
      %v4346 = vshrl.u32 %v2925, 16
      %v4348 = vrot.slane %v4346, 4
      %v4349 = vor.u32 %v4348, %v4344
      %v4350 = vrot.slane %v4349, 4
      %v4352 = vshll.u32 %v2926, 16
      %v4354 = vrot.slane %v4352, 5
      %v4355 = vsel %vm279, %v4350, %v4354
      %v4356 = vshrl.u32 %v2926, 16
      %v4358 = vrot.slane %v4356, 4
      %v4359 = vor.u32 %v4358, %v4354
      %v4360 = vrot.slane %v4359, 4
      %v4362 = vshll.u32 %v2927, 16
      %v4364 = vrot.slane %v4362, 5
      %v4365 = vsel %vm279, %v4360, %v4364
      %v4366 = vshrl.u32 %v2927, 16
      %v4368 = vrot.slane %v4366, 4
      %v4369 = vor.u32 %v4368, %v4364
      %v4370 = vrot.slane %v4369, 4
      %v4372 = vshll.u32 %v3096, 16
      %v4374 = vrot.slane %v4372, 5
      %v4375 = vsel %vm279, %v4370, %v4374
      %v4377 = vshrl.u32 %v2928, 16
      %v4379 = vrot.slane %v4377, 4
      %v4380 = vshll.u32 %v2928, 16
      %v4382 = vrot.slane %v4380, 5
      %v4383 = vor.u32 %v4379, %v4382
      %v4384 = vrot.slane %v4383, 4
      %v4386 = vshll.u32 %v2929, 16
      %v4388 = vrot.slane %v4386, 5
      %v4389 = vsel %vm279, %v4384, %v4388
      %v4390 = vshrl.u32 %v2929, 16
      %v4392 = vrot.slane %v4390, 4
      %v4393 = vor.u32 %v4392, %v4388
      %v4394 = vrot.slane %v4393, 4
      %v4396 = vshll.u32 %v2930, 16
      %v4398 = vrot.slane %v4396, 5
      %v4399 = vsel %vm279, %v4394, %v4398
      %v4400 = vshrl.u32 %v2930, 16
      %v4402 = vrot.slane %v4400, 4
      %v4403 = vor.u32 %v4402, %v4398
      %v4404 = vrot.slane %v4403, 4
      %v4406 = vshll.u32 %v2931, 16
      %v4408 = vrot.slane %v4406, 5
      %v4409 = vsel %vm279, %v4404, %v4408
      %v4410 = vshrl.u32 %v2931, 16
      %v4412 = vrot.slane %v4410, 4
      %v4413 = vor.u32 %v4412, %v4408
      %v4414 = vrot.slane %v4413, 4
      %v4416 = vshll.u32 %v3097, 16
      %v4418 = vrot.slane %v4416, 5
      %v4419 = vsel %vm279, %v4414, %v4418
      %v4421 = vshrl.u32 %v2932, 16
      %v4423 = vrot.slane %v4421, 4
      %v4424 = vshll.u32 %v2932, 16
      %v4426 = vrot.slane %v4424, 5
      %v4427 = vor.u32 %v4423, %v4426
      %v4428 = vrot.slane %v4427, 4
      %v4430 = vshll.u32 %v2933, 16
      %v4432 = vrot.slane %v4430, 5
      %v4433 = vsel %vm279, %v4428, %v4432
      %v4434 = vshrl.u32 %v2933, 16
      %v4436 = vrot.slane %v4434, 4
      %v4437 = vor.u32 %v4436, %v4432
      %v4438 = vrot.slane %v4437, 4
      %v4440 = vshll.u32 %v2934, 16
      %v4442 = vrot.slane %v4440, 5
      %v4443 = vsel %vm279, %v4438, %v4442
      %v4444 = vshrl.u32 %v2934, 16
      %v4446 = vrot.slane %v4444, 4
      %v4447 = vor.u32 %v4446, %v4442
      %v4448 = vrot.slane %v4447, 4
      %v4450 = vshll.u32 %v2935, 16
      %v4452 = vrot.slane %v4450, 5
      %v4453 = vsel %vm279, %v4448, %v4452
      %v4454 = vshrl.u32 %v2935, 16
      %v4456 = vrot.slane %v4454, 4
      %v4457 = vor.u32 %v4456, %v4452
      %v4458 = vrot.slane %v4457, 4
      %v4460 = vshll.u32 %v3098, 16
      %v4462 = vrot.slane %v4460, 5
      %v4463 = vsel %vm279, %v4458, %v4462
      %v4465 = vshrl.u32 %v2936, 16
      %v4467 = vrot.slane %v4465, 4
      %v4468 = vshll.u32 %v2936, 16
      %v4470 = vrot.slane %v4468, 5
      %v4471 = vor.u32 %v4467, %v4470
      %v4472 = vrot.slane %v4471, 4
      %v4474 = vshll.u32 %v2937, 16
      %v4476 = vrot.slane %v4474, 5
      %v4477 = vsel %vm279, %v4472, %v4476
      %v4478 = vshrl.u32 %v2937, 16
      %v4480 = vrot.slane %v4478, 4
      %v4481 = vor.u32 %v4480, %v4476
      %v4482 = vrot.slane %v4481, 4
      %v4484 = vshll.u32 %v2938, 16
      %v4486 = vrot.slane %v4484, 5
      %v4487 = vsel %vm279, %v4482, %v4486
      %v4488 = vshrl.u32 %v2938, 16
      %v4490 = vrot.slane %v4488, 4
      %v4491 = vor.u32 %v4490, %v4486
      %v4492 = vrot.slane %v4491, 4
      %v4494 = vshll.u32 %v2939, 16
      %v4496 = vrot.slane %v4494, 5
      %v4497 = vsel %vm279, %v4492, %v4496
      %v4498 = vshrl.u32 %v2939, 16
      %v4500 = vrot.slane %v4498, 4
      %v4501 = vor.u32 %v4500, %v4496
      %v4502 = vrot.slane %v4501, 4
      %v4504 = vshll.u32 %v3099, 16
      %v4506 = vrot.slane %v4504, 5
      %v4507 = vsel %vm279, %v4502, %v4506
      %v4636 = vmax.bf16 %v2940, %v3113
      %v4637 = vmax.bf16 %v2941, %v3123
      %v4638 = vmax.bf16 %v2942, %v3133
      %v4639 = vmax.bf16 %v2943, %v3143
      %v4640 = vmax.bf16 %v2944, %v3157
      %v4641 = vmax.bf16 %v2945, %v3167
      %v4642 = vmax.bf16 %v2946, %v3177
      %v4643 = vmax.bf16 %v2947, %v3187
      %v4644 = vmax.bf16 %v2948, %v3201
      %v4645 = vmax.bf16 %v2949, %v3211
      %v4646 = vmax.bf16 %v2950, %v3221
      %v4647 = vmax.bf16 %v2951, %v3231
      %v4648 = vmax.bf16 %v2952, %v3245
      %v4649 = vmax.bf16 %v2953, %v3255
      %v4650 = vmax.bf16 %v2954, %v3265
      %v4651 = vmax.bf16 %v2955, %v3275
      %v4652 = vmax.bf16 %v2956, %v3289
      %v4653 = vmax.bf16 %v2957, %v3299
      %v4654 = vmax.bf16 %v2958, %v3309
      %v4655 = vmax.bf16 %v2959, %v3319
      %v4656 = vmax.bf16 %v2960, %v3333
      %v4657 = vmax.bf16 %v2961, %v3343
      %v4658 = vmax.bf16 %v2962, %v3353
      %v4659 = vmax.bf16 %v2963, %v3363
      %v4660 = vmax.bf16 %v2964, %v3377
      %v4661 = vmax.bf16 %v2965, %v3387
      %v4662 = vmax.bf16 %v2966, %v3397
      %v4663 = vmax.bf16 %v2967, %v3407
      %v4664 = vmax.bf16 %v2968, %v3421
      %v4665 = vmax.bf16 %v2969, %v3431
      %v4666 = vmax.bf16 %v2970, %v3441
      %v4667 = vmax.bf16 %v2971, %v3451
      %v4668 = vmax.bf16 %v2972, %v3465
      %v4669 = vmax.bf16 %v2973, %v3475
      %v4670 = vmax.bf16 %v2974, %v3485
      %v4671 = vmax.bf16 %v2975, %v3495
      %v4672 = vmax.bf16 %v2976, %v3509
      %v4673 = vmax.bf16 %v2977, %v3519
      %v4674 = vmax.bf16 %v2978, %v3529
      %v4675 = vmax.bf16 %v2979, %v3539
      %v4676 = vmax.bf16 %v2980, %v3553
      %v4677 = vmax.bf16 %v2981, %v3563
      %v4678 = vmax.bf16 %v2982, %v3573
      %v4679 = vmax.bf16 %v2983, %v3583
      %v4680 = vmax.bf16 %v2984, %v3597
      %v4681 = vmax.bf16 %v2985, %v3607
      %v4682 = vmax.bf16 %v2986, %v3617
      %v4683 = vmax.bf16 %v2987, %v3627
      %v4684 = vmax.bf16 %v2988, %v3641
      %v4685 = vmax.bf16 %v2989, %v3651
      %v4686 = vmax.bf16 %v2990, %v3661
      %v4687 = vmax.bf16 %v2991, %v3671
      %v4688 = vmax.bf16 %v2992, %v3685
      %v4689 = vmax.bf16 %v2993, %v3695
      %v4690 = vmax.bf16 %v2994, %v3705
      %v4691 = vmax.bf16 %v2995, %v3715
      %v4692 = vmax.bf16 %v2996, %v3729
      %v4693 = vmax.bf16 %v2997, %v3739
      %v4694 = vmax.bf16 %v2998, %v3749
      %v4695 = vmax.bf16 %v2999, %v3759
      %v4696 = vmax.bf16 %v3000, %v3773
      %v4697 = vmax.bf16 %v3001, %v3783
      %v4698 = vmax.bf16 %v3002, %v3793
      %v4699 = vmax.bf16 %v3003, %v3803
      %v4700 = vmax.bf16 %v3004, %v3817
      %v4701 = vmax.bf16 %v3005, %v3827
      %v4702 = vmax.bf16 %v3006, %v3837
      %v4703 = vmax.bf16 %v3007, %v3847
      %v4704 = vmax.bf16 %v3008, %v3861
      %v4705 = vmax.bf16 %v3009, %v3871
      %v4706 = vmax.bf16 %v3010, %v3881
      %v4707 = vmax.bf16 %v3011, %v3891
      %v4708 = vmax.bf16 %v3012, %v3905
      %v4709 = vmax.bf16 %v3013, %v3915
      %v4710 = vmax.bf16 %v3014, %v3925
      %v4711 = vmax.bf16 %v3015, %v3935
      %v4712 = vmax.bf16 %v3016, %v3949
      %v4713 = vmax.bf16 %v3017, %v3959
      %v4714 = vmax.bf16 %v3018, %v3969
      %v4715 = vmax.bf16 %v3019, %v3979
      %v4716 = vmax.bf16 %v3020, %v3993
      %v4717 = vmax.bf16 %v3021, %v4003
      %v4718 = vmax.bf16 %v3022, %v4013
      %v4719 = vmax.bf16 %v3023, %v4023
      %v4720 = vmax.bf16 %v3024, %v4037
      %v4721 = vmax.bf16 %v3025, %v4047
      %v4722 = vmax.bf16 %v3026, %v4057
      %v4723 = vmax.bf16 %v3027, %v4067
      %v4724 = vmax.bf16 %v3028, %v4081
      %v4725 = vmax.bf16 %v3029, %v4091
      %v4726 = vmax.bf16 %v3030, %v4101
      %v4727 = vmax.bf16 %v3031, %v4111
      %v4728 = vmax.bf16 %v3032, %v4125
      %v4729 = vmax.bf16 %v3033, %v4135
      %v4730 = vmax.bf16 %v3034, %v4145
      %v4731 = vmax.bf16 %v3035, %v4155
      %v4732 = vmax.bf16 %v3036, %v4169
      %v4733 = vmax.bf16 %v3037, %v4179
      %v4734 = vmax.bf16 %v3038, %v4189
      %v4735 = vmax.bf16 %v3039, %v4199
      %v4736 = vmax.bf16 %v3040, %v4213
      %v4737 = vmax.bf16 %v3041, %v4223
      %v4738 = vmax.bf16 %v3042, %v4233
      %v4739 = vmax.bf16 %v3043, %v4243
      %v4740 = vmax.bf16 %v3044, %v4257
      %v4741 = vmax.bf16 %v3045, %v4267
      %v4742 = vmax.bf16 %v3046, %v4277
      %v4743 = vmax.bf16 %v3047, %v4287
      %v4744 = vmax.bf16 %v3048, %v4301
      %v4745 = vmax.bf16 %v3049, %v4311
      %v4746 = vmax.bf16 %v3050, %v4321
      %v4747 = vmax.bf16 %v3051, %v4331
      %v4748 = vmax.bf16 %v3052, %v4345
      %v4749 = vmax.bf16 %v3053, %v4355
      %v4750 = vmax.bf16 %v3054, %v4365
      %v4751 = vmax.bf16 %v3055, %v4375
      %v4752 = vmax.bf16 %v3056, %v4389
      %v4753 = vmax.bf16 %v3057, %v4399
      %v4754 = vmax.bf16 %v3058, %v4409
      %v4755 = vmax.bf16 %v3059, %v4419
      %v4756 = vmax.bf16 %v3060, %v4433
      %v4757 = vmax.bf16 %v3061, %v4443
      %v4758 = vmax.bf16 %v3062, %v4453
      %v4759 = vmax.bf16 %v3063, %v4463
      %v4760 = vmax.bf16 %v3064, %v4477
      %v4761 = vmax.bf16 %v3065, %v4487
      %v4762 = vmax.bf16 %v3066, %v4497
      %v4763 = vmax.bf16 %v3067, %v4507
      %v4764 = vld [vmem:[%s2811] sm:$0xe]
      %v4765 = vld [vmem:[%s2811 + $0x14] sm:$0xe]
      %v4766 = vld [vmem:[%s2811 + $0x28] sm:$0xe]
      %v4767 = vld [vmem:[%s2811 + $0x3c] sm:$0xe]
      %v4768 = vld [vmem:[%s2811 + $0x50] sm:$0xe]
      %v4769 = vld [vmem:[%s2811 + $0x64] sm:$0xe]
      %v4770 = vld [vmem:[%s2811 + $0x78] sm:$0xe]
      %v4771 = vld [vmem:[%s2811 + $0x8c] sm:$0xe]
      %v4772 = vld [vmem:[%s2811 + $0xa0] sm:$0xe]
      %v4773 = vld [vmem:[%s2811 + $0xb4] sm:$0xe]
      %v4774 = vld [vmem:[%s2811 + $0xc8] sm:$0xe]
      %v4775 = vld [vmem:[%s2811 + $0xdc] sm:$0xe]
      %v4776 = vld [vmem:[%s2811 + $0xf0] sm:$0xe]
      %v4777 = vld [vmem:[%s2811 + $0x104] sm:$0xe]
      %v4778 = vld [vmem:[%s2811 + $0x118] sm:$0xe]
      %v4779 = vld [vmem:[%s2811 + $0x12c] sm:$0xe]
      %v4780 = vld [vmem:[%s2811 + $0x140] sm:$0xe]
      %v4781 = vld [vmem:[%s2811 + $0x154] sm:$0xe]
      %v4782 = vld [vmem:[%s2811 + $0x168] sm:$0xe]
      %v4783 = vld [vmem:[%s2811 + $0x17c] sm:$0xe]
      %v4784 = vld [vmem:[%s2811 + $0x190] sm:$0xe]
      %v4785 = vld [vmem:[%s2811 + $0x1a4] sm:$0xe]
      %v4786 = vld [vmem:[%s2811 + $0x1b8] sm:$0xe]
      %v4787 = vld [vmem:[%s2811 + $0x1cc] sm:$0xe]
      %v4788 = vld [vmem:[%s2811 + $0x1e0] sm:$0xe]
      %v4789 = vld [vmem:[%s2811 + $0x1f4] sm:$0xe]
      %v4790 = vld [vmem:[%s2811 + $0x208] sm:$0xe]
      %v4791 = vld [vmem:[%s2811 + $0x21c] sm:$0xe]
      %v4792 = vld [vmem:[%s2811 + $0x230] sm:$0xe]
      %v4793 = vld [vmem:[%s2811 + $0x244] sm:$0xe]
      %v4794 = vld [vmem:[%s2811 + $0x258] sm:$0xe]
      %v4795 = vld [vmem:[%s2811 + $0x26c] sm:$0xe]
      %v4956 = vrot.slane %v4764, 5
      %v4957 = vrot.slane %v4956, 4
      %v4958 = vrot.slane %v2813, 5
      %v4959 = vsel %vm2138, %v4957, %v4958
      %v4960 = vrot.slane %v4958, 4
      %v4961 = vrot.slane %v2814, 5
      %v4962 = vsel %vm2138, %v4960, %v4961
      %v4963 = vrot.slane %v4961, 4
      %v4964 = vrot.slane %v2815, 5
      %v4965 = vsel %vm2138, %v4963, %v4964
      %v4966 = vrot.slane %v4964, 4
      %v4967 = vrot.slane %v3068, 5
      %v4968 = vsel %vm2138, %v4966, %v4967
      %v4969 = vrot.slane %v4765, 5
      %v4970 = vrot.slane %v4969, 4
      %v4971 = vrot.slane %v2817, 5
      %v4972 = vsel %vm2138, %v4970, %v4971
      %v4973 = vrot.slane %v4971, 4
      %v4974 = vrot.slane %v2818, 5
      %v4975 = vsel %vm2138, %v4973, %v4974
      %v4976 = vrot.slane %v4974, 4
      %v4977 = vrot.slane %v2819, 5
      %v4978 = vsel %vm2138, %v4976, %v4977
      %v4979 = vrot.slane %v4977, 4
      %v4980 = vrot.slane %v3069, 5
      %v4981 = vsel %vm2138, %v4979, %v4980
      %v4982 = vrot.slane %v4766, 5
      %v4983 = vrot.slane %v4982, 4
      %v4984 = vrot.slane %v2821, 5
      %v4985 = vsel %vm2138, %v4983, %v4984
      %v4986 = vrot.slane %v4984, 4
      %v4987 = vrot.slane %v2822, 5
      %v4988 = vsel %vm2138, %v4986, %v4987
      %v4989 = vrot.slane %v4987, 4
      %v4990 = vrot.slane %v2823, 5
      %v4991 = vsel %vm2138, %v4989, %v4990
      %v4992 = vrot.slane %v4990, 4
      %v4993 = vrot.slane %v3070, 5
      %v4994 = vsel %vm2138, %v4992, %v4993
      %v4995 = vrot.slane %v4767, 5
      %v4996 = vrot.slane %v4995, 4
      %v4997 = vrot.slane %v2825, 5
      %v4998 = vsel %vm2138, %v4996, %v4997
      %v4999 = vrot.slane %v4997, 4
      %v5000 = vrot.slane %v2826, 5
      %v5001 = vsel %vm2138, %v4999, %v5000
      %v5002 = vrot.slane %v5000, 4
      %v5003 = vrot.slane %v2827, 5
      %v5004 = vsel %vm2138, %v5002, %v5003
      %v5005 = vrot.slane %v5003, 4
      %v5006 = vrot.slane %v3071, 5
      %v5007 = vsel %vm2138, %v5005, %v5006
      %v5008 = vrot.slane %v4768, 5
      %v5009 = vrot.slane %v5008, 4
      %v5010 = vrot.slane %v2829, 5
      %v5011 = vsel %vm2138, %v5009, %v5010
      %v5012 = vrot.slane %v5010, 4
      %v5013 = vrot.slane %v2830, 5
      %v5014 = vsel %vm2138, %v5012, %v5013
      %v5015 = vrot.slane %v5013, 4
      %v5016 = vrot.slane %v2831, 5
      %v5017 = vsel %vm2138, %v5015, %v5016
      %v5018 = vrot.slane %v5016, 4
      %v5019 = vrot.slane %v3072, 5
      %v5020 = vsel %vm2138, %v5018, %v5019
      %v5021 = vrot.slane %v4769, 5
      %v5022 = vrot.slane %v5021, 4
      %v5023 = vrot.slane %v2833, 5
      %v5024 = vsel %vm2138, %v5022, %v5023
      %v5025 = vrot.slane %v5023, 4
      %v5026 = vrot.slane %v2834, 5
      %v5027 = vsel %vm2138, %v5025, %v5026
      %v5028 = vrot.slane %v5026, 4
      %v5029 = vrot.slane %v2835, 5
      %v5030 = vsel %vm2138, %v5028, %v5029
      %v5031 = vrot.slane %v5029, 4
      %v5032 = vrot.slane %v3073, 5
      %v5033 = vsel %vm2138, %v5031, %v5032
      %v5034 = vrot.slane %v4770, 5
      %v5035 = vrot.slane %v5034, 4
      %v5036 = vrot.slane %v2837, 5
      %v5037 = vsel %vm2138, %v5035, %v5036
      %v5038 = vrot.slane %v5036, 4
      %v5039 = vrot.slane %v2838, 5
      %v5040 = vsel %vm2138, %v5038, %v5039
      %v5041 = vrot.slane %v5039, 4
      %v5042 = vrot.slane %v2839, 5
      %v5043 = vsel %vm2138, %v5041, %v5042
      %v5044 = vrot.slane %v5042, 4
      %v5045 = vrot.slane %v3074, 5
      %v5046 = vsel %vm2138, %v5044, %v5045
      %v5047 = vrot.slane %v4771, 5
      %v5048 = vrot.slane %v5047, 4
      %v5049 = vrot.slane %v2841, 5
      %v5050 = vsel %vm2138, %v5048, %v5049
      %v5051 = vrot.slane %v5049, 4
      %v5052 = vrot.slane %v2842, 5
      %v5053 = vsel %vm2138, %v5051, %v5052
      %v5054 = vrot.slane %v5052, 4
      %v5055 = vrot.slane %v2843, 5
      %v5056 = vsel %vm2138, %v5054, %v5055
      %v5057 = vrot.slane %v5055, 4
      %v5058 = vrot.slane %v3075, 5
      %v5059 = vsel %vm2138, %v5057, %v5058
      %v5060 = vrot.slane %v4772, 5
      %v5061 = vrot.slane %v5060, 4
      %v5062 = vrot.slane %v2845, 5
      %v5063 = vsel %vm2138, %v5061, %v5062
      %v5064 = vrot.slane %v5062, 4
      %v5065 = vrot.slane %v2846, 5
      %v5066 = vsel %vm2138, %v5064, %v5065
      %v5067 = vrot.slane %v5065, 4
      %v5068 = vrot.slane %v2847, 5
      %v5069 = vsel %vm2138, %v5067, %v5068
      %v5070 = vrot.slane %v5068, 4
      %v5071 = vrot.slane %v3076, 5
      %v5072 = vsel %vm2138, %v5070, %v5071
      %v5073 = vrot.slane %v4773, 5
      %v5074 = vrot.slane %v5073, 4
      %v5075 = vrot.slane %v2849, 5
      %v5076 = vsel %vm2138, %v5074, %v5075
      %v5077 = vrot.slane %v5075, 4
      %v5078 = vrot.slane %v2850, 5
      %v5079 = vsel %vm2138, %v5077, %v5078
      %v5080 = vrot.slane %v5078, 4
      %v5081 = vrot.slane %v2851, 5
      %v5082 = vsel %vm2138, %v5080, %v5081
      %v5083 = vrot.slane %v5081, 4
      %v5084 = vrot.slane %v3077, 5
      %v5085 = vsel %vm2138, %v5083, %v5084
      %v5086 = vrot.slane %v4774, 5
      %v5087 = vrot.slane %v5086, 4
      %v5088 = vrot.slane %v2853, 5
      %v5089 = vsel %vm2138, %v5087, %v5088
      %v5090 = vrot.slane %v5088, 4
      %v5091 = vrot.slane %v2854, 5
      %v5092 = vsel %vm2138, %v5090, %v5091
      %v5093 = vrot.slane %v5091, 4
      %v5094 = vrot.slane %v2855, 5
      %v5095 = vsel %vm2138, %v5093, %v5094
      %v5096 = vrot.slane %v5094, 4
      %v5097 = vrot.slane %v3078, 5
      %v5098 = vsel %vm2138, %v5096, %v5097
      %v5099 = vrot.slane %v4775, 5
      %v5100 = vrot.slane %v5099, 4
      %v5101 = vrot.slane %v2857, 5
      %v5102 = vsel %vm2138, %v5100, %v5101
      %v5103 = vrot.slane %v5101, 4
      %v5104 = vrot.slane %v2858, 5
      %v5105 = vsel %vm2138, %v5103, %v5104
      %v5106 = vrot.slane %v5104, 4
      %v5107 = vrot.slane %v2859, 5
      %v5108 = vsel %vm2138, %v5106, %v5107
      %v5109 = vrot.slane %v5107, 4
      %v5110 = vrot.slane %v3079, 5
      %v5111 = vsel %vm2138, %v5109, %v5110
      %v5112 = vrot.slane %v4776, 5
      %v5113 = vrot.slane %v5112, 4
      %v5114 = vrot.slane %v2861, 5
      %v5115 = vsel %vm2138, %v5113, %v5114
      %v5116 = vrot.slane %v5114, 4
      %v5117 = vrot.slane %v2862, 5
      %v5118 = vsel %vm2138, %v5116, %v5117
      %v5119 = vrot.slane %v5117, 4
      %v5120 = vrot.slane %v2863, 5
      %v5121 = vsel %vm2138, %v5119, %v5120
      %v5122 = vrot.slane %v5120, 4
      %v5123 = vrot.slane %v3080, 5
      %v5124 = vsel %vm2138, %v5122, %v5123
      %v5125 = vrot.slane %v4777, 5
      %v5126 = vrot.slane %v5125, 4
      %v5127 = vrot.slane %v2865, 5
      %v5128 = vsel %vm2138, %v5126, %v5127
      %v5129 = vrot.slane %v5127, 4
      %v5130 = vrot.slane %v2866, 5
      %v5131 = vsel %vm2138, %v5129, %v5130
      %v5132 = vrot.slane %v5130, 4
      %v5133 = vrot.slane %v2867, 5
      %v5134 = vsel %vm2138, %v5132, %v5133
      %v5135 = vrot.slane %v5133, 4
      %v5136 = vrot.slane %v3081, 5
      %v5137 = vsel %vm2138, %v5135, %v5136
      %v5138 = vrot.slane %v4778, 5
      %v5139 = vrot.slane %v5138, 4
      %v5140 = vrot.slane %v2869, 5
      %v5141 = vsel %vm2138, %v5139, %v5140
      %v5142 = vrot.slane %v5140, 4
      %v5143 = vrot.slane %v2870, 5
      %v5144 = vsel %vm2138, %v5142, %v5143
      %v5145 = vrot.slane %v5143, 4
      %v5146 = vrot.slane %v2871, 5
      %v5147 = vsel %vm2138, %v5145, %v5146
      %v5148 = vrot.slane %v5146, 4
      %v5149 = vrot.slane %v3082, 5
      %v5150 = vsel %vm2138, %v5148, %v5149
      %v5151 = vrot.slane %v4779, 5
      %v5152 = vrot.slane %v5151, 4
      %v5153 = vrot.slane %v2873, 5
      %v5154 = vsel %vm2138, %v5152, %v5153
      %v5155 = vrot.slane %v5153, 4
      %v5156 = vrot.slane %v2874, 5
      %v5157 = vsel %vm2138, %v5155, %v5156
      %v5158 = vrot.slane %v5156, 4
      %v5159 = vrot.slane %v2875, 5
      %v5160 = vsel %vm2138, %v5158, %v5159
      %v5161 = vrot.slane %v5159, 4
      %v5162 = vrot.slane %v3083, 5
      %v5163 = vsel %vm2138, %v5161, %v5162
      %v5164 = vrot.slane %v4780, 5
      %v5165 = vrot.slane %v5164, 4
      %v5166 = vrot.slane %v2877, 5
      %v5167 = vsel %vm2138, %v5165, %v5166
      %v5168 = vrot.slane %v5166, 4
      %v5169 = vrot.slane %v2878, 5
      %v5170 = vsel %vm2138, %v5168, %v5169
      %v5171 = vrot.slane %v5169, 4
      %v5172 = vrot.slane %v2879, 5
      %v5173 = vsel %vm2138, %v5171, %v5172
      %v5174 = vrot.slane %v5172, 4
      %v5175 = vrot.slane %v3084, 5
      %v5176 = vsel %vm2138, %v5174, %v5175
      %v5177 = vrot.slane %v4781, 5
      %v5178 = vrot.slane %v5177, 4
      %v5179 = vrot.slane %v2881, 5
      %v5180 = vsel %vm2138, %v5178, %v5179
      %v5181 = vrot.slane %v5179, 4
      %v5182 = vrot.slane %v2882, 5
      %v5183 = vsel %vm2138, %v5181, %v5182
      %v5184 = vrot.slane %v5182, 4
      %v5185 = vrot.slane %v2883, 5
      %v5186 = vsel %vm2138, %v5184, %v5185
      %v5187 = vrot.slane %v5185, 4
      %v5188 = vrot.slane %v3085, 5
      %v5189 = vsel %vm2138, %v5187, %v5188
      %v5190 = vrot.slane %v4782, 5
      %v5191 = vrot.slane %v5190, 4
      %v5192 = vrot.slane %v2885, 5
      %v5193 = vsel %vm2138, %v5191, %v5192
      %v5194 = vrot.slane %v5192, 4
      %v5195 = vrot.slane %v2886, 5
      %v5196 = vsel %vm2138, %v5194, %v5195
      %v5197 = vrot.slane %v5195, 4
      %v5198 = vrot.slane %v2887, 5
      %v5199 = vsel %vm2138, %v5197, %v5198
      %v5200 = vrot.slane %v5198, 4
      %v5201 = vrot.slane %v3086, 5
      %v5202 = vsel %vm2138, %v5200, %v5201
      %v5203 = vrot.slane %v4783, 5
      %v5204 = vrot.slane %v5203, 4
      %v5205 = vrot.slane %v2889, 5
      %v5206 = vsel %vm2138, %v5204, %v5205
      %v5207 = vrot.slane %v5205, 4
      %v5208 = vrot.slane %v2890, 5
      %v5209 = vsel %vm2138, %v5207, %v5208
      %v5210 = vrot.slane %v5208, 4
      %v5211 = vrot.slane %v2891, 5
      %v5212 = vsel %vm2138, %v5210, %v5211
      %v5213 = vrot.slane %v5211, 4
      %v5214 = vrot.slane %v3087, 5
      %v5215 = vsel %vm2138, %v5213, %v5214
      %v5216 = vrot.slane %v4784, 5
      %v5217 = vrot.slane %v5216, 4
      %v5218 = vrot.slane %v2893, 5
      %v5219 = vsel %vm2138, %v5217, %v5218
      %v5220 = vrot.slane %v5218, 4
      %v5221 = vrot.slane %v2894, 5
      %v5222 = vsel %vm2138, %v5220, %v5221
      %v5223 = vrot.slane %v5221, 4
      %v5224 = vrot.slane %v2895, 5
      %v5225 = vsel %vm2138, %v5223, %v5224
      %v5226 = vrot.slane %v5224, 4
      %v5227 = vrot.slane %v3088, 5
      %v5228 = vsel %vm2138, %v5226, %v5227
      %v5229 = vrot.slane %v4785, 5
      %v5230 = vrot.slane %v5229, 4
      %v5231 = vrot.slane %v2897, 5
      %v5232 = vsel %vm2138, %v5230, %v5231
      %v5233 = vrot.slane %v5231, 4
      %v5234 = vrot.slane %v2898, 5
      %v5235 = vsel %vm2138, %v5233, %v5234
      %v5236 = vrot.slane %v5234, 4
      %v5237 = vrot.slane %v2899, 5
      %v5238 = vsel %vm2138, %v5236, %v5237
      %v5239 = vrot.slane %v5237, 4
      %v5240 = vrot.slane %v3089, 5
      %v5241 = vsel %vm2138, %v5239, %v5240
      %v5242 = vrot.slane %v4786, 5
      %v5243 = vrot.slane %v5242, 4
      %v5244 = vrot.slane %v2901, 5
      %v5245 = vsel %vm2138, %v5243, %v5244
      %v5246 = vrot.slane %v5244, 4
      %v5247 = vrot.slane %v2902, 5
      %v5248 = vsel %vm2138, %v5246, %v5247
      %v5249 = vrot.slane %v5247, 4
      %v5250 = vrot.slane %v2903, 5
      %v5251 = vsel %vm2138, %v5249, %v5250
      %v5252 = vrot.slane %v5250, 4
      %v5253 = vrot.slane %v3090, 5
      %v5254 = vsel %vm2138, %v5252, %v5253
      %v5255 = vrot.slane %v4787, 5
      %v5256 = vrot.slane %v5255, 4
      %v5257 = vrot.slane %v2905, 5
      %v5258 = vsel %vm2138, %v5256, %v5257
      %v5259 = vrot.slane %v5257, 4
      %v5260 = vrot.slane %v2906, 5
      %v5261 = vsel %vm2138, %v5259, %v5260
      %v5262 = vrot.slane %v5260, 4
      %v5263 = vrot.slane %v2907, 5
      %v5264 = vsel %vm2138, %v5262, %v5263
      %v5265 = vrot.slane %v5263, 4
      %v5266 = vrot.slane %v3091, 5
      %v5267 = vsel %vm2138, %v5265, %v5266
      %v5268 = vrot.slane %v4788, 5
      %v5269 = vrot.slane %v5268, 4
      %v5270 = vrot.slane %v2909, 5
      %v5271 = vsel %vm2138, %v5269, %v5270
      %v5272 = vrot.slane %v5270, 4
      %v5273 = vrot.slane %v2910, 5
      %v5274 = vsel %vm2138, %v5272, %v5273
      %v5275 = vrot.slane %v5273, 4
      %v5276 = vrot.slane %v2911, 5
      %v5277 = vsel %vm2138, %v5275, %v5276
      %v5278 = vrot.slane %v5276, 4
      %v5279 = vrot.slane %v3092, 5
      %v5280 = vsel %vm2138, %v5278, %v5279
      %v5281 = vrot.slane %v4789, 5
      %v5282 = vrot.slane %v5281, 4
      %v5283 = vrot.slane %v2913, 5
      %v5284 = vsel %vm2138, %v5282, %v5283
      %v5285 = vrot.slane %v5283, 4
      %v5286 = vrot.slane %v2914, 5
      %v5287 = vsel %vm2138, %v5285, %v5286
      %v5288 = vrot.slane %v5286, 4
      %v5289 = vrot.slane %v2915, 5
      %v5290 = vsel %vm2138, %v5288, %v5289
      %v5291 = vrot.slane %v5289, 4
      %v5292 = vrot.slane %v3093, 5
      %v5293 = vsel %vm2138, %v5291, %v5292
      %v5294 = vrot.slane %v4790, 5
      %v5295 = vrot.slane %v5294, 4
      %v5296 = vrot.slane %v2917, 5
      %v5297 = vsel %vm2138, %v5295, %v5296
      %v5298 = vrot.slane %v5296, 4
      %v5299 = vrot.slane %v2918, 5
      %v5300 = vsel %vm2138, %v5298, %v5299
      %v5301 = vrot.slane %v5299, 4
      %v5302 = vrot.slane %v2919, 5
      %v5303 = vsel %vm2138, %v5301, %v5302
      %v5304 = vrot.slane %v5302, 4
      %v5305 = vrot.slane %v3094, 5
      %v5306 = vsel %vm2138, %v5304, %v5305
      %v5307 = vrot.slane %v4791, 5
      %v5308 = vrot.slane %v5307, 4
      %v5309 = vrot.slane %v2921, 5
      %v5310 = vsel %vm2138, %v5308, %v5309
      %v5311 = vrot.slane %v5309, 4
      %v5312 = vrot.slane %v2922, 5
      %v5313 = vsel %vm2138, %v5311, %v5312
      %v5314 = vrot.slane %v5312, 4
      %v5315 = vrot.slane %v2923, 5
      %v5316 = vsel %vm2138, %v5314, %v5315
      %v5317 = vrot.slane %v5315, 4
      %v5318 = vrot.slane %v3095, 5
      %v5319 = vsel %vm2138, %v5317, %v5318
      %v5320 = vrot.slane %v4792, 5
      %v5321 = vrot.slane %v5320, 4
      %v5322 = vrot.slane %v2925, 5
      %v5323 = vsel %vm2138, %v5321, %v5322
      %v5324 = vrot.slane %v5322, 4
      %v5325 = vrot.slane %v2926, 5
      %v5326 = vsel %vm2138, %v5324, %v5325
      %v5327 = vrot.slane %v5325, 4
      %v5328 = vrot.slane %v2927, 5
      %v5329 = vsel %vm2138, %v5327, %v5328
      %v5330 = vrot.slane %v5328, 4
      %v5331 = vrot.slane %v3096, 5
      %v5332 = vsel %vm2138, %v5330, %v5331
      %v5333 = vrot.slane %v4793, 5
      %v5334 = vrot.slane %v5333, 4
      %v5335 = vrot.slane %v2929, 5
      %v5336 = vsel %vm2138, %v5334, %v5335
      %v5337 = vrot.slane %v5335, 4
      %v5338 = vrot.slane %v2930, 5
      %v5339 = vsel %vm2138, %v5337, %v5338
      %v5340 = vrot.slane %v5338, 4
      %v5341 = vrot.slane %v2931, 5
      %v5342 = vsel %vm2138, %v5340, %v5341
      %v5343 = vrot.slane %v5341, 4
      %v5344 = vrot.slane %v3097, 5
      %v5345 = vsel %vm2138, %v5343, %v5344
      %v5346 = vrot.slane %v4794, 5
      %v5347 = vrot.slane %v5346, 4
      %v5348 = vrot.slane %v2933, 5
      %v5349 = vsel %vm2138, %v5347, %v5348
      %v5350 = vrot.slane %v5348, 4
      %v5351 = vrot.slane %v2934, 5
      %v5352 = vsel %vm2138, %v5350, %v5351
      %v5353 = vrot.slane %v5351, 4
      %v5354 = vrot.slane %v2935, 5
      %v5355 = vsel %vm2138, %v5353, %v5354
      %v5356 = vrot.slane %v5354, 4
      %v5357 = vrot.slane %v3098, 5
      %v5358 = vsel %vm2138, %v5356, %v5357
      %v5359 = vrot.slane %v4795, 5
      %v5360 = vrot.slane %v5359, 4
      %v5361 = vrot.slane %v2937, 5
      %v5362 = vsel %vm2138, %v5360, %v5361
      %v5363 = vrot.slane %v5361, 4
      %v5364 = vrot.slane %v2938, 5
      %v5365 = vsel %vm2138, %v5363, %v5364
      %v5366 = vrot.slane %v5364, 4
      %v5367 = vrot.slane %v2939, 5
      %v5368 = vsel %vm2138, %v5366, %v5367
      %v5369 = vrot.slane %v5367, 4
      %v5370 = vrot.slane %v3099, 5
      %v5371 = vsel %vm2138, %v5369, %v5370
      %v5500 = vmax.bf16 %v4636, %v4959
      %v5501 = vmax.bf16 %v4637, %v4962
      %v5502 = vmax.bf16 %v4638, %v4965
      %v5503 = vmax.bf16 %v4639, %v4968
      %v5504 = vmax.bf16 %v4640, %v4972
      %v5505 = vmax.bf16 %v4641, %v4975
      %v5506 = vmax.bf16 %v4642, %v4978
      %v5507 = vmax.bf16 %v4643, %v4981
      %v5508 = vmax.bf16 %v4644, %v4985
      %v5509 = vmax.bf16 %v4645, %v4988
      %v5510 = vmax.bf16 %v4646, %v4991
      %v5511 = vmax.bf16 %v4647, %v4994
      %v5512 = vmax.bf16 %v4648, %v4998
      %v5513 = vmax.bf16 %v4649, %v5001
      %v5514 = vmax.bf16 %v4650, %v5004
      %v5515 = vmax.bf16 %v4651, %v5007
      %v5516 = vmax.bf16 %v4652, %v5011
      %v5517 = vmax.bf16 %v4653, %v5014
      %v5518 = vmax.bf16 %v4654, %v5017
      %v5519 = vmax.bf16 %v4655, %v5020
      %v5520 = vmax.bf16 %v4656, %v5024
      %v5521 = vmax.bf16 %v4657, %v5027
      %v5522 = vmax.bf16 %v4658, %v5030
      %v5523 = vmax.bf16 %v4659, %v5033
      %v5524 = vmax.bf16 %v4660, %v5037
      %v5525 = vmax.bf16 %v4661, %v5040
      %v5526 = vmax.bf16 %v4662, %v5043
      %v5527 = vmax.bf16 %v4663, %v5046
      %v5528 = vmax.bf16 %v4664, %v5050
      %v5529 = vmax.bf16 %v4665, %v5053
      %v5530 = vmax.bf16 %v4666, %v5056
      %v5531 = vmax.bf16 %v4667, %v5059
      %v5532 = vmax.bf16 %v4668, %v5063
      %v5533 = vmax.bf16 %v4669, %v5066
      %v5534 = vmax.bf16 %v4670, %v5069
      %v5535 = vmax.bf16 %v4671, %v5072
      %v5536 = vmax.bf16 %v4672, %v5076
      %v5537 = vmax.bf16 %v4673, %v5079
      %v5538 = vmax.bf16 %v4674, %v5082
      %v5539 = vmax.bf16 %v4675, %v5085
      %v5540 = vmax.bf16 %v4676, %v5089
      %v5541 = vmax.bf16 %v4677, %v5092
      %v5542 = vmax.bf16 %v4678, %v5095
      %v5543 = vmax.bf16 %v4679, %v5098
      %v5544 = vmax.bf16 %v4680, %v5102
      %v5545 = vmax.bf16 %v4681, %v5105
      %v5546 = vmax.bf16 %v4682, %v5108
      %v5547 = vmax.bf16 %v4683, %v5111
      %v5548 = vmax.bf16 %v4684, %v5115
      %v5549 = vmax.bf16 %v4685, %v5118
      %v5550 = vmax.bf16 %v4686, %v5121
      %v5551 = vmax.bf16 %v4687, %v5124
      %v5552 = vmax.bf16 %v4688, %v5128
      %v5553 = vmax.bf16 %v4689, %v5131
      %v5554 = vmax.bf16 %v4690, %v5134
      %v5555 = vmax.bf16 %v4691, %v5137
      %v5556 = vmax.bf16 %v4692, %v5141
      %v5557 = vmax.bf16 %v4693, %v5144
      %v5558 = vmax.bf16 %v4694, %v5147
      %v5559 = vmax.bf16 %v4695, %v5150
      %v5560 = vmax.bf16 %v4696, %v5154
      %v5561 = vmax.bf16 %v4697, %v5157
      %v5562 = vmax.bf16 %v4698, %v5160
      %v5563 = vmax.bf16 %v4699, %v5163
      %v5564 = vmax.bf16 %v4700, %v5167
      %v5565 = vmax.bf16 %v4701, %v5170
      %v5566 = vmax.bf16 %v4702, %v5173
      %v5567 = vmax.bf16 %v4703, %v5176
      %v5568 = vmax.bf16 %v4704, %v5180
      %v5569 = vmax.bf16 %v4705, %v5183
      %v5570 = vmax.bf16 %v4706, %v5186
      %v5571 = vmax.bf16 %v4707, %v5189
      %v5572 = vmax.bf16 %v4708, %v5193
      %v5573 = vmax.bf16 %v4709, %v5196
      %v5574 = vmax.bf16 %v4710, %v5199
      %v5575 = vmax.bf16 %v4711, %v5202
      %v5576 = vmax.bf16 %v4712, %v5206
      %v5577 = vmax.bf16 %v4713, %v5209
      %v5578 = vmax.bf16 %v4714, %v5212
      %v5579 = vmax.bf16 %v4715, %v5215
      %v5580 = vmax.bf16 %v4716, %v5219
      %v5581 = vmax.bf16 %v4717, %v5222
      %v5582 = vmax.bf16 %v4718, %v5225
      %v5583 = vmax.bf16 %v4719, %v5228
      %v5584 = vmax.bf16 %v4720, %v5232
      %v5585 = vmax.bf16 %v4721, %v5235
      %v5586 = vmax.bf16 %v4722, %v5238
      %v5587 = vmax.bf16 %v4723, %v5241
      %v5588 = vmax.bf16 %v4724, %v5245
      %v5589 = vmax.bf16 %v4725, %v5248
      %v5590 = vmax.bf16 %v4726, %v5251
      %v5591 = vmax.bf16 %v4727, %v5254
      %v5592 = vmax.bf16 %v4728, %v5258
      %v5593 = vmax.bf16 %v4729, %v5261
      %v5594 = vmax.bf16 %v4730, %v5264
      %v5595 = vmax.bf16 %v4731, %v5267
      %v5596 = vmax.bf16 %v4732, %v5271
      %v5597 = vmax.bf16 %v4733, %v5274
      %v5598 = vmax.bf16 %v4734, %v5277
      %v5599 = vmax.bf16 %v4735, %v5280
      %v5600 = vmax.bf16 %v4736, %v5284
      %v5601 = vmax.bf16 %v4737, %v5287
      %v5602 = vmax.bf16 %v4738, %v5290
      %v5603 = vmax.bf16 %v4739, %v5293
      %v5604 = vmax.bf16 %v4740, %v5297
      %v5605 = vmax.bf16 %v4741, %v5300
      %v5606 = vmax.bf16 %v4742, %v5303
      %v5607 = vmax.bf16 %v4743, %v5306
      %v5608 = vmax.bf16 %v4744, %v5310
      %v5609 = vmax.bf16 %v4745, %v5313
      %v5610 = vmax.bf16 %v4746, %v5316
      %v5611 = vmax.bf16 %v4747, %v5319
      %v5612 = vmax.bf16 %v4748, %v5323
      %v5613 = vmax.bf16 %v4749, %v5326
      %v5614 = vmax.bf16 %v4750, %v5329
      %v5615 = vmax.bf16 %v4751, %v5332
      %v5616 = vmax.bf16 %v4752, %v5336
      %v5617 = vmax.bf16 %v4753, %v5339
      %v5618 = vmax.bf16 %v4754, %v5342
      %v5619 = vmax.bf16 %v4755, %v5345
      %v5620 = vmax.bf16 %v4756, %v5349
      %v5621 = vmax.bf16 %v4757, %v5352
      %v5622 = vmax.bf16 %v4758, %v5355
      %v5623 = vmax.bf16 %v4759, %v5358
      %v5624 = vmax.bf16 %v4760, %v5362
      %v5625 = vmax.bf16 %v4761, %v5365
      %v5626 = vmax.bf16 %v4762, %v5368
      %v5627 = vmax.bf16 %v4763, %v5371
      %s5628 = scalar_lea.vmem %s111, 40
      %v5629 = vld [vmem:[%s5628] sm:$0xf]
      %v5630 = vld [vmem:[%s5628 + $0x4] sm:$0xf]
      %v5631 = vld [vmem:[%s5628 + $0x8] sm:$0xf]
      %v5632 = vld [vmem:[%s5628 + $0xc] sm:$0xf]
      %v5633 = vld [vmem:[%s5628 + $0x14] sm:$0xf]
      %v5634 = vld [vmem:[%s5628 + $0x18] sm:$0xf]
      %v5635 = vld [vmem:[%s5628 + $0x1c] sm:$0xf]
      %v5636 = vld [vmem:[%s5628 + $0x20] sm:$0xf]
      %v5637 = vld [vmem:[%s5628 + $0x28] sm:$0xf]
      %v5638 = vld [vmem:[%s5628 + $0x2c] sm:$0xf]
      %v5639 = vld [vmem:[%s5628 + $0x30] sm:$0xf]
      %v5640 = vld [vmem:[%s5628 + $0x34] sm:$0xf]
      %v5641 = vld [vmem:[%s5628 + $0x3c] sm:$0xf]
      %v5642 = vld [vmem:[%s5628 + $0x40] sm:$0xf]
      %v5643 = vld [vmem:[%s5628 + $0x44] sm:$0xf]
      %v5644 = vld [vmem:[%s5628 + $0x48] sm:$0xf]
      %v5645 = vld [vmem:[%s5628 + $0x50] sm:$0xf]
      %v5646 = vld [vmem:[%s5628 + $0x54] sm:$0xf]
      %v5647 = vld [vmem:[%s5628 + $0x58] sm:$0xf]
      %v5648 = vld [vmem:[%s5628 + $0x5c] sm:$0xf]
      %v5649 = vld [vmem:[%s5628 + $0x64] sm:$0xf]
      %v5650 = vld [vmem:[%s5628 + $0x68] sm:$0xf]
      %v5651 = vld [vmem:[%s5628 + $0x6c] sm:$0xf]
      %v5652 = vld [vmem:[%s5628 + $0x70] sm:$0xf]
      %v5653 = vld [vmem:[%s5628 + $0x78] sm:$0xf]
      %v5654 = vld [vmem:[%s5628 + $0x7c] sm:$0xf]
      %v5655 = vld [vmem:[%s5628 + $0x80] sm:$0xf]
      %v5656 = vld [vmem:[%s5628 + $0x84] sm:$0xf]
      %v5657 = vld [vmem:[%s5628 + $0x8c] sm:$0xf]
      %v5658 = vld [vmem:[%s5628 + $0x90] sm:$0xf]
      %v5659 = vld [vmem:[%s5628 + $0x94] sm:$0xf]
      %v5660 = vld [vmem:[%s5628 + $0x98] sm:$0xf]
      %v5661 = vld [vmem:[%s5628 + $0xa0] sm:$0xf]
      %v5662 = vld [vmem:[%s5628 + $0xa4] sm:$0xf]
      %v5663 = vld [vmem:[%s5628 + $0xa8] sm:$0xf]
      %v5664 = vld [vmem:[%s5628 + $0xac] sm:$0xf]
      %v5665 = vld [vmem:[%s5628 + $0xb4] sm:$0xf]
      %v5666 = vld [vmem:[%s5628 + $0xb8] sm:$0xf]
      %v5667 = vld [vmem:[%s5628 + $0xbc] sm:$0xf]
      %v5668 = vld [vmem:[%s5628 + $0xc0] sm:$0xf]
      %v5669 = vld [vmem:[%s5628 + $0xc8] sm:$0xf]
      %v5670 = vld [vmem:[%s5628 + $0xcc] sm:$0xf]
      %v5671 = vld [vmem:[%s5628 + $0xd0] sm:$0xf]
      %v5672 = vld [vmem:[%s5628 + $0xd4] sm:$0xf]
      %v5673 = vld [vmem:[%s5628 + $0xdc] sm:$0xf]
      %v5674 = vld [vmem:[%s5628 + $0xe0] sm:$0xf]
      %v5675 = vld [vmem:[%s5628 + $0xe4] sm:$0xf]
      %v5676 = vld [vmem:[%s5628 + $0xe8] sm:$0xf]
      %v5677 = vld [vmem:[%s5628 + $0xf0] sm:$0xf]
      %v5678 = vld [vmem:[%s5628 + $0xf4] sm:$0xf]
      %v5679 = vld [vmem:[%s5628 + $0xf8] sm:$0xf]
      %v5680 = vld [vmem:[%s5628 + $0xfc] sm:$0xf]
      %v5681 = vld [vmem:[%s5628 + $0x104] sm:$0xf]
      %v5682 = vld [vmem:[%s5628 + $0x108] sm:$0xf]
      %v5683 = vld [vmem:[%s5628 + $0x10c] sm:$0xf]
      %v5684 = vld [vmem:[%s5628 + $0x110] sm:$0xf]
      %v5685 = vld [vmem:[%s5628 + $0x118] sm:$0xf]
      %v5686 = vld [vmem:[%s5628 + $0x11c] sm:$0xf]
      %v5687 = vld [vmem:[%s5628 + $0x120] sm:$0xf]
      %v5688 = vld [vmem:[%s5628 + $0x124] sm:$0xf]
      %v5689 = vld [vmem:[%s5628 + $0x12c] sm:$0xf]
      %v5690 = vld [vmem:[%s5628 + $0x130] sm:$0xf]
      %v5691 = vld [vmem:[%s5628 + $0x134] sm:$0xf]
      %v5692 = vld [vmem:[%s5628 + $0x138] sm:$0xf]
      %v5693 = vld [vmem:[%s5628 + $0x140] sm:$0xf]
      %v5694 = vld [vmem:[%s5628 + $0x144] sm:$0xf]
      %v5695 = vld [vmem:[%s5628 + $0x148] sm:$0xf]
      %v5696 = vld [vmem:[%s5628 + $0x14c] sm:$0xf]
      %v5697 = vld [vmem:[%s5628 + $0x154] sm:$0xf]
      %v5698 = vld [vmem:[%s5628 + $0x158] sm:$0xf]
      %v5699 = vld [vmem:[%s5628 + $0x15c] sm:$0xf]
      %v5700 = vld [vmem:[%s5628 + $0x160] sm:$0xf]
      %v5701 = vld [vmem:[%s5628 + $0x168] sm:$0xf]
      %v5702 = vld [vmem:[%s5628 + $0x16c] sm:$0xf]
      %v5703 = vld [vmem:[%s5628 + $0x170] sm:$0xf]
      %v5704 = vld [vmem:[%s5628 + $0x174] sm:$0xf]
      %v5705 = vld [vmem:[%s5628 + $0x17c] sm:$0xf]
      %v5706 = vld [vmem:[%s5628 + $0x180] sm:$0xf]
      %v5707 = vld [vmem:[%s5628 + $0x184] sm:$0xf]
      %v5708 = vld [vmem:[%s5628 + $0x188] sm:$0xf]
      %v5709 = vld [vmem:[%s5628 + $0x190] sm:$0xf]
      %v5710 = vld [vmem:[%s5628 + $0x194] sm:$0xf]
      %v5711 = vld [vmem:[%s5628 + $0x198] sm:$0xf]
      %v5712 = vld [vmem:[%s5628 + $0x19c] sm:$0xf]
      %v5713 = vld [vmem:[%s5628 + $0x1a4] sm:$0xf]
      %v5714 = vld [vmem:[%s5628 + $0x1a8] sm:$0xf]
      %v5715 = vld [vmem:[%s5628 + $0x1ac] sm:$0xf]
      %v5716 = vld [vmem:[%s5628 + $0x1b0] sm:$0xf]
      %v5717 = vld [vmem:[%s5628 + $0x1b8] sm:$0xf]
      %v5718 = vld [vmem:[%s5628 + $0x1bc] sm:$0xf]
      %v5719 = vld [vmem:[%s5628 + $0x1c0] sm:$0xf]
      %v5720 = vld [vmem:[%s5628 + $0x1c4] sm:$0xf]
      %v5721 = vld [vmem:[%s5628 + $0x1cc] sm:$0xf]
      %v5722 = vld [vmem:[%s5628 + $0x1d0] sm:$0xf]
      %v5723 = vld [vmem:[%s5628 + $0x1d4] sm:$0xf]
      %v5724 = vld [vmem:[%s5628 + $0x1d8] sm:$0xf]
      %v5725 = vld [vmem:[%s5628 + $0x1e0] sm:$0xf]
      %v5726 = vld [vmem:[%s5628 + $0x1e4] sm:$0xf]
      %v5727 = vld [vmem:[%s5628 + $0x1e8] sm:$0xf]
      %v5728 = vld [vmem:[%s5628 + $0x1ec] sm:$0xf]
      %v5729 = vld [vmem:[%s5628 + $0x1f4] sm:$0xf]
      %v5730 = vld [vmem:[%s5628 + $0x1f8] sm:$0xf]
      %v5731 = vld [vmem:[%s5628 + $0x1fc] sm:$0xf]
      %v5732 = vld [vmem:[%s5628 + $0x200] sm:$0xf]
      %v5733 = vld [vmem:[%s5628 + $0x208] sm:$0xf]
      %v5734 = vld [vmem:[%s5628 + $0x20c] sm:$0xf]
      %v5735 = vld [vmem:[%s5628 + $0x210] sm:$0xf]
      %v5736 = vld [vmem:[%s5628 + $0x214] sm:$0xf]
      %v5737 = vld [vmem:[%s5628 + $0x21c] sm:$0xf]
      %v5738 = vld [vmem:[%s5628 + $0x220] sm:$0xf]
      %v5739 = vld [vmem:[%s5628 + $0x224] sm:$0xf]
      %v5740 = vld [vmem:[%s5628 + $0x228] sm:$0xf]
      %v5741 = vld [vmem:[%s5628 + $0x230] sm:$0xf]
      %v5742 = vld [vmem:[%s5628 + $0x234] sm:$0xf]
      %v5743 = vld [vmem:[%s5628 + $0x238] sm:$0xf]
      %v5744 = vld [vmem:[%s5628 + $0x23c] sm:$0xf]
      %v5745 = vld [vmem:[%s5628 + $0x244] sm:$0xf]
      %v5746 = vld [vmem:[%s5628 + $0x248] sm:$0xf]
      %v5747 = vld [vmem:[%s5628 + $0x24c] sm:$0xf]
      %v5748 = vld [vmem:[%s5628 + $0x250] sm:$0xf]
      %v5749 = vld [vmem:[%s5628 + $0x258] sm:$0xf]
      %v5750 = vld [vmem:[%s5628 + $0x25c] sm:$0xf]
      %v5751 = vld [vmem:[%s5628 + $0x260] sm:$0xf]
      %v5752 = vld [vmem:[%s5628 + $0x264] sm:$0xf]
      %v5753 = vld [vmem:[%s5628 + $0x26c] sm:$0xf]
      %v5754 = vld [vmem:[%s5628 + $0x270] sm:$0xf]
      %v5755 = vld [vmem:[%s5628 + $0x274] sm:$0xf]
      %v5756 = vld [vmem:[%s5628 + $0x278] sm:$0xf]
      %v5757 = vmax.bf16 %v5500, %v5629
      %v5758 = vmax.bf16 %v5501, %v5630
      %v5759 = vmax.bf16 %v5502, %v5631
      %v5760 = vmax.bf16 %v5503, %v5632
      %v5761 = vmax.bf16 %v5504, %v5633
      %v5762 = vmax.bf16 %v5505, %v5634
      %v5763 = vmax.bf16 %v5506, %v5635
      %v5764 = vmax.bf16 %v5507, %v5636
      %v5765 = vmax.bf16 %v5508, %v5637
      %v5766 = vmax.bf16 %v5509, %v5638
      %v5767 = vmax.bf16 %v5510, %v5639
      %v5768 = vmax.bf16 %v5511, %v5640
      %v5769 = vmax.bf16 %v5512, %v5641
      %v5770 = vmax.bf16 %v5513, %v5642
      %v5771 = vmax.bf16 %v5514, %v5643
      %v5772 = vmax.bf16 %v5515, %v5644
      %v5773 = vmax.bf16 %v5516, %v5645
      %v5774 = vmax.bf16 %v5517, %v5646
      %v5775 = vmax.bf16 %v5518, %v5647
      %v5776 = vmax.bf16 %v5519, %v5648
      %v5777 = vmax.bf16 %v5520, %v5649
      %v5778 = vmax.bf16 %v5521, %v5650
      %v5779 = vmax.bf16 %v5522, %v5651
      %v5780 = vmax.bf16 %v5523, %v5652
      %v5781 = vmax.bf16 %v5524, %v5653
      %v5782 = vmax.bf16 %v5525, %v5654
      %v5783 = vmax.bf16 %v5526, %v5655
      %v5784 = vmax.bf16 %v5527, %v5656
      %v5785 = vmax.bf16 %v5528, %v5657
      %v5786 = vmax.bf16 %v5529, %v5658
      %v5787 = vmax.bf16 %v5530, %v5659
      %v5788 = vmax.bf16 %v5531, %v5660
      %v5789 = vmax.bf16 %v5532, %v5661
      %v5790 = vmax.bf16 %v5533, %v5662
      %v5791 = vmax.bf16 %v5534, %v5663
      %v5792 = vmax.bf16 %v5535, %v5664
      %v5793 = vmax.bf16 %v5536, %v5665
      %v5794 = vmax.bf16 %v5537, %v5666
      %v5795 = vmax.bf16 %v5538, %v5667
      %v5796 = vmax.bf16 %v5539, %v5668
      %v5797 = vmax.bf16 %v5540, %v5669
      %v5798 = vmax.bf16 %v5541, %v5670
      %v5799 = vmax.bf16 %v5542, %v5671
      %v5800 = vmax.bf16 %v5543, %v5672
      %v5801 = vmax.bf16 %v5544, %v5673
      %v5802 = vmax.bf16 %v5545, %v5674
      %v5803 = vmax.bf16 %v5546, %v5675
      %v5804 = vmax.bf16 %v5547, %v5676
      %v5805 = vmax.bf16 %v5548, %v5677
      %v5806 = vmax.bf16 %v5549, %v5678
      %v5807 = vmax.bf16 %v5550, %v5679
      %v5808 = vmax.bf16 %v5551, %v5680
      %v5809 = vmax.bf16 %v5552, %v5681
      %v5810 = vmax.bf16 %v5553, %v5682
      %v5811 = vmax.bf16 %v5554, %v5683
      %v5812 = vmax.bf16 %v5555, %v5684
      %v5813 = vmax.bf16 %v5556, %v5685
      %v5814 = vmax.bf16 %v5557, %v5686
      %v5815 = vmax.bf16 %v5558, %v5687
      %v5816 = vmax.bf16 %v5559, %v5688
      %v5817 = vmax.bf16 %v5560, %v5689
      %v5818 = vmax.bf16 %v5561, %v5690
      %v5819 = vmax.bf16 %v5562, %v5691
      %v5820 = vmax.bf16 %v5563, %v5692
      %v5821 = vmax.bf16 %v5564, %v5693
      %v5822 = vmax.bf16 %v5565, %v5694
      %v5823 = vmax.bf16 %v5566, %v5695
      %v5824 = vmax.bf16 %v5567, %v5696
      %v5825 = vmax.bf16 %v5568, %v5697
      %v5826 = vmax.bf16 %v5569, %v5698
      %v5827 = vmax.bf16 %v5570, %v5699
      %v5828 = vmax.bf16 %v5571, %v5700
      %v5829 = vmax.bf16 %v5572, %v5701
      %v5830 = vmax.bf16 %v5573, %v5702
      %v5831 = vmax.bf16 %v5574, %v5703
      %v5832 = vmax.bf16 %v5575, %v5704
      %v5833 = vmax.bf16 %v5576, %v5705
      %v5834 = vmax.bf16 %v5577, %v5706
      %v5835 = vmax.bf16 %v5578, %v5707
      %v5836 = vmax.bf16 %v5579, %v5708
      %v5837 = vmax.bf16 %v5580, %v5709
      %v5838 = vmax.bf16 %v5581, %v5710
      %v5839 = vmax.bf16 %v5582, %v5711
      %v5840 = vmax.bf16 %v5583, %v5712
      %v5841 = vmax.bf16 %v5584, %v5713
      %v5842 = vmax.bf16 %v5585, %v5714
      %v5843 = vmax.bf16 %v5586, %v5715
      %v5844 = vmax.bf16 %v5587, %v5716
      %v5845 = vmax.bf16 %v5588, %v5717
      %v5846 = vmax.bf16 %v5589, %v5718
      %v5847 = vmax.bf16 %v5590, %v5719
      %v5848 = vmax.bf16 %v5591, %v5720
      %v5849 = vmax.bf16 %v5592, %v5721
      %v5850 = vmax.bf16 %v5593, %v5722
      %v5851 = vmax.bf16 %v5594, %v5723
      %v5852 = vmax.bf16 %v5595, %v5724
      %v5853 = vmax.bf16 %v5596, %v5725
      %v5854 = vmax.bf16 %v5597, %v5726
      %v5855 = vmax.bf16 %v5598, %v5727
      %v5856 = vmax.bf16 %v5599, %v5728
      %v5857 = vmax.bf16 %v5600, %v5729
      %v5858 = vmax.bf16 %v5601, %v5730
      %v5859 = vmax.bf16 %v5602, %v5731
      %v5860 = vmax.bf16 %v5603, %v5732
      %v5861 = vmax.bf16 %v5604, %v5733
      %v5862 = vmax.bf16 %v5605, %v5734
      %v5863 = vmax.bf16 %v5606, %v5735
      %v5864 = vmax.bf16 %v5607, %v5736
      %v5865 = vmax.bf16 %v5608, %v5737
      %v5866 = vmax.bf16 %v5609, %v5738
      %v5867 = vmax.bf16 %v5610, %v5739
      %v5868 = vmax.bf16 %v5611, %v5740
      %v5869 = vmax.bf16 %v5612, %v5741
      %v5870 = vmax.bf16 %v5613, %v5742
      %v5871 = vmax.bf16 %v5614, %v5743
      %v5872 = vmax.bf16 %v5615, %v5744
      %v5873 = vmax.bf16 %v5616, %v5745
      %v5874 = vmax.bf16 %v5617, %v5746
      %v5875 = vmax.bf16 %v5618, %v5747
      %v5876 = vmax.bf16 %v5619, %v5748
      %v5877 = vmax.bf16 %v5620, %v5749
      %v5878 = vmax.bf16 %v5621, %v5750
      %v5879 = vmax.bf16 %v5622, %v5751
      %v5880 = vmax.bf16 %v5623, %v5752
      %v5881 = vmax.bf16 %v5624, %v5753
      %v5882 = vmax.bf16 %v5625, %v5754
      %v5883 = vmax.bf16 %v5626, %v5755
      %v5884 = vmax.bf16 %v5627, %v5756
      %v5885 = vld [vmem:[%s5628 + $0x10] sm:$0x1]
      %v5886 = vld [vmem:[%s5628 + $0x24] sm:$0x1]
      %v5887 = vld [vmem:[%s5628 + $0x38] sm:$0x1]
      %v5888 = vld [vmem:[%s5628 + $0x4c] sm:$0x1]
      %v5889 = vld [vmem:[%s5628 + $0x60] sm:$0x1]
      %v5890 = vld [vmem:[%s5628 + $0x74] sm:$0x1]
      %v5891 = vld [vmem:[%s5628 + $0x88] sm:$0x1]
      %v5892 = vld [vmem:[%s5628 + $0x9c] sm:$0x1]
      %v5893 = vld [vmem:[%s5628 + $0xb0] sm:$0x1]
      %v5894 = vld [vmem:[%s5628 + $0xc4] sm:$0x1]
      %v5895 = vld [vmem:[%s5628 + $0xd8] sm:$0x1]
      %v5896 = vld [vmem:[%s5628 + $0xec] sm:$0x1]
      %v5897 = vld [vmem:[%s5628 + $0x100] sm:$0x1]
      %v5898 = vld [vmem:[%s5628 + $0x114] sm:$0x1]
      %v5899 = vld [vmem:[%s5628 + $0x128] sm:$0x1]
      %v5900 = vld [vmem:[%s5628 + $0x13c] sm:$0x1]
      %v5901 = vld [vmem:[%s5628 + $0x150] sm:$0x1]
      %v5902 = vld [vmem:[%s5628 + $0x164] sm:$0x1]
      %v5903 = vld [vmem:[%s5628 + $0x178] sm:$0x1]
      %v5904 = vld [vmem:[%s5628 + $0x18c] sm:$0x1]
      %v5905 = vld [vmem:[%s5628 + $0x1a0] sm:$0x1]
      %v5906 = vld [vmem:[%s5628 + $0x1b4] sm:$0x1]
      %v5907 = vld [vmem:[%s5628 + $0x1c8] sm:$0x1]
      %v5908 = vld [vmem:[%s5628 + $0x1dc] sm:$0x1]
      %v5909 = vld [vmem:[%s5628 + $0x1f0] sm:$0x1]
      %v5910 = vld [vmem:[%s5628 + $0x204] sm:$0x1]
      %v5911 = vld [vmem:[%s5628 + $0x218] sm:$0x1]
      %v5912 = vld [vmem:[%s5628 + $0x22c] sm:$0x1]
      %v5913 = vld [vmem:[%s5628 + $0x240] sm:$0x1]
      %v5914 = vld [vmem:[%s5628 + $0x254] sm:$0x1]
      %v5915 = vld [vmem:[%s5628 + $0x268] sm:$0x1]
      %v5916 = vld [vmem:[%s5628 + $0x27c] sm:$0x1]
      %v5918 = vshrl.u32 %v5629, 16
      %v5920 = vrot.slane %v5918, 4
      %v5921 = vshll.u32 %v5629, 16
      %v5923 = vrot.slane %v5921, 5
      %v5924 = vor.u32 %v5920, %v5923
      %v5925 = vrot.slane %v5924, 4
      %v5927 = vshll.u32 %v5630, 16
      %v5929 = vrot.slane %v5927, 5
      %v5930 = vsel %vm279, %v5925, %v5929
      %v5931 = vshrl.u32 %v5630, 16
      %v5933 = vrot.slane %v5931, 4
      %v5934 = vor.u32 %v5933, %v5929
      %v5935 = vrot.slane %v5934, 4
      %v5937 = vshll.u32 %v5631, 16
      %v5939 = vrot.slane %v5937, 5
      %v5940 = vsel %vm279, %v5935, %v5939
      %v5941 = vshrl.u32 %v5631, 16
      %v5943 = vrot.slane %v5941, 4
      %v5944 = vor.u32 %v5943, %v5939
      %v5945 = vrot.slane %v5944, 4
      %v5947 = vshll.u32 %v5632, 16
      %v5949 = vrot.slane %v5947, 5
      %v5950 = vsel %vm279, %v5945, %v5949
      %v5951 = vshrl.u32 %v5632, 16
      %v5953 = vrot.slane %v5951, 4
      %v5954 = vor.u32 %v5953, %v5949
      %v5955 = vrot.slane %v5954, 4
      %v5957 = vshll.u32 %v5885, 16
      %v5959 = vrot.slane %v5957, 5
      %v5960 = vsel %vm279, %v5955, %v5959
      %v5962 = vshrl.u32 %v5633, 16
      %v5964 = vrot.slane %v5962, 4
      %v5965 = vshll.u32 %v5633, 16
      %v5967 = vrot.slane %v5965, 5
      %v5968 = vor.u32 %v5964, %v5967
      %v5969 = vrot.slane %v5968, 4
      %v5971 = vshll.u32 %v5634, 16
      %v5973 = vrot.slane %v5971, 5
      %v5974 = vsel %vm279, %v5969, %v5973
      %v5975 = vshrl.u32 %v5634, 16
      %v5977 = vrot.slane %v5975, 4
      %v5978 = vor.u32 %v5977, %v5973
      %v5979 = vrot.slane %v5978, 4
      %v5981 = vshll.u32 %v5635, 16
      %v5983 = vrot.slane %v5981, 5
      %v5984 = vsel %vm279, %v5979, %v5983
      %v5985 = vshrl.u32 %v5635, 16
      %v5987 = vrot.slane %v5985, 4
      %v5988 = vor.u32 %v5987, %v5983
      %v5989 = vrot.slane %v5988, 4
      %v5991 = vshll.u32 %v5636, 16
      %v5993 = vrot.slane %v5991, 5
      %v5994 = vsel %vm279, %v5989, %v5993
      %v5995 = vshrl.u32 %v5636, 16
      %v5997 = vrot.slane %v5995, 4
      %v5998 = vor.u32 %v5997, %v5993
      %v5999 = vrot.slane %v5998, 4
      %v6001 = vshll.u32 %v5886, 16
      %v6003 = vrot.slane %v6001, 5
      %v6004 = vsel %vm279, %v5999, %v6003
      %v6006 = vshrl.u32 %v5637, 16
      %v6008 = vrot.slane %v6006, 4
      %v6009 = vshll.u32 %v5637, 16
      %v6011 = vrot.slane %v6009, 5
      %v6012 = vor.u32 %v6008, %v6011
      %v6013 = vrot.slane %v6012, 4
      %v6015 = vshll.u32 %v5638, 16
      %v6017 = vrot.slane %v6015, 5
      %v6018 = vsel %vm279, %v6013, %v6017
      %v6019 = vshrl.u32 %v5638, 16
      %v6021 = vrot.slane %v6019, 4
      %v6022 = vor.u32 %v6021, %v6017
      %v6023 = vrot.slane %v6022, 4
      %v6025 = vshll.u32 %v5639, 16
      %v6027 = vrot.slane %v6025, 5
      %v6028 = vsel %vm279, %v6023, %v6027
      %v6029 = vshrl.u32 %v5639, 16
      %v6031 = vrot.slane %v6029, 4
      %v6032 = vor.u32 %v6031, %v6027
      %v6033 = vrot.slane %v6032, 4
      %v6035 = vshll.u32 %v5640, 16
      %v6037 = vrot.slane %v6035, 5
      %v6038 = vsel %vm279, %v6033, %v6037
      %v6039 = vshrl.u32 %v5640, 16
      %v6041 = vrot.slane %v6039, 4
      %v6042 = vor.u32 %v6041, %v6037
      %v6043 = vrot.slane %v6042, 4
      %v6045 = vshll.u32 %v5887, 16
      %v6047 = vrot.slane %v6045, 5
      %v6048 = vsel %vm279, %v6043, %v6047
      %v6050 = vshrl.u32 %v5641, 16
      %v6052 = vrot.slane %v6050, 4
      %v6053 = vshll.u32 %v5641, 16
      %v6055 = vrot.slane %v6053, 5
      %v6056 = vor.u32 %v6052, %v6055
      %v6057 = vrot.slane %v6056, 4
      %v6059 = vshll.u32 %v5642, 16
      %v6061 = vrot.slane %v6059, 5
      %v6062 = vsel %vm279, %v6057, %v6061
      %v6063 = vshrl.u32 %v5642, 16
      %v6065 = vrot.slane %v6063, 4
      %v6066 = vor.u32 %v6065, %v6061
      %v6067 = vrot.slane %v6066, 4
      %v6069 = vshll.u32 %v5643, 16
      %v6071 = vrot.slane %v6069, 5
      %v6072 = vsel %vm279, %v6067, %v6071
      %v6073 = vshrl.u32 %v5643, 16
      %v6075 = vrot.slane %v6073, 4
      %v6076 = vor.u32 %v6075, %v6071
      %v6077 = vrot.slane %v6076, 4
      %v6079 = vshll.u32 %v5644, 16
      %v6081 = vrot.slane %v6079, 5
      %v6082 = vsel %vm279, %v6077, %v6081
      %v6083 = vshrl.u32 %v5644, 16
      %v6085 = vrot.slane %v6083, 4
      %v6086 = vor.u32 %v6085, %v6081
      %v6087 = vrot.slane %v6086, 4
      %v6089 = vshll.u32 %v5888, 16
      %v6091 = vrot.slane %v6089, 5
      %v6092 = vsel %vm279, %v6087, %v6091
      %v6094 = vshrl.u32 %v5645, 16
      %v6096 = vrot.slane %v6094, 4
      %v6097 = vshll.u32 %v5645, 16
      %v6099 = vrot.slane %v6097, 5
      %v6100 = vor.u32 %v6096, %v6099
      %v6101 = vrot.slane %v6100, 4
      %v6103 = vshll.u32 %v5646, 16
      %v6105 = vrot.slane %v6103, 5
      %v6106 = vsel %vm279, %v6101, %v6105
      %v6107 = vshrl.u32 %v5646, 16
      %v6109 = vrot.slane %v6107, 4
      %v6110 = vor.u32 %v6109, %v6105
      %v6111 = vrot.slane %v6110, 4
      %v6113 = vshll.u32 %v5647, 16
      %v6115 = vrot.slane %v6113, 5
      %v6116 = vsel %vm279, %v6111, %v6115
      %v6117 = vshrl.u32 %v5647, 16
      %v6119 = vrot.slane %v6117, 4
      %v6120 = vor.u32 %v6119, %v6115
      %v6121 = vrot.slane %v6120, 4
      %v6123 = vshll.u32 %v5648, 16
      %v6125 = vrot.slane %v6123, 5
      %v6126 = vsel %vm279, %v6121, %v6125
      %v6127 = vshrl.u32 %v5648, 16
      %v6129 = vrot.slane %v6127, 4
      %v6130 = vor.u32 %v6129, %v6125
      %v6131 = vrot.slane %v6130, 4
      %v6133 = vshll.u32 %v5889, 16
      %v6135 = vrot.slane %v6133, 5
      %v6136 = vsel %vm279, %v6131, %v6135
      %v6138 = vshrl.u32 %v5649, 16
      %v6140 = vrot.slane %v6138, 4
      %v6141 = vshll.u32 %v5649, 16
      %v6143 = vrot.slane %v6141, 5
      %v6144 = vor.u32 %v6140, %v6143
      %v6145 = vrot.slane %v6144, 4
      %v6147 = vshll.u32 %v5650, 16
      %v6149 = vrot.slane %v6147, 5
      %v6150 = vsel %vm279, %v6145, %v6149
      %v6151 = vshrl.u32 %v5650, 16
      %v6153 = vrot.slane %v6151, 4
      %v6154 = vor.u32 %v6153, %v6149
      %v6155 = vrot.slane %v6154, 4
      %v6157 = vshll.u32 %v5651, 16
      %v6159 = vrot.slane %v6157, 5
      %v6160 = vsel %vm279, %v6155, %v6159
      %v6161 = vshrl.u32 %v5651, 16
      %v6163 = vrot.slane %v6161, 4
      %v6164 = vor.u32 %v6163, %v6159
      %v6165 = vrot.slane %v6164, 4
      %v6167 = vshll.u32 %v5652, 16
      %v6169 = vrot.slane %v6167, 5
      %v6170 = vsel %vm279, %v6165, %v6169
      %v6171 = vshrl.u32 %v5652, 16
      %v6173 = vrot.slane %v6171, 4
      %v6174 = vor.u32 %v6173, %v6169
      %v6175 = vrot.slane %v6174, 4
      %v6177 = vshll.u32 %v5890, 16
      %v6179 = vrot.slane %v6177, 5
      %v6180 = vsel %vm279, %v6175, %v6179
      %v6182 = vshrl.u32 %v5653, 16
      %v6184 = vrot.slane %v6182, 4
      %v6185 = vshll.u32 %v5653, 16
      %v6187 = vrot.slane %v6185, 5
      %v6188 = vor.u32 %v6184, %v6187
      %v6189 = vrot.slane %v6188, 4
      %v6191 = vshll.u32 %v5654, 16
      %v6193 = vrot.slane %v6191, 5
      %v6194 = vsel %vm279, %v6189, %v6193
      %v6195 = vshrl.u32 %v5654, 16
      %v6197 = vrot.slane %v6195, 4
      %v6198 = vor.u32 %v6197, %v6193
      %v6199 = vrot.slane %v6198, 4
      %v6201 = vshll.u32 %v5655, 16
      %v6203 = vrot.slane %v6201, 5
      %v6204 = vsel %vm279, %v6199, %v6203
      %v6205 = vshrl.u32 %v5655, 16
      %v6207 = vrot.slane %v6205, 4
      %v6208 = vor.u32 %v6207, %v6203
      %v6209 = vrot.slane %v6208, 4
      %v6211 = vshll.u32 %v5656, 16
      %v6213 = vrot.slane %v6211, 5
      %v6214 = vsel %vm279, %v6209, %v6213
      %v6215 = vshrl.u32 %v5656, 16
      %v6217 = vrot.slane %v6215, 4
      %v6218 = vor.u32 %v6217, %v6213
      %v6219 = vrot.slane %v6218, 4
      %v6221 = vshll.u32 %v5891, 16
      %v6223 = vrot.slane %v6221, 5
      %v6224 = vsel %vm279, %v6219, %v6223
      %v6226 = vshrl.u32 %v5657, 16
      %v6228 = vrot.slane %v6226, 4
      %v6229 = vshll.u32 %v5657, 16
      %v6231 = vrot.slane %v6229, 5
      %v6232 = vor.u32 %v6228, %v6231
      %v6233 = vrot.slane %v6232, 4
      %v6235 = vshll.u32 %v5658, 16
      %v6237 = vrot.slane %v6235, 5
      %v6238 = vsel %vm279, %v6233, %v6237
      %v6239 = vshrl.u32 %v5658, 16
      %v6241 = vrot.slane %v6239, 4
      %v6242 = vor.u32 %v6241, %v6237
      %v6243 = vrot.slane %v6242, 4
      %v6245 = vshll.u32 %v5659, 16
      %v6247 = vrot.slane %v6245, 5
      %v6248 = vsel %vm279, %v6243, %v6247
      %v6249 = vshrl.u32 %v5659, 16
      %v6251 = vrot.slane %v6249, 4
      %v6252 = vor.u32 %v6251, %v6247
      %v6253 = vrot.slane %v6252, 4
      %v6255 = vshll.u32 %v5660, 16
      %v6257 = vrot.slane %v6255, 5
      %v6258 = vsel %vm279, %v6253, %v6257
      %v6259 = vshrl.u32 %v5660, 16
      %v6261 = vrot.slane %v6259, 4
      %v6262 = vor.u32 %v6261, %v6257
      %v6263 = vrot.slane %v6262, 4
      %v6265 = vshll.u32 %v5892, 16
      %v6267 = vrot.slane %v6265, 5
      %v6268 = vsel %vm279, %v6263, %v6267
      %v6270 = vshrl.u32 %v5661, 16
      %v6272 = vrot.slane %v6270, 4
      %v6273 = vshll.u32 %v5661, 16
      %v6275 = vrot.slane %v6273, 5
      %v6276 = vor.u32 %v6272, %v6275
      %v6277 = vrot.slane %v6276, 4
      %v6279 = vshll.u32 %v5662, 16
      %v6281 = vrot.slane %v6279, 5
      %v6282 = vsel %vm279, %v6277, %v6281
      %v6283 = vshrl.u32 %v5662, 16
      %v6285 = vrot.slane %v6283, 4
      %v6286 = vor.u32 %v6285, %v6281
      %v6287 = vrot.slane %v6286, 4
      %v6289 = vshll.u32 %v5663, 16
      %v6291 = vrot.slane %v6289, 5
      %v6292 = vsel %vm279, %v6287, %v6291
      %v6293 = vshrl.u32 %v5663, 16
      %v6295 = vrot.slane %v6293, 4
      %v6296 = vor.u32 %v6295, %v6291
      %v6297 = vrot.slane %v6296, 4
      %v6299 = vshll.u32 %v5664, 16
      %v6301 = vrot.slane %v6299, 5
      %v6302 = vsel %vm279, %v6297, %v6301
      %v6303 = vshrl.u32 %v5664, 16
      %v6305 = vrot.slane %v6303, 4
      %v6306 = vor.u32 %v6305, %v6301
      %v6307 = vrot.slane %v6306, 4
      %v6309 = vshll.u32 %v5893, 16
      %v6311 = vrot.slane %v6309, 5
      %v6312 = vsel %vm279, %v6307, %v6311
      %v6314 = vshrl.u32 %v5665, 16
      %v6316 = vrot.slane %v6314, 4
      %v6317 = vshll.u32 %v5665, 16
      %v6319 = vrot.slane %v6317, 5
      %v6320 = vor.u32 %v6316, %v6319
      %v6321 = vrot.slane %v6320, 4
      %v6323 = vshll.u32 %v5666, 16
      %v6325 = vrot.slane %v6323, 5
      %v6326 = vsel %vm279, %v6321, %v6325
      %v6327 = vshrl.u32 %v5666, 16
      %v6329 = vrot.slane %v6327, 4
      %v6330 = vor.u32 %v6329, %v6325
      %v6331 = vrot.slane %v6330, 4
      %v6333 = vshll.u32 %v5667, 16
      %v6335 = vrot.slane %v6333, 5
      %v6336 = vsel %vm279, %v6331, %v6335
      %v6337 = vshrl.u32 %v5667, 16
      %v6339 = vrot.slane %v6337, 4
      %v6340 = vor.u32 %v6339, %v6335
      %v6341 = vrot.slane %v6340, 4
      %v6343 = vshll.u32 %v5668, 16
      %v6345 = vrot.slane %v6343, 5
      %v6346 = vsel %vm279, %v6341, %v6345
      %v6347 = vshrl.u32 %v5668, 16
      %v6349 = vrot.slane %v6347, 4
      %v6350 = vor.u32 %v6349, %v6345
      %v6351 = vrot.slane %v6350, 4
      %v6353 = vshll.u32 %v5894, 16
      %v6355 = vrot.slane %v6353, 5
      %v6356 = vsel %vm279, %v6351, %v6355
      %v6358 = vshrl.u32 %v5669, 16
      %v6360 = vrot.slane %v6358, 4
      %v6361 = vshll.u32 %v5669, 16
      %v6363 = vrot.slane %v6361, 5
      %v6364 = vor.u32 %v6360, %v6363
      %v6365 = vrot.slane %v6364, 4
      %v6367 = vshll.u32 %v5670, 16
      %v6369 = vrot.slane %v6367, 5
      %v6370 = vsel %vm279, %v6365, %v6369
      %v6371 = vshrl.u32 %v5670, 16
      %v6373 = vrot.slane %v6371, 4
      %v6374 = vor.u32 %v6373, %v6369
      %v6375 = vrot.slane %v6374, 4
      %v6377 = vshll.u32 %v5671, 16
      %v6379 = vrot.slane %v6377, 5
      %v6380 = vsel %vm279, %v6375, %v6379
      %v6381 = vshrl.u32 %v5671, 16
      %v6383 = vrot.slane %v6381, 4
      %v6384 = vor.u32 %v6383, %v6379
      %v6385 = vrot.slane %v6384, 4
      %v6387 = vshll.u32 %v5672, 16
      %v6389 = vrot.slane %v6387, 5
      %v6390 = vsel %vm279, %v6385, %v6389
      %v6391 = vshrl.u32 %v5672, 16
      %v6393 = vrot.slane %v6391, 4
      %v6394 = vor.u32 %v6393, %v6389
      %v6395 = vrot.slane %v6394, 4
      %v6397 = vshll.u32 %v5895, 16
      %v6399 = vrot.slane %v6397, 5
      %v6400 = vsel %vm279, %v6395, %v6399
      %v6402 = vshrl.u32 %v5673, 16
      %v6404 = vrot.slane %v6402, 4
      %v6405 = vshll.u32 %v5673, 16
      %v6407 = vrot.slane %v6405, 5
      %v6408 = vor.u32 %v6404, %v6407
      %v6409 = vrot.slane %v6408, 4
      %v6411 = vshll.u32 %v5674, 16
      %v6413 = vrot.slane %v6411, 5
      %v6414 = vsel %vm279, %v6409, %v6413
      %v6415 = vshrl.u32 %v5674, 16
      %v6417 = vrot.slane %v6415, 4
      %v6418 = vor.u32 %v6417, %v6413
      %v6419 = vrot.slane %v6418, 4
      %v6421 = vshll.u32 %v5675, 16
      %v6423 = vrot.slane %v6421, 5
      %v6424 = vsel %vm279, %v6419, %v6423
      %v6425 = vshrl.u32 %v5675, 16
      %v6427 = vrot.slane %v6425, 4
      %v6428 = vor.u32 %v6427, %v6423
      %v6429 = vrot.slane %v6428, 4
      %v6431 = vshll.u32 %v5676, 16
      %v6433 = vrot.slane %v6431, 5
      %v6434 = vsel %vm279, %v6429, %v6433
      %v6435 = vshrl.u32 %v5676, 16
      %v6437 = vrot.slane %v6435, 4
      %v6438 = vor.u32 %v6437, %v6433
      %v6439 = vrot.slane %v6438, 4
      %v6441 = vshll.u32 %v5896, 16
      %v6443 = vrot.slane %v6441, 5
      %v6444 = vsel %vm279, %v6439, %v6443
      %v6446 = vshrl.u32 %v5677, 16
      %v6448 = vrot.slane %v6446, 4
      %v6449 = vshll.u32 %v5677, 16
      %v6451 = vrot.slane %v6449, 5
      %v6452 = vor.u32 %v6448, %v6451
      %v6453 = vrot.slane %v6452, 4
      %v6455 = vshll.u32 %v5678, 16
      %v6457 = vrot.slane %v6455, 5
      %v6458 = vsel %vm279, %v6453, %v6457
      %v6459 = vshrl.u32 %v5678, 16
      %v6461 = vrot.slane %v6459, 4
      %v6462 = vor.u32 %v6461, %v6457
      %v6463 = vrot.slane %v6462, 4
      %v6465 = vshll.u32 %v5679, 16
      %v6467 = vrot.slane %v6465, 5
      %v6468 = vsel %vm279, %v6463, %v6467
      %v6469 = vshrl.u32 %v5679, 16
      %v6471 = vrot.slane %v6469, 4
      %v6472 = vor.u32 %v6471, %v6467
      %v6473 = vrot.slane %v6472, 4
      %v6475 = vshll.u32 %v5680, 16
      %v6477 = vrot.slane %v6475, 5
      %v6478 = vsel %vm279, %v6473, %v6477
      %v6479 = vshrl.u32 %v5680, 16
      %v6481 = vrot.slane %v6479, 4
      %v6482 = vor.u32 %v6481, %v6477
      %v6483 = vrot.slane %v6482, 4
      %v6485 = vshll.u32 %v5897, 16
      %v6487 = vrot.slane %v6485, 5
      %v6488 = vsel %vm279, %v6483, %v6487
      %v6490 = vshrl.u32 %v5681, 16
      %v6492 = vrot.slane %v6490, 4
      %v6493 = vshll.u32 %v5681, 16
      %v6495 = vrot.slane %v6493, 5
      %v6496 = vor.u32 %v6492, %v6495
      %v6497 = vrot.slane %v6496, 4
      %v6499 = vshll.u32 %v5682, 16
      %v6501 = vrot.slane %v6499, 5
      %v6502 = vsel %vm279, %v6497, %v6501
      %v6503 = vshrl.u32 %v5682, 16
      %v6505 = vrot.slane %v6503, 4
      %v6506 = vor.u32 %v6505, %v6501
      %v6507 = vrot.slane %v6506, 4
      %v6509 = vshll.u32 %v5683, 16
      %v6511 = vrot.slane %v6509, 5
      %v6512 = vsel %vm279, %v6507, %v6511
      %v6513 = vshrl.u32 %v5683, 16
      %v6515 = vrot.slane %v6513, 4
      %v6516 = vor.u32 %v6515, %v6511
      %v6517 = vrot.slane %v6516, 4
      %v6519 = vshll.u32 %v5684, 16
      %v6521 = vrot.slane %v6519, 5
      %v6522 = vsel %vm279, %v6517, %v6521
      %v6523 = vshrl.u32 %v5684, 16
      %v6525 = vrot.slane %v6523, 4
      %v6526 = vor.u32 %v6525, %v6521
      %v6527 = vrot.slane %v6526, 4
      %v6529 = vshll.u32 %v5898, 16
      %v6531 = vrot.slane %v6529, 5
      %v6532 = vsel %vm279, %v6527, %v6531
      %v6534 = vshrl.u32 %v5685, 16
      %v6536 = vrot.slane %v6534, 4
      %v6537 = vshll.u32 %v5685, 16
      %v6539 = vrot.slane %v6537, 5
      %v6540 = vor.u32 %v6536, %v6539
      %v6541 = vrot.slane %v6540, 4
      %v6543 = vshll.u32 %v5686, 16
      %v6545 = vrot.slane %v6543, 5
      %v6546 = vsel %vm279, %v6541, %v6545
      %v6547 = vshrl.u32 %v5686, 16
      %v6549 = vrot.slane %v6547, 4
      %v6550 = vor.u32 %v6549, %v6545
      %v6551 = vrot.slane %v6550, 4
      %v6553 = vshll.u32 %v5687, 16
      %v6555 = vrot.slane %v6553, 5
      %v6556 = vsel %vm279, %v6551, %v6555
      %v6557 = vshrl.u32 %v5687, 16
      %v6559 = vrot.slane %v6557, 4
      %v6560 = vor.u32 %v6559, %v6555
      %v6561 = vrot.slane %v6560, 4
      %v6563 = vshll.u32 %v5688, 16
      %v6565 = vrot.slane %v6563, 5
      %v6566 = vsel %vm279, %v6561, %v6565
      %v6567 = vshrl.u32 %v5688, 16
      %v6569 = vrot.slane %v6567, 4
      %v6570 = vor.u32 %v6569, %v6565
      %v6571 = vrot.slane %v6570, 4
      %v6573 = vshll.u32 %v5899, 16
      %v6575 = vrot.slane %v6573, 5
      %v6576 = vsel %vm279, %v6571, %v6575
      %v6578 = vshrl.u32 %v5689, 16
      %v6580 = vrot.slane %v6578, 4
      %v6581 = vshll.u32 %v5689, 16
      %v6583 = vrot.slane %v6581, 5
      %v6584 = vor.u32 %v6580, %v6583
      %v6585 = vrot.slane %v6584, 4
      %v6587 = vshll.u32 %v5690, 16
      %v6589 = vrot.slane %v6587, 5
      %v6590 = vsel %vm279, %v6585, %v6589
      %v6591 = vshrl.u32 %v5690, 16
      %v6593 = vrot.slane %v6591, 4
      %v6594 = vor.u32 %v6593, %v6589
      %v6595 = vrot.slane %v6594, 4
      %v6597 = vshll.u32 %v5691, 16
      %v6599 = vrot.slane %v6597, 5
      %v6600 = vsel %vm279, %v6595, %v6599
      %v6601 = vshrl.u32 %v5691, 16
      %v6603 = vrot.slane %v6601, 4
      %v6604 = vor.u32 %v6603, %v6599
      %v6605 = vrot.slane %v6604, 4
      %v6607 = vshll.u32 %v5692, 16
      %v6609 = vrot.slane %v6607, 5
      %v6610 = vsel %vm279, %v6605, %v6609
      %v6611 = vshrl.u32 %v5692, 16
      %v6613 = vrot.slane %v6611, 4
      %v6614 = vor.u32 %v6613, %v6609
      %v6615 = vrot.slane %v6614, 4
      %v6617 = vshll.u32 %v5900, 16
      %v6619 = vrot.slane %v6617, 5
      %v6620 = vsel %vm279, %v6615, %v6619
      %v6622 = vshrl.u32 %v5693, 16
      %v6624 = vrot.slane %v6622, 4
      %v6625 = vshll.u32 %v5693, 16
      %v6627 = vrot.slane %v6625, 5
      %v6628 = vor.u32 %v6624, %v6627
      %v6629 = vrot.slane %v6628, 4
      %v6631 = vshll.u32 %v5694, 16
      %v6633 = vrot.slane %v6631, 5
      %v6634 = vsel %vm279, %v6629, %v6633
      %v6635 = vshrl.u32 %v5694, 16
      %v6637 = vrot.slane %v6635, 4
      %v6638 = vor.u32 %v6637, %v6633
      %v6639 = vrot.slane %v6638, 4
      %v6641 = vshll.u32 %v5695, 16
      %v6643 = vrot.slane %v6641, 5
      %v6644 = vsel %vm279, %v6639, %v6643
      %v6645 = vshrl.u32 %v5695, 16
      %v6647 = vrot.slane %v6645, 4
      %v6648 = vor.u32 %v6647, %v6643
      %v6649 = vrot.slane %v6648, 4
      %v6651 = vshll.u32 %v5696, 16
      %v6653 = vrot.slane %v6651, 5
      %v6654 = vsel %vm279, %v6649, %v6653
      %v6655 = vshrl.u32 %v5696, 16
      %v6657 = vrot.slane %v6655, 4
      %v6658 = vor.u32 %v6657, %v6653
      %v6659 = vrot.slane %v6658, 4
      %v6661 = vshll.u32 %v5901, 16
      %v6663 = vrot.slane %v6661, 5
      %v6664 = vsel %vm279, %v6659, %v6663
      %v6666 = vshrl.u32 %v5697, 16
      %v6668 = vrot.slane %v6666, 4
      %v6669 = vshll.u32 %v5697, 16
      %v6671 = vrot.slane %v6669, 5
      %v6672 = vor.u32 %v6668, %v6671
      %v6673 = vrot.slane %v6672, 4
      %v6675 = vshll.u32 %v5698, 16
      %v6677 = vrot.slane %v6675, 5
      %v6678 = vsel %vm279, %v6673, %v6677
      %v6679 = vshrl.u32 %v5698, 16
      %v6681 = vrot.slane %v6679, 4
      %v6682 = vor.u32 %v6681, %v6677
      %v6683 = vrot.slane %v6682, 4
      %v6685 = vshll.u32 %v5699, 16
      %v6687 = vrot.slane %v6685, 5
      %v6688 = vsel %vm279, %v6683, %v6687
      %v6689 = vshrl.u32 %v5699, 16
      %v6691 = vrot.slane %v6689, 4
      %v6692 = vor.u32 %v6691, %v6687
      %v6693 = vrot.slane %v6692, 4
      %v6695 = vshll.u32 %v5700, 16
      %v6697 = vrot.slane %v6695, 5
      %v6698 = vsel %vm279, %v6693, %v6697
      %v6699 = vshrl.u32 %v5700, 16
      %v6701 = vrot.slane %v6699, 4
      %v6702 = vor.u32 %v6701, %v6697
      %v6703 = vrot.slane %v6702, 4
      %v6705 = vshll.u32 %v5902, 16
      %v6707 = vrot.slane %v6705, 5
      %v6708 = vsel %vm279, %v6703, %v6707
      %v6710 = vshrl.u32 %v5701, 16
      %v6712 = vrot.slane %v6710, 4
      %v6713 = vshll.u32 %v5701, 16
      %v6715 = vrot.slane %v6713, 5
      %v6716 = vor.u32 %v6712, %v6715
      %v6717 = vrot.slane %v6716, 4
      %v6719 = vshll.u32 %v5702, 16
      %v6721 = vrot.slane %v6719, 5
      %v6722 = vsel %vm279, %v6717, %v6721
      %v6723 = vshrl.u32 %v5702, 16
      %v6725 = vrot.slane %v6723, 4
      %v6726 = vor.u32 %v6725, %v6721
      %v6727 = vrot.slane %v6726, 4
      %v6729 = vshll.u32 %v5703, 16
      %v6731 = vrot.slane %v6729, 5
      %v6732 = vsel %vm279, %v6727, %v6731
      %v6733 = vshrl.u32 %v5703, 16
      %v6735 = vrot.slane %v6733, 4
      %v6736 = vor.u32 %v6735, %v6731
      %v6737 = vrot.slane %v6736, 4
      %v6739 = vshll.u32 %v5704, 16
      %v6741 = vrot.slane %v6739, 5
      %v6742 = vsel %vm279, %v6737, %v6741
      %v6743 = vshrl.u32 %v5704, 16
      %v6745 = vrot.slane %v6743, 4
      %v6746 = vor.u32 %v6745, %v6741
      %v6747 = vrot.slane %v6746, 4
      %v6749 = vshll.u32 %v5903, 16
      %v6751 = vrot.slane %v6749, 5
      %v6752 = vsel %vm279, %v6747, %v6751
      %v6754 = vshrl.u32 %v5705, 16
      %v6756 = vrot.slane %v6754, 4
      %v6757 = vshll.u32 %v5705, 16
      %v6759 = vrot.slane %v6757, 5
      %v6760 = vor.u32 %v6756, %v6759
      %v6761 = vrot.slane %v6760, 4
      %v6763 = vshll.u32 %v5706, 16
      %v6765 = vrot.slane %v6763, 5
      %v6766 = vsel %vm279, %v6761, %v6765
      %v6767 = vshrl.u32 %v5706, 16
      %v6769 = vrot.slane %v6767, 4
      %v6770 = vor.u32 %v6769, %v6765
      %v6771 = vrot.slane %v6770, 4
      %v6773 = vshll.u32 %v5707, 16
      %v6775 = vrot.slane %v6773, 5
      %v6776 = vsel %vm279, %v6771, %v6775
      %v6777 = vshrl.u32 %v5707, 16
      %v6779 = vrot.slane %v6777, 4
      %v6780 = vor.u32 %v6779, %v6775
      %v6781 = vrot.slane %v6780, 4
      %v6783 = vshll.u32 %v5708, 16
      %v6785 = vrot.slane %v6783, 5
      %v6786 = vsel %vm279, %v6781, %v6785
      %v6787 = vshrl.u32 %v5708, 16
      %v6789 = vrot.slane %v6787, 4
      %v6790 = vor.u32 %v6789, %v6785
      %v6791 = vrot.slane %v6790, 4
      %v6793 = vshll.u32 %v5904, 16
      %v6795 = vrot.slane %v6793, 5
      %v6796 = vsel %vm279, %v6791, %v6795
      %v6798 = vshrl.u32 %v5709, 16
      %v6800 = vrot.slane %v6798, 4
      %v6801 = vshll.u32 %v5709, 16
      %v6803 = vrot.slane %v6801, 5
      %v6804 = vor.u32 %v6800, %v6803
      %v6805 = vrot.slane %v6804, 4
      %v6807 = vshll.u32 %v5710, 16
      %v6809 = vrot.slane %v6807, 5
      %v6810 = vsel %vm279, %v6805, %v6809
      %v6811 = vshrl.u32 %v5710, 16
      %v6813 = vrot.slane %v6811, 4
      %v6814 = vor.u32 %v6813, %v6809
      %v6815 = vrot.slane %v6814, 4
      %v6817 = vshll.u32 %v5711, 16
      %v6819 = vrot.slane %v6817, 5
      %v6820 = vsel %vm279, %v6815, %v6819
      %v6821 = vshrl.u32 %v5711, 16
      %v6823 = vrot.slane %v6821, 4
      %v6824 = vor.u32 %v6823, %v6819
      %v6825 = vrot.slane %v6824, 4
      %v6827 = vshll.u32 %v5712, 16
      %v6829 = vrot.slane %v6827, 5
      %v6830 = vsel %vm279, %v6825, %v6829
      %v6831 = vshrl.u32 %v5712, 16
      %v6833 = vrot.slane %v6831, 4
      %v6834 = vor.u32 %v6833, %v6829
      %v6835 = vrot.slane %v6834, 4
      %v6837 = vshll.u32 %v5905, 16
      %v6839 = vrot.slane %v6837, 5
      %v6840 = vsel %vm279, %v6835, %v6839
      %v6842 = vshrl.u32 %v5713, 16
      %v6844 = vrot.slane %v6842, 4
      %v6845 = vshll.u32 %v5713, 16
      %v6847 = vrot.slane %v6845, 5
      %v6848 = vor.u32 %v6844, %v6847
      %v6849 = vrot.slane %v6848, 4
      %v6851 = vshll.u32 %v5714, 16
      %v6853 = vrot.slane %v6851, 5
      %v6854 = vsel %vm279, %v6849, %v6853
      %v6855 = vshrl.u32 %v5714, 16
      %v6857 = vrot.slane %v6855, 4
      %v6858 = vor.u32 %v6857, %v6853
      %v6859 = vrot.slane %v6858, 4
      %v6861 = vshll.u32 %v5715, 16
      %v6863 = vrot.slane %v6861, 5
      %v6864 = vsel %vm279, %v6859, %v6863
      %v6865 = vshrl.u32 %v5715, 16
      %v6867 = vrot.slane %v6865, 4
      %v6868 = vor.u32 %v6867, %v6863
      %v6869 = vrot.slane %v6868, 4
      %v6871 = vshll.u32 %v5716, 16
      %v6873 = vrot.slane %v6871, 5
      %v6874 = vsel %vm279, %v6869, %v6873
      %v6875 = vshrl.u32 %v5716, 16
      %v6877 = vrot.slane %v6875, 4
      %v6878 = vor.u32 %v6877, %v6873
      %v6879 = vrot.slane %v6878, 4
      %v6881 = vshll.u32 %v5906, 16
      %v6883 = vrot.slane %v6881, 5
      %v6884 = vsel %vm279, %v6879, %v6883
      %v6886 = vshrl.u32 %v5717, 16
      %v6888 = vrot.slane %v6886, 4
      %v6889 = vshll.u32 %v5717, 16
      %v6891 = vrot.slane %v6889, 5
      %v6892 = vor.u32 %v6888, %v6891
      %v6893 = vrot.slane %v6892, 4
      %v6895 = vshll.u32 %v5718, 16
      %v6897 = vrot.slane %v6895, 5
      %v6898 = vsel %vm279, %v6893, %v6897
      %v6899 = vshrl.u32 %v5718, 16
      %v6901 = vrot.slane %v6899, 4
      %v6902 = vor.u32 %v6901, %v6897
      %v6903 = vrot.slane %v6902, 4
      %v6905 = vshll.u32 %v5719, 16
      %v6907 = vrot.slane %v6905, 5
      %v6908 = vsel %vm279, %v6903, %v6907
      %v6909 = vshrl.u32 %v5719, 16
      %v6911 = vrot.slane %v6909, 4
      %v6912 = vor.u32 %v6911, %v6907
      %v6913 = vrot.slane %v6912, 4
      %v6915 = vshll.u32 %v5720, 16
      %v6917 = vrot.slane %v6915, 5
      %v6918 = vsel %vm279, %v6913, %v6917
      %v6919 = vshrl.u32 %v5720, 16
      %v6921 = vrot.slane %v6919, 4
      %v6922 = vor.u32 %v6921, %v6917
      %v6923 = vrot.slane %v6922, 4
      %v6925 = vshll.u32 %v5907, 16
      %v6927 = vrot.slane %v6925, 5
      %v6928 = vsel %vm279, %v6923, %v6927
      %v6930 = vshrl.u32 %v5721, 16
      %v6932 = vrot.slane %v6930, 4
      %v6933 = vshll.u32 %v5721, 16
      %v6935 = vrot.slane %v6933, 5
      %v6936 = vor.u32 %v6932, %v6935
      %v6937 = vrot.slane %v6936, 4
      %v6939 = vshll.u32 %v5722, 16
      %v6941 = vrot.slane %v6939, 5
      %v6942 = vsel %vm279, %v6937, %v6941
      %v6943 = vshrl.u32 %v5722, 16
      %v6945 = vrot.slane %v6943, 4
      %v6946 = vor.u32 %v6945, %v6941
      %v6947 = vrot.slane %v6946, 4
      %v6949 = vshll.u32 %v5723, 16
      %v6951 = vrot.slane %v6949, 5
      %v6952 = vsel %vm279, %v6947, %v6951
      %v6953 = vshrl.u32 %v5723, 16
      %v6955 = vrot.slane %v6953, 4
      %v6956 = vor.u32 %v6955, %v6951
      %v6957 = vrot.slane %v6956, 4
      %v6959 = vshll.u32 %v5724, 16
      %v6961 = vrot.slane %v6959, 5
      %v6962 = vsel %vm279, %v6957, %v6961
      %v6963 = vshrl.u32 %v5724, 16
      %v6965 = vrot.slane %v6963, 4
      %v6966 = vor.u32 %v6965, %v6961
      %v6967 = vrot.slane %v6966, 4
      %v6969 = vshll.u32 %v5908, 16
      %v6971 = vrot.slane %v6969, 5
      %v6972 = vsel %vm279, %v6967, %v6971
      %v6974 = vshrl.u32 %v5725, 16
      %v6976 = vrot.slane %v6974, 4
      %v6977 = vshll.u32 %v5725, 16
      %v6979 = vrot.slane %v6977, 5
      %v6980 = vor.u32 %v6976, %v6979
      %v6981 = vrot.slane %v6980, 4
      %v6983 = vshll.u32 %v5726, 16
      %v6985 = vrot.slane %v6983, 5
      %v6986 = vsel %vm279, %v6981, %v6985
      %v6987 = vshrl.u32 %v5726, 16
      %v6989 = vrot.slane %v6987, 4
      %v6990 = vor.u32 %v6989, %v6985
      %v6991 = vrot.slane %v6990, 4
      %v6993 = vshll.u32 %v5727, 16
      %v6995 = vrot.slane %v6993, 5
      %v6996 = vsel %vm279, %v6991, %v6995
      %v6997 = vshrl.u32 %v5727, 16
      %v6999 = vrot.slane %v6997, 4
      %v7000 = vor.u32 %v6999, %v6995
      %v7001 = vrot.slane %v7000, 4
      %v7003 = vshll.u32 %v5728, 16
      %v7005 = vrot.slane %v7003, 5
      %v7006 = vsel %vm279, %v7001, %v7005
      %v7007 = vshrl.u32 %v5728, 16
      %v7009 = vrot.slane %v7007, 4
      %v7010 = vor.u32 %v7009, %v7005
      %v7011 = vrot.slane %v7010, 4
      %v7013 = vshll.u32 %v5909, 16
      %v7015 = vrot.slane %v7013, 5
      %v7016 = vsel %vm279, %v7011, %v7015
      %v7018 = vshrl.u32 %v5729, 16
      %v7020 = vrot.slane %v7018, 4
      %v7021 = vshll.u32 %v5729, 16
      %v7023 = vrot.slane %v7021, 5
      %v7024 = vor.u32 %v7020, %v7023
      %v7025 = vrot.slane %v7024, 4
      %v7027 = vshll.u32 %v5730, 16
      %v7029 = vrot.slane %v7027, 5
      %v7030 = vsel %vm279, %v7025, %v7029
      %v7031 = vshrl.u32 %v5730, 16
      %v7033 = vrot.slane %v7031, 4
      %v7034 = vor.u32 %v7033, %v7029
      %v7035 = vrot.slane %v7034, 4
      %v7037 = vshll.u32 %v5731, 16
      %v7039 = vrot.slane %v7037, 5
      %v7040 = vsel %vm279, %v7035, %v7039
      %v7041 = vshrl.u32 %v5731, 16
      %v7043 = vrot.slane %v7041, 4
      %v7044 = vor.u32 %v7043, %v7039
      %v7045 = vrot.slane %v7044, 4
      %v7047 = vshll.u32 %v5732, 16
      %v7049 = vrot.slane %v7047, 5
      %v7050 = vsel %vm279, %v7045, %v7049
      %v7051 = vshrl.u32 %v5732, 16
      %v7053 = vrot.slane %v7051, 4
      %v7054 = vor.u32 %v7053, %v7049
      %v7055 = vrot.slane %v7054, 4
      %v7057 = vshll.u32 %v5910, 16
      %v7059 = vrot.slane %v7057, 5
      %v7060 = vsel %vm279, %v7055, %v7059
      %v7062 = vshrl.u32 %v5733, 16
      %v7064 = vrot.slane %v7062, 4
      %v7065 = vshll.u32 %v5733, 16
      %v7067 = vrot.slane %v7065, 5
      %v7068 = vor.u32 %v7064, %v7067
      %v7069 = vrot.slane %v7068, 4
      %v7071 = vshll.u32 %v5734, 16
      %v7073 = vrot.slane %v7071, 5
      %v7074 = vsel %vm279, %v7069, %v7073
      %v7075 = vshrl.u32 %v5734, 16
      %v7077 = vrot.slane %v7075, 4
      %v7078 = vor.u32 %v7077, %v7073
      %v7079 = vrot.slane %v7078, 4
      %v7081 = vshll.u32 %v5735, 16
      %v7083 = vrot.slane %v7081, 5
      %v7084 = vsel %vm279, %v7079, %v7083
      %v7085 = vshrl.u32 %v5735, 16
      %v7087 = vrot.slane %v7085, 4
      %v7088 = vor.u32 %v7087, %v7083
      %v7089 = vrot.slane %v7088, 4
      %v7091 = vshll.u32 %v5736, 16
      %v7093 = vrot.slane %v7091, 5
      %v7094 = vsel %vm279, %v7089, %v7093
      %v7095 = vshrl.u32 %v5736, 16
      %v7097 = vrot.slane %v7095, 4
      %v7098 = vor.u32 %v7097, %v7093
      %v7099 = vrot.slane %v7098, 4
      %v7101 = vshll.u32 %v5911, 16
      %v7103 = vrot.slane %v7101, 5
      %v7104 = vsel %vm279, %v7099, %v7103
      %v7106 = vshrl.u32 %v5737, 16
      %v7108 = vrot.slane %v7106, 4
      %v7109 = vshll.u32 %v5737, 16
      %v7111 = vrot.slane %v7109, 5
      %v7112 = vor.u32 %v7108, %v7111
      %v7113 = vrot.slane %v7112, 4
      %v7115 = vshll.u32 %v5738, 16
      %v7117 = vrot.slane %v7115, 5
      %v7118 = vsel %vm279, %v7113, %v7117
      %v7119 = vshrl.u32 %v5738, 16
      %v7121 = vrot.slane %v7119, 4
      %v7122 = vor.u32 %v7121, %v7117
      %v7123 = vrot.slane %v7122, 4
      %v7125 = vshll.u32 %v5739, 16
      %v7127 = vrot.slane %v7125, 5
      %v7128 = vsel %vm279, %v7123, %v7127
      %v7129 = vshrl.u32 %v5739, 16
      %v7131 = vrot.slane %v7129, 4
      %v7132 = vor.u32 %v7131, %v7127
      %v7133 = vrot.slane %v7132, 4
      %v7135 = vshll.u32 %v5740, 16
      %v7137 = vrot.slane %v7135, 5
      %v7138 = vsel %vm279, %v7133, %v7137
      %v7139 = vshrl.u32 %v5740, 16
      %v7141 = vrot.slane %v7139, 4
      %v7142 = vor.u32 %v7141, %v7137
      %v7143 = vrot.slane %v7142, 4
      %v7145 = vshll.u32 %v5912, 16
      %v7147 = vrot.slane %v7145, 5
      %v7148 = vsel %vm279, %v7143, %v7147
      %v7150 = vshrl.u32 %v5741, 16
      %v7152 = vrot.slane %v7150, 4
      %v7153 = vshll.u32 %v5741, 16
      %v7155 = vrot.slane %v7153, 5
      %v7156 = vor.u32 %v7152, %v7155
      %v7157 = vrot.slane %v7156, 4
      %v7159 = vshll.u32 %v5742, 16
      %v7161 = vrot.slane %v7159, 5
      %v7162 = vsel %vm279, %v7157, %v7161
      %v7163 = vshrl.u32 %v5742, 16
      %v7165 = vrot.slane %v7163, 4
      %v7166 = vor.u32 %v7165, %v7161
      %v7167 = vrot.slane %v7166, 4
      %v7169 = vshll.u32 %v5743, 16
      %v7171 = vrot.slane %v7169, 5
      %v7172 = vsel %vm279, %v7167, %v7171
      %v7173 = vshrl.u32 %v5743, 16
      %v7175 = vrot.slane %v7173, 4
      %v7176 = vor.u32 %v7175, %v7171
      %v7177 = vrot.slane %v7176, 4
      %v7179 = vshll.u32 %v5744, 16
      %v7181 = vrot.slane %v7179, 5
      %v7182 = vsel %vm279, %v7177, %v7181
      %v7183 = vshrl.u32 %v5744, 16
      %v7185 = vrot.slane %v7183, 4
      %v7186 = vor.u32 %v7185, %v7181
      %v7187 = vrot.slane %v7186, 4
      %v7189 = vshll.u32 %v5913, 16
      %v7191 = vrot.slane %v7189, 5
      %v7192 = vsel %vm279, %v7187, %v7191
      %v7194 = vshrl.u32 %v5745, 16
      %v7196 = vrot.slane %v7194, 4
      %v7197 = vshll.u32 %v5745, 16
      %v7199 = vrot.slane %v7197, 5
      %v7200 = vor.u32 %v7196, %v7199
      %v7201 = vrot.slane %v7200, 4
      %v7203 = vshll.u32 %v5746, 16
      %v7205 = vrot.slane %v7203, 5
      %v7206 = vsel %vm279, %v7201, %v7205
      %v7207 = vshrl.u32 %v5746, 16
      %v7209 = vrot.slane %v7207, 4
      %v7210 = vor.u32 %v7209, %v7205
      %v7211 = vrot.slane %v7210, 4
      %v7213 = vshll.u32 %v5747, 16
      %v7215 = vrot.slane %v7213, 5
      %v7216 = vsel %vm279, %v7211, %v7215
      %v7217 = vshrl.u32 %v5747, 16
      %v7219 = vrot.slane %v7217, 4
      %v7220 = vor.u32 %v7219, %v7215
      %v7221 = vrot.slane %v7220, 4
      %v7223 = vshll.u32 %v5748, 16
      %v7225 = vrot.slane %v7223, 5
      %v7226 = vsel %vm279, %v7221, %v7225
      %v7227 = vshrl.u32 %v5748, 16
      %v7229 = vrot.slane %v7227, 4
      %v7230 = vor.u32 %v7229, %v7225
      %v7231 = vrot.slane %v7230, 4
      %v7233 = vshll.u32 %v5914, 16
      %v7235 = vrot.slane %v7233, 5
      %v7236 = vsel %vm279, %v7231, %v7235
      %v7238 = vshrl.u32 %v5749, 16
      %v7240 = vrot.slane %v7238, 4
      %v7241 = vshll.u32 %v5749, 16
      %v7243 = vrot.slane %v7241, 5
      %v7244 = vor.u32 %v7240, %v7243
      %v7245 = vrot.slane %v7244, 4
      %v7247 = vshll.u32 %v5750, 16
      %v7249 = vrot.slane %v7247, 5
      %v7250 = vsel %vm279, %v7245, %v7249
      %v7251 = vshrl.u32 %v5750, 16
      %v7253 = vrot.slane %v7251, 4
      %v7254 = vor.u32 %v7253, %v7249
      %v7255 = vrot.slane %v7254, 4
      %v7257 = vshll.u32 %v5751, 16
      %v7259 = vrot.slane %v7257, 5
      %v7260 = vsel %vm279, %v7255, %v7259
      %v7261 = vshrl.u32 %v5751, 16
      %v7263 = vrot.slane %v7261, 4
      %v7264 = vor.u32 %v7263, %v7259
      %v7265 = vrot.slane %v7264, 4
      %v7267 = vshll.u32 %v5752, 16
      %v7269 = vrot.slane %v7267, 5
      %v7270 = vsel %vm279, %v7265, %v7269
      %v7271 = vshrl.u32 %v5752, 16
      %v7273 = vrot.slane %v7271, 4
      %v7274 = vor.u32 %v7273, %v7269
      %v7275 = vrot.slane %v7274, 4
      %v7277 = vshll.u32 %v5915, 16
      %v7279 = vrot.slane %v7277, 5
      %v7280 = vsel %vm279, %v7275, %v7279
      %v7282 = vshrl.u32 %v5753, 16
      %v7284 = vrot.slane %v7282, 4
      %v7285 = vshll.u32 %v5753, 16
      %v7287 = vrot.slane %v7285, 5
      %v7288 = vor.u32 %v7284, %v7287
      %v7289 = vrot.slane %v7288, 4
      %v7291 = vshll.u32 %v5754, 16
      %v7293 = vrot.slane %v7291, 5
      %v7294 = vsel %vm279, %v7289, %v7293
      %v7295 = vshrl.u32 %v5754, 16
      %v7297 = vrot.slane %v7295, 4
      %v7298 = vor.u32 %v7297, %v7293
      %v7299 = vrot.slane %v7298, 4
      %v7301 = vshll.u32 %v5755, 16
      %v7303 = vrot.slane %v7301, 5
      %v7304 = vsel %vm279, %v7299, %v7303
      %v7305 = vshrl.u32 %v5755, 16
      %v7307 = vrot.slane %v7305, 4
      %v7308 = vor.u32 %v7307, %v7303
      %v7309 = vrot.slane %v7308, 4
      %v7311 = vshll.u32 %v5756, 16
      %v7313 = vrot.slane %v7311, 5
      %v7314 = vsel %vm279, %v7309, %v7313
      %v7315 = vshrl.u32 %v5756, 16
      %v7317 = vrot.slane %v7315, 4
      %v7318 = vor.u32 %v7317, %v7313
      %v7319 = vrot.slane %v7318, 4
      %v7321 = vshll.u32 %v5916, 16
      %v7323 = vrot.slane %v7321, 5
      %v7324 = vsel %vm279, %v7319, %v7323
      %v7453 = vmax.bf16 %v5757, %v5930
      %v7454 = vmax.bf16 %v5758, %v5940
      %v7455 = vmax.bf16 %v5759, %v5950
      %v7456 = vmax.bf16 %v5760, %v5960
      %v7457 = vmax.bf16 %v5761, %v5974
      %v7458 = vmax.bf16 %v5762, %v5984
      %v7459 = vmax.bf16 %v5763, %v5994
      %v7460 = vmax.bf16 %v5764, %v6004
      %v7461 = vmax.bf16 %v5765, %v6018
      %v7462 = vmax.bf16 %v5766, %v6028
      %v7463 = vmax.bf16 %v5767, %v6038
      %v7464 = vmax.bf16 %v5768, %v6048
      %v7465 = vmax.bf16 %v5769, %v6062
      %v7466 = vmax.bf16 %v5770, %v6072
      %v7467 = vmax.bf16 %v5771, %v6082
      %v7468 = vmax.bf16 %v5772, %v6092
      %v7469 = vmax.bf16 %v5773, %v6106
      %v7470 = vmax.bf16 %v5774, %v6116
      %v7471 = vmax.bf16 %v5775, %v6126
      %v7472 = vmax.bf16 %v5776, %v6136
      %v7473 = vmax.bf16 %v5777, %v6150
      %v7474 = vmax.bf16 %v5778, %v6160
      %v7475 = vmax.bf16 %v5779, %v6170
      %v7476 = vmax.bf16 %v5780, %v6180
      %v7477 = vmax.bf16 %v5781, %v6194
      %v7478 = vmax.bf16 %v5782, %v6204
      %v7479 = vmax.bf16 %v5783, %v6214
      %v7480 = vmax.bf16 %v5784, %v6224
      %v7481 = vmax.bf16 %v5785, %v6238
      %v7482 = vmax.bf16 %v5786, %v6248
      %v7483 = vmax.bf16 %v5787, %v6258
      %v7484 = vmax.bf16 %v5788, %v6268
      %v7485 = vmax.bf16 %v5789, %v6282
      %v7486 = vmax.bf16 %v5790, %v6292
      %v7487 = vmax.bf16 %v5791, %v6302
      %v7488 = vmax.bf16 %v5792, %v6312
      %v7489 = vmax.bf16 %v5793, %v6326
      %v7490 = vmax.bf16 %v5794, %v6336
      %v7491 = vmax.bf16 %v5795, %v6346
      %v7492 = vmax.bf16 %v5796, %v6356
      %v7493 = vmax.bf16 %v5797, %v6370
      %v7494 = vmax.bf16 %v5798, %v6380
      %v7495 = vmax.bf16 %v5799, %v6390
      %v7496 = vmax.bf16 %v5800, %v6400
      %v7497 = vmax.bf16 %v5801, %v6414
      %v7498 = vmax.bf16 %v5802, %v6424
      %v7499 = vmax.bf16 %v5803, %v6434
      %v7500 = vmax.bf16 %v5804, %v6444
      %v7501 = vmax.bf16 %v5805, %v6458
      %v7502 = vmax.bf16 %v5806, %v6468
      %v7503 = vmax.bf16 %v5807, %v6478
      %v7504 = vmax.bf16 %v5808, %v6488
      %v7505 = vmax.bf16 %v5809, %v6502
      %v7506 = vmax.bf16 %v5810, %v6512
      %v7507 = vmax.bf16 %v5811, %v6522
      %v7508 = vmax.bf16 %v5812, %v6532
      %v7509 = vmax.bf16 %v5813, %v6546
      %v7510 = vmax.bf16 %v5814, %v6556
      %v7511 = vmax.bf16 %v5815, %v6566
      %v7512 = vmax.bf16 %v5816, %v6576
      %v7513 = vmax.bf16 %v5817, %v6590
      %v7514 = vmax.bf16 %v5818, %v6600
      %v7515 = vmax.bf16 %v5819, %v6610
      %v7516 = vmax.bf16 %v5820, %v6620
      %v7517 = vmax.bf16 %v5821, %v6634
      %v7518 = vmax.bf16 %v5822, %v6644
      %v7519 = vmax.bf16 %v5823, %v6654
      %v7520 = vmax.bf16 %v5824, %v6664
      %v7521 = vmax.bf16 %v5825, %v6678
      %v7522 = vmax.bf16 %v5826, %v6688
      %v7523 = vmax.bf16 %v5827, %v6698
      %v7524 = vmax.bf16 %v5828, %v6708
      %v7525 = vmax.bf16 %v5829, %v6722
      %v7526 = vmax.bf16 %v5830, %v6732
      %v7527 = vmax.bf16 %v5831, %v6742
      %v7528 = vmax.bf16 %v5832, %v6752
      %v7529 = vmax.bf16 %v5833, %v6766
      %v7530 = vmax.bf16 %v5834, %v6776
      %v7531 = vmax.bf16 %v5835, %v6786
      %v7532 = vmax.bf16 %v5836, %v6796
      %v7533 = vmax.bf16 %v5837, %v6810
      %v7534 = vmax.bf16 %v5838, %v6820
      %v7535 = vmax.bf16 %v5839, %v6830
      %v7536 = vmax.bf16 %v5840, %v6840
      %v7537 = vmax.bf16 %v5841, %v6854
      %v7538 = vmax.bf16 %v5842, %v6864
      %v7539 = vmax.bf16 %v5843, %v6874
      %v7540 = vmax.bf16 %v5844, %v6884
      %v7541 = vmax.bf16 %v5845, %v6898
      %v7542 = vmax.bf16 %v5846, %v6908
      %v7543 = vmax.bf16 %v5847, %v6918
      %v7544 = vmax.bf16 %v5848, %v6928
      %v7545 = vmax.bf16 %v5849, %v6942
      %v7546 = vmax.bf16 %v5850, %v6952
      %v7547 = vmax.bf16 %v5851, %v6962
      %v7548 = vmax.bf16 %v5852, %v6972
      %v7549 = vmax.bf16 %v5853, %v6986
      %v7550 = vmax.bf16 %v5854, %v6996
      %v7551 = vmax.bf16 %v5855, %v7006
      %v7552 = vmax.bf16 %v5856, %v7016
      %v7553 = vmax.bf16 %v5857, %v7030
      %v7554 = vmax.bf16 %v5858, %v7040
      %v7555 = vmax.bf16 %v5859, %v7050
      %v7556 = vmax.bf16 %v5860, %v7060
      %v7557 = vmax.bf16 %v5861, %v7074
      %v7558 = vmax.bf16 %v5862, %v7084
      %v7559 = vmax.bf16 %v5863, %v7094
      %v7560 = vmax.bf16 %v5864, %v7104
      %v7561 = vmax.bf16 %v5865, %v7118
      %v7562 = vmax.bf16 %v5866, %v7128
      %v7563 = vmax.bf16 %v5867, %v7138
      %v7564 = vmax.bf16 %v5868, %v7148
      %v7565 = vmax.bf16 %v5869, %v7162
      %v7566 = vmax.bf16 %v5870, %v7172
      %v7567 = vmax.bf16 %v5871, %v7182
      %v7568 = vmax.bf16 %v5872, %v7192
      %v7569 = vmax.bf16 %v5873, %v7206
      %v7570 = vmax.bf16 %v5874, %v7216
      %v7571 = vmax.bf16 %v5875, %v7226
      %v7572 = vmax.bf16 %v5876, %v7236
      %v7573 = vmax.bf16 %v5877, %v7250
      %v7574 = vmax.bf16 %v5878, %v7260
      %v7575 = vmax.bf16 %v5879, %v7270
      %v7576 = vmax.bf16 %v5880, %v7280
      %v7577 = vmax.bf16 %v5881, %v7294
      %v7578 = vmax.bf16 %v5882, %v7304
      %v7579 = vmax.bf16 %v5883, %v7314
      %v7580 = vmax.bf16 %v5884, %v7324
      %v7581 = vld [vmem:[%s5628] sm:$0xe]
      %v7582 = vld [vmem:[%s5628 + $0x14] sm:$0xe]
      %v7583 = vld [vmem:[%s5628 + $0x28] sm:$0xe]
      %v7584 = vld [vmem:[%s5628 + $0x3c] sm:$0xe]
      %v7585 = vld [vmem:[%s5628 + $0x50] sm:$0xe]
      %v7586 = vld [vmem:[%s5628 + $0x64] sm:$0xe]
      %v7587 = vld [vmem:[%s5628 + $0x78] sm:$0xe]
      %v7588 = vld [vmem:[%s5628 + $0x8c] sm:$0xe]
      %v7589 = vld [vmem:[%s5628 + $0xa0] sm:$0xe]
      %v7590 = vld [vmem:[%s5628 + $0xb4] sm:$0xe]
      %v7591 = vld [vmem:[%s5628 + $0xc8] sm:$0xe]
      %v7592 = vld [vmem:[%s5628 + $0xdc] sm:$0xe]
      %v7593 = vld [vmem:[%s5628 + $0xf0] sm:$0xe]
      %v7594 = vld [vmem:[%s5628 + $0x104] sm:$0xe]
      %v7595 = vld [vmem:[%s5628 + $0x118] sm:$0xe]
      %v7596 = vld [vmem:[%s5628 + $0x12c] sm:$0xe]
      %v7597 = vld [vmem:[%s5628 + $0x140] sm:$0xe]
      %v7598 = vld [vmem:[%s5628 + $0x154] sm:$0xe]
      %v7599 = vld [vmem:[%s5628 + $0x168] sm:$0xe]
      %v7600 = vld [vmem:[%s5628 + $0x17c] sm:$0xe]
      %v7601 = vld [vmem:[%s5628 + $0x190] sm:$0xe]
      %v7602 = vld [vmem:[%s5628 + $0x1a4] sm:$0xe]
      %v7603 = vld [vmem:[%s5628 + $0x1b8] sm:$0xe]
      %v7604 = vld [vmem:[%s5628 + $0x1cc] sm:$0xe]
      %v7605 = vld [vmem:[%s5628 + $0x1e0] sm:$0xe]
      %v7606 = vld [vmem:[%s5628 + $0x1f4] sm:$0xe]
      %v7607 = vld [vmem:[%s5628 + $0x208] sm:$0xe]
      %v7608 = vld [vmem:[%s5628 + $0x21c] sm:$0xe]
      %v7609 = vld [vmem:[%s5628 + $0x230] sm:$0xe]
      %v7610 = vld [vmem:[%s5628 + $0x244] sm:$0xe]
      %v7611 = vld [vmem:[%s5628 + $0x258] sm:$0xe]
      %v7612 = vld [vmem:[%s5628 + $0x26c] sm:$0xe]
      %v7773 = vrot.slane %v7581, 5
      %v7774 = vrot.slane %v7773, 4
      %v7775 = vrot.slane %v5630, 5
      %v7776 = vsel %vm2138, %v7774, %v7775
      %v7777 = vrot.slane %v7775, 4
      %v7778 = vrot.slane %v5631, 5
      %v7779 = vsel %vm2138, %v7777, %v7778
      %v7780 = vrot.slane %v7778, 4
      %v7781 = vrot.slane %v5632, 5
      %v7782 = vsel %vm2138, %v7780, %v7781
      %v7783 = vrot.slane %v7781, 4
      %v7784 = vrot.slane %v5885, 5
      %v7785 = vsel %vm2138, %v7783, %v7784
      %v7786 = vrot.slane %v7582, 5
      %v7787 = vrot.slane %v7786, 4
      %v7788 = vrot.slane %v5634, 5
      %v7789 = vsel %vm2138, %v7787, %v7788
      %v7790 = vrot.slane %v7788, 4
      %v7791 = vrot.slane %v5635, 5
      %v7792 = vsel %vm2138, %v7790, %v7791
      %v7793 = vrot.slane %v7791, 4
      %v7794 = vrot.slane %v5636, 5
      %v7795 = vsel %vm2138, %v7793, %v7794
      %v7796 = vrot.slane %v7794, 4
      %v7797 = vrot.slane %v5886, 5
      %v7798 = vsel %vm2138, %v7796, %v7797
      %v7799 = vrot.slane %v7583, 5
      %v7800 = vrot.slane %v7799, 4
      %v7801 = vrot.slane %v5638, 5
      %v7802 = vsel %vm2138, %v7800, %v7801
      %v7803 = vrot.slane %v7801, 4
      %v7804 = vrot.slane %v5639, 5
      %v7805 = vsel %vm2138, %v7803, %v7804
      %v7806 = vrot.slane %v7804, 4
      %v7807 = vrot.slane %v5640, 5
      %v7808 = vsel %vm2138, %v7806, %v7807
      %v7809 = vrot.slane %v7807, 4
      %v7810 = vrot.slane %v5887, 5
      %v7811 = vsel %vm2138, %v7809, %v7810
      %v7812 = vrot.slane %v7584, 5
      %v7813 = vrot.slane %v7812, 4
      %v7814 = vrot.slane %v5642, 5
      %v7815 = vsel %vm2138, %v7813, %v7814
      %v7816 = vrot.slane %v7814, 4
      %v7817 = vrot.slane %v5643, 5
      %v7818 = vsel %vm2138, %v7816, %v7817
      %v7819 = vrot.slane %v7817, 4
      %v7820 = vrot.slane %v5644, 5
      %v7821 = vsel %vm2138, %v7819, %v7820
      %v7822 = vrot.slane %v7820, 4
      %v7823 = vrot.slane %v5888, 5
      %v7824 = vsel %vm2138, %v7822, %v7823
      %v7825 = vrot.slane %v7585, 5
      %v7826 = vrot.slane %v7825, 4
      %v7827 = vrot.slane %v5646, 5
      %v7828 = vsel %vm2138, %v7826, %v7827
      %v7829 = vrot.slane %v7827, 4
      %v7830 = vrot.slane %v5647, 5
      %v7831 = vsel %vm2138, %v7829, %v7830
      %v7832 = vrot.slane %v7830, 4
      %v7833 = vrot.slane %v5648, 5
      %v7834 = vsel %vm2138, %v7832, %v7833
      %v7835 = vrot.slane %v7833, 4
      %v7836 = vrot.slane %v5889, 5
      %v7837 = vsel %vm2138, %v7835, %v7836
      %v7838 = vrot.slane %v7586, 5
      %v7839 = vrot.slane %v7838, 4
      %v7840 = vrot.slane %v5650, 5
      %v7841 = vsel %vm2138, %v7839, %v7840
      %v7842 = vrot.slane %v7840, 4
      %v7843 = vrot.slane %v5651, 5
      %v7844 = vsel %vm2138, %v7842, %v7843
      %v7845 = vrot.slane %v7843, 4
      %v7846 = vrot.slane %v5652, 5
      %v7847 = vsel %vm2138, %v7845, %v7846
      %v7848 = vrot.slane %v7846, 4
      %v7849 = vrot.slane %v5890, 5
      %v7850 = vsel %vm2138, %v7848, %v7849
      %v7851 = vrot.slane %v7587, 5
      %v7852 = vrot.slane %v7851, 4
      %v7853 = vrot.slane %v5654, 5
      %v7854 = vsel %vm2138, %v7852, %v7853
      %v7855 = vrot.slane %v7853, 4
      %v7856 = vrot.slane %v5655, 5
      %v7857 = vsel %vm2138, %v7855, %v7856
      %v7858 = vrot.slane %v7856, 4
      %v7859 = vrot.slane %v5656, 5
      %v7860 = vsel %vm2138, %v7858, %v7859
      %v7861 = vrot.slane %v7859, 4
      %v7862 = vrot.slane %v5891, 5
      %v7863 = vsel %vm2138, %v7861, %v7862
      %v7864 = vrot.slane %v7588, 5
      %v7865 = vrot.slane %v7864, 4
      %v7866 = vrot.slane %v5658, 5
      %v7867 = vsel %vm2138, %v7865, %v7866
      %v7868 = vrot.slane %v7866, 4
      %v7869 = vrot.slane %v5659, 5
      %v7870 = vsel %vm2138, %v7868, %v7869
      %v7871 = vrot.slane %v7869, 4
      %v7872 = vrot.slane %v5660, 5
      %v7873 = vsel %vm2138, %v7871, %v7872
      %v7874 = vrot.slane %v7872, 4
      %v7875 = vrot.slane %v5892, 5
      %v7876 = vsel %vm2138, %v7874, %v7875
      %v7877 = vrot.slane %v7589, 5
      %v7878 = vrot.slane %v7877, 4
      %v7879 = vrot.slane %v5662, 5
      %v7880 = vsel %vm2138, %v7878, %v7879
      %v7881 = vrot.slane %v7879, 4
      %v7882 = vrot.slane %v5663, 5
      %v7883 = vsel %vm2138, %v7881, %v7882
      %v7884 = vrot.slane %v7882, 4
      %v7885 = vrot.slane %v5664, 5
      %v7886 = vsel %vm2138, %v7884, %v7885
      %v7887 = vrot.slane %v7885, 4
      %v7888 = vrot.slane %v5893, 5
      %v7889 = vsel %vm2138, %v7887, %v7888
      %v7890 = vrot.slane %v7590, 5
      %v7891 = vrot.slane %v7890, 4
      %v7892 = vrot.slane %v5666, 5
      %v7893 = vsel %vm2138, %v7891, %v7892
      %v7894 = vrot.slane %v7892, 4
      %v7895 = vrot.slane %v5667, 5
      %v7896 = vsel %vm2138, %v7894, %v7895
      %v7897 = vrot.slane %v7895, 4
      %v7898 = vrot.slane %v5668, 5
      %v7899 = vsel %vm2138, %v7897, %v7898
      %v7900 = vrot.slane %v7898, 4
      %v7901 = vrot.slane %v5894, 5
      %v7902 = vsel %vm2138, %v7900, %v7901
      %v7903 = vrot.slane %v7591, 5
      %v7904 = vrot.slane %v7903, 4
      %v7905 = vrot.slane %v5670, 5
      %v7906 = vsel %vm2138, %v7904, %v7905
      %v7907 = vrot.slane %v7905, 4
      %v7908 = vrot.slane %v5671, 5
      %v7909 = vsel %vm2138, %v7907, %v7908
      %v7910 = vrot.slane %v7908, 4
      %v7911 = vrot.slane %v5672, 5
      %v7912 = vsel %vm2138, %v7910, %v7911
      %v7913 = vrot.slane %v7911, 4
      %v7914 = vrot.slane %v5895, 5
      %v7915 = vsel %vm2138, %v7913, %v7914
      %v7916 = vrot.slane %v7592, 5
      %v7917 = vrot.slane %v7916, 4
      %v7918 = vrot.slane %v5674, 5
      %v7919 = vsel %vm2138, %v7917, %v7918
      %v7920 = vrot.slane %v7918, 4
      %v7921 = vrot.slane %v5675, 5
      %v7922 = vsel %vm2138, %v7920, %v7921
      %v7923 = vrot.slane %v7921, 4
      %v7924 = vrot.slane %v5676, 5
      %v7925 = vsel %vm2138, %v7923, %v7924
      %v7926 = vrot.slane %v7924, 4
      %v7927 = vrot.slane %v5896, 5
      %v7928 = vsel %vm2138, %v7926, %v7927
      %v7929 = vrot.slane %v7593, 5
      %v7930 = vrot.slane %v7929, 4
      %v7931 = vrot.slane %v5678, 5
      %v7932 = vsel %vm2138, %v7930, %v7931
      %v7933 = vrot.slane %v7931, 4
      %v7934 = vrot.slane %v5679, 5
      %v7935 = vsel %vm2138, %v7933, %v7934
      %v7936 = vrot.slane %v7934, 4
      %v7937 = vrot.slane %v5680, 5
      %v7938 = vsel %vm2138, %v7936, %v7937
      %v7939 = vrot.slane %v7937, 4
      %v7940 = vrot.slane %v5897, 5
      %v7941 = vsel %vm2138, %v7939, %v7940
      %v7942 = vrot.slane %v7594, 5
      %v7943 = vrot.slane %v7942, 4
      %v7944 = vrot.slane %v5682, 5
      %v7945 = vsel %vm2138, %v7943, %v7944
      %v7946 = vrot.slane %v7944, 4
      %v7947 = vrot.slane %v5683, 5
      %v7948 = vsel %vm2138, %v7946, %v7947
      %v7949 = vrot.slane %v7947, 4
      %v7950 = vrot.slane %v5684, 5
      %v7951 = vsel %vm2138, %v7949, %v7950
      %v7952 = vrot.slane %v7950, 4
      %v7953 = vrot.slane %v5898, 5
      %v7954 = vsel %vm2138, %v7952, %v7953
      %v7955 = vrot.slane %v7595, 5
      %v7956 = vrot.slane %v7955, 4
      %v7957 = vrot.slane %v5686, 5
      %v7958 = vsel %vm2138, %v7956, %v7957
      %v7959 = vrot.slane %v7957, 4
      %v7960 = vrot.slane %v5687, 5
      %v7961 = vsel %vm2138, %v7959, %v7960
      %v7962 = vrot.slane %v7960, 4
      %v7963 = vrot.slane %v5688, 5
      %v7964 = vsel %vm2138, %v7962, %v7963
      %v7965 = vrot.slane %v7963, 4
      %v7966 = vrot.slane %v5899, 5
      %v7967 = vsel %vm2138, %v7965, %v7966
      %v7968 = vrot.slane %v7596, 5
      %v7969 = vrot.slane %v7968, 4
      %v7970 = vrot.slane %v5690, 5
      %v7971 = vsel %vm2138, %v7969, %v7970
      %v7972 = vrot.slane %v7970, 4
      %v7973 = vrot.slane %v5691, 5
      %v7974 = vsel %vm2138, %v7972, %v7973
      %v7975 = vrot.slane %v7973, 4
      %v7976 = vrot.slane %v5692, 5
      %v7977 = vsel %vm2138, %v7975, %v7976
      %v7978 = vrot.slane %v7976, 4
      %v7979 = vrot.slane %v5900, 5
      %v7980 = vsel %vm2138, %v7978, %v7979
      %v7981 = vrot.slane %v7597, 5
      %v7982 = vrot.slane %v7981, 4
      %v7983 = vrot.slane %v5694, 5
      %v7984 = vsel %vm2138, %v7982, %v7983
      %v7985 = vrot.slane %v7983, 4
      %v7986 = vrot.slane %v5695, 5
      %v7987 = vsel %vm2138, %v7985, %v7986
      %v7988 = vrot.slane %v7986, 4
      %v7989 = vrot.slane %v5696, 5
      %v7990 = vsel %vm2138, %v7988, %v7989
      %v7991 = vrot.slane %v7989, 4
      %v7992 = vrot.slane %v5901, 5
      %v7993 = vsel %vm2138, %v7991, %v7992
      %v7994 = vrot.slane %v7598, 5
      %v7995 = vrot.slane %v7994, 4
      %v7996 = vrot.slane %v5698, 5
      %v7997 = vsel %vm2138, %v7995, %v7996
      %v7998 = vrot.slane %v7996, 4
      %v7999 = vrot.slane %v5699, 5
      %v8000 = vsel %vm2138, %v7998, %v7999
      %v8001 = vrot.slane %v7999, 4
      %v8002 = vrot.slane %v5700, 5
      %v8003 = vsel %vm2138, %v8001, %v8002
      %v8004 = vrot.slane %v8002, 4
      %v8005 = vrot.slane %v5902, 5
      %v8006 = vsel %vm2138, %v8004, %v8005
      %v8007 = vrot.slane %v7599, 5
      %v8008 = vrot.slane %v8007, 4
      %v8009 = vrot.slane %v5702, 5
      %v8010 = vsel %vm2138, %v8008, %v8009
      %v8011 = vrot.slane %v8009, 4
      %v8012 = vrot.slane %v5703, 5
      %v8013 = vsel %vm2138, %v8011, %v8012
      %v8014 = vrot.slane %v8012, 4
      %v8015 = vrot.slane %v5704, 5
      %v8016 = vsel %vm2138, %v8014, %v8015
      %v8017 = vrot.slane %v8015, 4
      %v8018 = vrot.slane %v5903, 5
      %v8019 = vsel %vm2138, %v8017, %v8018
      %v8020 = vrot.slane %v7600, 5
      %v8021 = vrot.slane %v8020, 4
      %v8022 = vrot.slane %v5706, 5
      %v8023 = vsel %vm2138, %v8021, %v8022
      %v8024 = vrot.slane %v8022, 4
      %v8025 = vrot.slane %v5707, 5
      %v8026 = vsel %vm2138, %v8024, %v8025
      %v8027 = vrot.slane %v8025, 4
      %v8028 = vrot.slane %v5708, 5
      %v8029 = vsel %vm2138, %v8027, %v8028
      %v8030 = vrot.slane %v8028, 4
      %v8031 = vrot.slane %v5904, 5
      %v8032 = vsel %vm2138, %v8030, %v8031
      %v8033 = vrot.slane %v7601, 5
      %v8034 = vrot.slane %v8033, 4
      %v8035 = vrot.slane %v5710, 5
      %v8036 = vsel %vm2138, %v8034, %v8035
      %v8037 = vrot.slane %v8035, 4
      %v8038 = vrot.slane %v5711, 5
      %v8039 = vsel %vm2138, %v8037, %v8038
      %v8040 = vrot.slane %v8038, 4
      %v8041 = vrot.slane %v5712, 5
      %v8042 = vsel %vm2138, %v8040, %v8041
      %v8043 = vrot.slane %v8041, 4
      %v8044 = vrot.slane %v5905, 5
      %v8045 = vsel %vm2138, %v8043, %v8044
      %v8046 = vrot.slane %v7602, 5
      %v8047 = vrot.slane %v8046, 4
      %v8048 = vrot.slane %v5714, 5
      %v8049 = vsel %vm2138, %v8047, %v8048
      %v8050 = vrot.slane %v8048, 4
      %v8051 = vrot.slane %v5715, 5
      %v8052 = vsel %vm2138, %v8050, %v8051
      %v8053 = vrot.slane %v8051, 4
      %v8054 = vrot.slane %v5716, 5
      %v8055 = vsel %vm2138, %v8053, %v8054
      %v8056 = vrot.slane %v8054, 4
      %v8057 = vrot.slane %v5906, 5
      %v8058 = vsel %vm2138, %v8056, %v8057
      %v8059 = vrot.slane %v7603, 5
      %v8060 = vrot.slane %v8059, 4
      %v8061 = vrot.slane %v5718, 5
      %v8062 = vsel %vm2138, %v8060, %v8061
      %v8063 = vrot.slane %v8061, 4
      %v8064 = vrot.slane %v5719, 5
      %v8065 = vsel %vm2138, %v8063, %v8064
      %v8066 = vrot.slane %v8064, 4
      %v8067 = vrot.slane %v5720, 5
      %v8068 = vsel %vm2138, %v8066, %v8067
      %v8069 = vrot.slane %v8067, 4
      %v8070 = vrot.slane %v5907, 5
      %v8071 = vsel %vm2138, %v8069, %v8070
      %v8072 = vrot.slane %v7604, 5
      %v8073 = vrot.slane %v8072, 4
      %v8074 = vrot.slane %v5722, 5
      %v8075 = vsel %vm2138, %v8073, %v8074
      %v8076 = vrot.slane %v8074, 4
      %v8077 = vrot.slane %v5723, 5
      %v8078 = vsel %vm2138, %v8076, %v8077
      %v8079 = vrot.slane %v8077, 4
      %v8080 = vrot.slane %v5724, 5
      %v8081 = vsel %vm2138, %v8079, %v8080
      %v8082 = vrot.slane %v8080, 4
      %v8083 = vrot.slane %v5908, 5
      %v8084 = vsel %vm2138, %v8082, %v8083
      %v8085 = vrot.slane %v7605, 5
      %v8086 = vrot.slane %v8085, 4
      %v8087 = vrot.slane %v5726, 5
      %v8088 = vsel %vm2138, %v8086, %v8087
      %v8089 = vrot.slane %v8087, 4
      %v8090 = vrot.slane %v5727, 5
      %v8091 = vsel %vm2138, %v8089, %v8090
      %v8092 = vrot.slane %v8090, 4
      %v8093 = vrot.slane %v5728, 5
      %v8094 = vsel %vm2138, %v8092, %v8093
      %v8095 = vrot.slane %v8093, 4
      %v8096 = vrot.slane %v5909, 5
      %v8097 = vsel %vm2138, %v8095, %v8096
      %v8098 = vrot.slane %v7606, 5
      %v8099 = vrot.slane %v8098, 4
      %v8100 = vrot.slane %v5730, 5
      %v8101 = vsel %vm2138, %v8099, %v8100
      %v8102 = vrot.slane %v8100, 4
      %v8103 = vrot.slane %v5731, 5
      %v8104 = vsel %vm2138, %v8102, %v8103
      %v8105 = vrot.slane %v8103, 4
      %v8106 = vrot.slane %v5732, 5
      %v8107 = vsel %vm2138, %v8105, %v8106
      %v8108 = vrot.slane %v8106, 4
      %v8109 = vrot.slane %v5910, 5
      %v8110 = vsel %vm2138, %v8108, %v8109
      %v8111 = vrot.slane %v7607, 5
      %v8112 = vrot.slane %v8111, 4
      %v8113 = vrot.slane %v5734, 5
      %v8114 = vsel %vm2138, %v8112, %v8113
      %v8115 = vrot.slane %v8113, 4
      %v8116 = vrot.slane %v5735, 5
      %v8117 = vsel %vm2138, %v8115, %v8116
      %v8118 = vrot.slane %v8116, 4
      %v8119 = vrot.slane %v5736, 5
      %v8120 = vsel %vm2138, %v8118, %v8119
      %v8121 = vrot.slane %v8119, 4
      %v8122 = vrot.slane %v5911, 5
      %v8123 = vsel %vm2138, %v8121, %v8122
      %v8124 = vrot.slane %v7608, 5
      %v8125 = vrot.slane %v8124, 4
      %v8126 = vrot.slane %v5738, 5
      %v8127 = vsel %vm2138, %v8125, %v8126
      %v8128 = vrot.slane %v8126, 4
      %v8129 = vrot.slane %v5739, 5
      %v8130 = vsel %vm2138, %v8128, %v8129
      %v8131 = vrot.slane %v8129, 4
      %v8132 = vrot.slane %v5740, 5
      %v8133 = vsel %vm2138, %v8131, %v8132
      %v8134 = vrot.slane %v8132, 4
      %v8135 = vrot.slane %v5912, 5
      %v8136 = vsel %vm2138, %v8134, %v8135
      %v8137 = vrot.slane %v7609, 5
      %v8138 = vrot.slane %v8137, 4
      %v8139 = vrot.slane %v5742, 5
      %v8140 = vsel %vm2138, %v8138, %v8139
      %v8141 = vrot.slane %v8139, 4
      %v8142 = vrot.slane %v5743, 5
      %v8143 = vsel %vm2138, %v8141, %v8142
      %v8144 = vrot.slane %v8142, 4
      %v8145 = vrot.slane %v5744, 5
      %v8146 = vsel %vm2138, %v8144, %v8145
      %v8147 = vrot.slane %v8145, 4
      %v8148 = vrot.slane %v5913, 5
      %v8149 = vsel %vm2138, %v8147, %v8148
      %v8150 = vrot.slane %v7610, 5
      %v8151 = vrot.slane %v8150, 4
      %v8152 = vrot.slane %v5746, 5
      %v8153 = vsel %vm2138, %v8151, %v8152
      %v8154 = vrot.slane %v8152, 4
      %v8155 = vrot.slane %v5747, 5
      %v8156 = vsel %vm2138, %v8154, %v8155
      %v8157 = vrot.slane %v8155, 4
      %v8158 = vrot.slane %v5748, 5
      %v8159 = vsel %vm2138, %v8157, %v8158
      %v8160 = vrot.slane %v8158, 4
      %v8161 = vrot.slane %v5914, 5
      %v8162 = vsel %vm2138, %v8160, %v8161
      %v8163 = vrot.slane %v7611, 5
      %v8164 = vrot.slane %v8163, 4
      %v8165 = vrot.slane %v5750, 5
      %v8166 = vsel %vm2138, %v8164, %v8165
      %v8167 = vrot.slane %v8165, 4
      %v8168 = vrot.slane %v5751, 5
      %v8169 = vsel %vm2138, %v8167, %v8168
      %v8170 = vrot.slane %v8168, 4
      %v8171 = vrot.slane %v5752, 5
      %v8172 = vsel %vm2138, %v8170, %v8171
      %v8173 = vrot.slane %v8171, 4
      %v8174 = vrot.slane %v5915, 5
      %v8175 = vsel %vm2138, %v8173, %v8174
      %v8176 = vrot.slane %v7612, 5
      %v8177 = vrot.slane %v8176, 4
      %v8178 = vrot.slane %v5754, 5
      %v8179 = vsel %vm2138, %v8177, %v8178
      %v8180 = vrot.slane %v8178, 4
      %v8181 = vrot.slane %v5755, 5
      %v8182 = vsel %vm2138, %v8180, %v8181
      %v8183 = vrot.slane %v8181, 4
      %v8184 = vrot.slane %v5756, 5
      %v8185 = vsel %vm2138, %v8183, %v8184
      %v8186 = vrot.slane %v8184, 4
      %v8187 = vrot.slane %v5916, 5
      %v8188 = vsel %vm2138, %v8186, %v8187
      %v8317 = vmax.bf16 %v7453, %v7776
      %v8318 = vmax.bf16 %v7454, %v7779
      %v8319 = vmax.bf16 %v7455, %v7782
      %v8320 = vmax.bf16 %v7456, %v7785
      %v8321 = vmax.bf16 %v7457, %v7789
      %v8322 = vmax.bf16 %v7458, %v7792
      %v8323 = vmax.bf16 %v7459, %v7795
      %v8324 = vmax.bf16 %v7460, %v7798
      %v8325 = vmax.bf16 %v7461, %v7802
      %v8326 = vmax.bf16 %v7462, %v7805
      %v8327 = vmax.bf16 %v7463, %v7808
      %v8328 = vmax.bf16 %v7464, %v7811
      %v8329 = vmax.bf16 %v7465, %v7815
      %v8330 = vmax.bf16 %v7466, %v7818
      %v8331 = vmax.bf16 %v7467, %v7821
      %v8332 = vmax.bf16 %v7468, %v7824
      %v8333 = vmax.bf16 %v7469, %v7828
      %v8334 = vmax.bf16 %v7470, %v7831
      %v8335 = vmax.bf16 %v7471, %v7834
      %v8336 = vmax.bf16 %v7472, %v7837
      %v8337 = vmax.bf16 %v7473, %v7841
      %v8338 = vmax.bf16 %v7474, %v7844
      %v8339 = vmax.bf16 %v7475, %v7847
      %v8340 = vmax.bf16 %v7476, %v7850
      %v8341 = vmax.bf16 %v7477, %v7854
      %v8342 = vmax.bf16 %v7478, %v7857
      %v8343 = vmax.bf16 %v7479, %v7860
      %v8344 = vmax.bf16 %v7480, %v7863
      %v8345 = vmax.bf16 %v7481, %v7867
      %v8346 = vmax.bf16 %v7482, %v7870
      %v8347 = vmax.bf16 %v7483, %v7873
      %v8348 = vmax.bf16 %v7484, %v7876
      %v8349 = vmax.bf16 %v7485, %v7880
      %v8350 = vmax.bf16 %v7486, %v7883
      %v8351 = vmax.bf16 %v7487, %v7886
      %v8352 = vmax.bf16 %v7488, %v7889
      %v8353 = vmax.bf16 %v7489, %v7893
      %v8354 = vmax.bf16 %v7490, %v7896
      %v8355 = vmax.bf16 %v7491, %v7899
      %v8356 = vmax.bf16 %v7492, %v7902
      %v8357 = vmax.bf16 %v7493, %v7906
      %v8358 = vmax.bf16 %v7494, %v7909
      %v8359 = vmax.bf16 %v7495, %v7912
      %v8360 = vmax.bf16 %v7496, %v7915
      %v8361 = vmax.bf16 %v7497, %v7919
      %v8362 = vmax.bf16 %v7498, %v7922
      %v8363 = vmax.bf16 %v7499, %v7925
      %v8364 = vmax.bf16 %v7500, %v7928
      %v8365 = vmax.bf16 %v7501, %v7932
      %v8366 = vmax.bf16 %v7502, %v7935
      %v8367 = vmax.bf16 %v7503, %v7938
      %v8368 = vmax.bf16 %v7504, %v7941
      %v8369 = vmax.bf16 %v7505, %v7945
      %v8370 = vmax.bf16 %v7506, %v7948
      %v8371 = vmax.bf16 %v7507, %v7951
      %v8372 = vmax.bf16 %v7508, %v7954
      %v8373 = vmax.bf16 %v7509, %v7958
      %v8374 = vmax.bf16 %v7510, %v7961
      %v8375 = vmax.bf16 %v7511, %v7964
      %v8376 = vmax.bf16 %v7512, %v7967
      %v8377 = vmax.bf16 %v7513, %v7971
      %v8378 = vmax.bf16 %v7514, %v7974
      %v8379 = vmax.bf16 %v7515, %v7977
      %v8380 = vmax.bf16 %v7516, %v7980
      %v8381 = vmax.bf16 %v7517, %v7984
      %v8382 = vmax.bf16 %v7518, %v7987
      %v8383 = vmax.bf16 %v7519, %v7990
      %v8384 = vmax.bf16 %v7520, %v7993
      %v8385 = vmax.bf16 %v7521, %v7997
      %v8386 = vmax.bf16 %v7522, %v8000
      %v8387 = vmax.bf16 %v7523, %v8003
      %v8388 = vmax.bf16 %v7524, %v8006
      %v8389 = vmax.bf16 %v7525, %v8010
      %v8390 = vmax.bf16 %v7526, %v8013
      %v8391 = vmax.bf16 %v7527, %v8016
      %v8392 = vmax.bf16 %v7528, %v8019
      %v8393 = vmax.bf16 %v7529, %v8023
      %v8394 = vmax.bf16 %v7530, %v8026
      %v8395 = vmax.bf16 %v7531, %v8029
      %v8396 = vmax.bf16 %v7532, %v8032
      %v8397 = vmax.bf16 %v7533, %v8036
      %v8398 = vmax.bf16 %v7534, %v8039
      %v8399 = vmax.bf16 %v7535, %v8042
      %v8400 = vmax.bf16 %v7536, %v8045
      %v8401 = vmax.bf16 %v7537, %v8049
      %v8402 = vmax.bf16 %v7538, %v8052
      %v8403 = vmax.bf16 %v7539, %v8055
      %v8404 = vmax.bf16 %v7540, %v8058
      %v8405 = vmax.bf16 %v7541, %v8062
      %v8406 = vmax.bf16 %v7542, %v8065
      %v8407 = vmax.bf16 %v7543, %v8068
      %v8408 = vmax.bf16 %v7544, %v8071
      %v8409 = vmax.bf16 %v7545, %v8075
      %v8410 = vmax.bf16 %v7546, %v8078
      %v8411 = vmax.bf16 %v7547, %v8081
      %v8412 = vmax.bf16 %v7548, %v8084
      %v8413 = vmax.bf16 %v7549, %v8088
      %v8414 = vmax.bf16 %v7550, %v8091
      %v8415 = vmax.bf16 %v7551, %v8094
      %v8416 = vmax.bf16 %v7552, %v8097
      %v8417 = vmax.bf16 %v7553, %v8101
      %v8418 = vmax.bf16 %v7554, %v8104
      %v8419 = vmax.bf16 %v7555, %v8107
      %v8420 = vmax.bf16 %v7556, %v8110
      %v8421 = vmax.bf16 %v7557, %v8114
      %v8422 = vmax.bf16 %v7558, %v8117
      %v8423 = vmax.bf16 %v7559, %v8120
      %v8424 = vmax.bf16 %v7560, %v8123
      %v8425 = vmax.bf16 %v7561, %v8127
      %v8426 = vmax.bf16 %v7562, %v8130
      %v8427 = vmax.bf16 %v7563, %v8133
      %v8428 = vmax.bf16 %v7564, %v8136
      %v8429 = vmax.bf16 %v7565, %v8140
      %v8430 = vmax.bf16 %v7566, %v8143
      %v8431 = vmax.bf16 %v7567, %v8146
      %v8432 = vmax.bf16 %v7568, %v8149
      %v8433 = vmax.bf16 %v7569, %v8153
      %v8434 = vmax.bf16 %v7570, %v8156
      %v8435 = vmax.bf16 %v7571, %v8159
      %v8436 = vmax.bf16 %v7572, %v8162
      %v8437 = vmax.bf16 %v7573, %v8166
      %v8438 = vmax.bf16 %v7574, %v8169
      %v8439 = vmax.bf16 %v7575, %v8172
      %v8440 = vmax.bf16 %v7576, %v8175
      %v8441 = vmax.bf16 %v7577, %v8179
      %v8442 = vmax.bf16 %v7578, %v8182
      %v8443 = vmax.bf16 %v7579, %v8185
      %v8444 = vmax.bf16 %v7580, %v8188
      %8445 = vst [vmem:[%s116] sm:$0xf] %v8317
      %8446 = vst [vmem:[%s116 + $0x4] sm:$0xf] %v8318
      %8447 = vst [vmem:[%s116 + $0x8] sm:$0xf] %v8319
      %8448 = vst [vmem:[%s116 + $0xc] sm:$0xf] %v8320
      %8449 = vst [vmem:[%s116 + $0x10] sm:$0xf] %v8321
      %8450 = vst [vmem:[%s116 + $0x14] sm:$0xf] %v8322
      %8451 = vst [vmem:[%s116 + $0x18] sm:$0xf] %v8323
      %8452 = vst [vmem:[%s116 + $0x1c] sm:$0xf] %v8324
      %8453 = vst [vmem:[%s116 + $0x20] sm:$0xf] %v8325
      %8454 = vst [vmem:[%s116 + $0x24] sm:$0xf] %v8326
      %8455 = vst [vmem:[%s116 + $0x28] sm:$0xf] %v8327
      %8456 = vst [vmem:[%s116 + $0x2c] sm:$0xf] %v8328
      %8457 = vst [vmem:[%s116 + $0x30] sm:$0xf] %v8329
      %8458 = vst [vmem:[%s116 + $0x34] sm:$0xf] %v8330
      %8459 = vst [vmem:[%s116 + $0x38] sm:$0xf] %v8331
      %8460 = vst [vmem:[%s116 + $0x3c] sm:$0xf] %v8332
      %8461 = vst [vmem:[%s116 + $0x40] sm:$0xf] %v8333
      %8462 = vst [vmem:[%s116 + $0x44] sm:$0xf] %v8334
      %8463 = vst [vmem:[%s116 + $0x48] sm:$0xf] %v8335
      %8464 = vst [vmem:[%s116 + $0x4c] sm:$0xf] %v8336
      %8465 = vst [vmem:[%s116 + $0x50] sm:$0xf] %v8337
      %8466 = vst [vmem:[%s116 + $0x54] sm:$0xf] %v8338
      %8467 = vst [vmem:[%s116 + $0x58] sm:$0xf] %v8339
      %8468 = vst [vmem:[%s116 + $0x5c] sm:$0xf] %v8340
      %8469 = vst [vmem:[%s116 + $0x60] sm:$0xf] %v8341
      %8470 = vst [vmem:[%s116 + $0x64] sm:$0xf] %v8342
      %8471 = vst [vmem:[%s116 + $0x68] sm:$0xf] %v8343
      %8472 = vst [vmem:[%s116 + $0x6c] sm:$0xf] %v8344
      %8473 = vst [vmem:[%s116 + $0x70] sm:$0xf] %v8345
      %8474 = vst [vmem:[%s116 + $0x74] sm:$0xf] %v8346
      %8475 = vst [vmem:[%s116 + $0x78] sm:$0xf] %v8347
      %8476 = vst [vmem:[%s116 + $0x7c] sm:$0xf] %v8348
      %8477 = vst [vmem:[%s116 + $0x80] sm:$0xf] %v8349
      %8478 = vst [vmem:[%s116 + $0x84] sm:$0xf] %v8350
      %8479 = vst [vmem:[%s116 + $0x88] sm:$0xf] %v8351
      %8480 = vst [vmem:[%s116 + $0x8c] sm:$0xf] %v8352
      %8481 = vst [vmem:[%s116 + $0x90] sm:$0xf] %v8353
      %8482 = vst [vmem:[%s116 + $0x94] sm:$0xf] %v8354
      %8483 = vst [vmem:[%s116 + $0x98] sm:$0xf] %v8355
      %8484 = vst [vmem:[%s116 + $0x9c] sm:$0xf] %v8356
      %8485 = vst [vmem:[%s116 + $0xa0] sm:$0xf] %v8357
      %8486 = vst [vmem:[%s116 + $0xa4] sm:$0xf] %v8358
      %8487 = vst [vmem:[%s116 + $0xa8] sm:$0xf] %v8359
      %8488 = vst [vmem:[%s116 + $0xac] sm:$0xf] %v8360
      %8489 = vst [vmem:[%s116 + $0xb0] sm:$0xf] %v8361
      %8490 = vst [vmem:[%s116 + $0xb4] sm:$0xf] %v8362
      %8491 = vst [vmem:[%s116 + $0xb8] sm:$0xf] %v8363
      %8492 = vst [vmem:[%s116 + $0xbc] sm:$0xf] %v8364
      %8493 = vst [vmem:[%s116 + $0xc0] sm:$0xf] %v8365
      %8494 = vst [vmem:[%s116 + $0xc4] sm:$0xf] %v8366
      %8495 = vst [vmem:[%s116 + $0xc8] sm:$0xf] %v8367
      %8496 = vst [vmem:[%s116 + $0xcc] sm:$0xf] %v8368
      %8497 = vst [vmem:[%s116 + $0xd0] sm:$0xf] %v8369
      %8498 = vst [vmem:[%s116 + $0xd4] sm:$0xf] %v8370
      %8499 = vst [vmem:[%s116 + $0xd8] sm:$0xf] %v8371
      %8500 = vst [vmem:[%s116 + $0xdc] sm:$0xf] %v8372
      %8501 = vst [vmem:[%s116 + $0xe0] sm:$0xf] %v8373
      %8502 = vst [vmem:[%s116 + $0xe4] sm:$0xf] %v8374
      %8503 = vst [vmem:[%s116 + $0xe8] sm:$0xf] %v8375
      %8504 = vst [vmem:[%s116 + $0xec] sm:$0xf] %v8376
      %8505 = vst [vmem:[%s116 + $0xf0] sm:$0xf] %v8377
      %8506 = vst [vmem:[%s116 + $0xf4] sm:$0xf] %v8378
      %8507 = vst [vmem:[%s116 + $0xf8] sm:$0xf] %v8379
      %8508 = vst [vmem:[%s116 + $0xfc] sm:$0xf] %v8380
      %8509 = vst [vmem:[%s116 + $0x100] sm:$0xf] %v8381
      %8510 = vst [vmem:[%s116 + $0x104] sm:$0xf] %v8382
      %8511 = vst [vmem:[%s116 + $0x108] sm:$0xf] %v8383
      %8512 = vst [vmem:[%s116 + $0x10c] sm:$0xf] %v8384
      %8513 = vst [vmem:[%s116 + $0x110] sm:$0xf] %v8385
      %8514 = vst [vmem:[%s116 + $0x114] sm:$0xf] %v8386
      %8515 = vst [vmem:[%s116 + $0x118] sm:$0xf] %v8387
      %8516 = vst [vmem:[%s116 + $0x11c] sm:$0xf] %v8388
      %8517 = vst [vmem:[%s116 + $0x120] sm:$0xf] %v8389
      %8518 = vst [vmem:[%s116 + $0x124] sm:$0xf] %v8390
      %8519 = vst [vmem:[%s116 + $0x128] sm:$0xf] %v8391
      %8520 = vst [vmem:[%s116 + $0x12c] sm:$0xf] %v8392
      %8521 = vst [vmem:[%s116 + $0x130] sm:$0xf] %v8393
      %8522 = vst [vmem:[%s116 + $0x134] sm:$0xf] %v8394
      %8523 = vst [vmem:[%s116 + $0x138] sm:$0xf] %v8395
      %8524 = vst [vmem:[%s116 + $0x13c] sm:$0xf] %v8396
      %8525 = vst [vmem:[%s116 + $0x140] sm:$0xf] %v8397
      %8526 = vst [vmem:[%s116 + $0x144] sm:$0xf] %v8398
      %8527 = vst [vmem:[%s116 + $0x148] sm:$0xf] %v8399
      %8528 = vst [vmem:[%s116 + $0x14c] sm:$0xf] %v8400
      %8529 = vst [vmem:[%s116 + $0x150] sm:$0xf] %v8401
      %8530 = vst [vmem:[%s116 + $0x154] sm:$0xf] %v8402
      %8531 = vst [vmem:[%s116 + $0x158] sm:$0xf] %v8403
      %8532 = vst [vmem:[%s116 + $0x15c] sm:$0xf] %v8404
      %8533 = vst [vmem:[%s116 + $0x160] sm:$0xf] %v8405
      %8534 = vst [vmem:[%s116 + $0x164] sm:$0xf] %v8406
      %8535 = vst [vmem:[%s116 + $0x168] sm:$0xf] %v8407
      %8536 = vst [vmem:[%s116 + $0x16c] sm:$0xf] %v8408
      %8537 = vst [vmem:[%s116 + $0x170] sm:$0xf] %v8409
      %8538 = vst [vmem:[%s116 + $0x174] sm:$0xf] %v8410
      %8539 = vst [vmem:[%s116 + $0x178] sm:$0xf] %v8411
      %8540 = vst [vmem:[%s116 + $0x17c] sm:$0xf] %v8412
      %8541 = vst [vmem:[%s116 + $0x180] sm:$0xf] %v8413
      %8542 = vst [vmem:[%s116 + $0x184] sm:$0xf] %v8414
      %8543 = vst [vmem:[%s116 + $0x188] sm:$0xf] %v8415
      %8544 = vst [vmem:[%s116 + $0x18c] sm:$0xf] %v8416
      %8545 = vst [vmem:[%s116 + $0x190] sm:$0xf] %v8417
      %8546 = vst [vmem:[%s116 + $0x194] sm:$0xf] %v8418
      %8547 = vst [vmem:[%s116 + $0x198] sm:$0xf] %v8419
      %8548 = vst [vmem:[%s116 + $0x19c] sm:$0xf] %v8420
      %8549 = vst [vmem:[%s116 + $0x1a0] sm:$0xf] %v8421
      %8550 = vst [vmem:[%s116 + $0x1a4] sm:$0xf] %v8422
      %8551 = vst [vmem:[%s116 + $0x1a8] sm:$0xf] %v8423
      %8552 = vst [vmem:[%s116 + $0x1ac] sm:$0xf] %v8424
      %8553 = vst [vmem:[%s116 + $0x1b0] sm:$0xf] %v8425
      %8554 = vst [vmem:[%s116 + $0x1b4] sm:$0xf] %v8426
      %8555 = vst [vmem:[%s116 + $0x1b8] sm:$0xf] %v8427
      %8556 = vst [vmem:[%s116 + $0x1bc] sm:$0xf] %v8428
      %8557 = vst [vmem:[%s116 + $0x1c0] sm:$0xf] %v8429
      %8558 = vst [vmem:[%s116 + $0x1c4] sm:$0xf] %v8430
      %8559 = vst [vmem:[%s116 + $0x1c8] sm:$0xf] %v8431
      %8560 = vst [vmem:[%s116 + $0x1cc] sm:$0xf] %v8432
      %8561 = vst [vmem:[%s116 + $0x1d0] sm:$0xf] %v8433
      %8562 = vst [vmem:[%s116 + $0x1d4] sm:$0xf] %v8434
      %8563 = vst [vmem:[%s116 + $0x1d8] sm:$0xf] %v8435
      %8564 = vst [vmem:[%s116 + $0x1dc] sm:$0xf] %v8436
      %8565 = vst [vmem:[%s116 + $0x1e0] sm:$0xf] %v8437
      %8566 = vst [vmem:[%s116 + $0x1e4] sm:$0xf] %v8438
      %8567 = vst [vmem:[%s116 + $0x1e8] sm:$0xf] %v8439
      %8568 = vst [vmem:[%s116 + $0x1ec] sm:$0xf] %v8440
      %8569 = vst [vmem:[%s116 + $0x1f0] sm:$0xf] %v8441
      %8570 = vst [vmem:[%s116 + $0x1f4] sm:$0xf] %v8442
      %8571 = vst [vmem:[%s116 + $0x1f8] sm:$0xf] %v8443
      %8572 = vst [vmem:[%s116 + $0x1fc] sm:$0xf] %v8444
      %p8573 = scmp.lt.s32.totalorder %s12, 1
      %s8574 = scalar_select %p8573, %s12, 1
      %s8575 = smul.addr %s8574, 128
      %s8576 = smul.addr %s8575, 4
      %s8577 = scalar_lea.vmem %s1, %s8576
      // Predicated region
      $region25: #{stem_forward.3} parent=23 // pred_check
        %p8578 = pneg %p56
      $region26: #{stem_forward.3} parent=23 // pred_check_branch
        %8580 = sbr.rel (%p8578) target = $region28
      $region27: #{stem_forward.3} parent=23 // pred_region
        _
      $region28: #{stem_forward.3} parent=23 // pred_fallthru
        _
    $region24: #{stem_forward.3} parent=5 // pred_fallthru
      _
    %p8581 = scmp.le.s32.totalorder 2, %s7
    // Predicated region
    $region29: #{stem_forward.3} parent=5 // pred_check
      %p8582 = pneg %p8581
    $region30: #{stem_forward.3} parent=5 // pred_check_branch
      %8584 = sbr.rel (%p8582) target = $region32
    $region31: #{stem_forward.3} parent=5 // pred_region
      %s8585 = ssub.s32 %s7, 2
      // Predicated region
      $region33: #{stem_forward.3} parent=31 // pred_check
        %p8586 = pneg %p62
      $region34: #{stem_forward.3} parent=31 // pred_check_branch
        %8588 = sbr.rel (%p8586) target = $region36
      $region35: #{stem_forward.3} parent=31 // pred_region
        %p8589 = scmp.lt.s32.totalorder %s13, 1
        %s8590 = scalar_select %p8589, %s13, 1
        %s8591 = smul.addr %s8590, 128
        %s8592 = smul.addr %s8591, 4
        %s8593 = scalar_lea.vmem %s1, %s8592
      $region36: #{stem_forward.3} parent=31 // pred_fallthru
        _
    $region32: #{stem_forward.3} parent=5 // pred_fallthru
      _
  $region6: #{stem_forward.3} parent=0 // loop_footer
    %s11 = sadd.s32 1, %s7
  $region7: #{stem_forward.3} parent=0 // loop_footer_branch
    %6 = sbr.rel target = $region3
  $region8: #{stem_forward.3} parent=0 // loop_exit
    _

// kernel: stem_forward.2
$region0: #{stem_forward.2}
  #allocation0 [shape = 'u32[]', space=smem, size = 0x4, offset = 0x4, fixed_abs, tag = 'smem constant byte address 0x4 - core index']
  #allocation1 [shape = 'u32[144,128]{1,0:T(1,128)}', space=vmem, size = 0x12000, scoped, tag = 'internal scratch']
  %s0 = inlined_call_operand.vmem [shape: bf16[2048,147], index: 0, kind: input, shape index: {}]
  %s1 = inlined_call_operand.vmem [shape: bf16[147,128], index: 1, kind: input, shape index: {}]
  %s2 = inlined_call_operand.vmem [shape: f32[1,128], index: 2, kind: input, shape index: {}]
  %s3 = inlined_call_operand.vmem [shape: f32[1,128], index: 3, kind: input, shape index: {}]
  %s4 = inlined_call_operand.vmem [shape: bf16[2048,128], index: 4, kind: output, shape index: {}]
  %s5 = sld [smem:[#allocation0]]
  $region49: #{stem_forward.2} parent=0
    _
  %s7 = ssub.s32 1, %s5
  %s8 = scalar_select 0, %s7, %s5
  loop: start=0, step=1, limit=6
  $region2: #{stem_forward.2} parent=0 // loop_pre_header
    _
  $region3: #{stem_forward.2} parent=0 // loop_header
    %s10 = sphi 0, %s14
    %p11 = scmp.ge.s32.totalorder %s10, 6
    %s17 = sphi 0, %s29
    %s18 = sphi 0, %s25
    %s19 = sphi 0, %s17
    %s20 = sphi 0, %s18
    %s21 = sphi 0, %s19
    %s22 = sphi 0, %s20
    %s32 = sphi 0, %s34
    %s35 = sphi 0, %s32
    %s36 = sphi 0, %s35
    %s52 = sphi 0, %s36
    %s58 = sphi 0, %s60
    %s61 = sphi 0, %s58
    %s62 = sphi 0, %s61
    %s78 = sphi 0, %s62
    %s84 = sphi 0, %s86
    %s87 = sphi 0, %s84
    %s88 = sphi 0, %s87
    %s104 = sphi 0, %s88
    %s110 = sphi 0, %s112
    %s113 = sphi 0, %s110
    %s114 = sphi 0, %s113
    %s130 = sphi 0, %s114
    %s138 = sphi 0, %s140
    %s141 = sphi 0, %s138
    %s142 = sphi 0, %s141
    %s158 = sphi 0, %s142
  $region4: #{stem_forward.2} parent=0 // loop_header_branch
    %13 = sbr.rel (%p11) target = $region8
  $region5: #{stem_forward.2} parent=0 // loop_body
    %s15 = ssub.s32 %s10, 1
    %s16 = ssub.s32 %s10, 2
    %s23 = sadd.s32 1, %s18
    %p24 = scmp.ge.s32.totalorder %s23, 4
    %s25 = scalar_select %p24, 0, %s23
    %s26 = sadd.s32 1, %s17
    %s27 = scalar_select %p24, %s26, %s17
    %p28 = scmp.ge.s32.totalorder %s27, 1
    %s29 = scalar_select %p28, 0, %s27
    %s30 = ssub.s32 %s18, %s25
    %p31 = scmp.eq.s32.totalorder %s30, 0
    %s33 = sadd.s32 %s32, 1
    %s34 = scalar_select %p31, %s32, %s33
    %p37 = pneg %p31
    %p38 = scmp.eq.s32.totalorder %s10, 3
    %p39 = por %p37, %p38
    %p40 = scmp.ne.s32.totalorder %s32, %s35
    %p41 = scmp.eq.s32.totalorder %s10, 0
    %p42 = por %p40, %p41
    %p43 = scmp.ne.s32.totalorder %s32, %s35
    %p44 = scmp.eq.s32.totalorder %s15, 3
    %p45 = por %p43, %p44
    %p46 = scmp.ne.s32.totalorder %s35, %s36
    %p47 = scmp.eq.s32.totalorder %s15, 0
    %p48 = por %p46, %p47
    %p49 = scmp.ne.s32.totalorder %s35, %s36
    %p50 = scmp.eq.s32.totalorder %s16, 3
    %p51 = por %p49, %p50
    %p53 = scmp.ne.s32.totalorder %s36, %s52
    %p54 = scmp.eq.s32.totalorder %s16, 0
    %p55 = por %p53, %p54
    %s56 = ssub.s32 %s17, %s29
    %p57 = scmp.eq.s32.totalorder %s56, 0
    %s59 = sadd.s32 %s58, 1
    %s60 = scalar_select %p57, %s58, %s59
    %p63 = pneg %p57
    %p64 = scmp.eq.s32.totalorder %s10, 3
    %p65 = por %p63, %p64
    %p66 = scmp.ne.s32.totalorder %s58, %s61
    %p67 = scmp.eq.s32.totalorder %s10, 0
    %p68 = por %p66, %p67
    %p69 = scmp.ne.s32.totalorder %s58, %s61
    %p70 = scmp.eq.s32.totalorder %s15, 3
    %p71 = por %p69, %p70
    %p72 = scmp.ne.s32.totalorder %s61, %s62
    %p73 = scmp.eq.s32.totalorder %s15, 0
    %p74 = por %p72, %p73
    %p75 = scmp.ne.s32.totalorder %s61, %s62
    %p76 = scmp.eq.s32.totalorder %s16, 3
    %p77 = por %p75, %p76
    %p79 = scmp.ne.s32.totalorder %s62, %s78
    %p80 = scmp.eq.s32.totalorder %s16, 0
    %p81 = por %p79, %p80
    %s82 = ssub.s32 %s17, %s29
    %p83 = scmp.eq.s32.totalorder %s82, 0
    %s85 = sadd.s32 %s84, 1
    %s86 = scalar_select %p83, %s84, %s85
    %p89 = pneg %p83
    %p90 = scmp.eq.s32.totalorder %s10, 3
    %p91 = por %p89, %p90
    %p92 = scmp.ne.s32.totalorder %s84, %s87
    %p93 = scmp.eq.s32.totalorder %s10, 0
    %p94 = por %p92, %p93
    %p95 = scmp.ne.s32.totalorder %s84, %s87
    %p96 = scmp.eq.s32.totalorder %s15, 3
    %p97 = por %p95, %p96
    %p98 = scmp.ne.s32.totalorder %s87, %s88
    %p99 = scmp.eq.s32.totalorder %s15, 0
    %p100 = por %p98, %p99
    %p101 = scmp.ne.s32.totalorder %s87, %s88
    %p102 = scmp.eq.s32.totalorder %s16, 3
    %p103 = por %p101, %p102
    %p105 = scmp.ne.s32.totalorder %s88, %s104
    %p106 = scmp.eq.s32.totalorder %s16, 0
    %p107 = por %p105, %p106
    %s108 = ssub.s32 %s17, %s29
    %p109 = scmp.eq.s32.totalorder %s108, 0
    %s111 = sadd.s32 %s110, 1
    %s112 = scalar_select %p109, %s110, %s111
    %p115 = pneg %p109
    %p116 = scmp.eq.s32.totalorder %s10, 3
    %p117 = por %p115, %p116
    %p118 = scmp.ne.s32.totalorder %s110, %s113
    %p119 = scmp.eq.s32.totalorder %s10, 0
    %p120 = por %p118, %p119
    %p121 = scmp.ne.s32.totalorder %s110, %s113
    %p122 = scmp.eq.s32.totalorder %s15, 3
    %p123 = por %p121, %p122
    %p124 = scmp.ne.s32.totalorder %s113, %s114
    %p125 = scmp.eq.s32.totalorder %s15, 0
    %p126 = por %p124, %p125
    %p127 = scmp.ne.s32.totalorder %s113, %s114
    %p128 = scmp.eq.s32.totalorder %s16, 3
    %p129 = por %p127, %p128
    %p131 = scmp.ne.s32.totalorder %s114, %s130
    %p132 = scmp.eq.s32.totalorder %s16, 0
    %p133 = por %p131, %p132
    %s134 = ssub.s32 %s18, %s25
    %s135 = ssub.s32 %s17, %s29
    %s136 = sor.u32 %s134, %s135
    %p137 = scmp.eq.s32.totalorder %s136, 0
    %s139 = sadd.s32 %s138, 1
    %s140 = scalar_select %p137, %s138, %s139
    %p143 = pneg %p137
    %p144 = scmp.eq.s32.totalorder %s10, 3
    %p145 = por %p143, %p144
    %p146 = scmp.ne.s32.totalorder %s138, %s141
    %p147 = scmp.eq.s32.totalorder %s10, 0
    %p148 = por %p146, %p147
    %p149 = scmp.ne.s32.totalorder %s138, %s141
    %p150 = scmp.eq.s32.totalorder %s15, 3
    %p151 = por %p149, %p150
    %p152 = scmp.ne.s32.totalorder %s141, %s142
    %p153 = scmp.eq.s32.totalorder %s15, 0
    %p154 = por %p152, %p153
    %p155 = scmp.ne.s32.totalorder %s141, %s142
    %p156 = scmp.eq.s32.totalorder %s16, 3
    %p157 = por %p155, %p156
    %p159 = scmp.ne.s32.totalorder %s142, %s158
    %p160 = scmp.eq.s32.totalorder %s16, 0
    %p161 = por %p159, %p160
    %p162 = scmp.le.s32.totalorder 1, %s10
    %p163 = scmp.lt.s32.totalorder %s10, 5
    %p164 = pnand %p162, %p163
    %p165 = pneg %p164
    // Predicated region
    $region9: #{stem_forward.2} parent=5 // pred_check
      _
    $region10: #{stem_forward.2} parent=5 // pred_check_branch
      %167 = sbr.rel (%p164) target = $region12
    $region11: #{stem_forward.2} parent=5 // pred_region
      %s168 = ssub.s32 %s10, 1
      // Predicated region
      $region13: #{stem_forward.2} parent=11 // pred_check
        %p169 = pneg %p74
      $region14: #{stem_forward.2} parent=11 // pred_check_branch
        %171 = sbr.rel (%p169) target = $region16
      $region15: #{stem_forward.2} parent=11 // pred_region
        %p172 = scmp.lt.s32.totalorder %s19, 0
        %s173 = scalar_select %p172, %s19, 0
        %s174 = smul.addr %s173, 4
        %s175 = scalar_lea.vmem %s1, %s174
      $region16: #{stem_forward.2} parent=11 // pred_fallthru
        _
      // Predicated region
      $region17: #{stem_forward.2} parent=11 // pred_check
        %p176 = pneg %p100
      $region18: #{stem_forward.2} parent=11 // pred_check_branch
        %178 = sbr.rel (%p176) target = $region20
      $region19: #{stem_forward.2} parent=11 // pred_region
        %p179 = scmp.lt.s32.totalorder %s19, 0
        %s180 = scalar_select %p179, %s19, 0
        %s181 = scalar_lea.vmem %s2, %s180
      $region20: #{stem_forward.2} parent=11 // pred_fallthru
        _
      // Predicated region
      $region21: #{stem_forward.2} parent=11 // pred_check
        %p182 = pneg %p126
      $region22: #{stem_forward.2} parent=11 // pred_check_branch
        %184 = sbr.rel (%p182) target = $region24
      $region23: #{stem_forward.2} parent=11 // pred_region
        %p185 = scmp.lt.s32.totalorder %s19, 0
        %s186 = scalar_select %p185, %s19, 0
        %s187 = scalar_lea.vmem %s3, %s186
      $region24: #{stem_forward.2} parent=11 // pred_fallthru
        _
    $region12: #{stem_forward.2} parent=5 // pred_fallthru
      _
    %p188 = scmp.lt.s32.totalorder %s10, 4
    // Predicated region
    $region25: #{stem_forward.2} parent=5 // pred_check
      %p189 = pneg %p188
    $region26: #{stem_forward.2} parent=5 // pred_check_branch
      %191 = sbr.rel (%p189) target = $region28
    $region27: #{stem_forward.2} parent=5 // pred_region
      // Predicated region
      $region29: #{stem_forward.2} parent=27 // pred_check
        %p192 = pneg %p42
      $region30: #{stem_forward.2} parent=27 // pred_check_branch
        %194 = sbr.rel (%p192) target = $region32
      $region31: #{stem_forward.2} parent=27 // pred_region
        %s195 = smul.u32 64, %s18
        %p196 = scmp.lt.s32.totalorder %s195, 255
        %s197 = scalar_select %p196, %s195, 255
        %s198 = smul.addr %s197, 2
        %s199 = smul.addr %s198, 4
        %s200 = scalar_lea.vmem %s0, %s199
        %s201 = smul.u32 64, %s18
      $region32: #{stem_forward.2} parent=27 // pred_fallthru
        _
    $region28: #{stem_forward.2} parent=5 // pred_fallthru
      _
    %p202 = scmp.le.s32.totalorder 1, %s10
    %p203 = scmp.lt.s32.totalorder %s10, 5
    %p204 = pnand %p202, %p203
    %p205 = pneg %p204
    // Predicated region
    $region33: #{stem_forward.2} parent=5 // pred_check
      _
    $region34: #{stem_forward.2} parent=5 // pred_check_branch
      %207 = sbr.rel (%p204) target = $region36
    $region35: #{stem_forward.2} parent=5 // pred_region
      %s208 = ssub.s32 %s10, 1
      %s209 = smul.u32 64, %s20
      %p210 = scmp.lt.s32.totalorder %s209, 255
      %s211 = scalar_select %p210, %s209, 255
      %s212 = smul.addr %s211, 2
      %s213 = smul.addr %s212, 4
      %s214 = scalar_lea.vmem %s0, %s213
      %p215 = pneg %p48
      %p216 = pneg %p45
      %p217 = scmp.lt.s32.totalorder %s19, 0
      %s218 = scalar_select %p217, %s19, 0
      %s219 = smul.addr %s218, 4
      %s220 = scalar_lea.vmem %s1, %s219
      %p221 = pneg %p74
      %p222 = pneg %p71
      %p223 = scmp.lt.s32.totalorder %s19, 0
      %s224 = scalar_select %p223, %s19, 0
      %s225 = scalar_lea.vmem %s2, %s224
      %p226 = pneg %p100
      %p227 = pneg %p97
      %p228 = scmp.lt.s32.totalorder %s19, 0
      %s229 = scalar_select %p228, %s19, 0
      %s230 = scalar_lea.vmem %s3, %s229
      %p231 = pneg %p126
      %p232 = pneg %p123
      %p233 = pneg %p154
      %p234 = pneg %p151
      %s235 = smul.u32 64, %s20
      %p236 = scmp.lt.s32.totalorder %s235, 255
      %s237 = scalar_select %p236, %s235, 255
      %p238 = scmp.lt.s32.totalorder %s19, 0
      %s239 = scalar_select %p238, %s19, 0
      %s240 = sadd.s32 %s239, %s237
      %s241 = smul.addr %s240, 4
      %s242 = scalar_lea.vmem %s4, %s241
      %s243 = smul.u32 64, %s20
      %p244 = scmp.lt.s32.totalorder %s243, 255
      %s245 = scalar_select %p244, %s243, 255
      %s246 = smul.addr %s245, 2
      %s247 = smul.addr %s246, 4
      %s248 = scalar_lea.vmem %s0, %s247
      %s249 = smul.u32 64, %s20
      %p250 = scmp.lt.s32.totalorder %s19, 0
      %s251 = scalar_select %p250, %s19, 0
      %s252 = smul.addr %s251, 4
      %s253 = scalar_lea.vmem %s1, %s252
      %p254 = scmp.lt.s32.totalorder %s19, 0
      %s255 = scalar_select %p254, %s19, 0
      %s256 = scalar_lea.vmem %s2, %s255
      %p257 = scmp.lt.s32.totalorder %s19, 0
      %s258 = scalar_select %p257, %s19, 0
      %s259 = scalar_lea.vmem %s3, %s258
      %s260 = smul.u32 64, %s20
      %p261 = scmp.lt.s32.totalorder %s260, 255
      %s262 = scalar_select %p261, %s260, 255
      %p263 = scmp.lt.s32.totalorder %s19, 0
      %s264 = scalar_select %p263, %s19, 0
      %s265 = sadd.s32 %s264, %s262
      %s266 = smul.addr %s265, 4
      %s267 = scalar_lea.vmem %s4, %s266
      %s268 = smul.u32 64, %s20
      %v270 = vld [vmem:[%s248] sm:$0xff]
      %v271 = vld [vmem:[%s248 + $0x8] sm:$0xff]
      %v272 = vld [vmem:[%s248 + $0x10] sm:$0xff]
      %v273 = vld [vmem:[%s248 + $0x18] sm:$0xff]
      %v274 = vld [vmem:[%s248 + $0x20] sm:$0xff]
      %v275 = vld [vmem:[%s248 + $0x28] sm:$0xff]
      %v276 = vld [vmem:[%s248 + $0x30] sm:$0xff]
      %v277 = vld [vmem:[%s248 + $0x38] sm:$0xff]
      %v278 = vld [vmem:[%s248 + $0x40] sm:$0xff]
      %v279 = vld [vmem:[%s248 + $0x48] sm:$0xff]
      %v280 = vld [vmem:[%s248 + $0x50] sm:$0xff]
      %v281 = vld [vmem:[%s248 + $0x58] sm:$0xff]
      %v282 = vld [vmem:[%s248 + $0x60] sm:$0xff]
      %v283 = vld [vmem:[%s248 + $0x68] sm:$0xff]
      %v284 = vld [vmem:[%s248 + $0x70] sm:$0xff]
      %v285 = vld [vmem:[%s248 + $0x78] sm:$0xff]
      %v286 = vld [vmem:[%s248 + $0x80] sm:$0xff]
      %v287 = vld [vmem:[%s248 + $0x88] sm:$0xff]
      %v288 = vld [vmem:[%s248 + $0x90] sm:$0xff]
      %v289 = vld [vmem:[%s248 + $0x98] sm:$0xff]
      %v290 = vld [vmem:[%s248 + $0xa0] sm:$0xff]
      %v291 = vld [vmem:[%s248 + $0xa8] sm:$0xff]
      %v292 = vld [vmem:[%s248 + $0xb0] sm:$0xff]
      %v293 = vld [vmem:[%s248 + $0xb8] sm:$0xff]
      %v294 = vld [vmem:[%s248 + $0xc0] sm:$0xff]
      %v295 = vld [vmem:[%s248 + $0xc8] sm:$0xff]
      %v296 = vld [vmem:[%s248 + $0xd0] sm:$0xff]
      %v297 = vld [vmem:[%s248 + $0xd8] sm:$0xff]
      %v298 = vld [vmem:[%s248 + $0xe0] sm:$0xff]
      %v299 = vld [vmem:[%s248 + $0xe8] sm:$0xff]
      %v300 = vld [vmem:[%s248 + $0xf0] sm:$0xff]
      %v301 = vld [vmem:[%s248 + $0xf8] sm:$0xff]
      %v302 = vld [vmem:[%s248 + $0x100] sm:$0xff]
      %v303 = vld [vmem:[%s248 + $0x108] sm:$0xff]
      %v304 = vld [vmem:[%s248 + $0x110] sm:$0xff]
      %v305 = vld [vmem:[%s248 + $0x118] sm:$0xff]
      %v306 = vld [vmem:[%s248 + $0x120] sm:$0xff]
      %v307 = vld [vmem:[%s248 + $0x128] sm:$0xff]
      %v308 = vld [vmem:[%s248 + $0x130] sm:$0xff]
      %v309 = vld [vmem:[%s248 + $0x138] sm:$0xff]
      %v310 = vld [vmem:[%s248 + $0x140] sm:$0xff]
      %v311 = vld [vmem:[%s248 + $0x148] sm:$0xff]
      %v312 = vld [vmem:[%s248 + $0x150] sm:$0xff]
      %v313 = vld [vmem:[%s248 + $0x158] sm:$0xff]
      %v314 = vld [vmem:[%s248 + $0x160] sm:$0xff]
      %v315 = vld [vmem:[%s248 + $0x168] sm:$0xff]
      %v316 = vld [vmem:[%s248 + $0x170] sm:$0xff]
      %v317 = vld [vmem:[%s248 + $0x178] sm:$0xff]
      %v318 = vld [vmem:[%s248 + $0x180] sm:$0xff]
      %v319 = vld [vmem:[%s248 + $0x188] sm:$0xff]
      %v320 = vld [vmem:[%s248 + $0x190] sm:$0xff]
      %v321 = vld [vmem:[%s248 + $0x198] sm:$0xff]
      %v322 = vld [vmem:[%s248 + $0x1a0] sm:$0xff]
      %v323 = vld [vmem:[%s248 + $0x1a8] sm:$0xff]
      %v324 = vld [vmem:[%s248 + $0x1b0] sm:$0xff]
      %v325 = vld [vmem:[%s248 + $0x1b8] sm:$0xff]
      %v326 = vld [vmem:[%s248 + $0x1c0] sm:$0xff]
      %v327 = vld [vmem:[%s248 + $0x1c8] sm:$0xff]
      %v328 = vld [vmem:[%s248 + $0x1d0] sm:$0xff]
      %v329 = vld [vmem:[%s248 + $0x1d8] sm:$0xff]
      %v330 = vld [vmem:[%s248 + $0x1e0] sm:$0xff]
      %v331 = vld [vmem:[%s248 + $0x1e8] sm:$0xff]
      %v332 = vld [vmem:[%s248 + $0x1f0] sm:$0xff]
      %v333 = vld [vmem:[%s248 + $0x1f8] sm:$0xff]
      %v334 = vld [vmem:[%s253] sm:$0xf]
      %v335 = vld [vmem:[%s253 + $0x4] sm:$0xf]
      %v336 = vld [vmem:[%s253 + $0x8] sm:$0xf]
      %v337 = vld [vmem:[%s253 + $0xc] sm:$0xf]
      %v338 = vld [vmem:[%s253 + $0x10] sm:$0xf]
      %v339 = vld [vmem:[%s253 + $0x14] sm:$0xf]
      %v340 = vld [vmem:[%s253 + $0x18] sm:$0xf]
      %v341 = vld [vmem:[%s253 + $0x1c] sm:$0xf]
      %v342 = vld [vmem:[%s253 + $0x20] sm:$0xf]
      %v343 = vld [vmem:[%s253 + $0x24] sm:$0xf]
      %v344 = vld [vmem:[%s253 + $0x28] sm:$0xf]
      %v345 = vld [vmem:[%s253 + $0x2c] sm:$0xf]
      %v346 = vld [vmem:[%s253 + $0x30] sm:$0xf]
      %v347 = vld [vmem:[%s253 + $0x34] sm:$0xf]
      %v348 = vld [vmem:[%s253 + $0x38] sm:$0xf]
      %v349 = vld [vmem:[%s253 + $0x3c] sm:$0xf]
      %v350 = vld [vmem:[%s253 + $0x40] sm:$0xf]
      %v351 = vld [vmem:[%s253 + $0x44] sm:$0xf]
      %v352 = vld [vmem:[%s253 + $0x48] sm:$0x3]
      %v417 = vunpack.c.l.b16 %v270
      %v418 = vunpack.c.h.b16 %v270
      %v419 = vunpack.c.l.b16 %v271
      %v420 = vunpack.c.h.b16 %v271
      %v421 = vunpack.c.l.b16 %v272
      %v422 = vunpack.c.h.b16 %v272
      %v423 = vunpack.c.l.b16 %v273
      %v424 = vunpack.c.h.b16 %v273
      %v425 = vunpack.c.l.b16 %v274
      %v426 = vunpack.c.h.b16 %v274
      %v427 = vunpack.c.l.b16 %v275
      %v428 = vunpack.c.h.b16 %v275
      %v429 = vunpack.c.l.b16 %v276
      %v430 = vunpack.c.h.b16 %v276
      %v431 = vunpack.c.l.b16 %v277
      %v432 = vunpack.c.h.b16 %v277
      %v433 = vunpack.c.l.b16 %v278
      %v434 = vunpack.c.h.b16 %v278
      %v435 = vunpack.c.l.b16 %v279
      %v436 = vunpack.c.h.b16 %v279
      %v437 = vunpack.c.l.b16 %v280
      %v438 = vunpack.c.h.b16 %v280
      %v439 = vunpack.c.l.b16 %v281
      %v440 = vunpack.c.h.b16 %v281
      %v441 = vunpack.c.l.b16 %v282
      %v442 = vunpack.c.h.b16 %v282
      %v443 = vunpack.c.l.b16 %v283
      %v444 = vunpack.c.h.b16 %v283
      %v445 = vunpack.c.l.b16 %v284
      %v446 = vunpack.c.h.b16 %v284
      %v447 = vunpack.c.l.b16 %v285
      %v448 = vunpack.c.h.b16 %v285
      %v449 = vunpack.c.l.b16 %v286
      %v450 = vunpack.c.h.b16 %v286
      %v451 = vunpack.c.l.b16 %v287
      %v452 = vunpack.c.h.b16 %v287
      %v453 = vunpack.c.l.b16 %v288
      %v454 = vunpack.c.h.b16 %v288
      %v455 = vunpack.c.l.b16 %v289
      %v456 = vunpack.c.h.b16 %v289
      %v457 = vunpack.c.l.b16 %v290
      %v458 = vunpack.c.h.b16 %v290
      %v459 = vunpack.c.l.b16 %v291
      %v460 = vunpack.c.h.b16 %v291
      %v461 = vunpack.c.l.b16 %v292
      %v462 = vunpack.c.h.b16 %v292
      %v463 = vunpack.c.l.b16 %v293
      %v464 = vunpack.c.h.b16 %v293
      %v465 = vunpack.c.l.b16 %v294
      %v466 = vunpack.c.h.b16 %v294
      %v467 = vunpack.c.l.b16 %v295
      %v468 = vunpack.c.h.b16 %v295
      %v469 = vunpack.c.l.b16 %v296
      %v470 = vunpack.c.h.b16 %v296
      %v471 = vunpack.c.l.b16 %v297
      %v472 = vunpack.c.h.b16 %v297
      %v473 = vunpack.c.l.b16 %v298
      %v474 = vunpack.c.h.b16 %v298
      %v475 = vunpack.c.l.b16 %v299
      %v476 = vunpack.c.h.b16 %v299
      %v477 = vunpack.c.l.b16 %v300
      %v478 = vunpack.c.h.b16 %v300
      %v479 = vunpack.c.l.b16 %v301
      %v480 = vunpack.c.h.b16 %v301
      %v481 = vunpack.c.l.b16 %v302
      %v482 = vunpack.c.h.b16 %v302
      %v483 = vunpack.c.l.b16 %v303
      %v484 = vunpack.c.h.b16 %v303
      %v485 = vunpack.c.l.b16 %v304
      %v486 = vunpack.c.h.b16 %v304
      %v487 = vunpack.c.l.b16 %v305
      %v488 = vunpack.c.h.b16 %v305
      %v489 = vunpack.c.l.b16 %v306
      %v490 = vunpack.c.h.b16 %v306
      %v491 = vunpack.c.l.b16 %v307
      %v492 = vunpack.c.h.b16 %v307
      %v493 = vunpack.c.l.b16 %v308
      %v494 = vunpack.c.h.b16 %v308
      %v495 = vunpack.c.l.b16 %v309
      %v496 = vunpack.c.h.b16 %v309
      %v497 = vunpack.c.l.b16 %v310
      %v498 = vunpack.c.h.b16 %v310
      %v499 = vunpack.c.l.b16 %v311
      %v500 = vunpack.c.h.b16 %v311
      %v501 = vunpack.c.l.b16 %v312
      %v502 = vunpack.c.h.b16 %v312
      %v503 = vunpack.c.l.b16 %v313
      %v504 = vunpack.c.h.b16 %v313
      %v505 = vunpack.c.l.b16 %v314
      %v506 = vunpack.c.h.b16 %v314
      %v507 = vunpack.c.l.b16 %v315
      %v508 = vunpack.c.h.b16 %v315
      %v509 = vunpack.c.l.b16 %v316
      %v510 = vunpack.c.h.b16 %v316
      %v511 = vunpack.c.l.b16 %v317
      %v512 = vunpack.c.h.b16 %v317
      %v513 = vunpack.c.l.b16 %v318
      %v514 = vunpack.c.h.b16 %v318
      %v515 = vunpack.c.l.b16 %v319
      %v516 = vunpack.c.h.b16 %v319
      %v517 = vunpack.c.l.b16 %v320
      %v518 = vunpack.c.h.b16 %v320
      %v519 = vunpack.c.l.b16 %v321
      %v520 = vunpack.c.h.b16 %v321
      %v521 = vunpack.c.l.b16 %v322
      %v522 = vunpack.c.h.b16 %v322
      %v523 = vunpack.c.l.b16 %v323
      %v524 = vunpack.c.h.b16 %v323
      %v525 = vunpack.c.l.b16 %v324
      %v526 = vunpack.c.h.b16 %v324
      %v527 = vunpack.c.l.b16 %v325
      %v528 = vunpack.c.h.b16 %v325
      %v529 = vunpack.c.l.b16 %v326
      %v530 = vunpack.c.h.b16 %v326
      %v531 = vunpack.c.l.b16 %v327
      %v532 = vunpack.c.h.b16 %v327
      %v533 = vunpack.c.l.b16 %v328
      %v534 = vunpack.c.h.b16 %v328
      %v535 = vunpack.c.l.b16 %v329
      %v536 = vunpack.c.h.b16 %v329
      %v537 = vunpack.c.l.b16 %v330
      %v538 = vunpack.c.h.b16 %v330
      %v539 = vunpack.c.l.b16 %v331
      %v540 = vunpack.c.h.b16 %v331
      %v541 = vunpack.c.l.b16 %v332
      %v542 = vunpack.c.h.b16 %v332
      %v543 = vunpack.c.l.b16 %v333
      %v544 = vunpack.c.h.b16 %v333
      %v545 = vpack.c.b16 %v419, %v417
      %v546 = vpack.c.b16 %v420, %v418
      %v547 = vpack.c.b16 %v423, %v421
      %v548 = vpack.c.b16 %v424, %v422
      %v549 = vpack.c.b16 %v427, %v425
      %v550 = vpack.c.b16 %v428, %v426
      %v551 = vpack.c.b16 %v431, %v429
      %v552 = vpack.c.b16 %v432, %v430
      %v553 = vpack.c.b16 %v435, %v433
      %v554 = vpack.c.b16 %v436, %v434
      %v555 = vpack.c.b16 %v439, %v437
      %v556 = vpack.c.b16 %v440, %v438
      %v557 = vpack.c.b16 %v443, %v441
      %v558 = vpack.c.b16 %v444, %v442
      %v559 = vpack.c.b16 %v447, %v445
      %v560 = vpack.c.b16 %v448, %v446
      %v561 = vpack.c.b16 %v451, %v449
      %v562 = vpack.c.b16 %v452, %v450
      %v563 = vpack.c.b16 %v455, %v453
      %v564 = vpack.c.b16 %v456, %v454
      %v565 = vpack.c.b16 %v459, %v457
      %v566 = vpack.c.b16 %v460, %v458
      %v567 = vpack.c.b16 %v463, %v461
      %v568 = vpack.c.b16 %v464, %v462
      %v569 = vpack.c.b16 %v467, %v465
      %v570 = vpack.c.b16 %v468, %v466
      %v571 = vpack.c.b16 %v471, %v469
      %v572 = vpack.c.b16 %v472, %v470
      %v573 = vpack.c.b16 %v475, %v473
      %v574 = vpack.c.b16 %v476, %v474
      %v575 = vpack.c.b16 %v479, %v477
      %v576 = vpack.c.b16 %v480, %v478
      %v577 = vpack.c.b16 %v483, %v481
      %v578 = vpack.c.b16 %v484, %v482
      %v579 = vpack.c.b16 %v487, %v485
      %v580 = vpack.c.b16 %v488, %v486
      %v581 = vpack.c.b16 %v491, %v489
      %v582 = vpack.c.b16 %v492, %v490
      %v583 = vpack.c.b16 %v495, %v493
      %v584 = vpack.c.b16 %v496, %v494
      %v585 = vpack.c.b16 %v499, %v497
      %v586 = vpack.c.b16 %v500, %v498
      %v587 = vpack.c.b16 %v503, %v501
      %v588 = vpack.c.b16 %v504, %v502
      %v589 = vpack.c.b16 %v507, %v505
      %v590 = vpack.c.b16 %v508, %v506
      %v591 = vpack.c.b16 %v511, %v509
      %v592 = vpack.c.b16 %v512, %v510
      %v593 = vpack.c.b16 %v515, %v513
      %v594 = vpack.c.b16 %v516, %v514
      %v595 = vpack.c.b16 %v519, %v517
      %v596 = vpack.c.b16 %v520, %v518
      %v597 = vpack.c.b16 %v523, %v521
      %v598 = vpack.c.b16 %v524, %v522
      %v599 = vpack.c.b16 %v527, %v525
      %v600 = vpack.c.b16 %v528, %v526
      %v601 = vpack.c.b16 %v531, %v529
      %v602 = vpack.c.b16 %v532, %v530
      %v603 = vpack.c.b16 %v535, %v533
      %v604 = vpack.c.b16 %v536, %v534
      %v605 = vpack.c.b16 %v539, %v537
      %v606 = vpack.c.b16 %v540, %v538
      %v607 = vpack.c.b16 %v543, %v541
      %v608 = vpack.c.b16 %v544, %v542
      %v660 = vunpack.c.l.b16 %v334
      %v661 = vunpack.c.l.b16 %v335
      %v662 = vunpack.c.l.b16 %v336
      %v663 = vunpack.c.l.b16 %v337
      %v664 = vunpack.c.l.b16 %v338
      %v665 = vunpack.c.l.b16 %v339
      %v666 = vunpack.c.l.b16 %v340
      %v667 = vunpack.c.l.b16 %v341
      %v668 = vunpack.c.l.b16 %v342
      %v669 = vunpack.c.l.b16 %v343
      %v670 = vunpack.c.l.b16 %v344
      %v671 = vunpack.c.l.b16 %v345
      %v672 = vunpack.c.l.b16 %v346
      %v673 = vunpack.c.l.b16 %v347
      %v674 = vunpack.c.l.b16 %v348
      %v675 = vunpack.c.l.b16 %v349
      %v676 = vunpack.c.l.b16 %v350
      %v677 = vunpack.c.l.b16 %v351
      %v678 = vunpack.c.l.b16 %v352
      %v679 = vpack.c.b16 %v661, %v660
      %v680 = vpack.c.b16 %v663, %v662
      %v681 = vpack.c.b16 %v665, %v664
      %v682 = vpack.c.b16 %v667, %v666
      %v683 = vpack.c.b16 %v669, %v668
      %v684 = vpack.c.b16 %v671, %v670
      %v685 = vpack.c.b16 %v673, %v672
      %v686 = vpack.c.b16 %v675, %v674
      %v687 = vpack.c.b16 %v677, %v676
      %v688 = vpack.c.b16 %v678, %v678
      %vm698 = vcmask 154624
      %v700 = vsel %vm698, %v546, 0
      %v703 = vsel %vm698, %v548, 0
      %v706 = vsel %vm698, %v550, 0
      %v709 = vsel %vm698, %v552, 0
      %v712 = vsel %vm698, %v554, 0
      %v715 = vsel %vm698, %v556, 0
      %v718 = vsel %vm698, %v558, 0
      %v721 = vsel %vm698, %v560, 0
      %v724 = vsel %vm698, %v562, 0
      %v727 = vsel %vm698, %v564, 0
      %v730 = vsel %vm698, %v566, 0
      %v733 = vsel %vm698, %v568, 0
      %v736 = vsel %vm698, %v570, 0
      %v739 = vsel %vm698, %v572, 0
      %v742 = vsel %vm698, %v574, 0
      %v745 = vsel %vm698, %v576, 0
      %v748 = vsel %vm698, %v578, 0
      %v751 = vsel %vm698, %v580, 0
      %v754 = vsel %vm698, %v582, 0
      %v757 = vsel %vm698, %v584, 0
      %v760 = vsel %vm698, %v586, 0
      %v763 = vsel %vm698, %v588, 0
      %v766 = vsel %vm698, %v590, 0
      %v769 = vsel %vm698, %v592, 0
      %v772 = vsel %vm698, %v594, 0
      %v775 = vsel %vm698, %v596, 0
      %v778 = vsel %vm698, %v598, 0
      %v781 = vsel %vm698, %v600, 0
      %v784 = vsel %vm698, %v602, 0
      %v787 = vsel %vm698, %v604, 0
      %v790 = vsel %vm698, %v606, 0
      %v793 = vsel %vm698, %v608, 0
      %vm795 = vcmask 1040384
      %vm796 = vcmask 1041408
      %v797 = vsel %vm795, 4294967295, 65535
      %v798 = vsel %vm796, %v797, 0
      %v800 = vand.u32 %v688, %v798
      %802 = vmatprep.subr.bf16.mxu0 0
      %803 = vmatpush1.bf16.msra.mxu0 %v679
      %804 = vmatprep.subr.bf16.mxu0 0
      %805 = vmatpush1.bf16.msra.mxu0 %v680
      %806 = vmatprep.subr.bf16.mxu0 0
      %807 = vmatpush1.bf16.msra.mxu0 %v681
      %808 = vmatprep.subr.bf16.mxu0 0
      %809 = vmatpush1.bf16.msra.mxu0 %v682
      %810 = vmatprep.subr.bf16.mxu0 0
      %811 = vmatpush1.bf16.msra.mxu0 %v683
      %812 = vmatprep.subr.bf16.mxu0 0
      %813 = vmatpush1.bf16.msra.mxu0 %v684
      %814 = vmatprep.subr.bf16.mxu0 0
      %815 = vmatpush1.bf16.msra.mxu0 %v685
      %816 = vmatprep.subr.bf16.mxu0 0
      %817 = vmatpush1.bf16.msra.mxu0 %v686
      %818 = vmatprep.subr.bf16.mxu0 0
      %819 = vmatpush1.bf16.msra.mxu0 %v687
      %820 = vmatprep.subr.bf16.mxu0 0
      %821 = vmatpush1.bf16.msra.mxu0 %v800
      %822 = vmatprep.subr.bf16.mxu0 0
      %823 = vmatpush1.bf16.msra.mxu0 0
      %824 = vmatprep.subr.bf16.mxu0 0
      %825 = vmatpush1.bf16.msra.mxu0 0
      %826 = vmatprep.subr.bf16.mxu0 0
      %827 = vmatpush1.bf16.msra.mxu0 0
      %828 = vmatprep.subr.bf16.mxu0 0
      %829 = vmatpush1.bf16.msra.mxu0 0
      %830 = vmatprep.subr.bf16.mxu0 0
      %831 = vmatpush1.bf16.msra.mxu0 0
      %832 = vmatprep.subr.bf16.mxu0 0
      %833 = vmatpush1.bf16.msra.mxu0 0
      %834 = vmatprep.mubr.bf16.mxu0 %v700
      %835 = vmatmul.mubr.bf16.gmra.mrb[0].mxu0 %v545
      %v836 = vpop.f32.mrb[0].mxu0
      %v837 = vadd.f32 0.0, %v836
      %v838 = vpop.f32.mrb[0].mxu0
      %v839 = vpop.f32.mrb[0].mxu0
      %v840 = vadd.f32 0.0, %v839
      %v841 = vpop.f32.mrb[0].mxu0
      %842 = vmatprep.mubr.bf16.mxu0 %v703
      %843 = vmatmul.mubr.bf16.gmra.mrb[0].mxu0 %v547
      %v844 = vpop.f32.mrb[0].mxu0
      %v845 = vadd.f32 0.0, %v844
      %v846 = vpop.f32.mrb[0].mxu0
      %v847 = vpop.f32.mrb[0].mxu0
      %v848 = vadd.f32 0.0, %v847
      %v849 = vpop.f32.mrb[0].mxu0
      %850 = vmatprep.mubr.bf16.mxu0 %v706
      %851 = vmatmul.mubr.bf16.gmra.mrb[0].mxu0 %v549
      %v852 = vpop.f32.mrb[0].mxu0
      %v853 = vadd.f32 0.0, %v852
      %v854 = vpop.f32.mrb[0].mxu0
      %v855 = vpop.f32.mrb[0].mxu0
      %v856 = vadd.f32 0.0, %v855
      %v857 = vpop.f32.mrb[0].mxu0
      %858 = vmatprep.mubr.bf16.mxu0 %v709
      %859 = vmatmul.mubr.bf16.gmra.mrb[0].mxu0 %v551
      %v860 = vpop.f32.mrb[0].mxu0
      %v861 = vadd.f32 0.0, %v860
      %v862 = vpop.f32.mrb[0].mxu0
      %v863 = vpop.f32.mrb[0].mxu0
      %v864 = vadd.f32 0.0, %v863
      %v865 = vpop.f32.mrb[0].mxu0
      %866 = vmatprep.mubr.bf16.mxu0 %v712
      %867 = vmatmul.mubr.bf16.gmra.mrb[0].mxu0 %v553
      %v868 = vpop.f32.mrb[0].mxu0
      %v869 = vadd.f32 0.0, %v868
      %v870 = vpop.f32.mrb[0].mxu0
      %v871 = vpop.f32.mrb[0].mxu0
      %v872 = vadd.f32 0.0, %v871
      %v873 = vpop.f32.mrb[0].mxu0
      %874 = vmatprep.mubr.bf16.mxu0 %v715
      %875 = vmatmul.mubr.bf16.gmra.mrb[0].mxu0 %v555
      %v876 = vpop.f32.mrb[0].mxu0
      %v877 = vadd.f32 0.0, %v876
      %v878 = vpop.f32.mrb[0].mxu0
      %v879 = vpop.f32.mrb[0].mxu0
      %v880 = vadd.f32 0.0, %v879
      %v881 = vpop.f32.mrb[0].mxu0
      %882 = vmatprep.mubr.bf16.mxu0 %v718
      %883 = vmatmul.mubr.bf16.gmra.mrb[0].mxu0 %v557
      %v884 = vpop.f32.mrb[0].mxu0
      %v885 = vadd.f32 0.0, %v884
      %v886 = vpop.f32.mrb[0].mxu0
      %v887 = vpop.f32.mrb[0].mxu0
      %v888 = vadd.f32 0.0, %v887
      %v889 = vpop.f32.mrb[0].mxu0
      %890 = vmatprep.mubr.bf16.mxu0 %v721
      %891 = vmatmul.mubr.bf16.gmra.mrb[0].mxu0 %v559
      %v892 = vpop.f32.mrb[0].mxu0
      %v893 = vadd.f32 0.0, %v892
      %v894 = vpop.f32.mrb[0].mxu0
      %v895 = vpop.f32.mrb[0].mxu0
      %v896 = vadd.f32 0.0, %v895
      %v897 = vpop.f32.mrb[0].mxu0
      %898 = vmatprep.mubr.bf16.mxu0 %v724
      %899 = vmatmul.mubr.bf16.gmra.mrb[0].mxu0 %v561
      %v900 = vpop.f32.mrb[0].mxu0
      %v901 = vadd.f32 0.0, %v900
      %v902 = vpop.f32.mrb[0].mxu0
      %v903 = vpop.f32.mrb[0].mxu0
      %v904 = vadd.f32 0.0, %v903
      %v905 = vpop.f32.mrb[0].mxu0
      %906 = vmatprep.mubr.bf16.mxu0 %v727
      %907 = vmatmul.mubr.bf16.gmra.mrb[0].mxu0 %v563
      %v908 = vpop.f32.mrb[0].mxu0
      %v909 = vadd.f32 0.0, %v908
      %v910 = vpop.f32.mrb[0].mxu0
      %v911 = vpop.f32.mrb[0].mxu0
      %v912 = vadd.f32 0.0, %v911
      %v913 = vpop.f32.mrb[0].mxu0
      %914 = vmatprep.mubr.bf16.mxu0 %v730
      %915 = vmatmul.mubr.bf16.gmra.mrb[0].mxu0 %v565
      %v916 = vpop.f32.mrb[0].mxu0
      %v917 = vadd.f32 0.0, %v916
      %v918 = vpop.f32.mrb[0].mxu0
      %v919 = vpop.f32.mrb[0].mxu0
      %v920 = vadd.f32 0.0, %v919
      %v921 = vpop.f32.mrb[0].mxu0
      %922 = vmatprep.mubr.bf16.mxu0 %v733
      %923 = vmatmul.mubr.bf16.gmra.mrb[0].mxu0 %v567
      %v924 = vpop.f32.mrb[0].mxu0
      %v925 = vadd.f32 0.0, %v924
      %v926 = vpop.f32.mrb[0].mxu0
      %v927 = vpop.f32.mrb[0].mxu0
      %v928 = vadd.f32 0.0, %v927
      %v929 = vpop.f32.mrb[0].mxu0
      %930 = vmatprep.mubr.bf16.mxu0 %v736
      %931 = vmatmul.mubr.bf16.gmra.mrb[0].mxu0 %v569
      %v932 = vpop.f32.mrb[0].mxu0
      %v933 = vadd.f32 0.0, %v932
      %v934 = vpop.f32.mrb[0].mxu0
      %v935 = vpop.f32.mrb[0].mxu0
      %v936 = vadd.f32 0.0, %v935
      %v937 = vpop.f32.mrb[0].mxu0
      %938 = vmatprep.mubr.bf16.mxu0 %v739
      %939 = vmatmul.mubr.bf16.gmra.mrb[0].mxu0 %v571
      %v940 = vpop.f32.mrb[0].mxu0
      %v941 = vadd.f32 0.0, %v940
      %v942 = vpop.f32.mrb[0].mxu0
      %v943 = vpop.f32.mrb[0].mxu0
      %v944 = vadd.f32 0.0, %v943
      %v945 = vpop.f32.mrb[0].mxu0
      %946 = vmatprep.mubr.bf16.mxu0 %v742
      %947 = vmatmul.mubr.bf16.gmra.mrb[0].mxu0 %v573
      %v948 = vpop.f32.mrb[0].mxu0
      %v949 = vadd.f32 0.0, %v948
      %v950 = vpop.f32.mrb[0].mxu0
      %v951 = vpop.f32.mrb[0].mxu0
      %v952 = vadd.f32 0.0, %v951
      %v953 = vpop.f32.mrb[0].mxu0
      %954 = vmatprep.mubr.bf16.mxu0 %v745
      %955 = vmatmul.mubr.bf16.gmra.mrb[0].mxu0 %v575
      %v956 = vpop.f32.mrb[0].mxu0
      %v957 = vadd.f32 0.0, %v956
      %v958 = vpop.f32.mrb[0].mxu0
      %v959 = vpop.f32.mrb[0].mxu0
      %v960 = vadd.f32 0.0, %v959
      %v961 = vpop.f32.mrb[0].mxu0
      %962 = vmatprep.mubr.bf16.mxu0 %v748
      %963 = vmatmul.mubr.bf16.gmra.mrb[0].mxu0 %v577
      %v964 = vpop.f32.mrb[0].mxu0
      %v965 = vadd.f32 0.0, %v964
      %v966 = vpop.f32.mrb[0].mxu0
      %v967 = vpop.f32.mrb[0].mxu0
      %v968 = vadd.f32 0.0, %v967
      %v969 = vpop.f32.mrb[0].mxu0
      %970 = vmatprep.mubr.bf16.mxu0 %v751
      %971 = vmatmul.mubr.bf16.gmra.mrb[0].mxu0 %v579
      %v972 = vpop.f32.mrb[0].mxu0
      %v973 = vadd.f32 0.0, %v972
      %v974 = vpop.f32.mrb[0].mxu0
      %v975 = vpop.f32.mrb[0].mxu0
      %v976 = vadd.f32 0.0, %v975
      %v977 = vpop.f32.mrb[0].mxu0
      %978 = vmatprep.mubr.bf16.mxu0 %v754
      %979 = vmatmul.mubr.bf16.gmra.mrb[0].mxu0 %v581
      %v980 = vpop.f32.mrb[0].mxu0
      %v981 = vadd.f32 0.0, %v980
      %v982 = vpop.f32.mrb[0].mxu0
      %v983 = vpop.f32.mrb[0].mxu0
      %v984 = vadd.f32 0.0, %v983
      %v985 = vpop.f32.mrb[0].mxu0
      %986 = vmatprep.mubr.bf16.mxu0 %v757
      %987 = vmatmul.mubr.bf16.gmra.mrb[0].mxu0 %v583
      %v988 = vpop.f32.mrb[0].mxu0
      %v989 = vadd.f32 0.0, %v988
      %v990 = vpop.f32.mrb[0].mxu0
      %v991 = vpop.f32.mrb[0].mxu0
      %v992 = vadd.f32 0.0, %v991
      %v993 = vpop.f32.mrb[0].mxu0
      %994 = vmatprep.mubr.bf16.mxu0 %v760
      %995 = vmatmul.mubr.bf16.gmra.mrb[0].mxu0 %v585
      %v996 = vpop.f32.mrb[0].mxu0
      %v997 = vadd.f32 0.0, %v996
      %v998 = vpop.f32.mrb[0].mxu0
      %v999 = vpop.f32.mrb[0].mxu0
      %v1000 = vadd.f32 0.0, %v999
      %v1001 = vpop.f32.mrb[0].mxu0
      %1002 = vmatprep.mubr.bf16.mxu0 %v763
      %1003 = vmatmul.mubr.bf16.gmra.mrb[0].mxu0 %v587
      %v1004 = vpop.f32.mrb[0].mxu0
      %v1005 = vadd.f32 0.0, %v1004
      %v1006 = vpop.f32.mrb[0].mxu0
      %v1007 = vpop.f32.mrb[0].mxu0
      %v1008 = vadd.f32 0.0, %v1007
      %v1009 = vpop.f32.mrb[0].mxu0
      %1010 = vmatprep.mubr.bf16.mxu0 %v766
      %1011 = vmatmul.mubr.bf16.gmra.mrb[0].mxu0 %v589
      %v1012 = vpop.f32.mrb[0].mxu0
      %v1013 = vadd.f32 0.0, %v1012
      %v1014 = vpop.f32.mrb[0].mxu0
      %v1015 = vpop.f32.mrb[0].mxu0
      %v1016 = vadd.f32 0.0, %v1015
      %v1017 = vpop.f32.mrb[0].mxu0
      %1018 = vmatprep.mubr.bf16.mxu0 %v769
      %1019 = vmatmul.mubr.bf16.gmra.mrb[0].mxu0 %v591
      %v1020 = vpop.f32.mrb[0].mxu0
      %v1021 = vadd.f32 0.0, %v1020
      %v1022 = vpop.f32.mrb[0].mxu0
      %v1023 = vpop.f32.mrb[0].mxu0
      %v1024 = vadd.f32 0.0, %v1023
      %v1025 = vpop.f32.mrb[0].mxu0
      %1026 = vmatprep.mubr.bf16.mxu0 %v772
      %1027 = vmatmul.mubr.bf16.gmra.mrb[0].mxu0 %v593
      %v1028 = vpop.f32.mrb[0].mxu0
      %v1029 = vadd.f32 0.0, %v1028
      %v1030 = vpop.f32.mrb[0].mxu0
      %v1031 = vpop.f32.mrb[0].mxu0
      %v1032 = vadd.f32 0.0, %v1031
      %v1033 = vpop.f32.mrb[0].mxu0
      %1034 = vmatprep.mubr.bf16.mxu0 %v775
      %1035 = vmatmul.mubr.bf16.gmra.mrb[0].mxu0 %v595
      %v1036 = vpop.f32.mrb[0].mxu0
      %v1037 = vadd.f32 0.0, %v1036
      %v1038 = vpop.f32.mrb[0].mxu0
      %v1039 = vpop.f32.mrb[0].mxu0
      %v1040 = vadd.f32 0.0, %v1039
      %v1041 = vpop.f32.mrb[0].mxu0
      %1042 = vmatprep.mubr.bf16.mxu0 %v778
      %1043 = vmatmul.mubr.bf16.gmra.mrb[0].mxu0 %v597
      %v1044 = vpop.f32.mrb[0].mxu0
      %v1045 = vadd.f32 0.0, %v1044
      %v1046 = vpop.f32.mrb[0].mxu0
      %v1047 = vpop.f32.mrb[0].mxu0
      %v1048 = vadd.f32 0.0, %v1047
      %v1049 = vpop.f32.mrb[0].mxu0
      %1050 = vmatprep.mubr.bf16.mxu0 %v781
      %1051 = vmatmul.mubr.bf16.gmra.mrb[0].mxu0 %v599
      %v1052 = vpop.f32.mrb[0].mxu0
      %v1053 = vadd.f32 0.0, %v1052
      %v1054 = vpop.f32.mrb[0].mxu0
      %v1055 = vpop.f32.mrb[0].mxu0
      %v1056 = vadd.f32 0.0, %v1055
      %v1057 = vpop.f32.mrb[0].mxu0
      %1058 = vmatprep.mubr.bf16.mxu0 %v784
      %1059 = vmatmul.mubr.bf16.gmra.mrb[0].mxu0 %v601
      %v1060 = vpop.f32.mrb[0].mxu0
      %v1061 = vadd.f32 0.0, %v1060
      %v1062 = vpop.f32.mrb[0].mxu0
      %v1063 = vpop.f32.mrb[0].mxu0
      %v1064 = vadd.f32 0.0, %v1063
      %v1065 = vpop.f32.mrb[0].mxu0
      %1066 = vmatprep.mubr.bf16.mxu0 %v787
      %1067 = vmatmul.mubr.bf16.gmra.mrb[0].mxu0 %v603
      %v1068 = vpop.f32.mrb[0].mxu0
      %v1069 = vadd.f32 0.0, %v1068
      %v1070 = vpop.f32.mrb[0].mxu0
      %v1071 = vpop.f32.mrb[0].mxu0
      %v1072 = vadd.f32 0.0, %v1071
      %v1073 = vpop.f32.mrb[0].mxu0
      %1074 = vmatprep.mubr.bf16.mxu0 %v790
      %1075 = vmatmul.mubr.bf16.gmra.mrb[0].mxu0 %v605
      %v1076 = vpop.f32.mrb[0].mxu0
      %v1077 = vadd.f32 0.0, %v1076
      %v1078 = vpop.f32.mrb[0].mxu0
      %v1079 = vpop.f32.mrb[0].mxu0
      %v1080 = vadd.f32 0.0, %v1079
      %v1081 = vpop.f32.mrb[0].mxu0
      %1082 = vmatprep.mubr.bf16.mxu0 %v793
      %1083 = vmatmul.mubr.bf16.gmra.mrb[0].mxu0 %v607
      %v1084 = vpop.f32.mrb[0].mxu0
      %v1085 = vadd.f32 0.0, %v1084
      %v1086 = vpop.f32.mrb[0].mxu0
      %v1087 = vpop.f32.mrb[0].mxu0
      %v1088 = vadd.f32 0.0, %v1087
      %v1089 = vpop.f32.mrb[0].mxu0
      %1090 = vdwg.mxu0
      %v1091 = vld [vmem:[%s256] sm:$0x1]
      %v1093 = vlaneseq
      %v1094 = vshrl.u32 %v1093, 7
      %v1095 = vsub.s32 0, %v1094
      %v1096 = vrot.slane %v1091, %v1095
      %v1098 = vmul.f32 %v837, %v1096
      %v1099 = vmul.f32 %v840, %v1096
      %v1100 = vmul.f32 %v845, %v1096
      %v1101 = vmul.f32 %v848, %v1096
      %v1102 = vmul.f32 %v853, %v1096
      %v1103 = vmul.f32 %v856, %v1096
      %v1104 = vmul.f32 %v861, %v1096
      %v1105 = vmul.f32 %v864, %v1096
      %v1106 = vmul.f32 %v869, %v1096
      %v1107 = vmul.f32 %v872, %v1096
      %v1108 = vmul.f32 %v877, %v1096
      %v1109 = vmul.f32 %v880, %v1096
      %v1110 = vmul.f32 %v885, %v1096
      %v1111 = vmul.f32 %v888, %v1096
      %v1112 = vmul.f32 %v893, %v1096
      %v1113 = vmul.f32 %v896, %v1096
      %v1114 = vmul.f32 %v901, %v1096
      %v1115 = vmul.f32 %v904, %v1096
      %v1116 = vmul.f32 %v909, %v1096
      %v1117 = vmul.f32 %v912, %v1096
      %v1118 = vmul.f32 %v917, %v1096
      %v1119 = vmul.f32 %v920, %v1096
      %v1120 = vmul.f32 %v925, %v1096
      %v1121 = vmul.f32 %v928, %v1096
      %v1122 = vmul.f32 %v933, %v1096
      %v1123 = vmul.f32 %v936, %v1096
      %v1124 = vmul.f32 %v941, %v1096
      %v1125 = vmul.f32 %v944, %v1096
      %v1126 = vmul.f32 %v949, %v1096
      %v1127 = vmul.f32 %v952, %v1096
      %v1128 = vmul.f32 %v957, %v1096
      %v1129 = vmul.f32 %v960, %v1096
      %v1130 = vmul.f32 %v965, %v1096
      %v1131 = vmul.f32 %v968, %v1096
      %v1132 = vmul.f32 %v973, %v1096
      %v1133 = vmul.f32 %v976, %v1096
      %v1134 = vmul.f32 %v981, %v1096
      %v1135 = vmul.f32 %v984, %v1096
      %v1136 = vmul.f32 %v989, %v1096
      %v1137 = vmul.f32 %v992, %v1096
      %v1138 = vmul.f32 %v997, %v1096
      %v1139 = vmul.f32 %v1000, %v1096
      %v1140 = vmul.f32 %v1005, %v1096
      %v1141 = vmul.f32 %v1008, %v1096
      %v1142 = vmul.f32 %v1013, %v1096
      %v1143 = vmul.f32 %v1016, %v1096
      %v1144 = vmul.f32 %v1021, %v1096
      %v1145 = vmul.f32 %v1024, %v1096
      %v1146 = vmul.f32 %v1029, %v1096
      %v1147 = vmul.f32 %v1032, %v1096
      %v1148 = vmul.f32 %v1037, %v1096
      %v1149 = vmul.f32 %v1040, %v1096
      %v1150 = vmul.f32 %v1045, %v1096
      %v1151 = vmul.f32 %v1048, %v1096
      %v1152 = vmul.f32 %v1053, %v1096
      %v1153 = vmul.f32 %v1056, %v1096
      %v1154 = vmul.f32 %v1061, %v1096
      %v1155 = vmul.f32 %v1064, %v1096
      %v1156 = vmul.f32 %v1069, %v1096
      %v1157 = vmul.f32 %v1072, %v1096
      %v1158 = vmul.f32 %v1077, %v1096
      %v1159 = vmul.f32 %v1080, %v1096
      %v1160 = vmul.f32 %v1085, %v1096
      %v1161 = vmul.f32 %v1088, %v1096
      %v1162 = vld [vmem:[%s259] sm:$0x1]
      %v1164 = vlaneseq
      %v1165 = vshrl.u32 %v1164, 7
      %v1166 = vsub.s32 0, %v1165
      %v1167 = vrot.slane %v1162, %v1166
      %v1169 = vadd.f32 %v1098, %v1167
      %v1170 = vadd.f32 %v1099, %v1167
      %v1171 = vadd.f32 %v1100, %v1167
      %v1172 = vadd.f32 %v1101, %v1167
      %v1173 = vadd.f32 %v1102, %v1167
      %v1174 = vadd.f32 %v1103, %v1167
      %v1175 = vadd.f32 %v1104, %v1167
      %v1176 = vadd.f32 %v1105, %v1167
      %v1177 = vadd.f32 %v1106, %v1167
      %v1178 = vadd.f32 %v1107, %v1167
      %v1179 = vadd.f32 %v1108, %v1167
      %v1180 = vadd.f32 %v1109, %v1167
      %v1181 = vadd.f32 %v1110, %v1167
      %v1182 = vadd.f32 %v1111, %v1167
      %v1183 = vadd.f32 %v1112, %v1167
      %v1184 = vadd.f32 %v1113, %v1167
      %v1185 = vadd.f32 %v1114, %v1167
      %v1186 = vadd.f32 %v1115, %v1167
      %v1187 = vadd.f32 %v1116, %v1167
      %v1188 = vadd.f32 %v1117, %v1167
      %v1189 = vadd.f32 %v1118, %v1167
      %v1190 = vadd.f32 %v1119, %v1167
      %v1191 = vadd.f32 %v1120, %v1167
      %v1192 = vadd.f32 %v1121, %v1167
      %v1193 = vadd.f32 %v1122, %v1167
      %v1194 = vadd.f32 %v1123, %v1167
      %v1195 = vadd.f32 %v1124, %v1167
      %v1196 = vadd.f32 %v1125, %v1167
      %v1197 = vadd.f32 %v1126, %v1167
      %v1198 = vadd.f32 %v1127, %v1167
      %v1199 = vadd.f32 %v1128, %v1167
      %v1200 = vadd.f32 %v1129, %v1167
      %v1201 = vadd.f32 %v1130, %v1167
      %v1202 = vadd.f32 %v1131, %v1167
      %v1203 = vadd.f32 %v1132, %v1167
      %v1204 = vadd.f32 %v1133, %v1167
      %v1205 = vadd.f32 %v1134, %v1167
      %v1206 = vadd.f32 %v1135, %v1167
      %v1207 = vadd.f32 %v1136, %v1167
      %v1208 = vadd.f32 %v1137, %v1167
      %v1209 = vadd.f32 %v1138, %v1167
      %v1210 = vadd.f32 %v1139, %v1167
      %v1211 = vadd.f32 %v1140, %v1167
      %v1212 = vadd.f32 %v1141, %v1167
      %v1213 = vadd.f32 %v1142, %v1167
      %v1214 = vadd.f32 %v1143, %v1167
      %v1215 = vadd.f32 %v1144, %v1167
      %v1216 = vadd.f32 %v1145, %v1167
      %v1217 = vadd.f32 %v1146, %v1167
      %v1218 = vadd.f32 %v1147, %v1167
      %v1219 = vadd.f32 %v1148, %v1167
      %v1220 = vadd.f32 %v1149, %v1167
      %v1221 = vadd.f32 %v1150, %v1167
      %v1222 = vadd.f32 %v1151, %v1167
      %v1223 = vadd.f32 %v1152, %v1167
      %v1224 = vadd.f32 %v1153, %v1167
      %v1225 = vadd.f32 %v1154, %v1167
      %v1226 = vadd.f32 %v1155, %v1167
      %v1227 = vadd.f32 %v1156, %v1167
      %v1228 = vadd.f32 %v1157, %v1167
      %v1229 = vadd.f32 %v1158, %v1167
      %v1230 = vadd.f32 %v1159, %v1167
      %v1231 = vadd.f32 %v1160, %v1167
      %v1232 = vadd.f32 %v1161, %v1167
      %v1233 = vmax.f32 %v1169, 0.0
      %v1234 = vmax.f32 %v1170, 0.0
      %v1235 = vmax.f32 %v1171, 0.0
      %v1236 = vmax.f32 %v1172, 0.0
      %v1237 = vmax.f32 %v1173, 0.0
      %v1238 = vmax.f32 %v1174, 0.0
      %v1239 = vmax.f32 %v1175, 0.0
      %v1240 = vmax.f32 %v1176, 0.0
      %v1241 = vmax.f32 %v1177, 0.0
      %v1242 = vmax.f32 %v1178, 0.0
      %v1243 = vmax.f32 %v1179, 0.0
      %v1244 = vmax.f32 %v1180, 0.0
      %v1245 = vmax.f32 %v1181, 0.0
      %v1246 = vmax.f32 %v1182, 0.0
      %v1247 = vmax.f32 %v1183, 0.0
      %v1248 = vmax.f32 %v1184, 0.0
      %v1249 = vmax.f32 %v1185, 0.0
      %v1250 = vmax.f32 %v1186, 0.0
      %v1251 = vmax.f32 %v1187, 0.0
      %v1252 = vmax.f32 %v1188, 0.0
      %v1253 = vmax.f32 %v1189, 0.0
      %v1254 = vmax.f32 %v1190, 0.0
      %v1255 = vmax.f32 %v1191, 0.0
      %v1256 = vmax.f32 %v1192, 0.0
      %v1257 = vmax.f32 %v1193, 0.0
      %v1258 = vmax.f32 %v1194, 0.0
      %v1259 = vmax.f32 %v1195, 0.0
      %v1260 = vmax.f32 %v1196, 0.0
      %v1261 = vmax.f32 %v1197, 0.0
      %v1262 = vmax.f32 %v1198, 0.0
      %v1263 = vmax.f32 %v1199, 0.0
      %v1264 = vmax.f32 %v1200, 0.0
      %v1265 = vmax.f32 %v1201, 0.0
      %v1266 = vmax.f32 %v1202, 0.0
      %v1267 = vmax.f32 %v1203, 0.0
      %v1268 = vmax.f32 %v1204, 0.0
      %v1269 = vmax.f32 %v1205, 0.0
      %v1270 = vmax.f32 %v1206, 0.0
      %v1271 = vmax.f32 %v1207, 0.0
      %v1272 = vmax.f32 %v1208, 0.0
      %v1273 = vmax.f32 %v1209, 0.0
      %v1274 = vmax.f32 %v1210, 0.0
      %v1275 = vmax.f32 %v1211, 0.0
      %v1276 = vmax.f32 %v1212, 0.0
      %v1277 = vmax.f32 %v1213, 0.0
      %v1278 = vmax.f32 %v1214, 0.0
      %v1279 = vmax.f32 %v1215, 0.0
      %v1280 = vmax.f32 %v1216, 0.0
      %v1281 = vmax.f32 %v1217, 0.0
      %v1282 = vmax.f32 %v1218, 0.0
      %v1283 = vmax.f32 %v1219, 0.0
      %v1284 = vmax.f32 %v1220, 0.0
      %v1285 = vmax.f32 %v1221, 0.0
      %v1286 = vmax.f32 %v1222, 0.0
      %v1287 = vmax.f32 %v1223, 0.0
      %v1288 = vmax.f32 %v1224, 0.0
      %v1289 = vmax.f32 %v1225, 0.0
      %v1290 = vmax.f32 %v1226, 0.0
      %v1291 = vmax.f32 %v1227, 0.0
      %v1292 = vmax.f32 %v1228, 0.0
      %v1293 = vmax.f32 %v1229, 0.0
      %v1294 = vmax.f32 %v1230, 0.0
      %v1295 = vmax.f32 %v1231, 0.0
      %v1296 = vmax.f32 %v1232, 0.0
      %v1297 = vpack.c.bf16 %v1234, %v1233
      %v1298 = vpack.c.bf16 %v1236, %v1235
      %v1299 = vpack.c.bf16 %v1238, %v1237
      %v1300 = vpack.c.bf16 %v1240, %v1239
      %v1301 = vpack.c.bf16 %v1242, %v1241
      %v1302 = vpack.c.bf16 %v1244, %v1243
      %v1303 = vpack.c.bf16 %v1246, %v1245
      %v1304 = vpack.c.bf16 %v1248, %v1247
      %v1305 = vpack.c.bf16 %v1250, %v1249
      %v1306 = vpack.c.bf16 %v1252, %v1251
      %v1307 = vpack.c.bf16 %v1254, %v1253
      %v1308 = vpack.c.bf16 %v1256, %v1255
      %v1309 = vpack.c.bf16 %v1258, %v1257
      %v1310 = vpack.c.bf16 %v1260, %v1259
      %v1311 = vpack.c.bf16 %v1262, %v1261
      %v1312 = vpack.c.bf16 %v1264, %v1263
      %v1313 = vpack.c.bf16 %v1266, %v1265
      %v1314 = vpack.c.bf16 %v1268, %v1267
      %v1315 = vpack.c.bf16 %v1270, %v1269
      %v1316 = vpack.c.bf16 %v1272, %v1271
      %v1317 = vpack.c.bf16 %v1274, %v1273
      %v1318 = vpack.c.bf16 %v1276, %v1275
      %v1319 = vpack.c.bf16 %v1278, %v1277
      %v1320 = vpack.c.bf16 %v1280, %v1279
      %v1321 = vpack.c.bf16 %v1282, %v1281
      %v1322 = vpack.c.bf16 %v1284, %v1283
      %v1323 = vpack.c.bf16 %v1286, %v1285
      %v1324 = vpack.c.bf16 %v1288, %v1287
      %v1325 = vpack.c.bf16 %v1290, %v1289
      %v1326 = vpack.c.bf16 %v1292, %v1291
      %v1327 = vpack.c.bf16 %v1294, %v1293
      %v1328 = vpack.c.bf16 %v1296, %v1295
      %v1361 = vunpack.c.l.b16 %v1297
      %v1362 = vunpack.c.h.b16 %v1297
      %v1363 = vunpack.c.l.b16 %v1298
      %v1364 = vunpack.c.h.b16 %v1298
      %v1365 = vunpack.c.l.b16 %v1299
      %v1366 = vunpack.c.h.b16 %v1299
      %v1367 = vunpack.c.l.b16 %v1300
      %v1368 = vunpack.c.h.b16 %v1300
      %v1369 = vunpack.c.l.b16 %v1301
      %v1370 = vunpack.c.h.b16 %v1301
      %v1371 = vunpack.c.l.b16 %v1302
      %v1372 = vunpack.c.h.b16 %v1302
      %v1373 = vunpack.c.l.b16 %v1303
      %v1374 = vunpack.c.h.b16 %v1303
      %v1375 = vunpack.c.l.b16 %v1304
      %v1376 = vunpack.c.h.b16 %v1304
      %v1377 = vunpack.c.l.b16 %v1305
      %v1378 = vunpack.c.h.b16 %v1305
      %v1379 = vunpack.c.l.b16 %v1306
      %v1380 = vunpack.c.h.b16 %v1306
      %v1381 = vunpack.c.l.b16 %v1307
      %v1382 = vunpack.c.h.b16 %v1307
      %v1383 = vunpack.c.l.b16 %v1308
      %v1384 = vunpack.c.h.b16 %v1308
      %v1385 = vunpack.c.l.b16 %v1309
      %v1386 = vunpack.c.h.b16 %v1309
      %v1387 = vunpack.c.l.b16 %v1310
      %v1388 = vunpack.c.h.b16 %v1310
      %v1389 = vunpack.c.l.b16 %v1311
      %v1390 = vunpack.c.h.b16 %v1311
      %v1391 = vunpack.c.l.b16 %v1312
      %v1392 = vunpack.c.h.b16 %v1312
      %v1393 = vunpack.c.l.b16 %v1313
      %v1394 = vunpack.c.h.b16 %v1313
      %v1395 = vunpack.c.l.b16 %v1314
      %v1396 = vunpack.c.h.b16 %v1314
      %v1397 = vunpack.c.l.b16 %v1315
      %v1398 = vunpack.c.h.b16 %v1315
      %v1399 = vunpack.c.l.b16 %v1316
      %v1400 = vunpack.c.h.b16 %v1316
      %v1401 = vunpack.c.l.b16 %v1317
      %v1402 = vunpack.c.h.b16 %v1317
      %v1403 = vunpack.c.l.b16 %v1318
      %v1404 = vunpack.c.h.b16 %v1318
      %v1405 = vunpack.c.l.b16 %v1319
      %v1406 = vunpack.c.h.b16 %v1319
      %v1407 = vunpack.c.l.b16 %v1320
      %v1408 = vunpack.c.h.b16 %v1320
      %v1409 = vunpack.c.l.b16 %v1321
      %v1410 = vunpack.c.h.b16 %v1321
      %v1411 = vunpack.c.l.b16 %v1322
      %v1412 = vunpack.c.h.b16 %v1322
      %v1413 = vunpack.c.l.b16 %v1323
      %v1414 = vunpack.c.h.b16 %v1323
      %v1415 = vunpack.c.l.b16 %v1324
      %v1416 = vunpack.c.h.b16 %v1324
      %v1417 = vunpack.c.l.b16 %v1325
      %v1418 = vunpack.c.h.b16 %v1325
      %v1419 = vunpack.c.l.b16 %v1326
      %v1420 = vunpack.c.h.b16 %v1326
      %v1421 = vunpack.c.l.b16 %v1327
      %v1422 = vunpack.c.h.b16 %v1327
      %v1423 = vunpack.c.l.b16 %v1328
      %v1424 = vunpack.c.h.b16 %v1328
      %v1425 = vpack.c.b16 %v1361, %v1361
      %v1426 = vpack.c.b16 %v1362, %v1362
      %v1427 = vpack.c.b16 %v1363, %v1363
      %v1428 = vpack.c.b16 %v1364, %v1364
      %v1429 = vpack.c.b16 %v1365, %v1365
      %v1430 = vpack.c.b16 %v1366, %v1366
      %v1431 = vpack.c.b16 %v1367, %v1367
      %v1432 = vpack.c.b16 %v1368, %v1368
      %v1433 = vpack.c.b16 %v1369, %v1369
      %v1434 = vpack.c.b16 %v1370, %v1370
      %v1435 = vpack.c.b16 %v1371, %v1371
      %v1436 = vpack.c.b16 %v1372, %v1372
      %v1437 = vpack.c.b16 %v1373, %v1373
      %v1438 = vpack.c.b16 %v1374, %v1374
      %v1439 = vpack.c.b16 %v1375, %v1375
      %v1440 = vpack.c.b16 %v1376, %v1376
      %v1441 = vpack.c.b16 %v1377, %v1377
      %v1442 = vpack.c.b16 %v1378, %v1378
      %v1443 = vpack.c.b16 %v1379, %v1379
      %v1444 = vpack.c.b16 %v1380, %v1380
      %v1445 = vpack.c.b16 %v1381, %v1381
      %v1446 = vpack.c.b16 %v1382, %v1382
      %v1447 = vpack.c.b16 %v1383, %v1383
      %v1448 = vpack.c.b16 %v1384, %v1384
      %v1449 = vpack.c.b16 %v1385, %v1385
      %v1450 = vpack.c.b16 %v1386, %v1386
      %v1451 = vpack.c.b16 %v1387, %v1387
      %v1452 = vpack.c.b16 %v1388, %v1388
      %v1453 = vpack.c.b16 %v1389, %v1389
      %v1454 = vpack.c.b16 %v1390, %v1390
      %v1455 = vpack.c.b16 %v1391, %v1391
      %v1456 = vpack.c.b16 %v1392, %v1392
      %v1457 = vpack.c.b16 %v1393, %v1393
      %v1458 = vpack.c.b16 %v1394, %v1394
      %v1459 = vpack.c.b16 %v1395, %v1395
      %v1460 = vpack.c.b16 %v1396, %v1396
      %v1461 = vpack.c.b16 %v1397, %v1397
      %v1462 = vpack.c.b16 %v1398, %v1398
      %v1463 = vpack.c.b16 %v1399, %v1399
      %v1464 = vpack.c.b16 %v1400, %v1400
      %v1465 = vpack.c.b16 %v1401, %v1401
      %v1466 = vpack.c.b16 %v1402, %v1402
      %v1467 = vpack.c.b16 %v1403, %v1403
      %v1468 = vpack.c.b16 %v1404, %v1404
      %v1469 = vpack.c.b16 %v1405, %v1405
      %v1470 = vpack.c.b16 %v1406, %v1406
      %v1471 = vpack.c.b16 %v1407, %v1407
      %v1472 = vpack.c.b16 %v1408, %v1408
      %v1473 = vpack.c.b16 %v1409, %v1409
      %v1474 = vpack.c.b16 %v1410, %v1410
      %v1475 = vpack.c.b16 %v1411, %v1411
      %v1476 = vpack.c.b16 %v1412, %v1412
      %v1477 = vpack.c.b16 %v1413, %v1413
      %v1478 = vpack.c.b16 %v1414, %v1414
      %v1479 = vpack.c.b16 %v1415, %v1415
      %v1480 = vpack.c.b16 %v1416, %v1416
      %v1481 = vpack.c.b16 %v1417, %v1417
      %v1482 = vpack.c.b16 %v1418, %v1418
      %v1483 = vpack.c.b16 %v1419, %v1419
      %v1484 = vpack.c.b16 %v1420, %v1420
      %v1485 = vpack.c.b16 %v1421, %v1421
      %v1486 = vpack.c.b16 %v1422, %v1422
      %v1487 = vpack.c.b16 %v1423, %v1423
      %v1488 = vpack.c.b16 %v1424, %v1424
      %1553 = vst [vmem:[%s267] sm:$0xf] %v1425
      %1554 = vst [vmem:[%s267 + $0x4] sm:$0xf] %v1426
      %1555 = vst [vmem:[%s267 + $0x8] sm:$0xf] %v1427
      %1556 = vst [vmem:[%s267 + $0xc] sm:$0xf] %v1428
      %1557 = vst [vmem:[%s267 + $0x10] sm:$0xf] %v1429
      %1558 = vst [vmem:[%s267 + $0x14] sm:$0xf] %v1430
      %1559 = vst [vmem:[%s267 + $0x18] sm:$0xf] %v1431
      %1560 = vst [vmem:[%s267 + $0x1c] sm:$0xf] %v1432
      %1561 = vst [vmem:[%s267 + $0x20] sm:$0xf] %v1433
      %1562 = vst [vmem:[%s267 + $0x24] sm:$0xf] %v1434
      %1563 = vst [vmem:[%s267 + $0x28] sm:$0xf] %v1435
      %1564 = vst [vmem:[%s267 + $0x2c] sm:$0xf] %v1436
      %1565 = vst [vmem:[%s267 + $0x30] sm:$0xf] %v1437
      %1566 = vst [vmem:[%s267 + $0x34] sm:$0xf] %v1438
      %1567 = vst [vmem:[%s267 + $0x38] sm:$0xf] %v1439
      %1568 = vst [vmem:[%s267 + $0x3c] sm:$0xf] %v1440
      %1569 = vst [vmem:[%s267 + $0x40] sm:$0xf] %v1441
      %1570 = vst [vmem:[%s267 + $0x44] sm:$0xf] %v1442
      %1571 = vst [vmem:[%s267 + $0x48] sm:$0xf] %v1443
      %1572 = vst [vmem:[%s267 + $0x4c] sm:$0xf] %v1444
      %1573 = vst [vmem:[%s267 + $0x50] sm:$0xf] %v1445
      %1574 = vst [vmem:[%s267 + $0x54] sm:$0xf] %v1446
      %1575 = vst [vmem:[%s267 + $0x58] sm:$0xf] %v1447
      %1576 = vst [vmem:[%s267 + $0x5c] sm:$0xf] %v1448
      %1577 = vst [vmem:[%s267 + $0x60] sm:$0xf] %v1449
      %1578 = vst [vmem:[%s267 + $0x64] sm:$0xf] %v1450
      %1579 = vst [vmem:[%s267 + $0x68] sm:$0xf] %v1451
      %1580 = vst [vmem:[%s267 + $0x6c] sm:$0xf] %v1452
      %1581 = vst [vmem:[%s267 + $0x70] sm:$0xf] %v1453
      %1582 = vst [vmem:[%s267 + $0x74] sm:$0xf] %v1454
      %1583 = vst [vmem:[%s267 + $0x78] sm:$0xf] %v1455
      %1584 = vst [vmem:[%s267 + $0x7c] sm:$0xf] %v1456
      %1585 = vst [vmem:[%s267 + $0x80] sm:$0xf] %v1457
      %1586 = vst [vmem:[%s267 + $0x84] sm:$0xf] %v1458
      %1587 = vst [vmem:[%s267 + $0x88] sm:$0xf] %v1459
      %1588 = vst [vmem:[%s267 + $0x8c] sm:$0xf] %v1460
      %1589 = vst [vmem:[%s267 + $0x90] sm:$0xf] %v1461
      %1590 = vst [vmem:[%s267 + $0x94] sm:$0xf] %v1462
      %1591 = vst [vmem:[%s267 + $0x98] sm:$0xf] %v1463
      %1592 = vst [vmem:[%s267 + $0x9c] sm:$0xf] %v1464
      %1593 = vst [vmem:[%s267 + $0xa0] sm:$0xf] %v1465
      %1594 = vst [vmem:[%s267 + $0xa4] sm:$0xf] %v1466
      %1595 = vst [vmem:[%s267 + $0xa8] sm:$0xf] %v1467
      %1596 = vst [vmem:[%s267 + $0xac] sm:$0xf] %v1468
      %1597 = vst [vmem:[%s267 + $0xb0] sm:$0xf] %v1469
      %1598 = vst [vmem:[%s267 + $0xb4] sm:$0xf] %v1470
      %1599 = vst [vmem:[%s267 + $0xb8] sm:$0xf] %v1471
      %1600 = vst [vmem:[%s267 + $0xbc] sm:$0xf] %v1472
      %1601 = vst [vmem:[%s267 + $0xc0] sm:$0xf] %v1473
      %1602 = vst [vmem:[%s267 + $0xc4] sm:$0xf] %v1474
      %1603 = vst [vmem:[%s267 + $0xc8] sm:$0xf] %v1475
      %1604 = vst [vmem:[%s267 + $0xcc] sm:$0xf] %v1476
      %1605 = vst [vmem:[%s267 + $0xd0] sm:$0xf] %v1477
      %1606 = vst [vmem:[%s267 + $0xd4] sm:$0xf] %v1478
      %1607 = vst [vmem:[%s267 + $0xd8] sm:$0xf] %v1479
      %1608 = vst [vmem:[%s267 + $0xdc] sm:$0xf] %v1480
      %1609 = vst [vmem:[%s267 + $0xe0] sm:$0xf] %v1481
      %1610 = vst [vmem:[%s267 + $0xe4] sm:$0xf] %v1482
      %1611 = vst [vmem:[%s267 + $0xe8] sm:$0xf] %v1483
      %1612 = vst [vmem:[%s267 + $0xec] sm:$0xf] %v1484
      %1613 = vst [vmem:[%s267 + $0xf0] sm:$0xf] %v1485
      %1614 = vst [vmem:[%s267 + $0xf4] sm:$0xf] %v1486
      %1615 = vst [vmem:[%s267 + $0xf8] sm:$0xf] %v1487
      %1616 = vst [vmem:[%s267 + $0xfc] sm:$0xf] %v1488
      %s1617 = smul.u32 64, %s20
      %p1618 = scmp.lt.s32.totalorder %s1617, 255
      %s1619 = scalar_select %p1618, %s1617, 255
      %p1620 = scmp.lt.s32.totalorder %s19, 0
      %s1621 = scalar_select %p1620, %s19, 0
      %s1622 = sadd.s32 %s1621, %s1619
      %s1623 = smul.addr %s1622, 4
      %s1624 = scalar_lea.vmem %s4, %s1623
      // Predicated region
      $region37: #{stem_forward.2} parent=35 // pred_check
        %p1625 = pneg %p151
      $region38: #{stem_forward.2} parent=35 // pred_check_branch
        %1627 = sbr.rel (%p1625) target = $region40
      $region39: #{stem_forward.2} parent=35 // pred_region
        %s1628 = smul.u32 64, %s20
      $region40: #{stem_forward.2} parent=35 // pred_fallthru
        _
    $region36: #{stem_forward.2} parent=5 // pred_fallthru
      _
    %p1629 = scmp.le.s32.totalorder 2, %s10
    // Predicated region
    $region41: #{stem_forward.2} parent=5 // pred_check
      %p1630 = pneg %p1629
    $region42: #{stem_forward.2} parent=5 // pred_check_branch
      %1632 = sbr.rel (%p1630) target = $region44
    $region43: #{stem_forward.2} parent=5 // pred_region
      %s1633 = ssub.s32 %s10, 2
      // Predicated region
      $region45: #{stem_forward.2} parent=43 // pred_check
        %p1634 = pneg %p157
      $region46: #{stem_forward.2} parent=43 // pred_check_branch
        %1636 = sbr.rel (%p1634) target = $region48
      $region47: #{stem_forward.2} parent=43 // pred_region
        %s1637 = smul.u32 64, %s22
        %p1638 = scmp.lt.s32.totalorder %s1637, 255
        %s1639 = scalar_select %p1638, %s1637, 255
        %p1640 = scmp.lt.s32.totalorder %s21, 0
        %s1641 = scalar_select %p1640, %s21, 0
        %s1642 = sadd.s32 %s1641, %s1639
        %s1643 = smul.addr %s1642, 4
        %s1644 = scalar_lea.vmem %s4, %s1643
      $region48: #{stem_forward.2} parent=43 // pred_fallthru
        _
    $region44: #{stem_forward.2} parent=5 // pred_fallthru
      _
  $region6: #{stem_forward.2} parent=0 // loop_footer
    %s14 = sadd.s32 1, %s10
  $region7: #{stem_forward.2} parent=0 // loop_footer_branch
    %9 = sbr.rel target = $region3
  $region8: #{stem_forward.2} parent=0 // loop_exit
    _

// kernel: stem_forward.3
$region0: #{stem_forward.3}
  #allocation0 [shape = 'u32[]', space=smem, size = 0x4, offset = 0x4, fixed_abs, tag = 'smem constant byte address 0x4 - core index']
  #allocation1 [shape = 'u32[144,128]{1,0:T(1,128)}', space=vmem, size = 0x12000, scoped, tag = 'internal scratch']
  %s0 = inlined_call_operand.vmem [shape: bf16[9,512,128], index: 0, kind: input, shape index: {}]
  %s1 = inlined_call_operand.hbm [shape: bf16[512,128], index: 1, kind: output, shape index: {}]
  %s2 = sld [smem:[#allocation0]]
  $region14: #{stem_forward.3} parent=0
    _
  %s4 = ssub.s32 1, %s2
  %s5 = scalar_select 0, %s4, %s2
  $region1: #{stem_forward.3} parent=0
    #allocation2 [shape = 'u8[131072]{0}', space=vmem, size = 0x20000, scoped, tag = 'output window, operand 0, single buffered']
    #allocation3 [shape = 's32[1]{0}', space=sflag, size = 0x4, scoped, tag = 'scoped memory for stem_forward.3']
    %6 = vsyncpa [#allocation3], 0
    // Predicated region
    $region2: #{stem_forward.3} parent=1 // pred_check
      _
    $region3: #{stem_forward.3} parent=1 // pred_check_branch
      %8 = sbr.rel (0) target = $region5
    $region4: #{stem_forward.3} parent=1 // pred_region
      _
    $region5: #{stem_forward.3} parent=1 // pred_fallthru
      _
    %v10 = vld [vmem:[%s0] sm:$0xf]
    %v11 = vld [vmem:[%s0 + $0x4] sm:$0xf]
    %v12 = vld [vmem:[%s0 + $0x8] sm:$0xf]
    %v13 = vld [vmem:[%s0 + $0xc] sm:$0xf]
    %v14 = vld [vmem:[%s0 + $0x10] sm:$0xf]
    %v15 = vld [vmem:[%s0 + $0x14] sm:$0xf]
    %v16 = vld [vmem:[%s0 + $0x18] sm:$0xf]
    %v17 = vld [vmem:[%s0 + $0x1c] sm:$0xf]
    %v18 = vld [vmem:[%s0 + $0x20] sm:$0xf]
    %v19 = vld [vmem:[%s0 + $0x24] sm:$0xf]
    %v20 = vld [vmem:[%s0 + $0x28] sm:$0xf]
    %v21 = vld [vmem:[%s0 + $0x2c] sm:$0xf]
    %v22 = vld [vmem:[%s0 + $0x30] sm:$0xf]
    %v23 = vld [vmem:[%s0 + $0x34] sm:$0xf]
    %v24 = vld [vmem:[%s0 + $0x38] sm:$0xf]
    %v25 = vld [vmem:[%s0 + $0x3c] sm:$0xf]
    %v26 = vld [vmem:[%s0 + $0x40] sm:$0xf]
    %v27 = vld [vmem:[%s0 + $0x44] sm:$0xf]
    %v28 = vld [vmem:[%s0 + $0x48] sm:$0xf]
    %v29 = vld [vmem:[%s0 + $0x4c] sm:$0xf]
    %v30 = vld [vmem:[%s0 + $0x50] sm:$0xf]
    %v31 = vld [vmem:[%s0 + $0x54] sm:$0xf]
    %v32 = vld [vmem:[%s0 + $0x58] sm:$0xf]
    %v33 = vld [vmem:[%s0 + $0x5c] sm:$0xf]
    %v34 = vld [vmem:[%s0 + $0x60] sm:$0xf]
    %v35 = vld [vmem:[%s0 + $0x64] sm:$0xf]
    %v36 = vld [vmem:[%s0 + $0x68] sm:$0xf]
    %v37 = vld [vmem:[%s0 + $0x6c] sm:$0xf]
    %v38 = vld [vmem:[%s0 + $0x70] sm:$0xf]
    %v39 = vld [vmem:[%s0 + $0x74] sm:$0xf]
    %v40 = vld [vmem:[%s0 + $0x78] sm:$0xf]
    %v41 = vld [vmem:[%s0 + $0x7c] sm:$0xf]
    %v42 = vld [vmem:[%s0 + $0x80] sm:$0xf]
    %v43 = vld [vmem:[%s0 + $0x84] sm:$0xf]
    %v44 = vld [vmem:[%s0 + $0x88] sm:$0xf]
    %v45 = vld [vmem:[%s0 + $0x8c] sm:$0xf]
    %v46 = vld [vmem:[%s0 + $0x90] sm:$0xf]
    %v47 = vld [vmem:[%s0 + $0x94] sm:$0xf]
    %v48 = vld [vmem:[%s0 + $0x98] sm:$0xf]
    %v49 = vld [vmem:[%s0 + $0x9c] sm:$0xf]
    %v50 = vld [vmem:[%s0 + $0xa0] sm:$0xf]
    %v51 = vld [vmem:[%s0 + $0xa4] sm:$0xf]
    %v52 = vld [vmem:[%s0 + $0xa8] sm:$0xf]
    %v53 = vld [vmem:[%s0 + $0xac] sm:$0xf]
    %v54 = vld [vmem:[%s0 + $0xb0] sm:$0xf]
    %v55 = vld [vmem:[%s0 + $0xb4] sm:$0xf]
    %v56 = vld [vmem:[%s0 + $0xb8] sm:$0xf]
    %v57 = vld [vmem:[%s0 + $0xbc] sm:$0xf]
    %v58 = vld [vmem:[%s0 + $0xc0] sm:$0xf]
    %v59 = vld [vmem:[%s0 + $0xc4] sm:$0xf]
    %v60 = vld [vmem:[%s0 + $0xc8] sm:$0xf]
    %v61 = vld [vmem:[%s0 + $0xcc] sm:$0xf]
    %v62 = vld [vmem:[%s0 + $0xd0] sm:$0xf]
    %v63 = vld [vmem:[%s0 + $0xd4] sm:$0xf]
    %v64 = vld [vmem:[%s0 + $0xd8] sm:$0xf]
    %v65 = vld [vmem:[%s0 + $0xdc] sm:$0xf]
    %v66 = vld [vmem:[%s0 + $0xe0] sm:$0xf]
    %v67 = vld [vmem:[%s0 + $0xe4] sm:$0xf]
    %v68 = vld [vmem:[%s0 + $0xe8] sm:$0xf]
    %v69 = vld [vmem:[%s0 + $0xec] sm:$0xf]
    %v70 = vld [vmem:[%s0 + $0xf0] sm:$0xf]
    %v71 = vld [vmem:[%s0 + $0xf4] sm:$0xf]
    %v72 = vld [vmem:[%s0 + $0xf8] sm:$0xf]
    %v73 = vld [vmem:[%s0 + $0xfc] sm:$0xf]
    %v74 = vld [vmem:[%s0 + $0x100] sm:$0xf]
    %v75 = vld [vmem:[%s0 + $0x104] sm:$0xf]
    %v76 = vld [vmem:[%s0 + $0x108] sm:$0xf]
    %v77 = vld [vmem:[%s0 + $0x10c] sm:$0xf]
    %v78 = vld [vmem:[%s0 + $0x110] sm:$0xf]
    %v79 = vld [vmem:[%s0 + $0x114] sm:$0xf]
    %v80 = vld [vmem:[%s0 + $0x118] sm:$0xf]
    %v81 = vld [vmem:[%s0 + $0x11c] sm:$0xf]
    %v82 = vld [vmem:[%s0 + $0x120] sm:$0xf]
    %v83 = vld [vmem:[%s0 + $0x124] sm:$0xf]
    %v84 = vld [vmem:[%s0 + $0x128] sm:$0xf]
    %v85 = vld [vmem:[%s0 + $0x12c] sm:$0xf]
    %v86 = vld [vmem:[%s0 + $0x130] sm:$0xf]
    %v87 = vld [vmem:[%s0 + $0x134] sm:$0xf]
    %v88 = vld [vmem:[%s0 + $0x138] sm:$0xf]
    %v89 = vld [vmem:[%s0 + $0x13c] sm:$0xf]
    %v90 = vld [vmem:[%s0 + $0x140] sm:$0xf]
    %v91 = vld [vmem:[%s0 + $0x144] sm:$0xf]
    %v92 = vld [vmem:[%s0 + $0x148] sm:$0xf]
    %v93 = vld [vmem:[%s0 + $0x14c] sm:$0xf]
    %v94 = vld [vmem:[%s0 + $0x150] sm:$0xf]
    %v95 = vld [vmem:[%s0 + $0x154] sm:$0xf]
    %v96 = vld [vmem:[%s0 + $0x158] sm:$0xf]
    %v97 = vld [vmem:[%s0 + $0x15c] sm:$0xf]
    %v98 = vld [vmem:[%s0 + $0x160] sm:$0xf]
    %v99 = vld [vmem:[%s0 + $0x164] sm:$0xf]
    %v100 = vld [vmem:[%s0 + $0x168] sm:$0xf]
    %v101 = vld [vmem:[%s0 + $0x16c] sm:$0xf]
    %v102 = vld [vmem:[%s0 + $0x170] sm:$0xf]
    %v103 = vld [vmem:[%s0 + $0x174] sm:$0xf]
    %v104 = vld [vmem:[%s0 + $0x178] sm:$0xf]
    %v105 = vld [vmem:[%s0 + $0x17c] sm:$0xf]
    %v106 = vld [vmem:[%s0 + $0x180] sm:$0xf]
    %v107 = vld [vmem:[%s0 + $0x184] sm:$0xf]
    %v108 = vld [vmem:[%s0 + $0x188] sm:$0xf]
    %v109 = vld [vmem:[%s0 + $0x18c] sm:$0xf]
    %v110 = vld [vmem:[%s0 + $0x190] sm:$0xf]
    %v111 = vld [vmem:[%s0 + $0x194] sm:$0xf]
    %v112 = vld [vmem:[%s0 + $0x198] sm:$0xf]
    %v113 = vld [vmem:[%s0 + $0x19c] sm:$0xf]
    %v114 = vld [vmem:[%s0 + $0x1a0] sm:$0xf]
    %v115 = vld [vmem:[%s0 + $0x1a4] sm:$0xf]
    %v116 = vld [vmem:[%s0 + $0x1a8] sm:$0xf]
    %v117 = vld [vmem:[%s0 + $0x1ac] sm:$0xf]
    %v118 = vld [vmem:[%s0 + $0x1b0] sm:$0xf]
    %v119 = vld [vmem:[%s0 + $0x1b4] sm:$0xf]
    %v120 = vld [vmem:[%s0 + $0x1b8] sm:$0xf]
    %v121 = vld [vmem:[%s0 + $0x1bc] sm:$0xf]
    %v122 = vld [vmem:[%s0 + $0x1c0] sm:$0xf]
    %v123 = vld [vmem:[%s0 + $0x1c4] sm:$0xf]
    %v124 = vld [vmem:[%s0 + $0x1c8] sm:$0xf]
    %v125 = vld [vmem:[%s0 + $0x1cc] sm:$0xf]
    %v126 = vld [vmem:[%s0 + $0x1d0] sm:$0xf]
    %v127 = vld [vmem:[%s0 + $0x1d4] sm:$0xf]
    %v128 = vld [vmem:[%s0 + $0x1d8] sm:$0xf]
    %v129 = vld [vmem:[%s0 + $0x1dc] sm:$0xf]
    %v130 = vld [vmem:[%s0 + $0x1e0] sm:$0xf]
    %v131 = vld [vmem:[%s0 + $0x1e4] sm:$0xf]
    %v132 = vld [vmem:[%s0 + $0x1e8] sm:$0xf]
    %v133 = vld [vmem:[%s0 + $0x1ec] sm:$0xf]
    %v134 = vld [vmem:[%s0 + $0x1f0] sm:$0xf]
    %v135 = vld [vmem:[%s0 + $0x1f4] sm:$0xf]
    %v136 = vld [vmem:[%s0 + $0x1f8] sm:$0xf]
    %v137 = vld [vmem:[%s0 + $0x1fc] sm:$0xf]
    %v138 = vld [vmem:[%s0 + $0x200] sm:$0xf]
    %v139 = vld [vmem:[%s0 + $0x204] sm:$0xf]
    %v140 = vld [vmem:[%s0 + $0x208] sm:$0xf]
    %v141 = vld [vmem:[%s0 + $0x20c] sm:$0xf]
    %v142 = vld [vmem:[%s0 + $0x210] sm:$0xf]
    %v143 = vld [vmem:[%s0 + $0x214] sm:$0xf]
    %v144 = vld [vmem:[%s0 + $0x218] sm:$0xf]
    %v145 = vld [vmem:[%s0 + $0x21c] sm:$0xf]
    %v146 = vld [vmem:[%s0 + $0x220] sm:$0xf]
    %v147 = vld [vmem:[%s0 + $0x224] sm:$0xf]
    %v148 = vld [vmem:[%s0 + $0x228] sm:$0xf]
    %v149 = vld [vmem:[%s0 + $0x22c] sm:$0xf]
    %v150 = vld [vmem:[%s0 + $0x230] sm:$0xf]
    %v151 = vld [vmem:[%s0 + $0x234] sm:$0xf]
    %v152 = vld [vmem:[%s0 + $0x238] sm:$0xf]
    %v153 = vld [vmem:[%s0 + $0x23c] sm:$0xf]
    %v154 = vld [vmem:[%s0 + $0x240] sm:$0xf]
    %v155 = vld [vmem:[%s0 + $0x244] sm:$0xf]
    %v156 = vld [vmem:[%s0 + $0x248] sm:$0xf]
    %v157 = vld [vmem:[%s0 + $0x24c] sm:$0xf]
    %v158 = vld [vmem:[%s0 + $0x250] sm:$0xf]
    %v159 = vld [vmem:[%s0 + $0x254] sm:$0xf]
    %v160 = vld [vmem:[%s0 + $0x258] sm:$0xf]
    %v161 = vld [vmem:[%s0 + $0x25c] sm:$0xf]
    %v162 = vld [vmem:[%s0 + $0x260] sm:$0xf]
    %v163 = vld [vmem:[%s0 + $0x264] sm:$0xf]
    %v164 = vld [vmem:[%s0 + $0x268] sm:$0xf]
    %v165 = vld [vmem:[%s0 + $0x26c] sm:$0xf]
    %v166 = vld [vmem:[%s0 + $0x270] sm:$0xf]
    %v167 = vld [vmem:[%s0 + $0x274] sm:$0xf]
    %v168 = vld [vmem:[%s0 + $0x278] sm:$0xf]
    %v169 = vld [vmem:[%s0 + $0x27c] sm:$0xf]
    %v170 = vld [vmem:[%s0 + $0x280] sm:$0xf]
    %v171 = vld [vmem:[%s0 + $0x284] sm:$0xf]
    %v172 = vld [vmem:[%s0 + $0x288] sm:$0xf]
    %v173 = vld [vmem:[%s0 + $0x28c] sm:$0xf]
    %v174 = vld [vmem:[%s0 + $0x290] sm:$0xf]
    %v175 = vld [vmem:[%s0 + $0x294] sm:$0xf]
    %v176 = vld [vmem:[%s0 + $0x298] sm:$0xf]
    %v177 = vld [vmem:[%s0 + $0x29c] sm:$0xf]
    %v178 = vld [vmem:[%s0 + $0x2a0] sm:$0xf]
    %v179 = vld [vmem:[%s0 + $0x2a4] sm:$0xf]
    %v180 = vld [vmem:[%s0 + $0x2a8] sm:$0xf]
    %v181 = vld [vmem:[%s0 + $0x2ac] sm:$0xf]
    %v182 = vld [vmem:[%s0 + $0x2b0] sm:$0xf]
    %v183 = vld [vmem:[%s0 + $0x2b4] sm:$0xf]
    %v184 = vld [vmem:[%s0 + $0x2b8] sm:$0xf]
    %v185 = vld [vmem:[%s0 + $0x2bc] sm:$0xf]
    %v186 = vld [vmem:[%s0 + $0x2c0] sm:$0xf]
    %v187 = vld [vmem:[%s0 + $0x2c4] sm:$0xf]
    %v188 = vld [vmem:[%s0 + $0x2c8] sm:$0xf]
    %v189 = vld [vmem:[%s0 + $0x2cc] sm:$0xf]
    %v190 = vld [vmem:[%s0 + $0x2d0] sm:$0xf]
    %v191 = vld [vmem:[%s0 + $0x2d4] sm:$0xf]
    %v192 = vld [vmem:[%s0 + $0x2d8] sm:$0xf]
    %v193 = vld [vmem:[%s0 + $0x2dc] sm:$0xf]
    %v194 = vld [vmem:[%s0 + $0x2e0] sm:$0xf]
    %v195 = vld [vmem:[%s0 + $0x2e4] sm:$0xf]
    %v196 = vld [vmem:[%s0 + $0x2e8] sm:$0xf]
    %v197 = vld [vmem:[%s0 + $0x2ec] sm:$0xf]
    %v198 = vld [vmem:[%s0 + $0x2f0] sm:$0xf]
    %v199 = vld [vmem:[%s0 + $0x2f4] sm:$0xf]
    %v200 = vld [vmem:[%s0 + $0x2f8] sm:$0xf]
    %v201 = vld [vmem:[%s0 + $0x2fc] sm:$0xf]
    %v202 = vld [vmem:[%s0 + $0x300] sm:$0xf]
    %v203 = vld [vmem:[%s0 + $0x304] sm:$0xf]
    %v204 = vld [vmem:[%s0 + $0x308] sm:$0xf]
    %v205 = vld [vmem:[%s0 + $0x30c] sm:$0xf]
    %v206 = vld [vmem:[%s0 + $0x310] sm:$0xf]
    %v207 = vld [vmem:[%s0 + $0x314] sm:$0xf]
    %v208 = vld [vmem:[%s0 + $0x318] sm:$0xf]
    %v209 = vld [vmem:[%s0 + $0x31c] sm:$0xf]
    %v210 = vld [vmem:[%s0 + $0x320] sm:$0xf]
    %v211 = vld [vmem:[%s0 + $0x324] sm:$0xf]
    %v212 = vld [vmem:[%s0 + $0x328] sm:$0xf]
    %v213 = vld [vmem:[%s0 + $0x32c] sm:$0xf]
    %v214 = vld [vmem:[%s0 + $0x330] sm:$0xf]
    %v215 = vld [vmem:[%s0 + $0x334] sm:$0xf]
    %v216 = vld [vmem:[%s0 + $0x338] sm:$0xf]
    %v217 = vld [vmem:[%s0 + $0x33c] sm:$0xf]
    %v218 = vld [vmem:[%s0 + $0x340] sm:$0xf]
    %v219 = vld [vmem:[%s0 + $0x344] sm:$0xf]
    %v220 = vld [vmem:[%s0 + $0x348] sm:$0xf]
    %v221 = vld [vmem:[%s0 + $0x34c] sm:$0xf]
    %v222 = vld [vmem:[%s0 + $0x350] sm:$0xf]
    %v223 = vld [vmem:[%s0 + $0x354] sm:$0xf]
    %v224 = vld [vmem:[%s0 + $0x358] sm:$0xf]
    %v225 = vld [vmem:[%s0 + $0x35c] sm:$0xf]
    %v226 = vld [vmem:[%s0 + $0x360] sm:$0xf]
    %v227 = vld [vmem:[%s0 + $0x364] sm:$0xf]
    %v228 = vld [vmem:[%s0 + $0x368] sm:$0xf]
    %v229 = vld [vmem:[%s0 + $0x36c] sm:$0xf]
    %v230 = vld [vmem:[%s0 + $0x370] sm:$0xf]
    %v231 = vld [vmem:[%s0 + $0x374] sm:$0xf]
    %v232 = vld [vmem:[%s0 + $0x378] sm:$0xf]
    %v233 = vld [vmem:[%s0 + $0x37c] sm:$0xf]
    %v234 = vld [vmem:[%s0 + $0x380] sm:$0xf]
    %v235 = vld [vmem:[%s0 + $0x384] sm:$0xf]
    %v236 = vld [vmem:[%s0 + $0x388] sm:$0xf]
    %v237 = vld [vmem:[%s0 + $0x38c] sm:$0xf]
    %v238 = vld [vmem:[%s0 + $0x390] sm:$0xf]
    %v239 = vld [vmem:[%s0 + $0x394] sm:$0xf]
    %v240 = vld [vmem:[%s0 + $0x398] sm:$0xf]
    %v241 = vld [vmem:[%s0 + $0x39c] sm:$0xf]
    %v242 = vld [vmem:[%s0 + $0x3a0] sm:$0xf]
    %v243 = vld [vmem:[%s0 + $0x3a4] sm:$0xf]
    %v244 = vld [vmem:[%s0 + $0x3a8] sm:$0xf]
    %v245 = vld [vmem:[%s0 + $0x3ac] sm:$0xf]
    %v246 = vld [vmem:[%s0 + $0x3b0] sm:$0xf]
    %v247 = vld [vmem:[%s0 + $0x3b4] sm:$0xf]
    %v248 = vld [vmem:[%s0 + $0x3b8] sm:$0xf]
    %v249 = vld [vmem:[%s0 + $0x3bc] sm:$0xf]
    %v250 = vld [vmem:[%s0 + $0x3c0] sm:$0xf]
    %v251 = vld [vmem:[%s0 + $0x3c4] sm:$0xf]
    %v252 = vld [vmem:[%s0 + $0x3c8] sm:$0xf]
    %v253 = vld [vmem:[%s0 + $0x3cc] sm:$0xf]
    %v254 = vld [vmem:[%s0 + $0x3d0] sm:$0xf]
    %v255 = vld [vmem:[%s0 + $0x3d4] sm:$0xf]
    %v256 = vld [vmem:[%s0 + $0x3d8] sm:$0xf]
    %v257 = vld [vmem:[%s0 + $0x3dc] sm:$0xf]
    %v258 = vld [vmem:[%s0 + $0x3e0] sm:$0xf]
    %v259 = vld [vmem:[%s0 + $0x3e4] sm:$0xf]
    %v260 = vld [vmem:[%s0 + $0x3e8] sm:$0xf]
    %v261 = vld [vmem:[%s0 + $0x3ec] sm:$0xf]
    %v262 = vld [vmem:[%s0 + $0x3f0] sm:$0xf]
    %v263 = vld [vmem:[%s0 + $0x3f4] sm:$0xf]
    %v264 = vld [vmem:[%s0 + $0x3f8] sm:$0xf]
    %v265 = vld [vmem:[%s0 + $0x3fc] sm:$0xf]
    %v266 = vld [vmem:[%s0 + $0x400] sm:$0xf]
    %v267 = vld [vmem:[%s0 + $0x404] sm:$0xf]
    %v268 = vld [vmem:[%s0 + $0x408] sm:$0xf]
    %v269 = vld [vmem:[%s0 + $0x40c] sm:$0xf]
    %v270 = vld [vmem:[%s0 + $0x410] sm:$0xf]
    %v271 = vld [vmem:[%s0 + $0x414] sm:$0xf]
    %v272 = vld [vmem:[%s0 + $0x418] sm:$0xf]
    %v273 = vld [vmem:[%s0 + $0x41c] sm:$0xf]
    %v274 = vld [vmem:[%s0 + $0x420] sm:$0xf]
    %v275 = vld [vmem:[%s0 + $0x424] sm:$0xf]
    %v276 = vld [vmem:[%s0 + $0x428] sm:$0xf]
    %v277 = vld [vmem:[%s0 + $0x42c] sm:$0xf]
    %v278 = vld [vmem:[%s0 + $0x430] sm:$0xf]
    %v279 = vld [vmem:[%s0 + $0x434] sm:$0xf]
    %v280 = vld [vmem:[%s0 + $0x438] sm:$0xf]
    %v281 = vld [vmem:[%s0 + $0x43c] sm:$0xf]
    %v282 = vld [vmem:[%s0 + $0x440] sm:$0xf]
    %v283 = vld [vmem:[%s0 + $0x444] sm:$0xf]
    %v284 = vld [vmem:[%s0 + $0x448] sm:$0xf]
    %v285 = vld [vmem:[%s0 + $0x44c] sm:$0xf]
    %v286 = vld [vmem:[%s0 + $0x450] sm:$0xf]
    %v287 = vld [vmem:[%s0 + $0x454] sm:$0xf]
    %v288 = vld [vmem:[%s0 + $0x458] sm:$0xf]
    %v289 = vld [vmem:[%s0 + $0x45c] sm:$0xf]
    %v290 = vld [vmem:[%s0 + $0x460] sm:$0xf]
    %v291 = vld [vmem:[%s0 + $0x464] sm:$0xf]
    %v292 = vld [vmem:[%s0 + $0x468] sm:$0xf]
    %v293 = vld [vmem:[%s0 + $0x46c] sm:$0xf]
    %v294 = vld [vmem:[%s0 + $0x470] sm:$0xf]
    %v295 = vld [vmem:[%s0 + $0x474] sm:$0xf]
    %v296 = vld [vmem:[%s0 + $0x478] sm:$0xf]
    %v297 = vld [vmem:[%s0 + $0x47c] sm:$0xf]
    %v298 = vld [vmem:[%s0 + $0x480] sm:$0xf]
    %v299 = vld [vmem:[%s0 + $0x484] sm:$0xf]
    %v300 = vld [vmem:[%s0 + $0x488] sm:$0xf]
    %v301 = vld [vmem:[%s0 + $0x48c] sm:$0xf]
    %v302 = vld [vmem:[%s0 + $0x490] sm:$0xf]
    %v303 = vld [vmem:[%s0 + $0x494] sm:$0xf]
    %v304 = vld [vmem:[%s0 + $0x498] sm:$0xf]
    %v305 = vld [vmem:[%s0 + $0x49c] sm:$0xf]
    %v306 = vld [vmem:[%s0 + $0x4a0] sm:$0xf]
    %v307 = vld [vmem:[%s0 + $0x4a4] sm:$0xf]
    %v308 = vld [vmem:[%s0 + $0x4a8] sm:$0xf]
    %v309 = vld [vmem:[%s0 + $0x4ac] sm:$0xf]
    %v310 = vld [vmem:[%s0 + $0x4b0] sm:$0xf]
    %v311 = vld [vmem:[%s0 + $0x4b4] sm:$0xf]
    %v312 = vld [vmem:[%s0 + $0x4b8] sm:$0xf]
    %v313 = vld [vmem:[%s0 + $0x4bc] sm:$0xf]
    %v314 = vld [vmem:[%s0 + $0x4c0] sm:$0xf]
    %v315 = vld [vmem:[%s0 + $0x4c4] sm:$0xf]
    %v316 = vld [vmem:[%s0 + $0x4c8] sm:$0xf]
    %v317 = vld [vmem:[%s0 + $0x4cc] sm:$0xf]
    %v318 = vld [vmem:[%s0 + $0x4d0] sm:$0xf]
    %v319 = vld [vmem:[%s0 + $0x4d4] sm:$0xf]
    %v320 = vld [vmem:[%s0 + $0x4d8] sm:$0xf]
    %v321 = vld [vmem:[%s0 + $0x4dc] sm:$0xf]
    %v322 = vld [vmem:[%s0 + $0x4e0] sm:$0xf]
    %v323 = vld [vmem:[%s0 + $0x4e4] sm:$0xf]
    %v324 = vld [vmem:[%s0 + $0x4e8] sm:$0xf]
    %v325 = vld [vmem:[%s0 + $0x4ec] sm:$0xf]
    %v326 = vld [vmem:[%s0 + $0x4f0] sm:$0xf]
    %v327 = vld [vmem:[%s0 + $0x4f4] sm:$0xf]
    %v328 = vld [vmem:[%s0 + $0x4f8] sm:$0xf]
    %v329 = vld [vmem:[%s0 + $0x4fc] sm:$0xf]
    %v330 = vld [vmem:[%s0 + $0x500] sm:$0xf]
    %v331 = vld [vmem:[%s0 + $0x504] sm:$0xf]
    %v332 = vld [vmem:[%s0 + $0x508] sm:$0xf]
    %v333 = vld [vmem:[%s0 + $0x50c] sm:$0xf]
    %v334 = vld [vmem:[%s0 + $0x510] sm:$0xf]
    %v335 = vld [vmem:[%s0 + $0x514] sm:$0xf]
    %v336 = vld [vmem:[%s0 + $0x518] sm:$0xf]
    %v337 = vld [vmem:[%s0 + $0x51c] sm:$0xf]
    %v338 = vld [vmem:[%s0 + $0x520] sm:$0xf]
    %v339 = vld [vmem:[%s0 + $0x524] sm:$0xf]
    %v340 = vld [vmem:[%s0 + $0x528] sm:$0xf]
    %v341 = vld [vmem:[%s0 + $0x52c] sm:$0xf]
    %v342 = vld [vmem:[%s0 + $0x530] sm:$0xf]
    %v343 = vld [vmem:[%s0 + $0x534] sm:$0xf]
    %v344 = vld [vmem:[%s0 + $0x538] sm:$0xf]
    %v345 = vld [vmem:[%s0 + $0x53c] sm:$0xf]
    %v346 = vld [vmem:[%s0 + $0x540] sm:$0xf]
    %v347 = vld [vmem:[%s0 + $0x544] sm:$0xf]
    %v348 = vld [vmem:[%s0 + $0x548] sm:$0xf]
    %v349 = vld [vmem:[%s0 + $0x54c] sm:$0xf]
    %v350 = vld [vmem:[%s0 + $0x550] sm:$0xf]
    %v351 = vld [vmem:[%s0 + $0x554] sm:$0xf]
    %v352 = vld [vmem:[%s0 + $0x558] sm:$0xf]
    %v353 = vld [vmem:[%s0 + $0x55c] sm:$0xf]
    %v354 = vld [vmem:[%s0 + $0x560] sm:$0xf]
    %v355 = vld [vmem:[%s0 + $0x564] sm:$0xf]
    %v356 = vld [vmem:[%s0 + $0x568] sm:$0xf]
    %v357 = vld [vmem:[%s0 + $0x56c] sm:$0xf]
    %v358 = vld [vmem:[%s0 + $0x570] sm:$0xf]
    %v359 = vld [vmem:[%s0 + $0x574] sm:$0xf]
    %v360 = vld [vmem:[%s0 + $0x578] sm:$0xf]
    %v361 = vld [vmem:[%s0 + $0x57c] sm:$0xf]
    %v362 = vld [vmem:[%s0 + $0x580] sm:$0xf]
    %v363 = vld [vmem:[%s0 + $0x584] sm:$0xf]
    %v364 = vld [vmem:[%s0 + $0x588] sm:$0xf]
    %v365 = vld [vmem:[%s0 + $0x58c] sm:$0xf]
    %v366 = vld [vmem:[%s0 + $0x590] sm:$0xf]
    %v367 = vld [vmem:[%s0 + $0x594] sm:$0xf]
    %v368 = vld [vmem:[%s0 + $0x598] sm:$0xf]
    %v369 = vld [vmem:[%s0 + $0x59c] sm:$0xf]
    %v370 = vld [vmem:[%s0 + $0x5a0] sm:$0xf]
    %v371 = vld [vmem:[%s0 + $0x5a4] sm:$0xf]
    %v372 = vld [vmem:[%s0 + $0x5a8] sm:$0xf]
    %v373 = vld [vmem:[%s0 + $0x5ac] sm:$0xf]
    %v374 = vld [vmem:[%s0 + $0x5b0] sm:$0xf]
    %v375 = vld [vmem:[%s0 + $0x5b4] sm:$0xf]
    %v376 = vld [vmem:[%s0 + $0x5b8] sm:$0xf]
    %v377 = vld [vmem:[%s0 + $0x5bc] sm:$0xf]
    %v378 = vld [vmem:[%s0 + $0x5c0] sm:$0xf]
    %v379 = vld [vmem:[%s0 + $0x5c4] sm:$0xf]
    %v380 = vld [vmem:[%s0 + $0x5c8] sm:$0xf]
    %v381 = vld [vmem:[%s0 + $0x5cc] sm:$0xf]
    %v382 = vld [vmem:[%s0 + $0x5d0] sm:$0xf]
    %v383 = vld [vmem:[%s0 + $0x5d4] sm:$0xf]
    %v384 = vld [vmem:[%s0 + $0x5d8] sm:$0xf]
    %v385 = vld [vmem:[%s0 + $0x5dc] sm:$0xf]
    %v386 = vld [vmem:[%s0 + $0x5e0] sm:$0xf]
    %v387 = vld [vmem:[%s0 + $0x5e4] sm:$0xf]
    %v388 = vld [vmem:[%s0 + $0x5e8] sm:$0xf]
    %v389 = vld [vmem:[%s0 + $0x5ec] sm:$0xf]
    %v390 = vld [vmem:[%s0 + $0x5f0] sm:$0xf]
    %v391 = vld [vmem:[%s0 + $0x5f4] sm:$0xf]
    %v392 = vld [vmem:[%s0 + $0x5f8] sm:$0xf]
    %v393 = vld [vmem:[%s0 + $0x5fc] sm:$0xf]
    %v394 = vld [vmem:[%s0 + $0x600] sm:$0xf]
    %v395 = vld [vmem:[%s0 + $0x604] sm:$0xf]
    %v396 = vld [vmem:[%s0 + $0x608] sm:$0xf]
    %v397 = vld [vmem:[%s0 + $0x60c] sm:$0xf]
    %v398 = vld [vmem:[%s0 + $0x610] sm:$0xf]
    %v399 = vld [vmem:[%s0 + $0x614] sm:$0xf]
    %v400 = vld [vmem:[%s0 + $0x618] sm:$0xf]
    %v401 = vld [vmem:[%s0 + $0x61c] sm:$0xf]
    %v402 = vld [vmem:[%s0 + $0x620] sm:$0xf]
    %v403 = vld [vmem:[%s0 + $0x624] sm:$0xf]
    %v404 = vld [vmem:[%s0 + $0x628] sm:$0xf]
    %v405 = vld [vmem:[%s0 + $0x62c] sm:$0xf]
    %v406 = vld [vmem:[%s0 + $0x630] sm:$0xf]
    %v407 = vld [vmem:[%s0 + $0x634] sm:$0xf]
    %v408 = vld [vmem:[%s0 + $0x638] sm:$0xf]
    %v409 = vld [vmem:[%s0 + $0x63c] sm:$0xf]
    %v410 = vld [vmem:[%s0 + $0x640] sm:$0xf]
    %v411 = vld [vmem:[%s0 + $0x644] sm:$0xf]
    %v412 = vld [vmem:[%s0 + $0x648] sm:$0xf]
    %v413 = vld [vmem:[%s0 + $0x64c] sm:$0xf]
    %v414 = vld [vmem:[%s0 + $0x650] sm:$0xf]
    %v415 = vld [vmem:[%s0 + $0x654] sm:$0xf]
    %v416 = vld [vmem:[%s0 + $0x658] sm:$0xf]
    %v417 = vld [vmem:[%s0 + $0x65c] sm:$0xf]
    %v418 = vld [vmem:[%s0 + $0x660] sm:$0xf]
    %v419 = vld [vmem:[%s0 + $0x664] sm:$0xf]
    %v420 = vld [vmem:[%s0 + $0x668] sm:$0xf]
    %v421 = vld [vmem:[%s0 + $0x66c] sm:$0xf]
    %v422 = vld [vmem:[%s0 + $0x670] sm:$0xf]
    %v423 = vld [vmem:[%s0 + $0x674] sm:$0xf]
    %v424 = vld [vmem:[%s0 + $0x678] sm:$0xf]
    %v425 = vld [vmem:[%s0 + $0x67c] sm:$0xf]
    %v426 = vld [vmem:[%s0 + $0x680] sm:$0xf]
    %v427 = vld [vmem:[%s0 + $0x684] sm:$0xf]
    %v428 = vld [vmem:[%s0 + $0x688] sm:$0xf]
    %v429 = vld [vmem:[%s0 + $0x68c] sm:$0xf]
    %v430 = vld [vmem:[%s0 + $0x690] sm:$0xf]
    %v431 = vld [vmem:[%s0 + $0x694] sm:$0xf]
    %v432 = vld [vmem:[%s0 + $0x698] sm:$0xf]
    %v433 = vld [vmem:[%s0 + $0x69c] sm:$0xf]
    %v434 = vld [vmem:[%s0 + $0x6a0] sm:$0xf]
    %v435 = vld [vmem:[%s0 + $0x6a4] sm:$0xf]
    %v436 = vld [vmem:[%s0 + $0x6a8] sm:$0xf]
    %v437 = vld [vmem:[%s0 + $0x6ac] sm:$0xf]
    %v438 = vld [vmem:[%s0 + $0x6b0] sm:$0xf]
    %v439 = vld [vmem:[%s0 + $0x6b4] sm:$0xf]
    %v440 = vld [vmem:[%s0 + $0x6b8] sm:$0xf]
    %v441 = vld [vmem:[%s0 + $0x6bc] sm:$0xf]
    %v442 = vld [vmem:[%s0 + $0x6c0] sm:$0xf]
    %v443 = vld [vmem:[%s0 + $0x6c4] sm:$0xf]
    %v444 = vld [vmem:[%s0 + $0x6c8] sm:$0xf]
    %v445 = vld [vmem:[%s0 + $0x6cc] sm:$0xf]
    %v446 = vld [vmem:[%s0 + $0x6d0] sm:$0xf]
    %v447 = vld [vmem:[%s0 + $0x6d4] sm:$0xf]
    %v448 = vld [vmem:[%s0 + $0x6d8] sm:$0xf]
    %v449 = vld [vmem:[%s0 + $0x6dc] sm:$0xf]
    %v450 = vld [vmem:[%s0 + $0x6e0] sm:$0xf]
    %v451 = vld [vmem:[%s0 + $0x6e4] sm:$0xf]
    %v452 = vld [vmem:[%s0 + $0x6e8] sm:$0xf]
    %v453 = vld [vmem:[%s0 + $0x6ec] sm:$0xf]
    %v454 = vld [vmem:[%s0 + $0x6f0] sm:$0xf]
    %v455 = vld [vmem:[%s0 + $0x6f4] sm:$0xf]
    %v456 = vld [vmem:[%s0 + $0x6f8] sm:$0xf]
    %v457 = vld [vmem:[%s0 + $0x6fc] sm:$0xf]
    %v458 = vld [vmem:[%s0 + $0x700] sm:$0xf]
    %v459 = vld [vmem:[%s0 + $0x704] sm:$0xf]
    %v460 = vld [vmem:[%s0 + $0x708] sm:$0xf]
    %v461 = vld [vmem:[%s0 + $0x70c] sm:$0xf]
    %v462 = vld [vmem:[%s0 + $0x710] sm:$0xf]
    %v463 = vld [vmem:[%s0 + $0x714] sm:$0xf]
    %v464 = vld [vmem:[%s0 + $0x718] sm:$0xf]
    %v465 = vld [vmem:[%s0 + $0x71c] sm:$0xf]
    %v466 = vld [vmem:[%s0 + $0x720] sm:$0xf]
    %v467 = vld [vmem:[%s0 + $0x724] sm:$0xf]
    %v468 = vld [vmem:[%s0 + $0x728] sm:$0xf]
    %v469 = vld [vmem:[%s0 + $0x72c] sm:$0xf]
    %v470 = vld [vmem:[%s0 + $0x730] sm:$0xf]
    %v471 = vld [vmem:[%s0 + $0x734] sm:$0xf]
    %v472 = vld [vmem:[%s0 + $0x738] sm:$0xf]
    %v473 = vld [vmem:[%s0 + $0x73c] sm:$0xf]
    %v474 = vld [vmem:[%s0 + $0x740] sm:$0xf]
    %v475 = vld [vmem:[%s0 + $0x744] sm:$0xf]
    %v476 = vld [vmem:[%s0 + $0x748] sm:$0xf]
    %v477 = vld [vmem:[%s0 + $0x74c] sm:$0xf]
    %v478 = vld [vmem:[%s0 + $0x750] sm:$0xf]
    %v479 = vld [vmem:[%s0 + $0x754] sm:$0xf]
    %v480 = vld [vmem:[%s0 + $0x758] sm:$0xf]
    %v481 = vld [vmem:[%s0 + $0x75c] sm:$0xf]
    %v482 = vld [vmem:[%s0 + $0x760] sm:$0xf]
    %v483 = vld [vmem:[%s0 + $0x764] sm:$0xf]
    %v484 = vld [vmem:[%s0 + $0x768] sm:$0xf]
    %v485 = vld [vmem:[%s0 + $0x76c] sm:$0xf]
    %v486 = vld [vmem:[%s0 + $0x770] sm:$0xf]
    %v487 = vld [vmem:[%s0 + $0x774] sm:$0xf]
    %v488 = vld [vmem:[%s0 + $0x778] sm:$0xf]
    %v489 = vld [vmem:[%s0 + $0x77c] sm:$0xf]
    %v490 = vld [vmem:[%s0 + $0x780] sm:$0xf]
    %v491 = vld [vmem:[%s0 + $0x784] sm:$0xf]
    %v492 = vld [vmem:[%s0 + $0x788] sm:$0xf]
    %v493 = vld [vmem:[%s0 + $0x78c] sm:$0xf]
    %v494 = vld [vmem:[%s0 + $0x790] sm:$0xf]
    %v495 = vld [vmem:[%s0 + $0x794] sm:$0xf]
    %v496 = vld [vmem:[%s0 + $0x798] sm:$0xf]
    %v497 = vld [vmem:[%s0 + $0x79c] sm:$0xf]
    %v498 = vld [vmem:[%s0 + $0x7a0] sm:$0xf]
    %v499 = vld [vmem:[%s0 + $0x7a4] sm:$0xf]
    %v500 = vld [vmem:[%s0 + $0x7a8] sm:$0xf]
    %v501 = vld [vmem:[%s0 + $0x7ac] sm:$0xf]
    %v502 = vld [vmem:[%s0 + $0x7b0] sm:$0xf]
    %v503 = vld [vmem:[%s0 + $0x7b4] sm:$0xf]
    %v504 = vld [vmem:[%s0 + $0x7b8] sm:$0xf]
    %v505 = vld [vmem:[%s0 + $0x7bc] sm:$0xf]
    %v506 = vld [vmem:[%s0 + $0x7c0] sm:$0xf]
    %v507 = vld [vmem:[%s0 + $0x7c4] sm:$0xf]
    %v508 = vld [vmem:[%s0 + $0x7c8] sm:$0xf]
    %v509 = vld [vmem:[%s0 + $0x7cc] sm:$0xf]
    %v510 = vld [vmem:[%s0 + $0x7d0] sm:$0xf]
    %v511 = vld [vmem:[%s0 + $0x7d4] sm:$0xf]
    %v512 = vld [vmem:[%s0 + $0x7d8] sm:$0xf]
    %v513 = vld [vmem:[%s0 + $0x7dc] sm:$0xf]
    %v514 = vld [vmem:[%s0 + $0x7e0] sm:$0xf]
    %v515 = vld [vmem:[%s0 + $0x7e4] sm:$0xf]
    %v516 = vld [vmem:[%s0 + $0x7e8] sm:$0xf]
    %v517 = vld [vmem:[%s0 + $0x7ec] sm:$0xf]
    %v518 = vld [vmem:[%s0 + $0x7f0] sm:$0xf]
    %v519 = vld [vmem:[%s0 + $0x7f4] sm:$0xf]
    %v520 = vld [vmem:[%s0 + $0x7f8] sm:$0xf]
    %v521 = vld [vmem:[%s0 + $0x7fc] sm:$0xf]
    %v522 = vld [vmem:[%s0 + $0x800] sm:$0xf]
    %v523 = vld [vmem:[%s0 + $0x804] sm:$0xf]
    %v524 = vld [vmem:[%s0 + $0x808] sm:$0xf]
    %v525 = vld [vmem:[%s0 + $0x80c] sm:$0xf]
    %v526 = vld [vmem:[%s0 + $0x810] sm:$0xf]
    %v527 = vld [vmem:[%s0 + $0x814] sm:$0xf]
    %v528 = vld [vmem:[%s0 + $0x818] sm:$0xf]
    %v529 = vld [vmem:[%s0 + $0x81c] sm:$0xf]
    %v530 = vld [vmem:[%s0 + $0x820] sm:$0xf]
    %v531 = vld [vmem:[%s0 + $0x824] sm:$0xf]
    %v532 = vld [vmem:[%s0 + $0x828] sm:$0xf]
    %v533 = vld [vmem:[%s0 + $0x82c] sm:$0xf]
    %v534 = vld [vmem:[%s0 + $0x830] sm:$0xf]
    %v535 = vld [vmem:[%s0 + $0x834] sm:$0xf]
    %v536 = vld [vmem:[%s0 + $0x838] sm:$0xf]
    %v537 = vld [vmem:[%s0 + $0x83c] sm:$0xf]
    %v538 = vld [vmem:[%s0 + $0x840] sm:$0xf]
    %v539 = vld [vmem:[%s0 + $0x844] sm:$0xf]
    %v540 = vld [vmem:[%s0 + $0x848] sm:$0xf]
    %v541 = vld [vmem:[%s0 + $0x84c] sm:$0xf]
    %v542 = vld [vmem:[%s0 + $0x850] sm:$0xf]
    %v543 = vld [vmem:[%s0 + $0x854] sm:$0xf]
    %v544 = vld [vmem:[%s0 + $0x858] sm:$0xf]
    %v545 = vld [vmem:[%s0 + $0x85c] sm:$0xf]
    %v546 = vld [vmem:[%s0 + $0x860] sm:$0xf]
    %v547 = vld [vmem:[%s0 + $0x864] sm:$0xf]
    %v548 = vld [vmem:[%s0 + $0x868] sm:$0xf]
    %v549 = vld [vmem:[%s0 + $0x86c] sm:$0xf]
    %v550 = vld [vmem:[%s0 + $0x870] sm:$0xf]
    %v551 = vld [vmem:[%s0 + $0x874] sm:$0xf]
    %v552 = vld [vmem:[%s0 + $0x878] sm:$0xf]
    %v553 = vld [vmem:[%s0 + $0x87c] sm:$0xf]
    %v554 = vld [vmem:[%s0 + $0x880] sm:$0xf]
    %v555 = vld [vmem:[%s0 + $0x884] sm:$0xf]
    %v556 = vld [vmem:[%s0 + $0x888] sm:$0xf]
    %v557 = vld [vmem:[%s0 + $0x88c] sm:$0xf]
    %v558 = vld [vmem:[%s0 + $0x890] sm:$0xf]
    %v559 = vld [vmem:[%s0 + $0x894] sm:$0xf]
    %v560 = vld [vmem:[%s0 + $0x898] sm:$0xf]
    %v561 = vld [vmem:[%s0 + $0x89c] sm:$0xf]
    %v562 = vld [vmem:[%s0 + $0x8a0] sm:$0xf]
    %v563 = vld [vmem:[%s0 + $0x8a4] sm:$0xf]
    %v564 = vld [vmem:[%s0 + $0x8a8] sm:$0xf]
    %v565 = vld [vmem:[%s0 + $0x8ac] sm:$0xf]
    %v566 = vld [vmem:[%s0 + $0x8b0] sm:$0xf]
    %v567 = vld [vmem:[%s0 + $0x8b4] sm:$0xf]
    %v568 = vld [vmem:[%s0 + $0x8b8] sm:$0xf]
    %v569 = vld [vmem:[%s0 + $0x8bc] sm:$0xf]
    %v570 = vld [vmem:[%s0 + $0x8c0] sm:$0xf]
    %v571 = vld [vmem:[%s0 + $0x8c4] sm:$0xf]
    %v572 = vld [vmem:[%s0 + $0x8c8] sm:$0xf]
    %v573 = vld [vmem:[%s0 + $0x8cc] sm:$0xf]
    %v574 = vld [vmem:[%s0 + $0x8d0] sm:$0xf]
    %v575 = vld [vmem:[%s0 + $0x8d4] sm:$0xf]
    %v576 = vld [vmem:[%s0 + $0x8d8] sm:$0xf]
    %v577 = vld [vmem:[%s0 + $0x8dc] sm:$0xf]
    %v578 = vld [vmem:[%s0 + $0x8e0] sm:$0xf]
    %v579 = vld [vmem:[%s0 + $0x8e4] sm:$0xf]
    %v580 = vld [vmem:[%s0 + $0x8e8] sm:$0xf]
    %v581 = vld [vmem:[%s0 + $0x8ec] sm:$0xf]
    %v582 = vld [vmem:[%s0 + $0x8f0] sm:$0xf]
    %v583 = vld [vmem:[%s0 + $0x8f4] sm:$0xf]
    %v584 = vld [vmem:[%s0 + $0x8f8] sm:$0xf]
    %v585 = vld [vmem:[%s0 + $0x8fc] sm:$0xf]
    %vm586 = vcmask 1043456
    %v589 = vsel %vm586, %v10, 4286644096
    %v592 = vsel %vm586, %v74, 4286644096
    %v594 = vmax.bf16 %v589, %v592
    %v596 = vsel %vm586, %v138, 4286644096
    %v598 = vmax.bf16 %v594, %v596
    %v600 = vsel %vm586, %v202, 4286644096
    %v602 = vmax.bf16 %v598, %v600
    %v604 = vsel %vm586, %v266, 4286644096
    %v606 = vmax.bf16 %v602, %v604
    %v608 = vsel %vm586, %v330, 4286644096
    %v610 = vmax.bf16 %v606, %v608
    %v612 = vsel %vm586, %v394, 4286644096
    %v614 = vmax.bf16 %v610, %v612
    %v616 = vsel %vm586, %v458, 4286644096
    %v618 = vmax.bf16 %v614, %v616
    %v620 = vsel %vm586, %v522, 4286644096
    %v622 = vmax.bf16 %v618, %v620
    %v624 = vsel %vm586, %v11, 4286644096
    %v627 = vsel %vm586, %v75, 4286644096
    %v629 = vmax.bf16 %v624, %v627
    %v631 = vsel %vm586, %v139, 4286644096
    %v633 = vmax.bf16 %v629, %v631
    %v635 = vsel %vm586, %v203, 4286644096
    %v637 = vmax.bf16 %v633, %v635
    %v639 = vsel %vm586, %v267, 4286644096
    %v641 = vmax.bf16 %v637, %v639
    %v643 = vsel %vm586, %v331, 4286644096
    %v645 = vmax.bf16 %v641, %v643
    %v647 = vsel %vm586, %v395, 4286644096
    %v649 = vmax.bf16 %v645, %v647
    %v651 = vsel %vm586, %v459, 4286644096
    %v653 = vmax.bf16 %v649, %v651
    %v655 = vsel %vm586, %v523, 4286644096
    %v657 = vmax.bf16 %v653, %v655
    %v659 = vsel %vm586, %v12, 4286644096
    %v662 = vsel %vm586, %v76, 4286644096
    %v664 = vmax.bf16 %v659, %v662
    %v666 = vsel %vm586, %v140, 4286644096
    %v668 = vmax.bf16 %v664, %v666
    %v670 = vsel %vm586, %v204, 4286644096
    %v672 = vmax.bf16 %v668, %v670
    %v674 = vsel %vm586, %v268, 4286644096
    %v676 = vmax.bf16 %v672, %v674
    %v678 = vsel %vm586, %v332, 4286644096
    %v680 = vmax.bf16 %v676, %v678
    %v682 = vsel %vm586, %v396, 4286644096
    %v684 = vmax.bf16 %v680, %v682
    %v686 = vsel %vm586, %v460, 4286644096
    %v688 = vmax.bf16 %v684, %v686
    %v690 = vsel %vm586, %v524, 4286644096
    %v692 = vmax.bf16 %v688, %v690
    %v694 = vsel %vm586, %v13, 4286644096
    %v697 = vsel %vm586, %v77, 4286644096
    %v699 = vmax.bf16 %v694, %v697
    %v701 = vsel %vm586, %v141, 4286644096
    %v703 = vmax.bf16 %v699, %v701
    %v705 = vsel %vm586, %v205, 4286644096
    %v707 = vmax.bf16 %v703, %v705
    %v709 = vsel %vm586, %v269, 4286644096
    %v711 = vmax.bf16 %v707, %v709
    %v713 = vsel %vm586, %v333, 4286644096
    %v715 = vmax.bf16 %v711, %v713
    %v717 = vsel %vm586, %v397, 4286644096
    %v719 = vmax.bf16 %v715, %v717
    %v721 = vsel %vm586, %v461, 4286644096
    %v723 = vmax.bf16 %v719, %v721
    %v725 = vsel %vm586, %v525, 4286644096
    %v727 = vmax.bf16 %v723, %v725
    %v729 = vsel %vm586, %v14, 4286644096
    %v732 = vsel %vm586, %v78, 4286644096
    %v734 = vmax.bf16 %v729, %v732
    %v736 = vsel %vm586, %v142, 4286644096
    %v738 = vmax.bf16 %v734, %v736
    %v740 = vsel %vm586, %v206, 4286644096
    %v742 = vmax.bf16 %v738, %v740
    %v744 = vsel %vm586, %v270, 4286644096
    %v746 = vmax.bf16 %v742, %v744
    %v748 = vsel %vm586, %v334, 4286644096
    %v750 = vmax.bf16 %v746, %v748
    %v752 = vsel %vm586, %v398, 4286644096
    %v754 = vmax.bf16 %v750, %v752
    %v756 = vsel %vm586, %v462, 4286644096
    %v758 = vmax.bf16 %v754, %v756
    %v760 = vsel %vm586, %v526, 4286644096
    %v762 = vmax.bf16 %v758, %v760
    %v764 = vsel %vm586, %v15, 4286644096
    %v767 = vsel %vm586, %v79, 4286644096
    %v769 = vmax.bf16 %v764, %v767
    %v771 = vsel %vm586, %v143, 4286644096
    %v773 = vmax.bf16 %v769, %v771
    %v775 = vsel %vm586, %v207, 4286644096
    %v777 = vmax.bf16 %v773, %v775
    %v779 = vsel %vm586, %v271, 4286644096
    %v781 = vmax.bf16 %v777, %v779
    %v783 = vsel %vm586, %v335, 4286644096
    %v785 = vmax.bf16 %v781, %v783
    %v787 = vsel %vm586, %v399, 4286644096
    %v789 = vmax.bf16 %v785, %v787
    %v791 = vsel %vm586, %v463, 4286644096
    %v793 = vmax.bf16 %v789, %v791
    %v795 = vsel %vm586, %v527, 4286644096
    %v797 = vmax.bf16 %v793, %v795
    %v799 = vsel %vm586, %v16, 4286644096
    %v802 = vsel %vm586, %v80, 4286644096
    %v804 = vmax.bf16 %v799, %v802
    %v806 = vsel %vm586, %v144, 4286644096
    %v808 = vmax.bf16 %v804, %v806
    %v810 = vsel %vm586, %v208, 4286644096
    %v812 = vmax.bf16 %v808, %v810
    %v814 = vsel %vm586, %v272, 4286644096
    %v816 = vmax.bf16 %v812, %v814
    %v818 = vsel %vm586, %v336, 4286644096
    %v820 = vmax.bf16 %v816, %v818
    %v822 = vsel %vm586, %v400, 4286644096
    %v824 = vmax.bf16 %v820, %v822
    %v826 = vsel %vm586, %v464, 4286644096
    %v828 = vmax.bf16 %v824, %v826
    %v830 = vsel %vm586, %v528, 4286644096
    %v832 = vmax.bf16 %v828, %v830
    %v834 = vsel %vm586, %v17, 4286644096
    %v837 = vsel %vm586, %v81, 4286644096
    %v839 = vmax.bf16 %v834, %v837
    %v841 = vsel %vm586, %v145, 4286644096
    %v843 = vmax.bf16 %v839, %v841
    %v845 = vsel %vm586, %v209, 4286644096
    %v847 = vmax.bf16 %v843, %v845
    %v849 = vsel %vm586, %v273, 4286644096
    %v851 = vmax.bf16 %v847, %v849
    %v853 = vsel %vm586, %v337, 4286644096
    %v855 = vmax.bf16 %v851, %v853
    %v857 = vsel %vm586, %v401, 4286644096
    %v859 = vmax.bf16 %v855, %v857
    %v861 = vsel %vm586, %v465, 4286644096
    %v863 = vmax.bf16 %v859, %v861
    %v865 = vsel %vm586, %v529, 4286644096
    %v867 = vmax.bf16 %v863, %v865
    %v869 = vsel %vm586, %v18, 4286644096
    %v872 = vsel %vm586, %v82, 4286644096
    %v874 = vmax.bf16 %v869, %v872
    %v876 = vsel %vm586, %v146, 4286644096
    %v878 = vmax.bf16 %v874, %v876
    %v880 = vsel %vm586, %v210, 4286644096
    %v882 = vmax.bf16 %v878, %v880
    %v884 = vsel %vm586, %v274, 4286644096
    %v886 = vmax.bf16 %v882, %v884
    %v888 = vsel %vm586, %v338, 4286644096
    %v890 = vmax.bf16 %v886, %v888
    %v892 = vsel %vm586, %v402, 4286644096
    %v894 = vmax.bf16 %v890, %v892
    %v896 = vsel %vm586, %v466, 4286644096
    %v898 = vmax.bf16 %v894, %v896
    %v900 = vsel %vm586, %v530, 4286644096
    %v902 = vmax.bf16 %v898, %v900
    %v904 = vsel %vm586, %v19, 4286644096
    %v907 = vsel %vm586, %v83, 4286644096
    %v909 = vmax.bf16 %v904, %v907
    %v911 = vsel %vm586, %v147, 4286644096
    %v913 = vmax.bf16 %v909, %v911
    %v915 = vsel %vm586, %v211, 4286644096
    %v917 = vmax.bf16 %v913, %v915
    %v919 = vsel %vm586, %v275, 4286644096
    %v921 = vmax.bf16 %v917, %v919
    %v923 = vsel %vm586, %v339, 4286644096
    %v925 = vmax.bf16 %v921, %v923
    %v927 = vsel %vm586, %v403, 4286644096
    %v929 = vmax.bf16 %v925, %v927
    %v931 = vsel %vm586, %v467, 4286644096
    %v933 = vmax.bf16 %v929, %v931
    %v935 = vsel %vm586, %v531, 4286644096
    %v937 = vmax.bf16 %v933, %v935
    %v939 = vsel %vm586, %v20, 4286644096
    %v942 = vsel %vm586, %v84, 4286644096
    %v944 = vmax.bf16 %v939, %v942
    %v946 = vsel %vm586, %v148, 4286644096
    %v948 = vmax.bf16 %v944, %v946
    %v950 = vsel %vm586, %v212, 4286644096
    %v952 = vmax.bf16 %v948, %v950
    %v954 = vsel %vm586, %v276, 4286644096
    %v956 = vmax.bf16 %v952, %v954
    %v958 = vsel %vm586, %v340, 4286644096
    %v960 = vmax.bf16 %v956, %v958
    %v962 = vsel %vm586, %v404, 4286644096
    %v964 = vmax.bf16 %v960, %v962
    %v966 = vsel %vm586, %v468, 4286644096
    %v968 = vmax.bf16 %v964, %v966
    %v970 = vsel %vm586, %v532, 4286644096
    %v972 = vmax.bf16 %v968, %v970
    %v974 = vsel %vm586, %v21, 4286644096
    %v977 = vsel %vm586, %v85, 4286644096
    %v979 = vmax.bf16 %v974, %v977
    %v981 = vsel %vm586, %v149, 4286644096
    %v983 = vmax.bf16 %v979, %v981
    %v985 = vsel %vm586, %v213, 4286644096
    %v987 = vmax.bf16 %v983, %v985
    %v989 = vsel %vm586, %v277, 4286644096
    %v991 = vmax.bf16 %v987, %v989
    %v993 = vsel %vm586, %v341, 4286644096
    %v995 = vmax.bf16 %v991, %v993
    %v997 = vsel %vm586, %v405, 4286644096
    %v999 = vmax.bf16 %v995, %v997
    %v1001 = vsel %vm586, %v469, 4286644096
    %v1003 = vmax.bf16 %v999, %v1001
    %v1005 = vsel %vm586, %v533, 4286644096
    %v1007 = vmax.bf16 %v1003, %v1005
    %v1009 = vsel %vm586, %v22, 4286644096
    %v1012 = vsel %vm586, %v86, 4286644096
    %v1014 = vmax.bf16 %v1009, %v1012
    %v1016 = vsel %vm586, %v150, 4286644096
    %v1018 = vmax.bf16 %v1014, %v1016
    %v1020 = vsel %vm586, %v214, 4286644096
    %v1022 = vmax.bf16 %v1018, %v1020
    %v1024 = vsel %vm586, %v278, 4286644096
    %v1026 = vmax.bf16 %v1022, %v1024
    %v1028 = vsel %vm586, %v342, 4286644096
    %v1030 = vmax.bf16 %v1026, %v1028
    %v1032 = vsel %vm586, %v406, 4286644096
    %v1034 = vmax.bf16 %v1030, %v1032
    %v1036 = vsel %vm586, %v470, 4286644096
    %v1038 = vmax.bf16 %v1034, %v1036
    %v1040 = vsel %vm586, %v534, 4286644096
    %v1042 = vmax.bf16 %v1038, %v1040
    %v1044 = vsel %vm586, %v23, 4286644096
    %v1047 = vsel %vm586, %v87, 4286644096
    %v1049 = vmax.bf16 %v1044, %v1047
    %v1051 = vsel %vm586, %v151, 4286644096
    %v1053 = vmax.bf16 %v1049, %v1051
    %v1055 = vsel %vm586, %v215, 4286644096
    %v1057 = vmax.bf16 %v1053, %v1055
    %v1059 = vsel %vm586, %v279, 4286644096
    %v1061 = vmax.bf16 %v1057, %v1059
    %v1063 = vsel %vm586, %v343, 4286644096
    %v1065 = vmax.bf16 %v1061, %v1063
    %v1067 = vsel %vm586, %v407, 4286644096
    %v1069 = vmax.bf16 %v1065, %v1067
    %v1071 = vsel %vm586, %v471, 4286644096
    %v1073 = vmax.bf16 %v1069, %v1071
    %v1075 = vsel %vm586, %v535, 4286644096
    %v1077 = vmax.bf16 %v1073, %v1075
    %v1079 = vsel %vm586, %v24, 4286644096
    %v1082 = vsel %vm586, %v88, 4286644096
    %v1084 = vmax.bf16 %v1079, %v1082
    %v1086 = vsel %vm586, %v152, 4286644096
    %v1088 = vmax.bf16 %v1084, %v1086
    %v1090 = vsel %vm586, %v216, 4286644096
    %v1092 = vmax.bf16 %v1088, %v1090
    %v1094 = vsel %vm586, %v280, 4286644096
    %v1096 = vmax.bf16 %v1092, %v1094
    %v1098 = vsel %vm586, %v344, 4286644096
    %v1100 = vmax.bf16 %v1096, %v1098
    %v1102 = vsel %vm586, %v408, 4286644096
    %v1104 = vmax.bf16 %v1100, %v1102
    %v1106 = vsel %vm586, %v472, 4286644096
    %v1108 = vmax.bf16 %v1104, %v1106
    %v1110 = vsel %vm586, %v536, 4286644096
    %v1112 = vmax.bf16 %v1108, %v1110
    %v1114 = vsel %vm586, %v25, 4286644096
    %v1117 = vsel %vm586, %v89, 4286644096
    %v1119 = vmax.bf16 %v1114, %v1117
    %v1121 = vsel %vm586, %v153, 4286644096
    %v1123 = vmax.bf16 %v1119, %v1121
    %v1125 = vsel %vm586, %v217, 4286644096
    %v1127 = vmax.bf16 %v1123, %v1125
    %v1129 = vsel %vm586, %v281, 4286644096
    %v1131 = vmax.bf16 %v1127, %v1129
    %v1133 = vsel %vm586, %v345, 4286644096
    %v1135 = vmax.bf16 %v1131, %v1133
    %v1137 = vsel %vm586, %v409, 4286644096
    %v1139 = vmax.bf16 %v1135, %v1137
    %v1141 = vsel %vm586, %v473, 4286644096
    %v1143 = vmax.bf16 %v1139, %v1141
    %v1145 = vsel %vm586, %v537, 4286644096
    %v1147 = vmax.bf16 %v1143, %v1145
    %v1149 = vsel %vm586, %v26, 4286644096
    %v1152 = vsel %vm586, %v90, 4286644096
    %v1154 = vmax.bf16 %v1149, %v1152
    %v1156 = vsel %vm586, %v154, 4286644096
    %v1158 = vmax.bf16 %v1154, %v1156
    %v1160 = vsel %vm586, %v218, 4286644096
    %v1162 = vmax.bf16 %v1158, %v1160
    %v1164 = vsel %vm586, %v282, 4286644096
    %v1166 = vmax.bf16 %v1162, %v1164
    %v1168 = vsel %vm586, %v346, 4286644096
    %v1170 = vmax.bf16 %v1166, %v1168
    %v1172 = vsel %vm586, %v410, 4286644096
    %v1174 = vmax.bf16 %v1170, %v1172
    %v1176 = vsel %vm586, %v474, 4286644096
    %v1178 = vmax.bf16 %v1174, %v1176
    %v1180 = vsel %vm586, %v538, 4286644096
    %v1182 = vmax.bf16 %v1178, %v1180
    %v1184 = vsel %vm586, %v27, 4286644096
    %v1187 = vsel %vm586, %v91, 4286644096
    %v1189 = vmax.bf16 %v1184, %v1187
    %v1191 = vsel %vm586, %v155, 4286644096
    %v1193 = vmax.bf16 %v1189, %v1191
    %v1195 = vsel %vm586, %v219, 4286644096
    %v1197 = vmax.bf16 %v1193, %v1195
    %v1199 = vsel %vm586, %v283, 4286644096
    %v1201 = vmax.bf16 %v1197, %v1199
    %v1203 = vsel %vm586, %v347, 4286644096
    %v1205 = vmax.bf16 %v1201, %v1203
    %v1207 = vsel %vm586, %v411, 4286644096
    %v1209 = vmax.bf16 %v1205, %v1207
    %v1211 = vsel %vm586, %v475, 4286644096
    %v1213 = vmax.bf16 %v1209, %v1211
    %v1215 = vsel %vm586, %v539, 4286644096
    %v1217 = vmax.bf16 %v1213, %v1215
    %v1219 = vsel %vm586, %v28, 4286644096
    %v1222 = vsel %vm586, %v92, 4286644096
    %v1224 = vmax.bf16 %v1219, %v1222
    %v1226 = vsel %vm586, %v156, 4286644096
    %v1228 = vmax.bf16 %v1224, %v1226
    %v1230 = vsel %vm586, %v220, 4286644096
    %v1232 = vmax.bf16 %v1228, %v1230
    %v1234 = vsel %vm586, %v284, 4286644096
    %v1236 = vmax.bf16 %v1232, %v1234
    %v1238 = vsel %vm586, %v348, 4286644096
    %v1240 = vmax.bf16 %v1236, %v1238
    %v1242 = vsel %vm586, %v412, 4286644096
    %v1244 = vmax.bf16 %v1240, %v1242
    %v1246 = vsel %vm586, %v476, 4286644096
    %v1248 = vmax.bf16 %v1244, %v1246
    %v1250 = vsel %vm586, %v540, 4286644096
    %v1252 = vmax.bf16 %v1248, %v1250
    %v1254 = vsel %vm586, %v29, 4286644096
    %v1257 = vsel %vm586, %v93, 4286644096
    %v1259 = vmax.bf16 %v1254, %v1257
    %v1261 = vsel %vm586, %v157, 4286644096
    %v1263 = vmax.bf16 %v1259, %v1261
    %v1265 = vsel %vm586, %v221, 4286644096
    %v1267 = vmax.bf16 %v1263, %v1265
    %v1269 = vsel %vm586, %v285, 4286644096
    %v1271 = vmax.bf16 %v1267, %v1269
    %v1273 = vsel %vm586, %v349, 4286644096
    %v1275 = vmax.bf16 %v1271, %v1273
    %v1277 = vsel %vm586, %v413, 4286644096
    %v1279 = vmax.bf16 %v1275, %v1277
    %v1281 = vsel %vm586, %v477, 4286644096
    %v1283 = vmax.bf16 %v1279, %v1281
    %v1285 = vsel %vm586, %v541, 4286644096
    %v1287 = vmax.bf16 %v1283, %v1285
    %v1289 = vsel %vm586, %v30, 4286644096
    %v1292 = vsel %vm586, %v94, 4286644096
    %v1294 = vmax.bf16 %v1289, %v1292
    %v1296 = vsel %vm586, %v158, 4286644096
    %v1298 = vmax.bf16 %v1294, %v1296
    %v1300 = vsel %vm586, %v222, 4286644096
    %v1302 = vmax.bf16 %v1298, %v1300
    %v1304 = vsel %vm586, %v286, 4286644096
    %v1306 = vmax.bf16 %v1302, %v1304
    %v1308 = vsel %vm586, %v350, 4286644096
    %v1310 = vmax.bf16 %v1306, %v1308
    %v1312 = vsel %vm586, %v414, 4286644096
    %v1314 = vmax.bf16 %v1310, %v1312
    %v1316 = vsel %vm586, %v478, 4286644096
    %v1318 = vmax.bf16 %v1314, %v1316
    %v1320 = vsel %vm586, %v542, 4286644096
    %v1322 = vmax.bf16 %v1318, %v1320
    %v1324 = vsel %vm586, %v31, 4286644096
    %v1327 = vsel %vm586, %v95, 4286644096
    %v1329 = vmax.bf16 %v1324, %v1327
    %v1331 = vsel %vm586, %v159, 4286644096
    %v1333 = vmax.bf16 %v1329, %v1331
    %v1335 = vsel %vm586, %v223, 4286644096
    %v1337 = vmax.bf16 %v1333, %v1335
    %v1339 = vsel %vm586, %v287, 4286644096
    %v1341 = vmax.bf16 %v1337, %v1339
    %v1343 = vsel %vm586, %v351, 4286644096
    %v1345 = vmax.bf16 %v1341, %v1343
    %v1347 = vsel %vm586, %v415, 4286644096
    %v1349 = vmax.bf16 %v1345, %v1347
    %v1351 = vsel %vm586, %v479, 4286644096
    %v1353 = vmax.bf16 %v1349, %v1351
    %v1355 = vsel %vm586, %v543, 4286644096
    %v1357 = vmax.bf16 %v1353, %v1355
    %v1359 = vsel %vm586, %v32, 4286644096
    %v1362 = vsel %vm586, %v96, 4286644096
    %v1364 = vmax.bf16 %v1359, %v1362
    %v1366 = vsel %vm586, %v160, 4286644096
    %v1368 = vmax.bf16 %v1364, %v1366
    %v1370 = vsel %vm586, %v224, 4286644096
    %v1372 = vmax.bf16 %v1368, %v1370
    %v1374 = vsel %vm586, %v288, 4286644096
    %v1376 = vmax.bf16 %v1372, %v1374
    %v1378 = vsel %vm586, %v352, 4286644096
    %v1380 = vmax.bf16 %v1376, %v1378
    %v1382 = vsel %vm586, %v416, 4286644096
    %v1384 = vmax.bf16 %v1380, %v1382
    %v1386 = vsel %vm586, %v480, 4286644096
    %v1388 = vmax.bf16 %v1384, %v1386
    %v1390 = vsel %vm586, %v544, 4286644096
    %v1392 = vmax.bf16 %v1388, %v1390
    %v1394 = vsel %vm586, %v33, 4286644096
    %v1397 = vsel %vm586, %v97, 4286644096
    %v1399 = vmax.bf16 %v1394, %v1397
    %v1401 = vsel %vm586, %v161, 4286644096
    %v1403 = vmax.bf16 %v1399, %v1401
    %v1405 = vsel %vm586, %v225, 4286644096
    %v1407 = vmax.bf16 %v1403, %v1405
    %v1409 = vsel %vm586, %v289, 4286644096
    %v1411 = vmax.bf16 %v1407, %v1409
    %v1413 = vsel %vm586, %v353, 4286644096
    %v1415 = vmax.bf16 %v1411, %v1413
    %v1417 = vsel %vm586, %v417, 4286644096
    %v1419 = vmax.bf16 %v1415, %v1417
    %v1421 = vsel %vm586, %v481, 4286644096
    %v1423 = vmax.bf16 %v1419, %v1421
    %v1425 = vsel %vm586, %v545, 4286644096
    %v1427 = vmax.bf16 %v1423, %v1425
    %v1429 = vsel %vm586, %v34, 4286644096
    %v1432 = vsel %vm586, %v98, 4286644096
    %v1434 = vmax.bf16 %v1429, %v1432
    %v1436 = vsel %vm586, %v162, 4286644096
    %v1438 = vmax.bf16 %v1434, %v1436
    %v1440 = vsel %vm586, %v226, 4286644096
    %v1442 = vmax.bf16 %v1438, %v1440
    %v1444 = vsel %vm586, %v290, 4286644096
    %v1446 = vmax.bf16 %v1442, %v1444
    %v1448 = vsel %vm586, %v354, 4286644096
    %v1450 = vmax.bf16 %v1446, %v1448
    %v1452 = vsel %vm586, %v418, 4286644096
    %v1454 = vmax.bf16 %v1450, %v1452
    %v1456 = vsel %vm586, %v482, 4286644096
    %v1458 = vmax.bf16 %v1454, %v1456
    %v1460 = vsel %vm586, %v546, 4286644096
    %v1462 = vmax.bf16 %v1458, %v1460
    %v1464 = vsel %vm586, %v35, 4286644096
    %v1467 = vsel %vm586, %v99, 4286644096
    %v1469 = vmax.bf16 %v1464, %v1467
    %v1471 = vsel %vm586, %v163, 4286644096
    %v1473 = vmax.bf16 %v1469, %v1471
    %v1475 = vsel %vm586, %v227, 4286644096
    %v1477 = vmax.bf16 %v1473, %v1475
    %v1479 = vsel %vm586, %v291, 4286644096
    %v1481 = vmax.bf16 %v1477, %v1479
    %v1483 = vsel %vm586, %v355, 4286644096
    %v1485 = vmax.bf16 %v1481, %v1483
    %v1487 = vsel %vm586, %v419, 4286644096
    %v1489 = vmax.bf16 %v1485, %v1487
    %v1491 = vsel %vm586, %v483, 4286644096
    %v1493 = vmax.bf16 %v1489, %v1491
    %v1495 = vsel %vm586, %v547, 4286644096
    %v1497 = vmax.bf16 %v1493, %v1495
    %v1499 = vsel %vm586, %v36, 4286644096
    %v1502 = vsel %vm586, %v100, 4286644096
    %v1504 = vmax.bf16 %v1499, %v1502
    %v1506 = vsel %vm586, %v164, 4286644096
    %v1508 = vmax.bf16 %v1504, %v1506
    %v1510 = vsel %vm586, %v228, 4286644096
    %v1512 = vmax.bf16 %v1508, %v1510
    %v1514 = vsel %vm586, %v292, 4286644096
    %v1516 = vmax.bf16 %v1512, %v1514
    %v1518 = vsel %vm586, %v356, 4286644096
    %v1520 = vmax.bf16 %v1516, %v1518
    %v1522 = vsel %vm586, %v420, 4286644096
    %v1524 = vmax.bf16 %v1520, %v1522
    %v1526 = vsel %vm586, %v484, 4286644096
    %v1528 = vmax.bf16 %v1524, %v1526
    %v1530 = vsel %vm586, %v548, 4286644096
    %v1532 = vmax.bf16 %v1528, %v1530
    %v1534 = vsel %vm586, %v37, 4286644096
    %v1537 = vsel %vm586, %v101, 4286644096
    %v1539 = vmax.bf16 %v1534, %v1537
    %v1541 = vsel %vm586, %v165, 4286644096
    %v1543 = vmax.bf16 %v1539, %v1541
    %v1545 = vsel %vm586, %v229, 4286644096
    %v1547 = vmax.bf16 %v1543, %v1545
    %v1549 = vsel %vm586, %v293, 4286644096
    %v1551 = vmax.bf16 %v1547, %v1549
    %v1553 = vsel %vm586, %v357, 4286644096
    %v1555 = vmax.bf16 %v1551, %v1553
    %v1557 = vsel %vm586, %v421, 4286644096
    %v1559 = vmax.bf16 %v1555, %v1557
    %v1561 = vsel %vm586, %v485, 4286644096
    %v1563 = vmax.bf16 %v1559, %v1561
    %v1565 = vsel %vm586, %v549, 4286644096
    %v1567 = vmax.bf16 %v1563, %v1565
    %v1569 = vsel %vm586, %v38, 4286644096
    %v1572 = vsel %vm586, %v102, 4286644096
    %v1574 = vmax.bf16 %v1569, %v1572
    %v1576 = vsel %vm586, %v166, 4286644096
    %v1578 = vmax.bf16 %v1574, %v1576
    %v1580 = vsel %vm586, %v230, 4286644096
    %v1582 = vmax.bf16 %v1578, %v1580
    %v1584 = vsel %vm586, %v294, 4286644096
    %v1586 = vmax.bf16 %v1582, %v1584
    %v1588 = vsel %vm586, %v358, 4286644096
    %v1590 = vmax.bf16 %v1586, %v1588
    %v1592 = vsel %vm586, %v422, 4286644096
    %v1594 = vmax.bf16 %v1590, %v1592
    %v1596 = vsel %vm586, %v486, 4286644096
    %v1598 = vmax.bf16 %v1594, %v1596
    %v1600 = vsel %vm586, %v550, 4286644096
    %v1602 = vmax.bf16 %v1598, %v1600
    %v1604 = vsel %vm586, %v39, 4286644096
    %v1607 = vsel %vm586, %v103, 4286644096
    %v1609 = vmax.bf16 %v1604, %v1607
    %v1611 = vsel %vm586, %v167, 4286644096
    %v1613 = vmax.bf16 %v1609, %v1611
    %v1615 = vsel %vm586, %v231, 4286644096
    %v1617 = vmax.bf16 %v1613, %v1615
    %v1619 = vsel %vm586, %v295, 4286644096
    %v1621 = vmax.bf16 %v1617, %v1619
    %v1623 = vsel %vm586, %v359, 4286644096
    %v1625 = vmax.bf16 %v1621, %v1623
    %v1627 = vsel %vm586, %v423, 4286644096
    %v1629 = vmax.bf16 %v1625, %v1627
    %v1631 = vsel %vm586, %v487, 4286644096
    %v1633 = vmax.bf16 %v1629, %v1631
    %v1635 = vsel %vm586, %v551, 4286644096
    %v1637 = vmax.bf16 %v1633, %v1635
    %v1639 = vsel %vm586, %v40, 4286644096
    %v1642 = vsel %vm586, %v104, 4286644096
    %v1644 = vmax.bf16 %v1639, %v1642
    %v1646 = vsel %vm586, %v168, 4286644096
    %v1648 = vmax.bf16 %v1644, %v1646
    %v1650 = vsel %vm586, %v232, 4286644096
    %v1652 = vmax.bf16 %v1648, %v1650
    %v1654 = vsel %vm586, %v296, 4286644096
    %v1656 = vmax.bf16 %v1652, %v1654
    %v1658 = vsel %vm586, %v360, 4286644096
    %v1660 = vmax.bf16 %v1656, %v1658
    %v1662 = vsel %vm586, %v424, 4286644096
    %v1664 = vmax.bf16 %v1660, %v1662
    %v1666 = vsel %vm586, %v488, 4286644096
    %v1668 = vmax.bf16 %v1664, %v1666
    %v1670 = vsel %vm586, %v552, 4286644096
    %v1672 = vmax.bf16 %v1668, %v1670
    %v1674 = vsel %vm586, %v41, 4286644096
    %v1677 = vsel %vm586, %v105, 4286644096
    %v1679 = vmax.bf16 %v1674, %v1677
    %v1681 = vsel %vm586, %v169, 4286644096
    %v1683 = vmax.bf16 %v1679, %v1681
    %v1685 = vsel %vm586, %v233, 4286644096
    %v1687 = vmax.bf16 %v1683, %v1685
    %v1689 = vsel %vm586, %v297, 4286644096
    %v1691 = vmax.bf16 %v1687, %v1689
    %v1693 = vsel %vm586, %v361, 4286644096
    %v1695 = vmax.bf16 %v1691, %v1693
    %v1697 = vsel %vm586, %v425, 4286644096
    %v1699 = vmax.bf16 %v1695, %v1697
    %v1701 = vsel %vm586, %v489, 4286644096
    %v1703 = vmax.bf16 %v1699, %v1701
    %v1705 = vsel %vm586, %v553, 4286644096
    %v1707 = vmax.bf16 %v1703, %v1705
    %v1709 = vsel %vm586, %v42, 4286644096
    %v1712 = vsel %vm586, %v106, 4286644096
    %v1714 = vmax.bf16 %v1709, %v1712
    %v1716 = vsel %vm586, %v170, 4286644096
    %v1718 = vmax.bf16 %v1714, %v1716
    %v1720 = vsel %vm586, %v234, 4286644096
    %v1722 = vmax.bf16 %v1718, %v1720
    %v1724 = vsel %vm586, %v298, 4286644096
    %v1726 = vmax.bf16 %v1722, %v1724
    %v1728 = vsel %vm586, %v362, 4286644096
    %v1730 = vmax.bf16 %v1726, %v1728
    %v1732 = vsel %vm586, %v426, 4286644096
    %v1734 = vmax.bf16 %v1730, %v1732
    %v1736 = vsel %vm586, %v490, 4286644096
    %v1738 = vmax.bf16 %v1734, %v1736
    %v1740 = vsel %vm586, %v554, 4286644096
    %v1742 = vmax.bf16 %v1738, %v1740
    %v1744 = vsel %vm586, %v43, 4286644096
    %v1747 = vsel %vm586, %v107, 4286644096
    %v1749 = vmax.bf16 %v1744, %v1747
    %v1751 = vsel %vm586, %v171, 4286644096
    %v1753 = vmax.bf16 %v1749, %v1751
    %v1755 = vsel %vm586, %v235, 4286644096
    %v1757 = vmax.bf16 %v1753, %v1755
    %v1759 = vsel %vm586, %v299, 4286644096
    %v1761 = vmax.bf16 %v1757, %v1759
    %v1763 = vsel %vm586, %v363, 4286644096
    %v1765 = vmax.bf16 %v1761, %v1763
    %v1767 = vsel %vm586, %v427, 4286644096
    %v1769 = vmax.bf16 %v1765, %v1767
    %v1771 = vsel %vm586, %v491, 4286644096
    %v1773 = vmax.bf16 %v1769, %v1771
    %v1775 = vsel %vm586, %v555, 4286644096
    %v1777 = vmax.bf16 %v1773, %v1775
    %v1779 = vsel %vm586, %v44, 4286644096
    %v1782 = vsel %vm586, %v108, 4286644096
    %v1784 = vmax.bf16 %v1779, %v1782
    %v1786 = vsel %vm586, %v172, 4286644096
    %v1788 = vmax.bf16 %v1784, %v1786
    %v1790 = vsel %vm586, %v236, 4286644096
    %v1792 = vmax.bf16 %v1788, %v1790
    %v1794 = vsel %vm586, %v300, 4286644096
    %v1796 = vmax.bf16 %v1792, %v1794
    %v1798 = vsel %vm586, %v364, 4286644096
    %v1800 = vmax.bf16 %v1796, %v1798
    %v1802 = vsel %vm586, %v428, 4286644096
    %v1804 = vmax.bf16 %v1800, %v1802
    %v1806 = vsel %vm586, %v492, 4286644096
    %v1808 = vmax.bf16 %v1804, %v1806
    %v1810 = vsel %vm586, %v556, 4286644096
    %v1812 = vmax.bf16 %v1808, %v1810
    %v1814 = vsel %vm586, %v45, 4286644096
    %v1817 = vsel %vm586, %v109, 4286644096
    %v1819 = vmax.bf16 %v1814, %v1817
    %v1821 = vsel %vm586, %v173, 4286644096
    %v1823 = vmax.bf16 %v1819, %v1821
    %v1825 = vsel %vm586, %v237, 4286644096
    %v1827 = vmax.bf16 %v1823, %v1825
    %v1829 = vsel %vm586, %v301, 4286644096
    %v1831 = vmax.bf16 %v1827, %v1829
    %v1833 = vsel %vm586, %v365, 4286644096
    %v1835 = vmax.bf16 %v1831, %v1833
    %v1837 = vsel %vm586, %v429, 4286644096
    %v1839 = vmax.bf16 %v1835, %v1837
    %v1841 = vsel %vm586, %v493, 4286644096
    %v1843 = vmax.bf16 %v1839, %v1841
    %v1845 = vsel %vm586, %v557, 4286644096
    %v1847 = vmax.bf16 %v1843, %v1845
    %v1849 = vsel %vm586, %v46, 4286644096
    %v1852 = vsel %vm586, %v110, 4286644096
    %v1854 = vmax.bf16 %v1849, %v1852
    %v1856 = vsel %vm586, %v174, 4286644096
    %v1858 = vmax.bf16 %v1854, %v1856
    %v1860 = vsel %vm586, %v238, 4286644096
    %v1862 = vmax.bf16 %v1858, %v1860
    %v1864 = vsel %vm586, %v302, 4286644096
    %v1866 = vmax.bf16 %v1862, %v1864
    %v1868 = vsel %vm586, %v366, 4286644096
    %v1870 = vmax.bf16 %v1866, %v1868
    %v1872 = vsel %vm586, %v430, 4286644096
    %v1874 = vmax.bf16 %v1870, %v1872
    %v1876 = vsel %vm586, %v494, 4286644096
    %v1878 = vmax.bf16 %v1874, %v1876
    %v1880 = vsel %vm586, %v558, 4286644096
    %v1882 = vmax.bf16 %v1878, %v1880
    %v1884 = vsel %vm586, %v47, 4286644096
    %v1887 = vsel %vm586, %v111, 4286644096
    %v1889 = vmax.bf16 %v1884, %v1887
    %v1891 = vsel %vm586, %v175, 4286644096
    %v1893 = vmax.bf16 %v1889, %v1891
    %v1895 = vsel %vm586, %v239, 4286644096
    %v1897 = vmax.bf16 %v1893, %v1895
    %v1899 = vsel %vm586, %v303, 4286644096
    %v1901 = vmax.bf16 %v1897, %v1899
    %v1903 = vsel %vm586, %v367, 4286644096
    %v1905 = vmax.bf16 %v1901, %v1903
    %v1907 = vsel %vm586, %v431, 4286644096
    %v1909 = vmax.bf16 %v1905, %v1907
    %v1911 = vsel %vm586, %v495, 4286644096
    %v1913 = vmax.bf16 %v1909, %v1911
    %v1915 = vsel %vm586, %v559, 4286644096
    %v1917 = vmax.bf16 %v1913, %v1915
    %v1919 = vsel %vm586, %v48, 4286644096
    %v1922 = vsel %vm586, %v112, 4286644096
    %v1924 = vmax.bf16 %v1919, %v1922
    %v1926 = vsel %vm586, %v176, 4286644096
    %v1928 = vmax.bf16 %v1924, %v1926
    %v1930 = vsel %vm586, %v240, 4286644096
    %v1932 = vmax.bf16 %v1928, %v1930
    %v1934 = vsel %vm586, %v304, 4286644096
    %v1936 = vmax.bf16 %v1932, %v1934
    %v1938 = vsel %vm586, %v368, 4286644096
    %v1940 = vmax.bf16 %v1936, %v1938
    %v1942 = vsel %vm586, %v432, 4286644096
    %v1944 = vmax.bf16 %v1940, %v1942
    %v1946 = vsel %vm586, %v496, 4286644096
    %v1948 = vmax.bf16 %v1944, %v1946
    %v1950 = vsel %vm586, %v560, 4286644096
    %v1952 = vmax.bf16 %v1948, %v1950
    %v1954 = vsel %vm586, %v49, 4286644096
    %v1957 = vsel %vm586, %v113, 4286644096
    %v1959 = vmax.bf16 %v1954, %v1957
    %v1961 = vsel %vm586, %v177, 4286644096
    %v1963 = vmax.bf16 %v1959, %v1961
    %v1965 = vsel %vm586, %v241, 4286644096
    %v1967 = vmax.bf16 %v1963, %v1965
    %v1969 = vsel %vm586, %v305, 4286644096
    %v1971 = vmax.bf16 %v1967, %v1969
    %v1973 = vsel %vm586, %v369, 4286644096
    %v1975 = vmax.bf16 %v1971, %v1973
    %v1977 = vsel %vm586, %v433, 4286644096
    %v1979 = vmax.bf16 %v1975, %v1977
    %v1981 = vsel %vm586, %v497, 4286644096
    %v1983 = vmax.bf16 %v1979, %v1981
    %v1985 = vsel %vm586, %v561, 4286644096
    %v1987 = vmax.bf16 %v1983, %v1985
    %v1989 = vsel %vm586, %v50, 4286644096
    %v1992 = vsel %vm586, %v114, 4286644096
    %v1994 = vmax.bf16 %v1989, %v1992
    %v1996 = vsel %vm586, %v178, 4286644096
    %v1998 = vmax.bf16 %v1994, %v1996
    %v2000 = vsel %vm586, %v242, 4286644096
    %v2002 = vmax.bf16 %v1998, %v2000
    %v2004 = vsel %vm586, %v306, 4286644096
    %v2006 = vmax.bf16 %v2002, %v2004
    %v2008 = vsel %vm586, %v370, 4286644096
    %v2010 = vmax.bf16 %v2006, %v2008
    %v2012 = vsel %vm586, %v434, 4286644096
    %v2014 = vmax.bf16 %v2010, %v2012
    %v2016 = vsel %vm586, %v498, 4286644096
    %v2018 = vmax.bf16 %v2014, %v2016
    %v2020 = vsel %vm586, %v562, 4286644096
    %v2022 = vmax.bf16 %v2018, %v2020
    %v2024 = vsel %vm586, %v51, 4286644096
    %v2027 = vsel %vm586, %v115, 4286644096
    %v2029 = vmax.bf16 %v2024, %v2027
    %v2031 = vsel %vm586, %v179, 4286644096
    %v2033 = vmax.bf16 %v2029, %v2031
    %v2035 = vsel %vm586, %v243, 4286644096
    %v2037 = vmax.bf16 %v2033, %v2035
    %v2039 = vsel %vm586, %v307, 4286644096
    %v2041 = vmax.bf16 %v2037, %v2039
    %v2043 = vsel %vm586, %v371, 4286644096
    %v2045 = vmax.bf16 %v2041, %v2043
    %v2047 = vsel %vm586, %v435, 4286644096
    %v2049 = vmax.bf16 %v2045, %v2047
    %v2051 = vsel %vm586, %v499, 4286644096
    %v2053 = vmax.bf16 %v2049, %v2051
    %v2055 = vsel %vm586, %v563, 4286644096
    %v2057 = vmax.bf16 %v2053, %v2055
    %v2059 = vsel %vm586, %v52, 4286644096
    %v2062 = vsel %vm586, %v116, 4286644096
    %v2064 = vmax.bf16 %v2059, %v2062
    %v2066 = vsel %vm586, %v180, 4286644096
    %v2068 = vmax.bf16 %v2064, %v2066
    %v2070 = vsel %vm586, %v244, 4286644096
    %v2072 = vmax.bf16 %v2068, %v2070
    %v2074 = vsel %vm586, %v308, 4286644096
    %v2076 = vmax.bf16 %v2072, %v2074
    %v2078 = vsel %vm586, %v372, 4286644096
    %v2080 = vmax.bf16 %v2076, %v2078
    %v2082 = vsel %vm586, %v436, 4286644096
    %v2084 = vmax.bf16 %v2080, %v2082
    %v2086 = vsel %vm586, %v500, 4286644096
    %v2088 = vmax.bf16 %v2084, %v2086
    %v2090 = vsel %vm586, %v564, 4286644096
    %v2092 = vmax.bf16 %v2088, %v2090
    %v2094 = vsel %vm586, %v53, 4286644096
    %v2097 = vsel %vm586, %v117, 4286644096
    %v2099 = vmax.bf16 %v2094, %v2097
    %v2101 = vsel %vm586, %v181, 4286644096
    %v2103 = vmax.bf16 %v2099, %v2101
    %v2105 = vsel %vm586, %v245, 4286644096
    %v2107 = vmax.bf16 %v2103, %v2105
    %v2109 = vsel %vm586, %v309, 4286644096
    %v2111 = vmax.bf16 %v2107, %v2109
    %v2113 = vsel %vm586, %v373, 4286644096
    %v2115 = vmax.bf16 %v2111, %v2113
    %v2117 = vsel %vm586, %v437, 4286644096
    %v2119 = vmax.bf16 %v2115, %v2117
    %v2121 = vsel %vm586, %v501, 4286644096
    %v2123 = vmax.bf16 %v2119, %v2121
    %v2125 = vsel %vm586, %v565, 4286644096
    %v2127 = vmax.bf16 %v2123, %v2125
    %v2129 = vsel %vm586, %v54, 4286644096
    %v2132 = vsel %vm586, %v118, 4286644096
    %v2134 = vmax.bf16 %v2129, %v2132
    %v2136 = vsel %vm586, %v182, 4286644096
    %v2138 = vmax.bf16 %v2134, %v2136
    %v2140 = vsel %vm586, %v246, 4286644096
    %v2142 = vmax.bf16 %v2138, %v2140
    %v2144 = vsel %vm586, %v310, 4286644096
    %v2146 = vmax.bf16 %v2142, %v2144
    %v2148 = vsel %vm586, %v374, 4286644096
    %v2150 = vmax.bf16 %v2146, %v2148
    %v2152 = vsel %vm586, %v438, 4286644096
    %v2154 = vmax.bf16 %v2150, %v2152
    %v2156 = vsel %vm586, %v502, 4286644096
    %v2158 = vmax.bf16 %v2154, %v2156
    %v2160 = vsel %vm586, %v566, 4286644096
    %v2162 = vmax.bf16 %v2158, %v2160
    %v2164 = vsel %vm586, %v55, 4286644096
    %v2167 = vsel %vm586, %v119, 4286644096
    %v2169 = vmax.bf16 %v2164, %v2167
    %v2171 = vsel %vm586, %v183, 4286644096
    %v2173 = vmax.bf16 %v2169, %v2171
    %v2175 = vsel %vm586, %v247, 4286644096
    %v2177 = vmax.bf16 %v2173, %v2175
    %v2179 = vsel %vm586, %v311, 4286644096
    %v2181 = vmax.bf16 %v2177, %v2179
    %v2183 = vsel %vm586, %v375, 4286644096
    %v2185 = vmax.bf16 %v2181, %v2183
    %v2187 = vsel %vm586, %v439, 4286644096
    %v2189 = vmax.bf16 %v2185, %v2187
    %v2191 = vsel %vm586, %v503, 4286644096
    %v2193 = vmax.bf16 %v2189, %v2191
    %v2195 = vsel %vm586, %v567, 4286644096
    %v2197 = vmax.bf16 %v2193, %v2195
    %v2199 = vsel %vm586, %v56, 4286644096
    %v2202 = vsel %vm586, %v120, 4286644096
    %v2204 = vmax.bf16 %v2199, %v2202
    %v2206 = vsel %vm586, %v184, 4286644096
    %v2208 = vmax.bf16 %v2204, %v2206
    %v2210 = vsel %vm586, %v248, 4286644096
    %v2212 = vmax.bf16 %v2208, %v2210
    %v2214 = vsel %vm586, %v312, 4286644096
    %v2216 = vmax.bf16 %v2212, %v2214
    %v2218 = vsel %vm586, %v376, 4286644096
    %v2220 = vmax.bf16 %v2216, %v2218
    %v2222 = vsel %vm586, %v440, 4286644096
    %v2224 = vmax.bf16 %v2220, %v2222
    %v2226 = vsel %vm586, %v504, 4286644096
    %v2228 = vmax.bf16 %v2224, %v2226
    %v2230 = vsel %vm586, %v568, 4286644096
    %v2232 = vmax.bf16 %v2228, %v2230
    %v2234 = vsel %vm586, %v57, 4286644096
    %v2237 = vsel %vm586, %v121, 4286644096
    %v2239 = vmax.bf16 %v2234, %v2237
    %v2241 = vsel %vm586, %v185, 4286644096
    %v2243 = vmax.bf16 %v2239, %v2241
    %v2245 = vsel %vm586, %v249, 4286644096
    %v2247 = vmax.bf16 %v2243, %v2245
    %v2249 = vsel %vm586, %v313, 4286644096
    %v2251 = vmax.bf16 %v2247, %v2249
    %v2253 = vsel %vm586, %v377, 4286644096
    %v2255 = vmax.bf16 %v2251, %v2253
    %v2257 = vsel %vm586, %v441, 4286644096
    %v2259 = vmax.bf16 %v2255, %v2257
    %v2261 = vsel %vm586, %v505, 4286644096
    %v2263 = vmax.bf16 %v2259, %v2261
    %v2265 = vsel %vm586, %v569, 4286644096
    %v2267 = vmax.bf16 %v2263, %v2265
    %v2269 = vsel %vm586, %v58, 4286644096
    %v2272 = vsel %vm586, %v122, 4286644096
    %v2274 = vmax.bf16 %v2269, %v2272
    %v2276 = vsel %vm586, %v186, 4286644096
    %v2278 = vmax.bf16 %v2274, %v2276
    %v2280 = vsel %vm586, %v250, 4286644096
    %v2282 = vmax.bf16 %v2278, %v2280
    %v2284 = vsel %vm586, %v314, 4286644096
    %v2286 = vmax.bf16 %v2282, %v2284
    %v2288 = vsel %vm586, %v378, 4286644096
    %v2290 = vmax.bf16 %v2286, %v2288
    %v2292 = vsel %vm586, %v442, 4286644096
    %v2294 = vmax.bf16 %v2290, %v2292
    %v2296 = vsel %vm586, %v506, 4286644096
    %v2298 = vmax.bf16 %v2294, %v2296
    %v2300 = vsel %vm586, %v570, 4286644096
    %v2302 = vmax.bf16 %v2298, %v2300
    %v2304 = vsel %vm586, %v59, 4286644096
    %v2307 = vsel %vm586, %v123, 4286644096
    %v2309 = vmax.bf16 %v2304, %v2307
    %v2311 = vsel %vm586, %v187, 4286644096
    %v2313 = vmax.bf16 %v2309, %v2311
    %v2315 = vsel %vm586, %v251, 4286644096
    %v2317 = vmax.bf16 %v2313, %v2315
    %v2319 = vsel %vm586, %v315, 4286644096
    %v2321 = vmax.bf16 %v2317, %v2319
    %v2323 = vsel %vm586, %v379, 4286644096
    %v2325 = vmax.bf16 %v2321, %v2323
    %v2327 = vsel %vm586, %v443, 4286644096
    %v2329 = vmax.bf16 %v2325, %v2327
    %v2331 = vsel %vm586, %v507, 4286644096
    %v2333 = vmax.bf16 %v2329, %v2331
    %v2335 = vsel %vm586, %v571, 4286644096
    %v2337 = vmax.bf16 %v2333, %v2335
    %v2339 = vsel %vm586, %v60, 4286644096
    %v2342 = vsel %vm586, %v124, 4286644096
    %v2344 = vmax.bf16 %v2339, %v2342
    %v2346 = vsel %vm586, %v188, 4286644096
    %v2348 = vmax.bf16 %v2344, %v2346
    %v2350 = vsel %vm586, %v252, 4286644096
    %v2352 = vmax.bf16 %v2348, %v2350
    %v2354 = vsel %vm586, %v316, 4286644096
    %v2356 = vmax.bf16 %v2352, %v2354
    %v2358 = vsel %vm586, %v380, 4286644096
    %v2360 = vmax.bf16 %v2356, %v2358
    %v2362 = vsel %vm586, %v444, 4286644096
    %v2364 = vmax.bf16 %v2360, %v2362
    %v2366 = vsel %vm586, %v508, 4286644096
    %v2368 = vmax.bf16 %v2364, %v2366
    %v2370 = vsel %vm586, %v572, 4286644096
    %v2372 = vmax.bf16 %v2368, %v2370
    %v2374 = vsel %vm586, %v61, 4286644096
    %v2377 = vsel %vm586, %v125, 4286644096
    %v2379 = vmax.bf16 %v2374, %v2377
    %v2381 = vsel %vm586, %v189, 4286644096
    %v2383 = vmax.bf16 %v2379, %v2381
    %v2385 = vsel %vm586, %v253, 4286644096
    %v2387 = vmax.bf16 %v2383, %v2385
    %v2389 = vsel %vm586, %v317, 4286644096
    %v2391 = vmax.bf16 %v2387, %v2389
    %v2393 = vsel %vm586, %v381, 4286644096
    %v2395 = vmax.bf16 %v2391, %v2393
    %v2397 = vsel %vm586, %v445, 4286644096
    %v2399 = vmax.bf16 %v2395, %v2397
    %v2401 = vsel %vm586, %v509, 4286644096
    %v2403 = vmax.bf16 %v2399, %v2401
    %v2405 = vsel %vm586, %v573, 4286644096
    %v2407 = vmax.bf16 %v2403, %v2405
    %v2409 = vsel %vm586, %v62, 4286644096
    %v2412 = vsel %vm586, %v126, 4286644096
    %v2414 = vmax.bf16 %v2409, %v2412
    %v2416 = vsel %vm586, %v190, 4286644096
    %v2418 = vmax.bf16 %v2414, %v2416
    %v2420 = vsel %vm586, %v254, 4286644096
    %v2422 = vmax.bf16 %v2418, %v2420
    %v2424 = vsel %vm586, %v318, 4286644096
    %v2426 = vmax.bf16 %v2422, %v2424
    %v2428 = vsel %vm586, %v382, 4286644096
    %v2430 = vmax.bf16 %v2426, %v2428
    %v2432 = vsel %vm586, %v446, 4286644096
    %v2434 = vmax.bf16 %v2430, %v2432
    %v2436 = vsel %vm586, %v510, 4286644096
    %v2438 = vmax.bf16 %v2434, %v2436
    %v2440 = vsel %vm586, %v574, 4286644096
    %v2442 = vmax.bf16 %v2438, %v2440
    %v2444 = vsel %vm586, %v63, 4286644096
    %v2447 = vsel %vm586, %v127, 4286644096
    %v2449 = vmax.bf16 %v2444, %v2447
    %v2451 = vsel %vm586, %v191, 4286644096
    %v2453 = vmax.bf16 %v2449, %v2451
    %v2455 = vsel %vm586, %v255, 4286644096
    %v2457 = vmax.bf16 %v2453, %v2455
    %v2459 = vsel %vm586, %v319, 4286644096
    %v2461 = vmax.bf16 %v2457, %v2459
    %v2463 = vsel %vm586, %v383, 4286644096
    %v2465 = vmax.bf16 %v2461, %v2463
    %v2467 = vsel %vm586, %v447, 4286644096
    %v2469 = vmax.bf16 %v2465, %v2467
    %v2471 = vsel %vm586, %v511, 4286644096
    %v2473 = vmax.bf16 %v2469, %v2471
    %v2475 = vsel %vm586, %v575, 4286644096
    %v2477 = vmax.bf16 %v2473, %v2475
    %v2479 = vsel %vm586, %v64, 4286644096
    %v2482 = vsel %vm586, %v128, 4286644096
    %v2484 = vmax.bf16 %v2479, %v2482
    %v2486 = vsel %vm586, %v192, 4286644096
    %v2488 = vmax.bf16 %v2484, %v2486
    %v2490 = vsel %vm586, %v256, 4286644096
    %v2492 = vmax.bf16 %v2488, %v2490
    %v2494 = vsel %vm586, %v320, 4286644096
    %v2496 = vmax.bf16 %v2492, %v2494
    %v2498 = vsel %vm586, %v384, 4286644096
    %v2500 = vmax.bf16 %v2496, %v2498
    %v2502 = vsel %vm586, %v448, 4286644096
    %v2504 = vmax.bf16 %v2500, %v2502
    %v2506 = vsel %vm586, %v512, 4286644096
    %v2508 = vmax.bf16 %v2504, %v2506
    %v2510 = vsel %vm586, %v576, 4286644096
    %v2512 = vmax.bf16 %v2508, %v2510
    %v2514 = vsel %vm586, %v65, 4286644096
    %v2517 = vsel %vm586, %v129, 4286644096
    %v2519 = vmax.bf16 %v2514, %v2517
    %v2521 = vsel %vm586, %v193, 4286644096
    %v2523 = vmax.bf16 %v2519, %v2521
    %v2525 = vsel %vm586, %v257, 4286644096
    %v2527 = vmax.bf16 %v2523, %v2525
    %v2529 = vsel %vm586, %v321, 4286644096
    %v2531 = vmax.bf16 %v2527, %v2529
    %v2533 = vsel %vm586, %v385, 4286644096
    %v2535 = vmax.bf16 %v2531, %v2533
    %v2537 = vsel %vm586, %v449, 4286644096
    %v2539 = vmax.bf16 %v2535, %v2537
    %v2541 = vsel %vm586, %v513, 4286644096
    %v2543 = vmax.bf16 %v2539, %v2541
    %v2545 = vsel %vm586, %v577, 4286644096
    %v2547 = vmax.bf16 %v2543, %v2545
    %v2549 = vsel %vm586, %v66, 4286644096
    %v2552 = vsel %vm586, %v130, 4286644096
    %v2554 = vmax.bf16 %v2549, %v2552
    %v2556 = vsel %vm586, %v194, 4286644096
    %v2558 = vmax.bf16 %v2554, %v2556
    %v2560 = vsel %vm586, %v258, 4286644096
    %v2562 = vmax.bf16 %v2558, %v2560
    %v2564 = vsel %vm586, %v322, 4286644096
    %v2566 = vmax.bf16 %v2562, %v2564
    %v2568 = vsel %vm586, %v386, 4286644096
    %v2570 = vmax.bf16 %v2566, %v2568
    %v2572 = vsel %vm586, %v450, 4286644096
    %v2574 = vmax.bf16 %v2570, %v2572
    %v2576 = vsel %vm586, %v514, 4286644096
    %v2578 = vmax.bf16 %v2574, %v2576
    %v2580 = vsel %vm586, %v578, 4286644096
    %v2582 = vmax.bf16 %v2578, %v2580
    %v2584 = vsel %vm586, %v67, 4286644096
    %v2587 = vsel %vm586, %v131, 4286644096
    %v2589 = vmax.bf16 %v2584, %v2587
    %v2591 = vsel %vm586, %v195, 4286644096
    %v2593 = vmax.bf16 %v2589, %v2591
    %v2595 = vsel %vm586, %v259, 4286644096
    %v2597 = vmax.bf16 %v2593, %v2595
    %v2599 = vsel %vm586, %v323, 4286644096
    %v2601 = vmax.bf16 %v2597, %v2599
    %v2603 = vsel %vm586, %v387, 4286644096
    %v2605 = vmax.bf16 %v2601, %v2603
    %v2607 = vsel %vm586, %v451, 4286644096
    %v2609 = vmax.bf16 %v2605, %v2607
    %v2611 = vsel %vm586, %v515, 4286644096
    %v2613 = vmax.bf16 %v2609, %v2611
    %v2615 = vsel %vm586, %v579, 4286644096
    %v2617 = vmax.bf16 %v2613, %v2615
    %v2619 = vsel %vm586, %v68, 4286644096
    %v2622 = vsel %vm586, %v132, 4286644096
    %v2624 = vmax.bf16 %v2619, %v2622
    %v2626 = vsel %vm586, %v196, 4286644096
    %v2628 = vmax.bf16 %v2624, %v2626
    %v2630 = vsel %vm586, %v260, 4286644096
    %v2632 = vmax.bf16 %v2628, %v2630
    %v2634 = vsel %vm586, %v324, 4286644096
    %v2636 = vmax.bf16 %v2632, %v2634
    %v2638 = vsel %vm586, %v388, 4286644096
    %v2640 = vmax.bf16 %v2636, %v2638
    %v2642 = vsel %vm586, %v452, 4286644096
    %v2644 = vmax.bf16 %v2640, %v2642
    %v2646 = vsel %vm586, %v516, 4286644096
    %v2648 = vmax.bf16 %v2644, %v2646
    %v2650 = vsel %vm586, %v580, 4286644096
    %v2652 = vmax.bf16 %v2648, %v2650
    %v2654 = vsel %vm586, %v69, 4286644096
    %v2657 = vsel %vm586, %v133, 4286644096
    %v2659 = vmax.bf16 %v2654, %v2657
    %v2661 = vsel %vm586, %v197, 4286644096
    %v2663 = vmax.bf16 %v2659, %v2661
    %v2665 = vsel %vm586, %v261, 4286644096
    %v2667 = vmax.bf16 %v2663, %v2665
    %v2669 = vsel %vm586, %v325, 4286644096
    %v2671 = vmax.bf16 %v2667, %v2669
    %v2673 = vsel %vm586, %v389, 4286644096
    %v2675 = vmax.bf16 %v2671, %v2673
    %v2677 = vsel %vm586, %v453, 4286644096
    %v2679 = vmax.bf16 %v2675, %v2677
    %v2681 = vsel %vm586, %v517, 4286644096
    %v2683 = vmax.bf16 %v2679, %v2681
    %v2685 = vsel %vm586, %v581, 4286644096
    %v2687 = vmax.bf16 %v2683, %v2685
    %v2689 = vsel %vm586, %v70, 4286644096
    %v2692 = vsel %vm586, %v134, 4286644096
    %v2694 = vmax.bf16 %v2689, %v2692
    %v2696 = vsel %vm586, %v198, 4286644096
    %v2698 = vmax.bf16 %v2694, %v2696
    %v2700 = vsel %vm586, %v262, 4286644096
    %v2702 = vmax.bf16 %v2698, %v2700
    %v2704 = vsel %vm586, %v326, 4286644096
    %v2706 = vmax.bf16 %v2702, %v2704
    %v2708 = vsel %vm586, %v390, 4286644096
    %v2710 = vmax.bf16 %v2706, %v2708
    %v2712 = vsel %vm586, %v454, 4286644096
    %v2714 = vmax.bf16 %v2710, %v2712
    %v2716 = vsel %vm586, %v518, 4286644096
    %v2718 = vmax.bf16 %v2714, %v2716
    %v2720 = vsel %vm586, %v582, 4286644096
    %v2722 = vmax.bf16 %v2718, %v2720
    %v2724 = vsel %vm586, %v71, 4286644096
    %v2727 = vsel %vm586, %v135, 4286644096
    %v2729 = vmax.bf16 %v2724, %v2727
    %v2731 = vsel %vm586, %v199, 4286644096
    %v2733 = vmax.bf16 %v2729, %v2731
    %v2735 = vsel %vm586, %v263, 4286644096
    %v2737 = vmax.bf16 %v2733, %v2735
    %v2739 = vsel %vm586, %v327, 4286644096
    %v2741 = vmax.bf16 %v2737, %v2739
    %v2743 = vsel %vm586, %v391, 4286644096
    %v2745 = vmax.bf16 %v2741, %v2743
    %v2747 = vsel %vm586, %v455, 4286644096
    %v2749 = vmax.bf16 %v2745, %v2747
    %v2751 = vsel %vm586, %v519, 4286644096
    %v2753 = vmax.bf16 %v2749, %v2751
    %v2755 = vsel %vm586, %v583, 4286644096
    %v2757 = vmax.bf16 %v2753, %v2755
    %v2759 = vsel %vm586, %v72, 4286644096
    %v2762 = vsel %vm586, %v136, 4286644096
    %v2764 = vmax.bf16 %v2759, %v2762
    %v2766 = vsel %vm586, %v200, 4286644096
    %v2768 = vmax.bf16 %v2764, %v2766
    %v2770 = vsel %vm586, %v264, 4286644096
    %v2772 = vmax.bf16 %v2768, %v2770
    %v2774 = vsel %vm586, %v328, 4286644096
    %v2776 = vmax.bf16 %v2772, %v2774
    %v2778 = vsel %vm586, %v392, 4286644096
    %v2780 = vmax.bf16 %v2776, %v2778
    %v2782 = vsel %vm586, %v456, 4286644096
    %v2784 = vmax.bf16 %v2780, %v2782
    %v2786 = vsel %vm586, %v520, 4286644096
    %v2788 = vmax.bf16 %v2784, %v2786
    %v2790 = vsel %vm586, %v584, 4286644096
    %v2792 = vmax.bf16 %v2788, %v2790
    %v2794 = vsel %vm586, %v73, 4286644096
    %v2797 = vsel %vm586, %v137, 4286644096
    %v2799 = vmax.bf16 %v2794, %v2797
    %v2801 = vsel %vm586, %v201, 4286644096
    %v2803 = vmax.bf16 %v2799, %v2801
    %v2805 = vsel %vm586, %v265, 4286644096
    %v2807 = vmax.bf16 %v2803, %v2805
    %v2809 = vsel %vm586, %v329, 4286644096
    %v2811 = vmax.bf16 %v2807, %v2809
    %v2813 = vsel %vm586, %v393, 4286644096
    %v2815 = vmax.bf16 %v2811, %v2813
    %v2817 = vsel %vm586, %v457, 4286644096
    %v2819 = vmax.bf16 %v2815, %v2817
    %v2821 = vsel %vm586, %v521, 4286644096
    %v2823 = vmax.bf16 %v2819, %v2821
    %v2825 = vsel %vm586, %v585, 4286644096
    %v2827 = vmax.bf16 %v2823, %v2825
    %2828 = vst [vmem:[#allocation2] sm:$0xf] %v622
    %2829 = vst [vmem:[#allocation2 + $0x4] sm:$0xf] %v657
    %2830 = vst [vmem:[#allocation2 + $0x8] sm:$0xf] %v692
    %2831 = vst [vmem:[#allocation2 + $0xc] sm:$0xf] %v727
    %2832 = vst [vmem:[#allocation2 + $0x10] sm:$0xf] %v762
    %2833 = vst [vmem:[#allocation2 + $0x14] sm:$0xf] %v797
    %2834 = vst [vmem:[#allocation2 + $0x18] sm:$0xf] %v832
    %2835 = vst [vmem:[#allocation2 + $0x1c] sm:$0xf] %v867
    %2836 = vst [vmem:[#allocation2 + $0x20] sm:$0xf] %v902
    %2837 = vst [vmem:[#allocation2 + $0x24] sm:$0xf] %v937
    %2838 = vst [vmem:[#allocation2 + $0x28] sm:$0xf] %v972
    %2839 = vst [vmem:[#allocation2 + $0x2c] sm:$0xf] %v1007
    %2840 = vst [vmem:[#allocation2 + $0x30] sm:$0xf] %v1042
    %2841 = vst [vmem:[#allocation2 + $0x34] sm:$0xf] %v1077
    %2842 = vst [vmem:[#allocation2 + $0x38] sm:$0xf] %v1112
    %2843 = vst [vmem:[#allocation2 + $0x3c] sm:$0xf] %v1147
    %2844 = vst [vmem:[#allocation2 + $0x40] sm:$0xf] %v1182
    %2845 = vst [vmem:[#allocation2 + $0x44] sm:$0xf] %v1217
    %2846 = vst [vmem:[#allocation2 + $0x48] sm:$0xf] %v1252
    %2847 = vst [vmem:[#allocation2 + $0x4c] sm:$0xf] %v1287
    %2848 = vst [vmem:[#allocation2 + $0x50] sm:$0xf] %v1322
    %2849 = vst [vmem:[#allocation2 + $0x54] sm:$0xf] %v1357
    %2850 = vst [vmem:[#allocation2 + $0x58] sm:$0xf] %v1392
    %2851 = vst [vmem:[#allocation2 + $0x5c] sm:$0xf] %v1427
    %2852 = vst [vmem:[#allocation2 + $0x60] sm:$0xf] %v1462
    %2853 = vst [vmem:[#allocation2 + $0x64] sm:$0xf] %v1497
    %2854 = vst [vmem:[#allocation2 + $0x68] sm:$0xf] %v1532
    %2855 = vst [vmem:[#allocation2 + $0x6c] sm:$0xf] %v1567
    %2856 = vst [vmem:[#allocation2 + $0x70] sm:$0xf] %v1602
    %2857 = vst [vmem:[#allocation2 + $0x74] sm:$0xf] %v1637
    %2858 = vst [vmem:[#allocation2 + $0x78] sm:$0xf] %v1672
    %2859 = vst [vmem:[#allocation2 + $0x7c] sm:$0xf] %v1707
    %2860 = vst [vmem:[#allocation2 + $0x80] sm:$0xf] %v1742
    %2861 = vst [vmem:[#allocation2 + $0x84] sm:$0xf] %v1777
    %2862 = vst [vmem:[#allocation2 + $0x88] sm:$0xf] %v1812
    %2863 = vst [vmem:[#allocation2 + $0x8c] sm:$0xf] %v1847
    %2864 = vst [vmem:[#allocation2 + $0x90] sm:$0xf] %v1882
    %2865 = vst [vmem:[#allocation2 + $0x94] sm:$0xf] %v1917
    %2866 = vst [vmem:[#allocation2 + $0x98] sm:$0xf] %v1952
    %2867 = vst [vmem:[#allocation2 + $0x9c] sm:$0xf] %v1987
    %2868 = vst [vmem:[#allocation2 + $0xa0] sm:$0xf] %v2022
    %2869 = vst [vmem:[#allocation2 + $0xa4] sm:$0xf] %v2057
    %2870 = vst [vmem:[#allocation2 + $0xa8] sm:$0xf] %v2092
    %2871 = vst [vmem:[#allocation2 + $0xac] sm:$0xf] %v2127
    %2872 = vst [vmem:[#allocation2 + $0xb0] sm:$0xf] %v2162
    %2873 = vst [vmem:[#allocation2 + $0xb4] sm:$0xf] %v2197
    %2874 = vst [vmem:[#allocation2 + $0xb8] sm:$0xf] %v2232
    %2875 = vst [vmem:[#allocation2 + $0xbc] sm:$0xf] %v2267
    %2876 = vst [vmem:[#allocation2 + $0xc0] sm:$0xf] %v2302
    %2877 = vst [vmem:[#allocation2 + $0xc4] sm:$0xf] %v2337
    %2878 = vst [vmem:[#allocation2 + $0xc8] sm:$0xf] %v2372
    %2879 = vst [vmem:[#allocation2 + $0xcc] sm:$0xf] %v2407
    %2880 = vst [vmem:[#allocation2 + $0xd0] sm:$0xf] %v2442
    %2881 = vst [vmem:[#allocation2 + $0xd4] sm:$0xf] %v2477
    %2882 = vst [vmem:[#allocation2 + $0xd8] sm:$0xf] %v2512
    %2883 = vst [vmem:[#allocation2 + $0xdc] sm:$0xf] %v2547
    %2884 = vst [vmem:[#allocation2 + $0xe0] sm:$0xf] %v2582
    %2885 = vst [vmem:[#allocation2 + $0xe4] sm:$0xf] %v2617
    %2886 = vst [vmem:[#allocation2 + $0xe8] sm:$0xf] %v2652
    %2887 = vst [vmem:[#allocation2 + $0xec] sm:$0xf] %v2687
    %2888 = vst [vmem:[#allocation2 + $0xf0] sm:$0xf] %v2722
    %2889 = vst [vmem:[#allocation2 + $0xf4] sm:$0xf] %v2757
    %2890 = vst [vmem:[#allocation2 + $0xf8] sm:$0xf] %v2792
    %2891 = vst [vmem:[#allocation2 + $0xfc] sm:$0xf] %v2827
    // Predicated region
    $region6: #{stem_forward.3} parent=1 // pred_check
      _
    $region7: #{stem_forward.3} parent=1 // pred_check_branch
      %2893 = sbr.rel (0) target = $region9
    $region8: #{stem_forward.3} parent=1 // pred_region
      %s2895 = ssub.s32 4096, 4096
      %2896 = vsyncadd [#allocation3], %s2895
      %s2897 = sshll.u32 [#allocation2], 4
      %s2898 = int_to_ptr.vmem [resolvable:$true] %s2897
      %2903 = dma.vmem_to_hbm [thread:$0]  %s2898, 4096, %s1, [#allocation3], 64, 64, 4
    $region9: #{stem_forward.3} parent=1 // pred_fallthru
      _
    // Predicated region
    $region10: #{stem_forward.3} parent=1 // pred_check
      _
    $region11: #{stem_forward.3} parent=1 // pred_check_branch
      %2905 = sbr.rel (0) target = $region13
    $region12: #{stem_forward.3} parent=1 // pred_region
      %2906 = dma.done [#allocation3], 4096
    $region13: #{stem_forward.3} parent=1 // pred_fallthru
      _
    %2907 = vsyncpa [#allocation3], 1

</llo_original>
